<compile_context>
chip_gen: v7x
topology: tpu7x:2x2x1
jax: 0.10.0
libtpu: 0.0.40
codegen_flags: <defaults>
</compile_context>

<pallas_src>
import functools
import math

import jax
import jax.numpy as jnp
from jax import lax
from jax.experimental import pallas as pl
from jax.experimental.pallas import tpu as pltpu


# ----------------------------- config ---------------------------------------

CFG = dict(
    vocab_size=100,
    embedding_size=16,
    hidden_size=32,
    num_heads=4,
    num_hidden_layers=2,
    max_position_embeddings=64,
    type_vocab_size=2,
    dropout_prob=0.0,  # identity at inference
)

LN_EPS = 1e-12


# ----------------------------- kernel helpers --------------------------------

def _layernorm(x, gamma, beta, eps=LN_EPS):
    # matches BertLayerNorm (non-apex path); rsqrt -> EUP slot
    u = jnp.mean(x, axis=-1, keepdims=True)
    d = x - u
    s = jnp.mean(d * d, axis=-1, keepdims=True)
    return gamma * (d * lax.rsqrt(s + eps)) + beta


def _gelu(x):
    # matches torch reference: x * 0.5 * (1 + erf(x / 1.41421))
    return x * 0.5 * (1.0 + lax.erf(x / 1.41421))


# ----------------------------- fused model kernel ----------------------------

def electra_kernel(num_heads, head_dim, num_layers, B, S,
                   we_ref, pe_ref, te_ref, eg_ref, eb_ref, wp_ref, bp_ref,
                   mask_ref,
                   wq_ref, bq_ref, wk_ref, bk_ref, wv_ref, bv_ref,
                   wo_ref, bo_ref, g1_ref, be1_ref,
                   w1_ref, b1_ref, w2_ref, b2_ref, g2_ref, be2_ref,
                   out_ref):
    T = B * S
    G = B * num_heads
    H = wp_ref.shape[1]
    scale = 1.0 / math.sqrt(head_dim)

    # ---- embeddings: (word + pos + type) -> LayerNorm -> projection ----
    e = we_ref[...] + pe_ref[...] + te_ref[...]                         # (T, E)
    e = _layernorm(e, eg_ref[...], eb_ref[...])
    h = jnp.dot(e, wp_ref[...],
                preferred_element_type=jnp.float32) + bp_ref[...]       # (T, H)

    mask = mask_ref[...]                                                # (G, 1, S)

    for l in range(num_layers):                      # static, unrolled layer loop
        # ---- multi-head attention, batched over G = B * num_heads ----
        xg = jnp.broadcast_to(h.reshape(B, 1, S, H),
                              (B, num_heads, S, H)).reshape(G, S, H)

        q = jnp.einsum('gsh,ghd->gsd', xg, wq_ref[l],
                       preferred_element_type=jnp.float32) + bq_ref[l]  # (G,S,hd)
        k = jnp.einsum('gsh,ghd->gsd', xg, wk_ref[l],
                       preferred_element_type=jnp.float32) + bk_ref[l]
        v = jnp.einsum('gsh,ghd->gsd', xg, wv_ref[l],
                       preferred_element_type=jnp.float32) + bv_ref[l]

        s = jnp.einsum('gqd,gkd->gqk', q, k,
                       preferred_element_type=jnp.float32) * scale + mask
        s = s - jnp.max(s, axis=-1, keepdims=True)
        p = jnp.exp(s)
        p = p * pl.reciprocal(jnp.sum(p, axis=-1, keepdims=True), approx=True)

        ctx = jnp.einsum('gqk,gkd->gqd', p, v,
                         preferred_element_type=jnp.float32)            # (G,S,hd)
        ao = jnp.einsum('gsd,gdh->gsh', ctx, wo_ref[l],
                        preferred_element_type=jnp.float32)             # (G,S,H)
        # sum per-head output-projection contributions, back to (T, H)
        attn = (ao.reshape(B, num_heads, S, H).sum(axis=1).reshape(T, H)
                + bo_ref[l])

        h = _layernorm(attn + h, g1_ref[l], be1_ref[l])                 # attention_norm

        # ---- position-wise feed-forward (bias_gelu) ----
        ff = jnp.dot(h, w1_ref[l], preferred_element_type=jnp.float32)
        ff = _gelu(ff + b1_ref[l])                                      # bias_gelu (fc1)
        ff = jnp.dot(ff, w2_ref[l],
                     preferred_element_type=jnp.float32) + b2_ref[l]

        h = _layernorm(ff + h, g2_ref[l], be2_ref[l])                   # feedforward_norm

    out_ref[...] = h


def run_electra(inputs, num_heads, head_dim, num_layers, B, S, H):
    T = B * S
    kern = functools.partial(electra_kernel, num_heads, head_dim, num_layers, B, S)

    def full(a):
        nd = a.ndim
        return pl.BlockSpec(a.shape, lambda i, _nd=nd: (0,) * _nd)

    return pl.pallas_call(
        kern,
        out_shape=jax.ShapeDtypeStruct((T, H), jnp.float32),
        grid=(1,),
        in_specs=[full(a) for a in inputs],
        out_specs=pl.BlockSpec((T, H), lambda i: (0, 0)),
        compiler_params=pltpu.CompilerParams(dimension_semantics=("arbitrary",)),
    )(*inputs)


# ----------------------------- parameter init --------------------------------

def init_params(key, cfg):
    E, H = cfg["embedding_size"], cfg["hidden_size"]
    I = 4 * H

    def normal(k, shape, std=0.02):
        return std * jax.random.normal(k, shape, dtype=jnp.float32)

    keys = iter(jax.random.split(key, 64))
    params = {}
    we = normal(next(keys), (cfg["vocab_size"], E))
    we = we.at[0].set(0.0)  # padding_idx=0
    params["word_emb"] = we
    params["pos_emb"] = normal(next(keys), (cfg["max_position_embeddings"], E))
    params["type_emb"] = normal(next(keys), (cfg["type_vocab_size"], E))
    params["emb_ln_g"] = jnp.ones((1, E), jnp.float32)
    params["emb_ln_b"] = jnp.zeros((1, E), jnp.float32)
    # embeddings_project (E != H); weights stored PRE-TRANSPOSED as (in, out)
    params["proj_w"] = normal(next(keys), (E, H))
    params["proj_b"] = jnp.zeros((1, H), jnp.float32)

    layers = []
    for _ in range(cfg["num_hidden_layers"]):
        lp = (
            normal(next(keys), (H, H)), jnp.zeros((1, H), jnp.float32),   # Wq, bq
            normal(next(keys), (H, H)), jnp.zeros((1, H), jnp.float32),   # Wk, bk
            normal(next(keys), (H, H)), jnp.zeros((1, H), jnp.float32),   # Wv, bv
            normal(next(keys), (H, H)), jnp.zeros((1, H), jnp.float32),   # Wo, bo
            jnp.ones((1, H), jnp.float32), jnp.zeros((1, H), jnp.float32),  # attn LN
            normal(next(keys), (H, I)), normal(next(keys), (1, I)),       # fc1 W, b
            normal(next(keys), (I, H)), jnp.zeros((1, H), jnp.float32),   # fc2 W, b
            jnp.ones((1, H), jnp.float32), jnp.zeros((1, H), jnp.float32),  # ffn LN
        )
        layers.append(lp)
    params["layers"] = layers
    return params


# ----------------------------- full model forward ----------------------------

def electra_forward(params, input_ids, token_type_ids=None, attention_mask=None,
                    cfg=CFG):
    B, S = input_ids.shape
    E = cfg["embedding_size"]
    H = cfg["hidden_size"]
    nH = cfg["num_heads"]
    hd = H // nH
    G = B * nH
    T = B * S
    L = len(params["layers"])

    if attention_mask is None:
        attention_mask = jnp.ones_like(input_ids)
    if token_type_ids is None:
        token_type_ids = jnp.zeros_like(input_ids)

    # extended attention mask: (1 - mask) * -10000, pre-broadcast to (G, 1, S)
    ext = (1.0 - attention_mask.astype(jnp.float32)) * -10000.0          # (B, S)
    mask_g = jnp.broadcast_to(ext[:, None, :], (B, nH, S)).reshape(G, 1, S)

    # embedding gathers (dynamic row lookups stay in plain JAX glue)
    we_g = jnp.take(params["word_emb"], input_ids, axis=0).reshape(T, E)
    te_g = jnp.take(params["type_emb"], token_type_ids, axis=0).reshape(T, E)
    pe_g = jnp.broadcast_to(params["pos_emb"][:S][None], (B, S, E)).reshape(T, E)

    # per-layer weights: split per head, broadcast over batch, stack over layers
    def bcast_g(x):  # (nH, ...) -> (G, ...)
        return jnp.broadcast_to(x[None], (B,) + x.shape).reshape((G,) + x.shape[1:])

    names = ["wq", "bq", "wk", "bk", "wv", "bv", "wo", "bo",
             "g1", "be1", "w1", "b1", "w2", "b2", "g2", "be2"]
    stk = {n: [] for n in names}
    for lp in params["layers"]:
        (wq, bq, wk, bk, wv, bv, wo, bo,
         g1, be1, w1, b1, w2, b2, g2, be2) = lp
        stk["wq"].append(bcast_g(wq.reshape(H, nH, hd).transpose(1, 0, 2)))  # (G,H,hd)
        stk["bq"].append(bcast_g(bq.reshape(nH, 1, hd)))                     # (G,1,hd)
        stk["wk"].append(bcast_g(wk.reshape(H, nH, hd).transpose(1, 0, 2)))
        stk["bk"].append(bcast_g(bk.reshape(nH, 1, hd)))
        stk["wv"].append(bcast_g(wv.reshape(H, nH, hd).transpose(1, 0, 2)))
        stk["bv"].append(bcast_g(bv.reshape(nH, 1, hd)))
        stk["wo"].append(bcast_g(wo.reshape(nH, hd, H)))                     # (G,hd,H)
        stk["bo"].append(bo)
        stk["g1"].append(g1); stk["be1"].append(be1)
        stk["w1"].append(w1); stk["b1"].append(b1)
        stk["w2"].append(w2); stk["b2"].append(b2)
        stk["g2"].append(g2); stk["be2"].append(be2)
    stacked = {n: jnp.stack(v) for n, v in stk.items()}

    inputs = [we_g, pe_g, te_g,
              params["emb_ln_g"], params["emb_ln_b"],
              params["proj_w"], params["proj_b"],
              mask_g,
              stacked["wq"], stacked["bq"], stacked["wk"], stacked["bk"],
              stacked["wv"], stacked["bv"], stacked["wo"], stacked["bo"],
              stacked["g1"], stacked["be1"], stacked["w1"], stacked["b1"],
              stacked["w2"], stacked["b2"], stacked["g2"], stacked["be2"]]

    out2d = run_electra(inputs, nH, hd, L, B, S, H)                      # (T, H)
    return out2d.reshape(B, S, H)


# ----------------------------- main ------------------------------------------

if __name__ == "__main__":
    key = jax.random.PRNGKey(0)
    pkey, ikey, tkey = jax.random.split(key, 3)

    B, S = 2, 8
    params = init_params(pkey, CFG)

    input_ids = jax.random.randint(ikey, (B, S), 1, CFG["vocab_size"], dtype=jnp.int32)
    token_type_ids = jax.random.randint(tkey, (B, S), 0, CFG["type_vocab_size"],
                                        dtype=jnp.int32)
    attention_mask = jnp.ones((B, S), dtype=jnp.int32).at[1, -2:].set(0)

    out = electra_forward(params, input_ids, token_type_ids, attention_mask)
    out = jax.block_until_ready(out)

    assert out.shape == (B, S, CFG["hidden_size"])
    assert bool(jnp.all(jnp.isfinite(out)))
    print("KERNEL_OK")
</pallas_src>

<mosaic_0001>
module attributes {stable_mosaic.version = 11 : i64} {
  func.func @electra_kernel(%arg0: i32, %arg1: memref<16x16xf32, #tpu.memory_space<vmem>>, %arg2: memref<16x16xf32, #tpu.memory_space<vmem>>, %arg3: memref<16x16xf32, #tpu.memory_space<vmem>>, %arg4: memref<1x16xf32, #tpu.memory_space<vmem>>, %arg5: memref<1x16xf32, #tpu.memory_space<vmem>>, %arg6: memref<16x32xf32, #tpu.memory_space<vmem>>, %arg7: memref<1x32xf32, #tpu.memory_space<vmem>>, %arg8: memref<8x1x8xf32, #tpu.memory_space<vmem>>, %arg9: memref<2x8x32x8xf32, #tpu.memory_space<vmem>>, %arg10: memref<2x8x1x8xf32, #tpu.memory_space<vmem>>, %arg11: memref<2x8x32x8xf32, #tpu.memory_space<vmem>>, %arg12: memref<2x8x1x8xf32, #tpu.memory_space<vmem>>, %arg13: memref<2x8x32x8xf32, #tpu.memory_space<vmem>>, %arg14: memref<2x8x1x8xf32, #tpu.memory_space<vmem>>, %arg15: memref<2x8x8x32xf32, #tpu.memory_space<vmem>>, %arg16: memref<2x1x32xf32, #tpu.memory_space<vmem>>, %arg17: memref<2x1x32xf32, #tpu.memory_space<vmem>>, %arg18: memref<2x1x32xf32, #tpu.memory_space<vmem>>, %arg19: memref<2x32x128xf32, #tpu.memory_space<vmem>>, %arg20: memref<2x1x128xf32, #tpu.memory_space<vmem>>, %arg21: memref<2x128x32xf32, #tpu.memory_space<vmem>>, %arg22: memref<2x1x32xf32, #tpu.memory_space<vmem>>, %arg23: memref<2x1x32xf32, #tpu.memory_space<vmem>>, %arg24: memref<2x1x32xf32, #tpu.memory_space<vmem>>, %arg25: memref<16x32xf32, #tpu.memory_space<vmem>>) attributes {dimension_semantics = [#tpu.dimension_semantics<arbitrary>], iteration_bounds = array<i64: 1>, scalar_prefetch = 0 : i64, scratch_operands = 0 : i64, tpu.core_type = #tpu.core_type<tc>, window_params = [{pipeline_mode = #tpu.pipeline_mode<synchronous>, transform_indices = @transform_0, window_bounds = array<i64: 16, 16>}, {pipeline_mode = #tpu.pipeline_mode<synchronous>, transform_indices = @transform_1, window_bounds = array<i64: 16, 16>}, {pipeline_mode = #tpu.pipeline_mode<synchronous>, transform_indices = @transform_2, window_bounds = array<i64: 16, 16>}, {pipeline_mode = #tpu.pipeline_mode<synchronous>, transform_indices = @transform_3, window_bounds = array<i64: 1, 16>}, {pipeline_mode = #tpu.pipeline_mode<synchronous>, transform_indices = @transform_4, window_bounds = array<i64: 1, 16>}, {pipeline_mode = #tpu.pipeline_mode<synchronous>, transform_indices = @transform_5, window_bounds = array<i64: 16, 32>}, {pipeline_mode = #tpu.pipeline_mode<synchronous>, transform_indices = @transform_6, window_bounds = array<i64: 1, 32>}, {pipeline_mode = #tpu.pipeline_mode<synchronous>, transform_indices = @transform_7, window_bounds = array<i64: 8, 1, 8>}, {pipeline_mode = #tpu.pipeline_mode<synchronous>, transform_indices = @transform_8, window_bounds = array<i64: 2, 8, 32, 8>}, {pipeline_mode = #tpu.pipeline_mode<synchronous>, transform_indices = @transform_9, window_bounds = array<i64: 2, 8, 1, 8>}, {pipeline_mode = #tpu.pipeline_mode<synchronous>, transform_indices = @transform_10, window_bounds = array<i64: 2, 8, 32, 8>}, {pipeline_mode = #tpu.pipeline_mode<synchronous>, transform_indices = @transform_11, window_bounds = array<i64: 2, 8, 1, 8>}, {pipeline_mode = #tpu.pipeline_mode<synchronous>, transform_indices = @transform_12, window_bounds = array<i64: 2, 8, 32, 8>}, {pipeline_mode = #tpu.pipeline_mode<synchronous>, transform_indices = @transform_13, window_bounds = array<i64: 2, 8, 1, 8>}, {pipeline_mode = #tpu.pipeline_mode<synchronous>, transform_indices = @transform_14, window_bounds = array<i64: 2, 8, 8, 32>}, {pipeline_mode = #tpu.pipeline_mode<synchronous>, transform_indices = @transform_15, window_bounds = array<i64: 2, 1, 32>}, {pipeline_mode = #tpu.pipeline_mode<synchronous>, transform_indices = @transform_16, window_bounds = array<i64: 2, 1, 32>}, {pipeline_mode = #tpu.pipeline_mode<synchronous>, transform_indices = @transform_17, window_bounds = array<i64: 2, 1, 32>}, {pipeline_mode = #tpu.pipeline_mode<synchronous>, transform_indices = @transform_18, window_bounds = array<i64: 2, 32, 128>}, {pipeline_mode = #tpu.pipeline_mode<synchronous>, transform_indices = @transform_19, window_bounds = array<i64: 2, 1, 128>}, {pipeline_mode = #tpu.pipeline_mode<synchronous>, transform_indices = @transform_20, window_bounds = array<i64: 2, 128, 32>}, {pipeline_mode = #tpu.pipeline_mode<synchronous>, transform_indices = @transform_21, window_bounds = array<i64: 2, 1, 32>}, {pipeline_mode = #tpu.pipeline_mode<synchronous>, transform_indices = @transform_22, window_bounds = array<i64: 2, 1, 32>}, {pipeline_mode = #tpu.pipeline_mode<synchronous>, transform_indices = @transform_23, window_bounds = array<i64: 2, 1, 32>}, {pipeline_mode = #tpu.pipeline_mode<synchronous>, transform_indices = @transform_24, window_bounds = array<i64: 16, 32>}]} {
    %c0 = arith.constant 0 : index
    %c0_0 = arith.constant 0 : index
    %0 = vector.load %arg1[%c0, %c0_0] : memref<16x16xf32, #tpu.memory_space<vmem>>, vector<16x16xf32>
    %c0_1 = arith.constant 0 : index
    %c0_2 = arith.constant 0 : index
    %1 = vector.load %arg2[%c0_1, %c0_2] : memref<16x16xf32, #tpu.memory_space<vmem>>, vector<16x16xf32>
    %2 = arith.addf %0, %1 : vector<16x16xf32>
    %c0_3 = arith.constant 0 : index
    %c0_4 = arith.constant 0 : index
    %3 = vector.load %arg3[%c0_3, %c0_4] : memref<16x16xf32, #tpu.memory_space<vmem>>, vector<16x16xf32>
    %4 = arith.addf %2, %3 : vector<16x16xf32>
    %c0_5 = arith.constant 0 : index
    %c0_6 = arith.constant 0 : index
    %5 = vector.load %arg4[%c0_5, %c0_6] : memref<1x16xf32, #tpu.memory_space<vmem>>, vector<1x16xf32>
    %c0_7 = arith.constant 0 : index
    %c0_8 = arith.constant 0 : index
    %6 = vector.load %arg5[%c0_7, %c0_8] : memref<1x16xf32, #tpu.memory_space<vmem>>, vector<1x16xf32>
    %cst = arith.constant dense<0.000000e+00> : vector<16xf32>
    %7 = vector.multi_reduction <add>, %4, %cst [1] : vector<16x16xf32> to vector<16xf32>
    %8 = vector.shape_cast %7 : vector<16xf32> to vector<16x1xf32>
    %cst_9 = arith.constant 1.600000e+01 : f32
    %9 = vector.broadcast %cst_9 : f32 to vector<16x1xf32>
    %10 = arith.divf %8, %9 : vector<16x1xf32>
    %11 = vector.broadcast %10 : vector<16x1xf32> to vector<16x16xf32>
    %12 = arith.subf %4, %11 : vector<16x16xf32>
    %13 = arith.mulf %12, %12 : vector<16x16xf32>
    %cst_10 = arith.constant dense<0.000000e+00> : vector<16xf32>
    %14 = vector.multi_reduction <add>, %13, %cst_10 [1] : vector<16x16xf32> to vector<16xf32>
    %15 = vector.shape_cast %14 : vector<16xf32> to vector<16x1xf32>
    %cst_11 = arith.constant 1.600000e+01 : f32
    %16 = vector.broadcast %cst_11 : f32 to vector<16x1xf32>
    %17 = arith.divf %15, %16 : vector<16x1xf32>
    %cst_12 = arith.constant 9.99999996E-13 : f32
    %18 = vector.broadcast %cst_12 : f32 to vector<16x1xf32>
    %19 = arith.addf %17, %18 : vector<16x1xf32>
    %20 = math.rsqrt %19 : vector<16x1xf32>
    %21 = vector.broadcast %20 : vector<16x1xf32> to vector<16x16xf32>
    %22 = arith.mulf %12, %21 : vector<16x16xf32>
    %23 = vector.broadcast %5 : vector<1x16xf32> to vector<16x16xf32>
    %24 = arith.mulf %23, %22 : vector<16x16xf32>
    %25 = vector.broadcast %6 : vector<1x16xf32> to vector<16x16xf32>
    %26 = arith.addf %24, %25 : vector<16x16xf32>
    %c0_13 = arith.constant 0 : index
    %c0_14 = arith.constant 0 : index
    %27 = vector.load %arg6[%c0_13, %c0_14] : memref<16x32xf32, #tpu.memory_space<vmem>>, vector<16x32xf32>
    %cst_15 = arith.constant dense<0.000000e+00> : vector<16x32xf32>
    %28 = tpu.matmul %26, %27, %cst_15 {dimension_numbers = #tpu.dot_dimension_numbers<[1], [0], [0], [1], [0, 0, 1, 1], [], []>} : vector<16x16xf32>, vector<16x32xf32>, vector<16x32xf32> -> vector<16x32xf32>
    %c0_16 = arith.constant 0 : index
    %c0_17 = arith.constant 0 : index
    %29 = vector.load %arg7[%c0_16, %c0_17] : memref<1x32xf32, #tpu.memory_space<vmem>>, vector<1x32xf32>
    %30 = vector.broadcast %29 : vector<1x32xf32> to vector<16x32xf32>
    %31 = arith.addf %28, %30 : vector<16x32xf32>
    %c0_18 = arith.constant 0 : index
    %c0_19 = arith.constant 0 : index
    %c0_20 = arith.constant 0 : index
    %32 = vector.load %arg8[%c0_18, %c0_19, %c0_20] : memref<8x1x8xf32, #tpu.memory_space<vmem>>, vector<8x1x8xf32>
    %33 = vector.shape_cast %31 : vector<16x32xf32> to vector<2x1x8x32xf32>
    %34 = vector.shape_cast %33 : vector<2x1x8x32xf32> to vector<2x1x8x32xf32>
    %35 = vector.broadcast %34 : vector<2x1x8x32xf32> to vector<2x4x8x32xf32>
    %36 = vector.shape_cast %35 : vector<2x4x8x32xf32> to vector<8x8x32xf32>
    %c0_21 = arith.constant 0 : index
    %c0_22 = arith.constant 0 : index
    %c0_23 = arith.constant 0 : index
    %c0_24 = arith.constant 0 : index
    %37 = vector.load %arg9[%c0_21, %c0_22, %c0_23, %c0_24] : memref<2x8x32x8xf32, #tpu.memory_space<vmem>>, vector<1x8x32x8xf32>
    %38 = vector.shape_cast %37 : vector<1x8x32x8xf32> to vector<8x32x8xf32>
    "tpu.trace_start"() <{level = 10 : i32, message = "gsh,ghd->gsd"}> : () -> ()
    %cst_25 = arith.constant dense<0.000000e+00> : vector<8x8x8xf32>
    %39 = tpu.matmul %36, %38, %cst_25 {dimension_numbers = #tpu.dot_dimension_numbers<[2], [1], [1], [2], [0, 0, 0, 1, 1, 2], [0], [0]>} : vector<8x8x32xf32>, vector<8x32x8xf32>, vector<8x8x8xf32> -> vector<8x8x8xf32>
    "tpu.trace_stop"() : () -> ()
    %c0_26 = arith.constant 0 : index
    %c0_27 = arith.constant 0 : index
    %c0_28 = arith.constant 0 : index
    %c0_29 = arith.constant 0 : index
    %40 = vector.load %arg10[%c0_26, %c0_27, %c0_28, %c0_29] : memref<2x8x1x8xf32, #tpu.memory_space<vmem>>, vector<1x8x1x8xf32>
    %41 = vector.shape_cast %40 : vector<1x8x1x8xf32> to vector<8x1x8xf32>
    %42 = vector.broadcast %41 : vector<8x1x8xf32> to vector<8x8x8xf32>
    %43 = arith.addf %39, %42 : vector<8x8x8xf32>
    %c0_30 = arith.constant 0 : index
    %c0_31 = arith.constant 0 : index
    %c0_32 = arith.constant 0 : index
    %c0_33 = arith.constant 0 : index
    %44 = vector.load %arg11[%c0_30, %c0_31, %c0_32, %c0_33] : memref<2x8x32x8xf32, #tpu.memory_space<vmem>>, vector<1x8x32x8xf32>
    %45 = vector.shape_cast %44 : vector<1x8x32x8xf32> to vector<8x32x8xf32>
    "tpu.trace_start"() <{level = 10 : i32, message = "gsh,ghd->gsd"}> : () -> ()
    %cst_34 = arith.constant dense<0.000000e+00> : vector<8x8x8xf32>
    %46 = tpu.matmul %36, %45, %cst_34 {dimension_numbers = #tpu.dot_dimension_numbers<[2], [1], [1], [2], [0, 0, 0, 1, 1, 2], [0], [0]>} : vector<8x8x32xf32>, vector<8x32x8xf32>, vector<8x8x8xf32> -> vector<8x8x8xf32>
    "tpu.trace_stop"() : () -> ()
    %c0_35 = arith.constant 0 : index
    %c0_36 = arith.constant 0 : index
    %c0_37 = arith.constant 0 : index
    %c0_38 = arith.constant 0 : index
    %47 = vector.load %arg12[%c0_35, %c0_36, %c0_37, %c0_38] : memref<2x8x1x8xf32, #tpu.memory_space<vmem>>, vector<1x8x1x8xf32>
    %48 = vector.shape_cast %47 : vector<1x8x1x8xf32> to vector<8x1x8xf32>
    %49 = vector.broadcast %48 : vector<8x1x8xf32> to vector<8x8x8xf32>
    %50 = arith.addf %46, %49 : vector<8x8x8xf32>
    %c0_39 = arith.constant 0 : index
    %c0_40 = arith.constant 0 : index
    %c0_41 = arith.constant 0 : index
    %c0_42 = arith.constant 0 : index
    %51 = vector.load %arg13[%c0_39, %c0_40, %c0_41, %c0_42] : memref<2x8x32x8xf32, #tpu.memory_space<vmem>>, vector<1x8x32x8xf32>
    %52 = vector.shape_cast %51 : vector<1x8x32x8xf32> to vector<8x32x8xf32>
    "tpu.trace_start"() <{level = 10 : i32, message = "gsh,ghd->gsd"}> : () -> ()
    %cst_43 = arith.constant dense<0.000000e+00> : vector<8x8x8xf32>
    %53 = tpu.matmul %36, %52, %cst_43 {dimension_numbers = #tpu.dot_dimension_numbers<[2], [1], [1], [2], [0, 0, 0, 1, 1, 2], [0], [0]>} : vector<8x8x32xf32>, vector<8x32x8xf32>, vector<8x8x8xf32> -> vector<8x8x8xf32>
    "tpu.trace_stop"() : () -> ()
    %c0_44 = arith.constant 0 : index
    %c0_45 = arith.constant 0 : index
    %c0_46 = arith.constant 0 : index
    %c0_47 = arith.constant 0 : index
    %54 = vector.load %arg14[%c0_44, %c0_45, %c0_46, %c0_47] : memref<2x8x1x8xf32, #tpu.memory_space<vmem>>, vector<1x8x1x8xf32>
    %55 = vector.shape_cast %54 : vector<1x8x1x8xf32> to vector<8x1x8xf32>
    %56 = vector.broadcast %55 : vector<8x1x8xf32> to vector<8x8x8xf32>
    %57 = arith.addf %53, %56 : vector<8x8x8xf32>
    "tpu.trace_start"() <{level = 10 : i32, message = "gqd,gkd->gqk"}> : () -> ()
    %cst_48 = arith.constant dense<0.000000e+00> : vector<8x8x8xf32>
    %58 = tpu.matmul %43, %50, %cst_48 {dimension_numbers = #tpu.dot_dimension_numbers<[2], [2], [1], [1], [0, 0, 0, 1, 1, 1], [0], [0]>} : vector<8x8x8xf32>, vector<8x8x8xf32>, vector<8x8x8xf32> -> vector<8x8x8xf32>
    "tpu.trace_stop"() : () -> ()
    %cst_49 = arith.constant 0.353553385 : f32
    %59 = vector.broadcast %cst_49 : f32 to vector<8x8x8xf32>
    %60 = arith.mulf %58, %59 : vector<8x8x8xf32>
    %61 = vector.broadcast %32 : vector<8x1x8xf32> to vector<8x8x8xf32>
    %62 = arith.addf %60, %61 : vector<8x8x8xf32>
    %cst_50 = arith.constant dense<0xFF800000> : vector<8x8xf32>
    %63 = vector.multi_reduction <maximumf>, %62, %cst_50 [2] : vector<8x8x8xf32> to vector<8x8xf32>
    %64 = vector.shape_cast %63 : vector<8x8xf32> to vector<8x8x1xf32>
    %65 = vector.broadcast %64 : vector<8x8x1xf32> to vector<8x8x8xf32>
    %66 = arith.subf %62, %65 : vector<8x8x8xf32>
    %67 = math.exp %66 : vector<8x8x8xf32>
    %cst_51 = arith.constant dense<0.000000e+00> : vector<8x8xf32>
    %68 = vector.multi_reduction <add>, %67, %cst_51 [2] : vector<8x8x8xf32> to vector<8x8xf32>
    %69 = vector.shape_cast %68 : vector<8x8xf32> to vector<8x8x1xf32>
    %70 = tpu.reciprocal %69 {approx = true} : vector<8x8x1xf32> -> vector<8x8x1xf32>
    %71 = vector.broadcast %70 : vector<8x8x1xf32> to vector<8x8x8xf32>
    %72 = arith.mulf %67, %71 : vector<8x8x8xf32>
    "tpu.trace_start"() <{level = 10 : i32, message = "gqk,gkd->gqd"}> : () -> ()
    %cst_52 = arith.constant dense<0.000000e+00> : vector<8x8x8xf32>
    %73 = tpu.matmul %72, %57, %cst_52 {dimension_numbers = #tpu.dot_dimension_numbers<[2], [1], [1], [2], [0, 0, 0, 1, 1, 2], [0], [0]>} : vector<8x8x8xf32>, vector<8x8x8xf32>, vector<8x8x8xf32> -> vector<8x8x8xf32>
    "tpu.trace_stop"() : () -> ()
    %c0_53 = arith.constant 0 : index
    %c0_54 = arith.constant 0 : index
    %c0_55 = arith.constant 0 : index
    %c0_56 = arith.constant 0 : index
    %74 = vector.load %arg15[%c0_53, %c0_54, %c0_55, %c0_56] : memref<2x8x8x32xf32, #tpu.memory_space<vmem>>, vector<1x8x8x32xf32>
    %75 = vector.shape_cast %74 : vector<1x8x8x32xf32> to vector<8x8x32xf32>
    "tpu.trace_start"() <{level = 10 : i32, message = "gsd,gdh->gsh"}> : () -> ()
    %cst_57 = arith.constant dense<0.000000e+00> : vector<8x8x32xf32>
    %76 = tpu.matmul %73, %75, %cst_57 {dimension_numbers = #tpu.dot_dimension_numbers<[2], [1], [1], [2], [0, 0, 0, 1, 1, 2], [0], [0]>} : vector<8x8x8xf32>, vector<8x8x32xf32>, vector<8x8x32xf32> -> vector<8x8x32xf32>
    "tpu.trace_stop"() : () -> ()
    %77 = vector.shape_cast %76 : vector<8x8x32xf32> to vector<2x4x8x32xf32>
    %cst_58 = arith.constant dense<0.000000e+00> : vector<2x8x32xf32>
    %78 = vector.multi_reduction <add>, %77, %cst_58 [1] : vector<2x4x8x32xf32> to vector<2x8x32xf32>
    %79 = vector.shape_cast %78 : vector<2x8x32xf32> to vector<16x32xf32>
    %c0_59 = arith.constant 0 : index
    %c0_60 = arith.constant 0 : index
    %c0_61 = arith.constant 0 : index
    %80 = vector.load %arg16[%c0_59, %c0_60, %c0_61] : memref<2x1x32xf32, #tpu.memory_space<vmem>>, vector<1x1x32xf32>
    %81 = vector.shape_cast %80 : vector<1x1x32xf32> to vector<1x32xf32>
    %82 = vector.broadcast %81 : vector<1x32xf32> to vector<16x32xf32>
    %83 = arith.addf %79, %82 : vector<16x32xf32>
    %84 = arith.addf %83, %31 : vector<16x32xf32>
    %c0_62 = arith.constant 0 : index
    %c0_63 = arith.constant 0 : index
    %c0_64 = arith.constant 0 : index
    %85 = vector.load %arg17[%c0_62, %c0_63, %c0_64] : memref<2x1x32xf32, #tpu.memory_space<vmem>>, vector<1x1x32xf32>
    %86 = vector.shape_cast %85 : vector<1x1x32xf32> to vector<1x32xf32>
    %c0_65 = arith.constant 0 : index
    %c0_66 = arith.constant 0 : index
    %c0_67 = arith.constant 0 : index
    %87 = vector.load %arg18[%c0_65, %c0_66, %c0_67] : memref<2x1x32xf32, #tpu.memory_space<vmem>>, vector<1x1x32xf32>
    %88 = vector.shape_cast %87 : vector<1x1x32xf32> to vector<1x32xf32>
    %cst_68 = arith.constant dense<0.000000e+00> : vector<16xf32>
    %89 = vector.multi_reduction <add>, %84, %cst_68 [1] : vector<16x32xf32> to vector<16xf32>
    %90 = vector.shape_cast %89 : vector<16xf32> to vector<16x1xf32>
    %cst_69 = arith.constant 3.200000e+01 : f32
    %91 = vector.broadcast %cst_69 : f32 to vector<16x1xf32>
    %92 = arith.divf %90, %91 : vector<16x1xf32>
    %93 = vector.broadcast %92 : vector<16x1xf32> to vector<16x32xf32>
    %94 = arith.subf %84, %93 : vector<16x32xf32>
    %95 = arith.mulf %94, %94 : vector<16x32xf32>
    %cst_70 = arith.constant dense<0.000000e+00> : vector<16xf32>
    %96 = vector.multi_reduction <add>, %95, %cst_70 [1] : vector<16x32xf32> to vector<16xf32>
    %97 = vector.shape_cast %96 : vector<16xf32> to vector<16x1xf32>
    %cst_71 = arith.constant 3.200000e+01 : f32
    %98 = vector.broadcast %cst_71 : f32 to vector<16x1xf32>
    %99 = arith.divf %97, %98 : vector<16x1xf32>
    %cst_72 = arith.constant 9.99999996E-13 : f32
    %100 = vector.broadcast %cst_72 : f32 to vector<16x1xf32>
    %101 = arith.addf %99, %100 : vector<16x1xf32>
    %102 = math.rsqrt %101 : vector<16x1xf32>
    %103 = vector.broadcast %102 : vector<16x1xf32> to vector<16x32xf32>
    %104 = arith.mulf %94, %103 : vector<16x32xf32>
    %105 = vector.broadcast %86 : vector<1x32xf32> to vector<16x32xf32>
    %106 = arith.mulf %105, %104 : vector<16x32xf32>
    %107 = vector.broadcast %88 : vector<1x32xf32> to vector<16x32xf32>
    %108 = arith.addf %106, %107 : vector<16x32xf32>
    %c0_73 = arith.constant 0 : index
    %c0_74 = arith.constant 0 : index
    %c0_75 = arith.constant 0 : index
    %109 = vector.load %arg19[%c0_73, %c0_74, %c0_75] : memref<2x32x128xf32, #tpu.memory_space<vmem>>, vector<1x32x128xf32>
    %110 = vector.shape_cast %109 : vector<1x32x128xf32> to vector<32x128xf32>
    %cst_76 = arith.constant dense<0.000000e+00> : vector<16x128xf32>
    %111 = tpu.matmul %108, %110, %cst_76 {dimension_numbers = #tpu.dot_dimension_numbers<[1], [0], [0], [1], [0, 0, 1, 1], [], []>} : vector<16x32xf32>, vector<32x128xf32>, vector<16x128xf32> -> vector<16x128xf32>
    %c0_77 = arith.constant 0 : index
    %c0_78 = arith.constant 0 : index
    %c0_79 = arith.constant 0 : index
    %112 = vector.load %arg20[%c0_77, %c0_78, %c0_79] : memref<2x1x128xf32, #tpu.memory_space<vmem>>, vector<1x1x128xf32>
    %113 = vector.shape_cast %112 : vector<1x1x128xf32> to vector<1x128xf32>
    %114 = vector.broadcast %113 : vector<1x128xf32> to vector<16x128xf32>
    %115 = arith.addf %111, %114 : vector<16x128xf32>
    %cst_80 = arith.constant 5.000000e-01 : f32
    %116 = vector.broadcast %cst_80 : f32 to vector<16x128xf32>
    %117 = arith.mulf %115, %116 : vector<16x128xf32>
    %cst_81 = arith.constant 1.414210e+00 : f32
    %118 = vector.broadcast %cst_81 : f32 to vector<16x128xf32>
    %119 = arith.divf %115, %118 : vector<16x128xf32>
    %120 = math.erf %119 : vector<16x128xf32>
    %cst_82 = arith.constant 1.000000e+00 : f32
    %121 = vector.broadcast %cst_82 : f32 to vector<16x128xf32>
    %122 = arith.addf %121, %120 : vector<16x128xf32>
    %123 = arith.mulf %117, %122 : vector<16x128xf32>
    %c0_83 = arith.constant 0 : index
    %c0_84 = arith.constant 0 : index
    %c0_85 = arith.constant 0 : index
    %124 = vector.load %arg21[%c0_83, %c0_84, %c0_85] : memref<2x128x32xf32, #tpu.memory_space<vmem>>, vector<1x128x32xf32>
    %125 = vector.shape_cast %124 : vector<1x128x32xf32> to vector<128x32xf32>
    %cst_86 = arith.constant dense<0.000000e+00> : vector<16x32xf32>
    %126 = tpu.matmul %123, %125, %cst_86 {dimension_numbers = #tpu.dot_dimension_numbers<[1], [0], [0], [1], [0, 0, 1, 1], [], []>} : vector<16x128xf32>, vector<128x32xf32>, vector<16x32xf32> -> vector<16x32xf32>
    %c0_87 = arith.constant 0 : index
    %c0_88 = arith.constant 0 : index
    %c0_89 = arith.constant 0 : index
    %127 = vector.load %arg22[%c0_87, %c0_88, %c0_89] : memref<2x1x32xf32, #tpu.memory_space<vmem>>, vector<1x1x32xf32>
    %128 = vector.shape_cast %127 : vector<1x1x32xf32> to vector<1x32xf32>
    %129 = vector.broadcast %128 : vector<1x32xf32> to vector<16x32xf32>
    %130 = arith.addf %126, %129 : vector<16x32xf32>
    %131 = arith.addf %130, %108 : vector<16x32xf32>
    %c0_90 = arith.constant 0 : index
    %c0_91 = arith.constant 0 : index
    %c0_92 = arith.constant 0 : index
    %132 = vector.load %arg23[%c0_90, %c0_91, %c0_92] : memref<2x1x32xf32, #tpu.memory_space<vmem>>, vector<1x1x32xf32>
    %133 = vector.shape_cast %132 : vector<1x1x32xf32> to vector<1x32xf32>
    %c0_93 = arith.constant 0 : index
    %c0_94 = arith.constant 0 : index
    %c0_95 = arith.constant 0 : index
    %134 = vector.load %arg24[%c0_93, %c0_94, %c0_95] : memref<2x1x32xf32, #tpu.memory_space<vmem>>, vector<1x1x32xf32>
    %135 = vector.shape_cast %134 : vector<1x1x32xf32> to vector<1x32xf32>
    %cst_96 = arith.constant dense<0.000000e+00> : vector<16xf32>
    %136 = vector.multi_reduction <add>, %131, %cst_96 [1] : vector<16x32xf32> to vector<16xf32>
    %137 = vector.shape_cast %136 : vector<16xf32> to vector<16x1xf32>
    %cst_97 = arith.constant 3.200000e+01 : f32
    %138 = vector.broadcast %cst_97 : f32 to vector<16x1xf32>
    %139 = arith.divf %137, %138 : vector<16x1xf32>
    %140 = vector.broadcast %139 : vector<16x1xf32> to vector<16x32xf32>
    %141 = arith.subf %131, %140 : vector<16x32xf32>
    %142 = arith.mulf %141, %141 : vector<16x32xf32>
    %cst_98 = arith.constant dense<0.000000e+00> : vector<16xf32>
    %143 = vector.multi_reduction <add>, %142, %cst_98 [1] : vector<16x32xf32> to vector<16xf32>
    %144 = vector.shape_cast %143 : vector<16xf32> to vector<16x1xf32>
    %cst_99 = arith.constant 3.200000e+01 : f32
    %145 = vector.broadcast %cst_99 : f32 to vector<16x1xf32>
    %146 = arith.divf %144, %145 : vector<16x1xf32>
    %cst_100 = arith.constant 9.99999996E-13 : f32
    %147 = vector.broadcast %cst_100 : f32 to vector<16x1xf32>
    %148 = arith.addf %146, %147 : vector<16x1xf32>
    %149 = math.rsqrt %148 : vector<16x1xf32>
    %150 = vector.broadcast %149 : vector<16x1xf32> to vector<16x32xf32>
    %151 = arith.mulf %141, %150 : vector<16x32xf32>
    %152 = vector.broadcast %133 : vector<1x32xf32> to vector<16x32xf32>
    %153 = arith.mulf %152, %151 : vector<16x32xf32>
    %154 = vector.broadcast %135 : vector<1x32xf32> to vector<16x32xf32>
    %155 = arith.addf %153, %154 : vector<16x32xf32>
    %156 = vector.shape_cast %155 : vector<16x32xf32> to vector<2x1x8x32xf32>
    %157 = vector.shape_cast %156 : vector<2x1x8x32xf32> to vector<2x1x8x32xf32>
    %158 = vector.broadcast %157 : vector<2x1x8x32xf32> to vector<2x4x8x32xf32>
    %159 = vector.shape_cast %158 : vector<2x4x8x32xf32> to vector<8x8x32xf32>
    %c1 = arith.constant 1 : index
    %c0_101 = arith.constant 0 : index
    %c0_102 = arith.constant 0 : index
    %c0_103 = arith.constant 0 : index
    %160 = vector.load %arg9[%c1, %c0_101, %c0_102, %c0_103] : memref<2x8x32x8xf32, #tpu.memory_space<vmem>>, vector<1x8x32x8xf32>
    %161 = vector.shape_cast %160 : vector<1x8x32x8xf32> to vector<8x32x8xf32>
    "tpu.trace_start"() <{level = 10 : i32, message = "gsh,ghd->gsd"}> : () -> ()
    %cst_104 = arith.constant dense<0.000000e+00> : vector<8x8x8xf32>
    %162 = tpu.matmul %159, %161, %cst_104 {dimension_numbers = #tpu.dot_dimension_numbers<[2], [1], [1], [2], [0, 0, 0, 1, 1, 2], [0], [0]>} : vector<8x8x32xf32>, vector<8x32x8xf32>, vector<8x8x8xf32> -> vector<8x8x8xf32>
    "tpu.trace_stop"() : () -> ()
    %c1_105 = arith.constant 1 : index
    %c0_106 = arith.constant 0 : index
    %c0_107 = arith.constant 0 : index
    %c0_108 = arith.constant 0 : index
    %163 = vector.load %arg10[%c1_105, %c0_106, %c0_107, %c0_108] : memref<2x8x1x8xf32, #tpu.memory_space<vmem>>, vector<1x8x1x8xf32>
    %164 = vector.shape_cast %163 : vector<1x8x1x8xf32> to vector<8x1x8xf32>
    %165 = vector.broadcast %164 : vector<8x1x8xf32> to vector<8x8x8xf32>
    %166 = arith.addf %162, %165 : vector<8x8x8xf32>
    %c1_109 = arith.constant 1 : index
    %c0_110 = arith.constant 0 : index
    %c0_111 = arith.constant 0 : index
    %c0_112 = arith.constant 0 : index
    %167 = vector.load %arg11[%c1_109, %c0_110, %c0_111, %c0_112] : memref<2x8x32x8xf32, #tpu.memory_space<vmem>>, vector<1x8x32x8xf32>
    %168 = vector.shape_cast %167 : vector<1x8x32x8xf32> to vector<8x32x8xf32>
    "tpu.trace_start"() <{level = 10 : i32, message = "gsh,ghd->gsd"}> : () -> ()
    %cst_113 = arith.constant dense<0.000000e+00> : vector<8x8x8xf32>
    %169 = tpu.matmul %159, %168, %cst_113 {dimension_numbers = #tpu.dot_dimension_numbers<[2], [1], [1], [2], [0, 0, 0, 1, 1, 2], [0], [0]>} : vector<8x8x32xf32>, vector<8x32x8xf32>, vector<8x8x8xf32> -> vector<8x8x8xf32>
    "tpu.trace_stop"() : () -> ()
    %c1_114 = arith.constant 1 : index
    %c0_115 = arith.constant 0 : index
    %c0_116 = arith.constant 0 : index
    %c0_117 = arith.constant 0 : index
    %170 = vector.load %arg12[%c1_114, %c0_115, %c0_116, %c0_117] : memref<2x8x1x8xf32, #tpu.memory_space<vmem>>, vector<1x8x1x8xf32>
    %171 = vector.shape_cast %170 : vector<1x8x1x8xf32> to vector<8x1x8xf32>
    %172 = vector.broadcast %171 : vector<8x1x8xf32> to vector<8x8x8xf32>
    %173 = arith.addf %169, %172 : vector<8x8x8xf32>
    %c1_118 = arith.constant 1 : index
    %c0_119 = arith.constant 0 : index
    %c0_120 = arith.constant 0 : index
    %c0_121 = arith.constant 0 : index
    %174 = vector.load %arg13[%c1_118, %c0_119, %c0_120, %c0_121] : memref<2x8x32x8xf32, #tpu.memory_space<vmem>>, vector<1x8x32x8xf32>
    %175 = vector.shape_cast %174 : vector<1x8x32x8xf32> to vector<8x32x8xf32>
    "tpu.trace_start"() <{level = 10 : i32, message = "gsh,ghd->gsd"}> : () -> ()
    %cst_122 = arith.constant dense<0.000000e+00> : vector<8x8x8xf32>
    %176 = tpu.matmul %159, %175, %cst_122 {dimension_numbers = #tpu.dot_dimension_numbers<[2], [1], [1], [2], [0, 0, 0, 1, 1, 2], [0], [0]>} : vector<8x8x32xf32>, vector<8x32x8xf32>, vector<8x8x8xf32> -> vector<8x8x8xf32>
    "tpu.trace_stop"() : () -> ()
    %c1_123 = arith.constant 1 : index
    %c0_124 = arith.constant 0 : index
    %c0_125 = arith.constant 0 : index
    %c0_126 = arith.constant 0 : index
    %177 = vector.load %arg14[%c1_123, %c0_124, %c0_125, %c0_126] : memref<2x8x1x8xf32, #tpu.memory_space<vmem>>, vector<1x8x1x8xf32>
    %178 = vector.shape_cast %177 : vector<1x8x1x8xf32> to vector<8x1x8xf32>
    %179 = vector.broadcast %178 : vector<8x1x8xf32> to vector<8x8x8xf32>
    %180 = arith.addf %176, %179 : vector<8x8x8xf32>
    "tpu.trace_start"() <{level = 10 : i32, message = "gqd,gkd->gqk"}> : () -> ()
    %cst_127 = arith.constant dense<0.000000e+00> : vector<8x8x8xf32>
    %181 = tpu.matmul %166, %173, %cst_127 {dimension_numbers = #tpu.dot_dimension_numbers<[2], [2], [1], [1], [0, 0, 0, 1, 1, 1], [0], [0]>} : vector<8x8x8xf32>, vector<8x8x8xf32>, vector<8x8x8xf32> -> vector<8x8x8xf32>
    "tpu.trace_stop"() : () -> ()
    %cst_128 = arith.constant 0.353553385 : f32
    %182 = vector.broadcast %cst_128 : f32 to vector<8x8x8xf32>
    %183 = arith.mulf %181, %182 : vector<8x8x8xf32>
    %184 = vector.broadcast %32 : vector<8x1x8xf32> to vector<8x8x8xf32>
    %185 = arith.addf %183, %184 : vector<8x8x8xf32>
    %cst_129 = arith.constant dense<0xFF800000> : vector<8x8xf32>
    %186 = vector.multi_reduction <maximumf>, %185, %cst_129 [2] : vector<8x8x8xf32> to vector<8x8xf32>
    %187 = vector.shape_cast %186 : vector<8x8xf32> to vector<8x8x1xf32>
    %188 = vector.broadcast %187 : vector<8x8x1xf32> to vector<8x8x8xf32>
    %189 = arith.subf %185, %188 : vector<8x8x8xf32>
    %190 = math.exp %189 : vector<8x8x8xf32>
    %cst_130 = arith.constant dense<0.000000e+00> : vector<8x8xf32>
    %191 = vector.multi_reduction <add>, %190, %cst_130 [2] : vector<8x8x8xf32> to vector<8x8xf32>
    %192 = vector.shape_cast %191 : vector<8x8xf32> to vector<8x8x1xf32>
    %193 = tpu.reciprocal %192 {approx = true} : vector<8x8x1xf32> -> vector<8x8x1xf32>
    %194 = vector.broadcast %193 : vector<8x8x1xf32> to vector<8x8x8xf32>
    %195 = arith.mulf %190, %194 : vector<8x8x8xf32>
    "tpu.trace_start"() <{level = 10 : i32, message = "gqk,gkd->gqd"}> : () -> ()
    %cst_131 = arith.constant dense<0.000000e+00> : vector<8x8x8xf32>
    %196 = tpu.matmul %195, %180, %cst_131 {dimension_numbers = #tpu.dot_dimension_numbers<[2], [1], [1], [2], [0, 0, 0, 1, 1, 2], [0], [0]>} : vector<8x8x8xf32>, vector<8x8x8xf32>, vector<8x8x8xf32> -> vector<8x8x8xf32>
    "tpu.trace_stop"() : () -> ()
    %c1_132 = arith.constant 1 : index
    %c0_133 = arith.constant 0 : index
    %c0_134 = arith.constant 0 : index
    %c0_135 = arith.constant 0 : index
    %197 = vector.load %arg15[%c1_132, %c0_133, %c0_134, %c0_135] : memref<2x8x8x32xf32, #tpu.memory_space<vmem>>, vector<1x8x8x32xf32>
    %198 = vector.shape_cast %197 : vector<1x8x8x32xf32> to vector<8x8x32xf32>
    "tpu.trace_start"() <{level = 10 : i32, message = "gsd,gdh->gsh"}> : () -> ()
    %cst_136 = arith.constant dense<0.000000e+00> : vector<8x8x32xf32>
    %199 = tpu.matmul %196, %198, %cst_136 {dimension_numbers = #tpu.dot_dimension_numbers<[2], [1], [1], [2], [0, 0, 0, 1, 1, 2], [0], [0]>} : vector<8x8x8xf32>, vector<8x8x32xf32>, vector<8x8x32xf32> -> vector<8x8x32xf32>
    "tpu.trace_stop"() : () -> ()
    %200 = vector.shape_cast %199 : vector<8x8x32xf32> to vector<2x4x8x32xf32>
    %cst_137 = arith.constant dense<0.000000e+00> : vector<2x8x32xf32>
    %201 = vector.multi_reduction <add>, %200, %cst_137 [1] : vector<2x4x8x32xf32> to vector<2x8x32xf32>
    %202 = vector.shape_cast %201 : vector<2x8x32xf32> to vector<16x32xf32>
    %c1_138 = arith.constant 1 : index
    %c0_139 = arith.constant 0 : index
    %c0_140 = arith.constant 0 : index
    %203 = vector.load %arg16[%c1_138, %c0_139, %c0_140] : memref<2x1x32xf32, #tpu.memory_space<vmem>>, vector<1x1x32xf32>
    %204 = vector.shape_cast %203 : vector<1x1x32xf32> to vector<1x32xf32>
    %205 = vector.broadcast %204 : vector<1x32xf32> to vector<16x32xf32>
    %206 = arith.addf %202, %205 : vector<16x32xf32>
    %207 = arith.addf %206, %155 : vector<16x32xf32>
    %c1_141 = arith.constant 1 : index
    %c0_142 = arith.constant 0 : index
    %c0_143 = arith.constant 0 : index
    %208 = vector.load %arg17[%c1_141, %c0_142, %c0_143] : memref<2x1x32xf32, #tpu.memory_space<vmem>>, vector<1x1x32xf32>
    %209 = vector.shape_cast %208 : vector<1x1x32xf32> to vector<1x32xf32>
    %c1_144 = arith.constant 1 : index
    %c0_145 = arith.constant 0 : index
    %c0_146 = arith.constant 0 : index
    %210 = vector.load %arg18[%c1_144, %c0_145, %c0_146] : memref<2x1x32xf32, #tpu.memory_space<vmem>>, vector<1x1x32xf32>
    %211 = vector.shape_cast %210 : vector<1x1x32xf32> to vector<1x32xf32>
    %cst_147 = arith.constant dense<0.000000e+00> : vector<16xf32>
    %212 = vector.multi_reduction <add>, %207, %cst_147 [1] : vector<16x32xf32> to vector<16xf32>
    %213 = vector.shape_cast %212 : vector<16xf32> to vector<16x1xf32>
    %cst_148 = arith.constant 3.200000e+01 : f32
    %214 = vector.broadcast %cst_148 : f32 to vector<16x1xf32>
    %215 = arith.divf %213, %214 : vector<16x1xf32>
    %216 = vector.broadcast %215 : vector<16x1xf32> to vector<16x32xf32>
    %217 = arith.subf %207, %216 : vector<16x32xf32>
    %218 = arith.mulf %217, %217 : vector<16x32xf32>
    %cst_149 = arith.constant dense<0.000000e+00> : vector<16xf32>
    %219 = vector.multi_reduction <add>, %218, %cst_149 [1] : vector<16x32xf32> to vector<16xf32>
    %220 = vector.shape_cast %219 : vector<16xf32> to vector<16x1xf32>
    %cst_150 = arith.constant 3.200000e+01 : f32
    %221 = vector.broadcast %cst_150 : f32 to vector<16x1xf32>
    %222 = arith.divf %220, %221 : vector<16x1xf32>
    %cst_151 = arith.constant 9.99999996E-13 : f32
    %223 = vector.broadcast %cst_151 : f32 to vector<16x1xf32>
    %224 = arith.addf %222, %223 : vector<16x1xf32>
    %225 = math.rsqrt %224 : vector<16x1xf32>
    %226 = vector.broadcast %225 : vector<16x1xf32> to vector<16x32xf32>
    %227 = arith.mulf %217, %226 : vector<16x32xf32>
    %228 = vector.broadcast %209 : vector<1x32xf32> to vector<16x32xf32>
    %229 = arith.mulf %228, %227 : vector<16x32xf32>
    %230 = vector.broadcast %211 : vector<1x32xf32> to vector<16x32xf32>
    %231 = arith.addf %229, %230 : vector<16x32xf32>
    %c1_152 = arith.constant 1 : index
    %c0_153 = arith.constant 0 : index
    %c0_154 = arith.constant 0 : index
    %232 = vector.load %arg19[%c1_152, %c0_153, %c0_154] : memref<2x32x128xf32, #tpu.memory_space<vmem>>, vector<1x32x128xf32>
    %233 = vector.shape_cast %232 : vector<1x32x128xf32> to vector<32x128xf32>
    %cst_155 = arith.constant dense<0.000000e+00> : vector<16x128xf32>
    %234 = tpu.matmul %231, %233, %cst_155 {dimension_numbers = #tpu.dot_dimension_numbers<[1], [0], [0], [1], [0, 0, 1, 1], [], []>} : vector<16x32xf32>, vector<32x128xf32>, vector<16x128xf32> -> vector<16x128xf32>
    %c1_156 = arith.constant 1 : index
    %c0_157 = arith.constant 0 : index
    %c0_158 = arith.constant 0 : index
    %235 = vector.load %arg20[%c1_156, %c0_157, %c0_158] : memref<2x1x128xf32, #tpu.memory_space<vmem>>, vector<1x1x128xf32>
    %236 = vector.shape_cast %235 : vector<1x1x128xf32> to vector<1x128xf32>
    %237 = vector.broadcast %236 : vector<1x128xf32> to vector<16x128xf32>
    %238 = arith.addf %234, %237 : vector<16x128xf32>
    %cst_159 = arith.constant 5.000000e-01 : f32
    %239 = vector.broadcast %cst_159 : f32 to vector<16x128xf32>
    %240 = arith.mulf %238, %239 : vector<16x128xf32>
    %cst_160 = arith.constant 1.414210e+00 : f32
    %241 = vector.broadcast %cst_160 : f32 to vector<16x128xf32>
    %242 = arith.divf %238, %241 : vector<16x128xf32>
    %243 = math.erf %242 : vector<16x128xf32>
    %cst_161 = arith.constant 1.000000e+00 : f32
    %244 = vector.broadcast %cst_161 : f32 to vector<16x128xf32>
    %245 = arith.addf %244, %243 : vector<16x128xf32>
    %246 = arith.mulf %240, %245 : vector<16x128xf32>
    %c1_162 = arith.constant 1 : index
    %c0_163 = arith.constant 0 : index
    %c0_164 = arith.constant 0 : index
    %247 = vector.load %arg21[%c1_162, %c0_163, %c0_164] : memref<2x128x32xf32, #tpu.memory_space<vmem>>, vector<1x128x32xf32>
    %248 = vector.shape_cast %247 : vector<1x128x32xf32> to vector<128x32xf32>
    %cst_165 = arith.constant dense<0.000000e+00> : vector<16x32xf32>
    %249 = tpu.matmul %246, %248, %cst_165 {dimension_numbers = #tpu.dot_dimension_numbers<[1], [0], [0], [1], [0, 0, 1, 1], [], []>} : vector<16x128xf32>, vector<128x32xf32>, vector<16x32xf32> -> vector<16x32xf32>
    %c1_166 = arith.constant 1 : index
    %c0_167 = arith.constant 0 : index
    %c0_168 = arith.constant 0 : index
    %250 = vector.load %arg22[%c1_166, %c0_167, %c0_168] : memref<2x1x32xf32, #tpu.memory_space<vmem>>, vector<1x1x32xf32>
    %251 = vector.shape_cast %250 : vector<1x1x32xf32> to vector<1x32xf32>
    %252 = vector.broadcast %251 : vector<1x32xf32> to vector<16x32xf32>
    %253 = arith.addf %249, %252 : vector<16x32xf32>
    %254 = arith.addf %253, %231 : vector<16x32xf32>
    %c1_169 = arith.constant 1 : index
    %c0_170 = arith.constant 0 : index
    %c0_171 = arith.constant 0 : index
    %255 = vector.load %arg23[%c1_169, %c0_170, %c0_171] : memref<2x1x32xf32, #tpu.memory_space<vmem>>, vector<1x1x32xf32>
    %256 = vector.shape_cast %255 : vector<1x1x32xf32> to vector<1x32xf32>
    %c1_172 = arith.constant 1 : index
    %c0_173 = arith.constant 0 : index
    %c0_174 = arith.constant 0 : index
    %257 = vector.load %arg24[%c1_172, %c0_173, %c0_174] : memref<2x1x32xf32, #tpu.memory_space<vmem>>, vector<1x1x32xf32>
    %258 = vector.shape_cast %257 : vector<1x1x32xf32> to vector<1x32xf32>
    %cst_175 = arith.constant dense<0.000000e+00> : vector<16xf32>
    %259 = vector.multi_reduction <add>, %254, %cst_175 [1] : vector<16x32xf32> to vector<16xf32>
    %260 = vector.shape_cast %259 : vector<16xf32> to vector<16x1xf32>
    %cst_176 = arith.constant 3.200000e+01 : f32
    %261 = vector.broadcast %cst_176 : f32 to vector<16x1xf32>
    %262 = arith.divf %260, %261 : vector<16x1xf32>
    %263 = vector.broadcast %262 : vector<16x1xf32> to vector<16x32xf32>
    %264 = arith.subf %254, %263 : vector<16x32xf32>
    %265 = arith.mulf %264, %264 : vector<16x32xf32>
    %cst_177 = arith.constant dense<0.000000e+00> : vector<16xf32>
    %266 = vector.multi_reduction <add>, %265, %cst_177 [1] : vector<16x32xf32> to vector<16xf32>
    %267 = vector.shape_cast %266 : vector<16xf32> to vector<16x1xf32>
    %cst_178 = arith.constant 3.200000e+01 : f32
    %268 = vector.broadcast %cst_178 : f32 to vector<16x1xf32>
    %269 = arith.divf %267, %268 : vector<16x1xf32>
    %cst_179 = arith.constant 9.99999996E-13 : f32
    %270 = vector.broadcast %cst_179 : f32 to vector<16x1xf32>
    %271 = arith.addf %269, %270 : vector<16x1xf32>
    %272 = math.rsqrt %271 : vector<16x1xf32>
    %273 = vector.broadcast %272 : vector<16x1xf32> to vector<16x32xf32>
    %274 = arith.mulf %264, %273 : vector<16x32xf32>
    %275 = vector.broadcast %256 : vector<1x32xf32> to vector<16x32xf32>
    %276 = arith.mulf %275, %274 : vector<16x32xf32>
    %277 = vector.broadcast %258 : vector<1x32xf32> to vector<16x32xf32>
    %278 = arith.addf %276, %277 : vector<16x32xf32>
    %c0_180 = arith.constant 0 : index
    %c0_181 = arith.constant 0 : index
    %279 = vector.load %arg25[%c0_180, %c0_181] : memref<16x32xf32, #tpu.memory_space<vmem>>, vector<16x32xf32>
    tpu.vector_store %arg25[%c0_180, %c0_181], %278 {strides = array<i32>} : memref<16x32xf32, #tpu.memory_space<vmem>>, vector<16x32xf32>,
    return
  }
  func.func @transform_0(%arg0: i32) -> (i32, i32) {
    %c0_i32 = arith.constant 0 : i32
    %c0_i32_0 = arith.constant 0 : i32
    %c0_i32_1 = arith.constant 0 : i32
    return %c0_i32, %c0_i32_0 : i32, i32
  }
  func.func @transform_1(%arg0: i32) -> (i32, i32) {
    %c0_i32 = arith.constant 0 : i32
    %c0_i32_0 = arith.constant 0 : i32
    %c0_i32_1 = arith.constant 0 : i32
    return %c0_i32, %c0_i32_0 : i32, i32
  }
  func.func @transform_2(%arg0: i32) -> (i32, i32) {
    %c0_i32 = arith.constant 0 : i32
    %c0_i32_0 = arith.constant 0 : i32
    %c0_i32_1 = arith.constant 0 : i32
    return %c0_i32, %c0_i32_0 : i32, i32
  }
  func.func @transform_3(%arg0: i32) -> (i32, i32) {
    %c0_i32 = arith.constant 0 : i32
    %c0_i32_0 = arith.constant 0 : i32
    %c0_i32_1 = arith.constant 0 : i32
    return %c0_i32, %c0_i32_0 : i32, i32
  }
  func.func @transform_4(%arg0: i32) -> (i32, i32) {
    %c0_i32 = arith.constant 0 : i32
    %c0_i32_0 = arith.constant 0 : i32
    %c0_i32_1 = arith.constant 0 : i32
    return %c0_i32, %c0_i32_0 : i32, i32
  }
  func.func @transform_5(%arg0: i32) -> (i32, i32) {
    %c0_i32 = arith.constant 0 : i32
    %c0_i32_0 = arith.constant 0 : i32
    %c0_i32_1 = arith.constant 0 : i32
    return %c0_i32, %c0_i32_0 : i32, i32
  }
  func.func @transform_6(%arg0: i32) -> (i32, i32) {
    %c0_i32 = arith.constant 0 : i32
    %c0_i32_0 = arith.constant 0 : i32
    %c0_i32_1 = arith.constant 0 : i32
    return %c0_i32, %c0_i32_0 : i32, i32
  }
  func.func @transform_7(%arg0: i32) -> (i32, i32, i32) {
    %c0_i32 = arith.constant 0 : i32
    %c0_i32_0 = arith.constant 0 : i32
    %c0_i32_1 = arith.constant 0 : i32
    %c0_i32_2 = arith.constant 0 : i32
    return %c0_i32, %c0_i32_0, %c0_i32_1 : i32, i32, i32
  }
  func.func @transform_8(%arg0: i32) -> (i32, i32, i32, i32) {
    %c0_i32 = arith.constant 0 : i32
    %c0_i32_0 = arith.constant 0 : i32
    %c0_i32_1 = arith.constant 0 : i32
    %c0_i32_2 = arith.constant 0 : i32
    %c0_i32_3 = arith.constant 0 : i32
    return %c0_i32, %c0_i32_0, %c0_i32_1, %c0_i32_2 : i32, i32, i32, i32
  }
  func.func @transform_9(%arg0: i32) -> (i32, i32, i32, i32) {
    %c0_i32 = arith.constant 0 : i32
    %c0_i32_0 = arith.constant 0 : i32
    %c0_i32_1 = arith.constant 0 : i32
    %c0_i32_2 = arith.constant 0 : i32
    %c0_i32_3 = arith.constant 0 : i32
    return %c0_i32, %c0_i32_0, %c0_i32_1, %c0_i32_2 : i32, i32, i32, i32
  }
  func.func @transform_10(%arg0: i32) -> (i32, i32, i32, i32) {
    %c0_i32 = arith.constant 0 : i32
    %c0_i32_0 = arith.constant 0 : i32
    %c0_i32_1 = arith.constant 0 : i32
    %c0_i32_2 = arith.constant 0 : i32
    %c0_i32_3 = arith.constant 0 : i32
    return %c0_i32, %c0_i32_0, %c0_i32_1, %c0_i32_2 : i32, i32, i32, i32
  }
  func.func @transform_11(%arg0: i32) -> (i32, i32, i32, i32) {
    %c0_i32 = arith.constant 0 : i32
    %c0_i32_0 = arith.constant 0 : i32
    %c0_i32_1 = arith.constant 0 : i32
    %c0_i32_2 = arith.constant 0 : i32
    %c0_i32_3 = arith.constant 0 : i32
    return %c0_i32, %c0_i32_0, %c0_i32_1, %c0_i32_2 : i32, i32, i32, i32
  }
  func.func @transform_12(%arg0: i32) -> (i32, i32, i32, i32) {
    %c0_i32 = arith.constant 0 : i32
    %c0_i32_0 = arith.constant 0 : i32
    %c0_i32_1 = arith.constant 0 : i32
    %c0_i32_2 = arith.constant 0 : i32
    %c0_i32_3 = arith.constant 0 : i32
    return %c0_i32, %c0_i32_0, %c0_i32_1, %c0_i32_2 : i32, i32, i32, i32
  }
  func.func @transform_13(%arg0: i32) -> (i32, i32, i32, i32) {
    %c0_i32 = arith.constant 0 : i32
    %c0_i32_0 = arith.constant 0 : i32
    %c0_i32_1 = arith.constant 0 : i32
    %c0_i32_2 = arith.constant 0 : i32
    %c0_i32_3 = arith.constant 0 : i32
    return %c0_i32, %c0_i32_0, %c0_i32_1, %c0_i32_2 : i32, i32, i32, i32
  }
  func.func @transform_14(%arg0: i32) -> (i32, i32, i32, i32) {
    %c0_i32 = arith.constant 0 : i32
    %c0_i32_0 = arith.constant 0 : i32
    %c0_i32_1 = arith.constant 0 : i32
    %c0_i32_2 = arith.constant 0 : i32
    %c0_i32_3 = arith.constant 0 : i32
    return %c0_i32, %c0_i32_0, %c0_i32_1, %c0_i32_2 : i32, i32, i32, i32
  }
  func.func @transform_15(%arg0: i32) -> (i32, i32, i32) {
    %c0_i32 = arith.constant 0 : i32
    %c0_i32_0 = arith.constant 0 : i32
    %c0_i32_1 = arith.constant 0 : i32
    %c0_i32_2 = arith.constant 0 : i32
    return %c0_i32, %c0_i32_0, %c0_i32_1 : i32, i32, i32
  }
  func.func @transform_16(%arg0: i32) -> (i32, i32, i32) {
    %c0_i32 = arith.constant 0 : i32
    %c0_i32_0 = arith.constant 0 : i32
    %c0_i32_1 = arith.constant 0 : i32
    %c0_i32_2 = arith.constant 0 : i32
    return %c0_i32, %c0_i32_0, %c0_i32_1 : i32, i32, i32
  }
  func.func @transform_17(%arg0: i32) -> (i32, i32, i32) {
    %c0_i32 = arith.constant 0 : i32
    %c0_i32_0 = arith.constant 0 : i32
    %c0_i32_1 = arith.constant 0 : i32
    %c0_i32_2 = arith.constant 0 : i32
    return %c0_i32, %c0_i32_0, %c0_i32_1 : i32, i32, i32
  }
  func.func @transform_18(%arg0: i32) -> (i32, i32, i32) {
    %c0_i32 = arith.constant 0 : i32
    %c0_i32_0 = arith.constant 0 : i32
    %c0_i32_1 = arith.constant 0 : i32
    %c0_i32_2 = arith.constant 0 : i32
    return %c0_i32, %c0_i32_0, %c0_i32_1 : i32, i32, i32
  }
  func.func @transform_19(%arg0: i32) -> (i32, i32, i32) {
    %c0_i32 = arith.constant 0 : i32
    %c0_i32_0 = arith.constant 0 : i32
    %c0_i32_1 = arith.constant 0 : i32
    %c0_i32_2 = arith.constant 0 : i32
    return %c0_i32, %c0_i32_0, %c0_i32_1 : i32, i32, i32
  }
  func.func @transform_20(%arg0: i32) -> (i32, i32, i32) {
    %c0_i32 = arith.constant 0 : i32
    %c0_i32_0 = arith.constant 0 : i32
    %c0_i32_1 = arith.constant 0 : i32
    %c0_i32_2 = arith.constant 0 : i32
    return %c0_i32, %c0_i32_0, %c0_i32_1 : i32, i32, i32
  }
  func.func @transform_21(%arg0: i32) -> (i32, i32, i32) {
    %c0_i32 = arith.constant 0 : i32
    %c0_i32_0 = arith.constant 0 : i32
    %c0_i32_1 = arith.constant 0 : i32
    %c0_i32_2 = arith.constant 0 : i32
    return %c0_i32, %c0_i32_0, %c0_i32_1 : i32, i32, i32
  }
  func.func @transform_22(%arg0: i32) -> (i32, i32, i32) {
    %c0_i32 = arith.constant 0 : i32
    %c0_i32_0 = arith.constant 0 : i32
    %c0_i32_1 = arith.constant 0 : i32
    %c0_i32_2 = arith.constant 0 : i32
    return %c0_i32, %c0_i32_0, %c0_i32_1 : i32, i32, i32
  }
  func.func @transform_23(%arg0: i32) -> (i32, i32, i32) {
    %c0_i32 = arith.constant 0 : i32
    %c0_i32_0 = arith.constant 0 : i32
    %c0_i32_1 = arith.constant 0 : i32
    %c0_i32_2 = arith.constant 0 : i32
    return %c0_i32, %c0_i32_0, %c0_i32_1 : i32, i32, i32
  }
  func.func @transform_24(%arg0: i32) -> (i32, i32) {
    %c0_i32 = arith.constant 0 : i32
    %c0_i32_0 = arith.constant 0 : i32
    %c0_i32_1 = arith.constant 0 : i32
    return %c0_i32, %c0_i32_0 : i32, i32
  }
}

</mosaic_0001>

<llo_original>
// kernel: tpu_custom_call.1
$region0: #{tpu_custom_call.1}
  #allocation0 [shape = 'u32[]', space=smem, size = 0x4, offset = 0x4, fixed_abs, tag = 'smem constant byte address 0x4 - core index']
  #allocation1 [shape = 'u32[144,128]{1,0:T(1,128)}', space=vmem, size = 0x12000, scoped, tag = 'internal scratch']
  %s0 = inlined_call_operand.vmem [shape: f32[16,16], index: 0, kind: input, shape index: {}]
  %s1 = inlined_call_operand.vmem [shape: f32[16,16], index: 1, kind: input, shape index: {}]
  %s2 = inlined_call_operand.vmem [shape: f32[16,16], index: 2, kind: input, shape index: {}]
  %s3 = inlined_call_operand.vmem [shape: f32[1,16], index: 3, kind: input, shape index: {}]
  %s4 = inlined_call_operand.vmem [shape: f32[1,16], index: 4, kind: input, shape index: {}]
  %s5 = inlined_call_operand.vmem [shape: f32[16,32], index: 5, kind: input, shape index: {}]
  %s6 = inlined_call_operand.vmem [shape: f32[1,32], index: 6, kind: input, shape index: {}]
  %s7 = inlined_call_operand.vmem [shape: f32[8,1,8], index: 7, kind: input, shape index: {}]
  %s8 = inlined_call_operand.vmem [shape: f32[2,8,32,8], index: 8, kind: input, shape index: {}]
  %s9 = inlined_call_operand.vmem [shape: f32[2,8,1,8], index: 9, kind: input, shape index: {}]
  %s10 = inlined_call_operand.vmem [shape: f32[2,8,32,8], index: 10, kind: input, shape index: {}]
  %s11 = inlined_call_operand.vmem [shape: f32[2,8,1,8], index: 11, kind: input, shape index: {}]
  %s12 = inlined_call_operand.vmem [shape: f32[2,8,32,8], index: 12, kind: input, shape index: {}]
  %s13 = inlined_call_operand.vmem [shape: f32[2,8,1,8], index: 13, kind: input, shape index: {}]
  %s14 = inlined_call_operand.vmem [shape: f32[2,8,8,32], index: 14, kind: input, shape index: {}]
  %s15 = inlined_call_operand.vmem [shape: f32[2,1,32], index: 15, kind: input, shape index: {}]
  %s16 = inlined_call_operand.vmem [shape: f32[2,1,32], index: 16, kind: input, shape index: {}]
  %s17 = inlined_call_operand.vmem [shape: f32[2,1,32], index: 17, kind: input, shape index: {}]
  %s18 = inlined_call_operand.vmem [shape: f32[2,32,128], index: 18, kind: input, shape index: {}]
  %s19 = inlined_call_operand.vmem [shape: f32[2,1,128], index: 19, kind: input, shape index: {}]
  %s20 = inlined_call_operand.vmem [shape: f32[2,128,32], index: 20, kind: input, shape index: {}]
  %s21 = inlined_call_operand.vmem [shape: f32[2,1,32], index: 21, kind: input, shape index: {}]
  %s22 = inlined_call_operand.vmem [shape: f32[2,1,32], index: 22, kind: input, shape index: {}]
  %s23 = inlined_call_operand.vmem [shape: f32[2,1,32], index: 23, kind: input, shape index: {}]
  %s24 = inlined_call_operand.hbm [shape: f32[16,32], index: 24, kind: output, shape index: {}]
  %s25 = sld [smem:[#allocation0]]
  $region106: #{tpu_custom_call.1} parent=0
    _
  %s27 = ssub.s32 1, %s25
  %s28 = scalar_select 0, %s27, %s25
  $region1: #{tpu_custom_call.1} parent=0
    #allocation2 [shape = 'u8[8192]{0}', space=vmem, size = 0x2000, scoped, tag = 'output window, operand 0, single buffered']
    #allocation3 [shape = 's32[1]{0}', space=sflag, size = 0x4, scoped, tag = 'scoped memory for tpu_custom_call.1']
    %29 = vsyncpa [#allocation3], 0
    // Predicated region
    $region2: #{tpu_custom_call.1} parent=1 // pred_check
      _
    $region3: #{tpu_custom_call.1} parent=1 // pred_check_branch
      %31 = sbr.rel (0) target = $region5
    $region4: #{tpu_custom_call.1} parent=1 // pred_region
      _
    $region5: #{tpu_custom_call.1} parent=1 // pred_fallthru
      _
    // Predicated region
    $region6: #{tpu_custom_call.1} parent=1 // pred_check
      _
    $region7: #{tpu_custom_call.1} parent=1 // pred_check_branch
      %33 = sbr.rel (0) target = $region9
    $region8: #{tpu_custom_call.1} parent=1 // pred_region
      _
    $region9: #{tpu_custom_call.1} parent=1 // pred_fallthru
      _
    // Predicated region
    $region10: #{tpu_custom_call.1} parent=1 // pred_check
      _
    $region11: #{tpu_custom_call.1} parent=1 // pred_check_branch
      %35 = sbr.rel (0) target = $region13
    $region12: #{tpu_custom_call.1} parent=1 // pred_region
      _
    $region13: #{tpu_custom_call.1} parent=1 // pred_fallthru
      _
    // Predicated region
    $region14: #{tpu_custom_call.1} parent=1 // pred_check
      _
    $region15: #{tpu_custom_call.1} parent=1 // pred_check_branch
      %37 = sbr.rel (0) target = $region17
    $region16: #{tpu_custom_call.1} parent=1 // pred_region
      _
    $region17: #{tpu_custom_call.1} parent=1 // pred_fallthru
      _
    // Predicated region
    $region18: #{tpu_custom_call.1} parent=1 // pred_check
      _
    $region19: #{tpu_custom_call.1} parent=1 // pred_check_branch
      %39 = sbr.rel (0) target = $region21
    $region20: #{tpu_custom_call.1} parent=1 // pred_region
      _
    $region21: #{tpu_custom_call.1} parent=1 // pred_fallthru
      _
    // Predicated region
    $region22: #{tpu_custom_call.1} parent=1 // pred_check
      _
    $region23: #{tpu_custom_call.1} parent=1 // pred_check_branch
      %41 = sbr.rel (0) target = $region25
    $region24: #{tpu_custom_call.1} parent=1 // pred_region
      _
    $region25: #{tpu_custom_call.1} parent=1 // pred_fallthru
      _
    // Predicated region
    $region26: #{tpu_custom_call.1} parent=1 // pred_check
      _
    $region27: #{tpu_custom_call.1} parent=1 // pred_check_branch
      %43 = sbr.rel (0) target = $region29
    $region28: #{tpu_custom_call.1} parent=1 // pred_region
      _
    $region29: #{tpu_custom_call.1} parent=1 // pred_fallthru
      _
    // Predicated region
    $region30: #{tpu_custom_call.1} parent=1 // pred_check
      _
    $region31: #{tpu_custom_call.1} parent=1 // pred_check_branch
      %45 = sbr.rel (0) target = $region33
    $region32: #{tpu_custom_call.1} parent=1 // pred_region
      _
    $region33: #{tpu_custom_call.1} parent=1 // pred_fallthru
      _
    // Predicated region
    $region34: #{tpu_custom_call.1} parent=1 // pred_check
      _
    $region35: #{tpu_custom_call.1} parent=1 // pred_check_branch
      %47 = sbr.rel (0) target = $region37
    $region36: #{tpu_custom_call.1} parent=1 // pred_region
      _
    $region37: #{tpu_custom_call.1} parent=1 // pred_fallthru
      _
    // Predicated region
    $region38: #{tpu_custom_call.1} parent=1 // pred_check
      _
    $region39: #{tpu_custom_call.1} parent=1 // pred_check_branch
      %49 = sbr.rel (0) target = $region41
    $region40: #{tpu_custom_call.1} parent=1 // pred_region
      _
    $region41: #{tpu_custom_call.1} parent=1 // pred_fallthru
      _
    // Predicated region
    $region42: #{tpu_custom_call.1} parent=1 // pred_check
      _
    $region43: #{tpu_custom_call.1} parent=1 // pred_check_branch
      %51 = sbr.rel (0) target = $region45
    $region44: #{tpu_custom_call.1} parent=1 // pred_region
      _
    $region45: #{tpu_custom_call.1} parent=1 // pred_fallthru
      _
    // Predicated region
    $region46: #{tpu_custom_call.1} parent=1 // pred_check
      _
    $region47: #{tpu_custom_call.1} parent=1 // pred_check_branch
      %53 = sbr.rel (0) target = $region49
    $region48: #{tpu_custom_call.1} parent=1 // pred_region
      _
    $region49: #{tpu_custom_call.1} parent=1 // pred_fallthru
      _
    // Predicated region
    $region50: #{tpu_custom_call.1} parent=1 // pred_check
      _
    $region51: #{tpu_custom_call.1} parent=1 // pred_check_branch
      %55 = sbr.rel (0) target = $region53
    $region52: #{tpu_custom_call.1} parent=1 // pred_region
      _
    $region53: #{tpu_custom_call.1} parent=1 // pred_fallthru
      _
    // Predicated region
    $region54: #{tpu_custom_call.1} parent=1 // pred_check
      _
    $region55: #{tpu_custom_call.1} parent=1 // pred_check_branch
      %57 = sbr.rel (0) target = $region57
    $region56: #{tpu_custom_call.1} parent=1 // pred_region
      _
    $region57: #{tpu_custom_call.1} parent=1 // pred_fallthru
      _
    // Predicated region
    $region58: #{tpu_custom_call.1} parent=1 // pred_check
      _
    $region59: #{tpu_custom_call.1} parent=1 // pred_check_branch
      %59 = sbr.rel (0) target = $region61
    $region60: #{tpu_custom_call.1} parent=1 // pred_region
      _
    $region61: #{tpu_custom_call.1} parent=1 // pred_fallthru
      _
    // Predicated region
    $region62: #{tpu_custom_call.1} parent=1 // pred_check
      _
    $region63: #{tpu_custom_call.1} parent=1 // pred_check_branch
      %61 = sbr.rel (0) target = $region65
    $region64: #{tpu_custom_call.1} parent=1 // pred_region
      _
    $region65: #{tpu_custom_call.1} parent=1 // pred_fallthru
      _
    // Predicated region
    $region66: #{tpu_custom_call.1} parent=1 // pred_check
      _
    $region67: #{tpu_custom_call.1} parent=1 // pred_check_branch
      %63 = sbr.rel (0) target = $region69
    $region68: #{tpu_custom_call.1} parent=1 // pred_region
      _
    $region69: #{tpu_custom_call.1} parent=1 // pred_fallthru
      _
    // Predicated region
    $region70: #{tpu_custom_call.1} parent=1 // pred_check
      _
    $region71: #{tpu_custom_call.1} parent=1 // pred_check_branch
      %65 = sbr.rel (0) target = $region73
    $region72: #{tpu_custom_call.1} parent=1 // pred_region
      _
    $region73: #{tpu_custom_call.1} parent=1 // pred_fallthru
      _
    // Predicated region
    $region74: #{tpu_custom_call.1} parent=1 // pred_check
      _
    $region75: #{tpu_custom_call.1} parent=1 // pred_check_branch
      %67 = sbr.rel (0) target = $region77
    $region76: #{tpu_custom_call.1} parent=1 // pred_region
      _
    $region77: #{tpu_custom_call.1} parent=1 // pred_fallthru
      _
    // Predicated region
    $region78: #{tpu_custom_call.1} parent=1 // pred_check
      _
    $region79: #{tpu_custom_call.1} parent=1 // pred_check_branch
      %69 = sbr.rel (0) target = $region81
    $region80: #{tpu_custom_call.1} parent=1 // pred_region
      _
    $region81: #{tpu_custom_call.1} parent=1 // pred_fallthru
      _
    // Predicated region
    $region82: #{tpu_custom_call.1} parent=1 // pred_check
      _
    $region83: #{tpu_custom_call.1} parent=1 // pred_check_branch
      %71 = sbr.rel (0) target = $region85
    $region84: #{tpu_custom_call.1} parent=1 // pred_region
      _
    $region85: #{tpu_custom_call.1} parent=1 // pred_fallthru
      _
    // Predicated region
    $region86: #{tpu_custom_call.1} parent=1 // pred_check
      _
    $region87: #{tpu_custom_call.1} parent=1 // pred_check_branch
      %73 = sbr.rel (0) target = $region89
    $region88: #{tpu_custom_call.1} parent=1 // pred_region
      _
    $region89: #{tpu_custom_call.1} parent=1 // pred_fallthru
      _
    // Predicated region
    $region90: #{tpu_custom_call.1} parent=1 // pred_check
      _
    $region91: #{tpu_custom_call.1} parent=1 // pred_check_branch
      %75 = sbr.rel (0) target = $region93
    $region92: #{tpu_custom_call.1} parent=1 // pred_region
      _
    $region93: #{tpu_custom_call.1} parent=1 // pred_fallthru
      _
    // Predicated region
    $region94: #{tpu_custom_call.1} parent=1 // pred_check
      _
    $region95: #{tpu_custom_call.1} parent=1 // pred_check_branch
      %77 = sbr.rel (0) target = $region97
    $region96: #{tpu_custom_call.1} parent=1 // pred_region
      _
    $region97: #{tpu_custom_call.1} parent=1 // pred_fallthru
      _
    %v78 = vld [vmem:[%s0] sm:$0xff]
    %v79 = vld [vmem:[%s0 + $0x8] sm:$0xff]
    %v80 = vld [vmem:[%s1] sm:$0xff]
    %v81 = vld [vmem:[%s1 + $0x8] sm:$0xff]
    %v82 = vadd.f32 %v78, %v80
    %v83 = vadd.f32 %v79, %v81
    %v84 = vld [vmem:[%s2] sm:$0xff]
    %v85 = vld [vmem:[%s2 + $0x8] sm:$0xff]
    %v86 = vadd.f32 %v82, %v84
    %v87 = vadd.f32 %v83, %v85
    %v88 = vld [vmem:[%s3] sm:$0x1]
    %v89 = vld [vmem:[%s4] sm:$0x1]
    %vm90 = vcmask 130048
    %v91 = vsel %vm90, %v86, 0.0
    %92 = vadd.xlane.f32.xlu0 %v91
    %v93 = vpop.xlane.xlu0 %92
    %v94 = vsel %vm90, %v87, 0.0
    %95 = vadd.xlane.f32.xlu0 %v94
    %v96 = vpop.xlane.xlu0 %95
    %v97 = vrcp.pop 16.0
    %v98 = vmul.f32 %v93, %v97
    %v99 = vmul.f32 %v96, %v97
    %v100 = vsub.f32 %v86, %v98
    %v101 = vsub.f32 %v87, %v99
    %v102 = vmul.f32 %v100, %v100
    %v103 = vmul.f32 %v101, %v101
    %v104 = vsel %vm90, %v102, 0.0
    %105 = vadd.xlane.f32.xlu0 %v104
    %v106 = vpop.xlane.xlu0 %105
    %v107 = vsel %vm90, %v103, 0.0
    %108 = vadd.xlane.f32.xlu0 %v107
    %v109 = vpop.xlane.xlu0 %108
    %v110 = vmul.f32 %v106, %v97
    %v111 = vmul.f32 %v109, %v97
    %v112 = vadd.f32 %v110, 1e-12
    %v113 = vadd.f32 %v111, 1e-12
    %v114 = vrsqrt.pop %v112
    %v115 = vrsqrt.pop %v113
    %v116 = vmul.f32 %v100, %v114
    %v117 = vmul.f32 %v101, %v115
    %v119 = vlaneseq
    %v120 = vshrl.u32 %v119, 7
    %v121 = vsub.s32 0, %v120
    %v122 = vrot.slane %v88, %v121
    %v124 = vmul.f32 %v122, %v116
    %v125 = vmul.f32 %v122, %v117
    %v127 = vlaneseq
    %v128 = vshrl.u32 %v127, 7
    %v129 = vsub.s32 0, %v128
    %v130 = vrot.slane %v89, %v129
    %v132 = vadd.f32 %v124, %v130
    %v133 = vadd.f32 %v125, %v130
    %v134 = vld [vmem:[%s5] sm:$0xff]
    %v135 = vld [vmem:[%s5 + $0x8] sm:$0xff]
    %v136 = vld [vmem:[%s6] sm:$0x1]
    %v138 = vlaneseq
    %v139 = vshrl.u32 %v138, 7
    %v140 = vsub.s32 0, %v139
    %v141 = vrot.slane %v136, %v140
    %v144 = vsel %vm90, %v132, 0
    %v147 = vsel %vm90, %v133, 0
    %149 = vmatprep.subr.mxu0 0.0
    %150 = vmatpush1.msra.mxu0 %v134
    %151 = vmatprep.subr.mxu0 0.0
    %152 = vmatpush1.msra.mxu0 %v135
    %153 = vmatprep.subr.mxu0 0.0
    %154 = vmatpush1.msra.mxu0 0.0
    %155 = vmatprep.subr.mxu0 0.0
    %156 = vmatpush1.msra.mxu0 0.0
    %157 = vmatprep.subr.mxu0 0.0
    %158 = vmatpush1.msra.mxu0 0.0
    %159 = vmatprep.subr.mxu0 0.0
    %160 = vmatpush1.msra.mxu0 0.0
    %161 = vmatprep.subr.mxu0 0.0
    %162 = vmatpush1.msra.mxu0 0.0
    %163 = vmatprep.subr.mxu0 0.0
    %164 = vmatpush1.msra.mxu0 0.0
    %165 = vmatprep.subr.mxu0 0.0
    %166 = vmatpush1.msra.mxu0 0.0
    %167 = vmatprep.subr.mxu0 0.0
    %168 = vmatpush1.msra.mxu0 0.0
    %169 = vmatprep.subr.mxu0 0.0
    %170 = vmatpush1.msra.mxu0 0.0
    %171 = vmatprep.subr.mxu0 0.0
    %172 = vmatpush1.msra.mxu0 0.0
    %173 = vmatprep.subr.mxu0 0.0
    %174 = vmatpush1.msra.mxu0 0.0
    %175 = vmatprep.subr.mxu0 0.0
    %176 = vmatpush1.msra.mxu0 0.0
    %177 = vmatprep.subr.mxu0 0.0
    %178 = vmatpush1.msra.mxu0 0.0
    %179 = vmatprep.subr.mxu0 0.0
    %180 = vmatpush1.msra.mxu0 0.0
    %181 = vmatprep.subr.mxu0 0.0
    %182 = vmatpush1.msra.mxu0 0.0
    %183 = vmatprep.subr.mxu0 0.0
    %184 = vmatpush1.msra.mxu0 0.0
    %185 = vmatprep.subr.mxu0 0.0
    %186 = vmatpush1.msra.mxu0 0.0
    %187 = vmatprep.subr.mxu0 0.0
    %188 = vmatpush1.msra.mxu0 0.0
    %189 = vmatprep.subr.mxu0 0.0
    %190 = vmatpush1.msra.mxu0 0.0
    %191 = vmatprep.subr.mxu0 0.0
    %192 = vmatpush1.msra.mxu0 0.0
    %193 = vmatprep.subr.mxu0 0.0
    %194 = vmatpush1.msra.mxu0 0.0
    %195 = vmatprep.subr.mxu0 0.0
    %196 = vmatpush1.msra.mxu0 0.0
    %197 = vmatprep.subr.mxu0 0.0
    %198 = vmatpush1.msra.mxu0 0.0
    %199 = vmatprep.subr.mxu0 0.0
    %200 = vmatpush1.msra.mxu0 0.0
    %201 = vmatprep.subr.mxu0 0.0
    %202 = vmatpush1.msra.mxu0 0.0
    %203 = vmatprep.subr.mxu0 0.0
    %204 = vmatpush1.msra.mxu0 0.0
    %205 = vmatprep.subr.mxu0 0.0
    %206 = vmatpush1.msra.mxu0 0.0
    %207 = vmatprep.subr.mxu0 0.0
    %208 = vmatpush1.msra.mxu0 0.0
    %209 = vmatprep.subr.mxu0 0.0
    %210 = vmatpush1.msra.mxu0 0.0
    %211 = vmatprep.subr.mxu0 0.0
    %212 = vmatpush1.msra.mxu0 0.0
    %213 = vmatprep.mubr.f32.mxu0 0.0
    %214 = vmatmul.mubr.f32.gmra.mrb[0].mxu0 %v144
    %v215 = vpop.f32.mrb[0].mxu0
    %v216 = vadd.f32 %v141, %v215
    %v217 = vpop.f32.mrb[0].mxu0
    %218 = vmatprep.mubr.f32.mxu0 0.0
    %219 = vmatmul.mubr.f32.gmra.mrb[0].mxu0 %v147
    %v220 = vpop.f32.mrb[0].mxu0
    %v221 = vadd.f32 %v141, %v220
    %v222 = vpop.f32.mrb[0].mxu0
    %223 = vdwg.mxu0
    %v224 = vld [vmem:[%s7] sm:$0x1]
    %v225 = vld [vmem:[%s7 + $0x1] sm:$0x1]
    %v226 = vld [vmem:[%s7 + $0x2] sm:$0x1]
    %v227 = vld [vmem:[%s7 + $0x3] sm:$0x1]
    %v228 = vld [vmem:[%s7 + $0x4] sm:$0x1]
    %v229 = vld [vmem:[%s7 + $0x5] sm:$0x1]
    %v230 = vld [vmem:[%s7 + $0x6] sm:$0x1]
    %v231 = vld [vmem:[%s7 + $0x7] sm:$0x1]
    %v232 = vld [vmem:[%s8] sm:$0xff]
    %v233 = vld [vmem:[%s8 + $0x8] sm:$0xff]
    %v234 = vld [vmem:[%s8 + $0x10] sm:$0xff]
    %v235 = vld [vmem:[%s8 + $0x18] sm:$0xff]
    %v236 = vld [vmem:[%s8 + $0x20] sm:$0xff]
    %v237 = vld [vmem:[%s8 + $0x28] sm:$0xff]
    %v238 = vld [vmem:[%s8 + $0x30] sm:$0xff]
    %v239 = vld [vmem:[%s8 + $0x38] sm:$0xff]
    %v240 = vld [vmem:[%s8 + $0x40] sm:$0xff]
    %v241 = vld [vmem:[%s8 + $0x48] sm:$0xff]
    %v242 = vld [vmem:[%s8 + $0x50] sm:$0xff]
    %v243 = vld [vmem:[%s8 + $0x58] sm:$0xff]
    %v244 = vld [vmem:[%s8 + $0x60] sm:$0xff]
    %v245 = vld [vmem:[%s8 + $0x68] sm:$0xff]
    %v246 = vld [vmem:[%s8 + $0x70] sm:$0xff]
    %v247 = vld [vmem:[%s8 + $0x78] sm:$0xff]
    %v248 = vld [vmem:[%s8 + $0x80] sm:$0xff]
    %v249 = vld [vmem:[%s8 + $0x88] sm:$0xff]
    %v250 = vld [vmem:[%s8 + $0x90] sm:$0xff]
    %v251 = vld [vmem:[%s8 + $0x98] sm:$0xff]
    %v252 = vld [vmem:[%s8 + $0xa0] sm:$0xff]
    %v253 = vld [vmem:[%s8 + $0xa8] sm:$0xff]
    %v254 = vld [vmem:[%s8 + $0xb0] sm:$0xff]
    %v255 = vld [vmem:[%s8 + $0xb8] sm:$0xff]
    %v256 = vld [vmem:[%s8 + $0xc0] sm:$0xff]
    %v257 = vld [vmem:[%s8 + $0xc8] sm:$0xff]
    %v258 = vld [vmem:[%s8 + $0xd0] sm:$0xff]
    %v259 = vld [vmem:[%s8 + $0xd8] sm:$0xff]
    %v260 = vld [vmem:[%s8 + $0xe0] sm:$0xff]
    %v261 = vld [vmem:[%s8 + $0xe8] sm:$0xff]
    %v262 = vld [vmem:[%s8 + $0xf0] sm:$0xff]
    %v263 = vld [vmem:[%s8 + $0xf8] sm:$0xff]
    %v264 = vld [vmem:[%s9] sm:$0x1]
    %v265 = vld [vmem:[%s9 + $0x1] sm:$0x1]
    %v266 = vld [vmem:[%s9 + $0x2] sm:$0x1]
    %v267 = vld [vmem:[%s9 + $0x3] sm:$0x1]
    %v268 = vld [vmem:[%s9 + $0x4] sm:$0x1]
    %v269 = vld [vmem:[%s9 + $0x5] sm:$0x1]
    %v270 = vld [vmem:[%s9 + $0x6] sm:$0x1]
    %v271 = vld [vmem:[%s9 + $0x7] sm:$0x1]
    %v280 = vlaneseq
    %v281 = vshrl.u32 %v280, 7
    %v282 = vsub.s32 0, %v281
    %v283 = vrot.slane %v264, %v282
    %v284 = vlaneseq
    %v285 = vshrl.u32 %v284, 7
    %v286 = vsub.s32 0, %v285
    %v287 = vrot.slane %v265, %v286
    %v288 = vlaneseq
    %v289 = vshrl.u32 %v288, 7
    %v290 = vsub.s32 0, %v289
    %v291 = vrot.slane %v266, %v290
    %v292 = vlaneseq
    %v293 = vshrl.u32 %v292, 7
    %v294 = vsub.s32 0, %v293
    %v295 = vrot.slane %v267, %v294
    %v296 = vlaneseq
    %v297 = vshrl.u32 %v296, 7
    %v298 = vsub.s32 0, %v297
    %v299 = vrot.slane %v268, %v298
    %v300 = vlaneseq
    %v301 = vshrl.u32 %v300, 7
    %v302 = vsub.s32 0, %v301
    %v303 = vrot.slane %v269, %v302
    %v304 = vlaneseq
    %v305 = vshrl.u32 %v304, 7
    %v306 = vsub.s32 0, %v305
    %v307 = vrot.slane %v270, %v306
    %v308 = vlaneseq
    %v309 = vshrl.u32 %v308, 7
    %v310 = vsub.s32 0, %v309
    %v311 = vrot.slane %v271, %v310
    %vm320 = vcmask 261120
    %v322 = vsel %vm320, %v216, 0
    %324 = vmatprep.subr.mxu0 0.0
    %325 = vmatpush1.msra.mxu0 %v232
    %326 = vmatprep.subr.mxu0 0.0
    %327 = vmatpush1.msra.mxu0 %v233
    %328 = vmatprep.subr.mxu0 0.0
    %329 = vmatpush1.msra.mxu0 %v234
    %330 = vmatprep.subr.mxu0 0.0
    %331 = vmatpush1.msra.mxu0 %v235
    %332 = vmatprep.subr.mxu0 0.0
    %333 = vmatpush1.msra.mxu0 0.0
    %334 = vmatprep.subr.mxu0 0.0
    %335 = vmatpush1.msra.mxu0 0.0
    %336 = vmatprep.subr.mxu0 0.0
    %337 = vmatpush1.msra.mxu0 0.0
    %338 = vmatprep.subr.mxu0 0.0
    %339 = vmatpush1.msra.mxu0 0.0
    %340 = vmatprep.subr.mxu0 0.0
    %341 = vmatpush1.msra.mxu0 0.0
    %342 = vmatprep.subr.mxu0 0.0
    %343 = vmatpush1.msra.mxu0 0.0
    %344 = vmatprep.subr.mxu0 0.0
    %345 = vmatpush1.msra.mxu0 0.0
    %346 = vmatprep.subr.mxu0 0.0
    %347 = vmatpush1.msra.mxu0 0.0
    %348 = vmatprep.subr.mxu0 0.0
    %349 = vmatpush1.msra.mxu0 0.0
    %350 = vmatprep.subr.mxu0 0.0
    %351 = vmatpush1.msra.mxu0 0.0
    %352 = vmatprep.subr.mxu0 0.0
    %353 = vmatpush1.msra.mxu0 0.0
    %354 = vmatprep.subr.mxu0 0.0
    %355 = vmatpush1.msra.mxu0 0.0
    %356 = vmatprep.subr.mxu0 0.0
    %357 = vmatpush1.msra.mxu0 0.0
    %358 = vmatprep.subr.mxu0 0.0
    %359 = vmatpush1.msra.mxu0 0.0
    %360 = vmatprep.subr.mxu0 0.0
    %361 = vmatpush1.msra.mxu0 0.0
    %362 = vmatprep.subr.mxu0 0.0
    %363 = vmatpush1.msra.mxu0 0.0
    %364 = vmatprep.subr.mxu0 0.0
    %365 = vmatpush1.msra.mxu0 0.0
    %366 = vmatprep.subr.mxu0 0.0
    %367 = vmatpush1.msra.mxu0 0.0
    %368 = vmatprep.subr.mxu0 0.0
    %369 = vmatpush1.msra.mxu0 0.0
    %370 = vmatprep.subr.mxu0 0.0
    %371 = vmatpush1.msra.mxu0 0.0
    %372 = vmatprep.subr.mxu0 0.0
    %373 = vmatpush1.msra.mxu0 0.0
    %374 = vmatprep.subr.mxu0 0.0
    %375 = vmatpush1.msra.mxu0 0.0
    %376 = vmatprep.subr.mxu0 0.0
    %377 = vmatpush1.msra.mxu0 0.0
    %378 = vmatprep.subr.mxu0 0.0
    %379 = vmatpush1.msra.mxu0 0.0
    %380 = vmatprep.subr.mxu0 0.0
    %381 = vmatpush1.msra.mxu0 0.0
    %382 = vmatprep.subr.mxu0 0.0
    %383 = vmatpush1.msra.mxu0 0.0
    %384 = vmatprep.subr.mxu0 0.0
    %385 = vmatpush1.msra.mxu0 0.0
    %386 = vmatprep.subr.mxu0 0.0
    %387 = vmatpush1.msra.mxu0 0.0
    %388 = vmatprep.mubr.f32.mxu0 0.0
    %389 = vmatmul.mubr.f32.gmra.mrb[0].mxu0 %v322
    %v390 = vpop.f32.mrb[0].mxu0
    %v391 = vadd.f32 %v283, %v390
    %v392 = vpop.f32.mrb[0].mxu0
    %393 = vdwg.mxu0
    %394 = vmatprep.subr.mxu0 0.0
    %395 = vmatpush1.msra.mxu0 %v236
    %396 = vmatprep.subr.mxu0 0.0
    %397 = vmatpush1.msra.mxu0 %v237
    %398 = vmatprep.subr.mxu0 0.0
    %399 = vmatpush1.msra.mxu0 %v238
    %400 = vmatprep.subr.mxu0 0.0
    %401 = vmatpush1.msra.mxu0 %v239
    %402 = vmatprep.subr.mxu0 0.0
    %403 = vmatpush1.msra.mxu0 0.0
    %404 = vmatprep.subr.mxu0 0.0
    %405 = vmatpush1.msra.mxu0 0.0
    %406 = vmatprep.subr.mxu0 0.0
    %407 = vmatpush1.msra.mxu0 0.0
    %408 = vmatprep.subr.mxu0 0.0
    %409 = vmatpush1.msra.mxu0 0.0
    %410 = vmatprep.subr.mxu0 0.0
    %411 = vmatpush1.msra.mxu0 0.0
    %412 = vmatprep.subr.mxu0 0.0
    %413 = vmatpush1.msra.mxu0 0.0
    %414 = vmatprep.subr.mxu0 0.0
    %415 = vmatpush1.msra.mxu0 0.0
    %416 = vmatprep.subr.mxu0 0.0
    %417 = vmatpush1.msra.mxu0 0.0
    %418 = vmatprep.subr.mxu0 0.0
    %419 = vmatpush1.msra.mxu0 0.0
    %420 = vmatprep.subr.mxu0 0.0
    %421 = vmatpush1.msra.mxu0 0.0
    %422 = vmatprep.subr.mxu0 0.0
    %423 = vmatpush1.msra.mxu0 0.0
    %424 = vmatprep.subr.mxu0 0.0
    %425 = vmatpush1.msra.mxu0 0.0
    %426 = vmatprep.subr.mxu0 0.0
    %427 = vmatpush1.msra.mxu0 0.0
    %428 = vmatprep.subr.mxu0 0.0
    %429 = vmatpush1.msra.mxu0 0.0
    %430 = vmatprep.subr.mxu0 0.0
    %431 = vmatpush1.msra.mxu0 0.0
    %432 = vmatprep.subr.mxu0 0.0
    %433 = vmatpush1.msra.mxu0 0.0
    %434 = vmatprep.subr.mxu0 0.0
    %435 = vmatpush1.msra.mxu0 0.0
    %436 = vmatprep.subr.mxu0 0.0
    %437 = vmatpush1.msra.mxu0 0.0
    %438 = vmatprep.subr.mxu0 0.0
    %439 = vmatpush1.msra.mxu0 0.0
    %440 = vmatprep.subr.mxu0 0.0
    %441 = vmatpush1.msra.mxu0 0.0
    %442 = vmatprep.subr.mxu0 0.0
    %443 = vmatpush1.msra.mxu0 0.0
    %444 = vmatprep.subr.mxu0 0.0
    %445 = vmatpush1.msra.mxu0 0.0
    %446 = vmatprep.subr.mxu0 0.0
    %447 = vmatpush1.msra.mxu0 0.0
    %448 = vmatprep.subr.mxu0 0.0
    %449 = vmatpush1.msra.mxu0 0.0
    %450 = vmatprep.subr.mxu0 0.0
    %451 = vmatpush1.msra.mxu0 0.0
    %452 = vmatprep.subr.mxu0 0.0
    %453 = vmatpush1.msra.mxu0 0.0
    %454 = vmatprep.subr.mxu0 0.0
    %455 = vmatpush1.msra.mxu0 0.0
    %456 = vmatprep.subr.mxu0 0.0
    %457 = vmatpush1.msra.mxu0 0.0
    %458 = vmatprep.mubr.f32.mxu0 0.0
    %459 = vmatmul.mubr.f32.gmra.mrb[0].mxu0 %v322
    %v460 = vpop.f32.mrb[0].mxu0
    %v461 = vadd.f32 %v287, %v460
    %v462 = vpop.f32.mrb[0].mxu0
    %463 = vdwg.mxu0
    %464 = vmatprep.subr.mxu0 0.0
    %465 = vmatpush1.msra.mxu0 %v240
    %466 = vmatprep.subr.mxu0 0.0
    %467 = vmatpush1.msra.mxu0 %v241
    %468 = vmatprep.subr.mxu0 0.0
    %469 = vmatpush1.msra.mxu0 %v242
    %470 = vmatprep.subr.mxu0 0.0
    %471 = vmatpush1.msra.mxu0 %v243
    %472 = vmatprep.subr.mxu0 0.0
    %473 = vmatpush1.msra.mxu0 0.0
    %474 = vmatprep.subr.mxu0 0.0
    %475 = vmatpush1.msra.mxu0 0.0
    %476 = vmatprep.subr.mxu0 0.0
    %477 = vmatpush1.msra.mxu0 0.0
    %478 = vmatprep.subr.mxu0 0.0
    %479 = vmatpush1.msra.mxu0 0.0
    %480 = vmatprep.subr.mxu0 0.0
    %481 = vmatpush1.msra.mxu0 0.0
    %482 = vmatprep.subr.mxu0 0.0
    %483 = vmatpush1.msra.mxu0 0.0
    %484 = vmatprep.subr.mxu0 0.0
    %485 = vmatpush1.msra.mxu0 0.0
    %486 = vmatprep.subr.mxu0 0.0
    %487 = vmatpush1.msra.mxu0 0.0
    %488 = vmatprep.subr.mxu0 0.0
    %489 = vmatpush1.msra.mxu0 0.0
    %490 = vmatprep.subr.mxu0 0.0
    %491 = vmatpush1.msra.mxu0 0.0
    %492 = vmatprep.subr.mxu0 0.0
    %493 = vmatpush1.msra.mxu0 0.0
    %494 = vmatprep.subr.mxu0 0.0
    %495 = vmatpush1.msra.mxu0 0.0
    %496 = vmatprep.subr.mxu0 0.0
    %497 = vmatpush1.msra.mxu0 0.0
    %498 = vmatprep.subr.mxu0 0.0
    %499 = vmatpush1.msra.mxu0 0.0
    %500 = vmatprep.subr.mxu0 0.0
    %501 = vmatpush1.msra.mxu0 0.0
    %502 = vmatprep.subr.mxu0 0.0
    %503 = vmatpush1.msra.mxu0 0.0
    %504 = vmatprep.subr.mxu0 0.0
    %505 = vmatpush1.msra.mxu0 0.0
    %506 = vmatprep.subr.mxu0 0.0
    %507 = vmatpush1.msra.mxu0 0.0
    %508 = vmatprep.subr.mxu0 0.0
    %509 = vmatpush1.msra.mxu0 0.0
    %510 = vmatprep.subr.mxu0 0.0
    %511 = vmatpush1.msra.mxu0 0.0
    %512 = vmatprep.subr.mxu0 0.0
    %513 = vmatpush1.msra.mxu0 0.0
    %514 = vmatprep.subr.mxu0 0.0
    %515 = vmatpush1.msra.mxu0 0.0
    %516 = vmatprep.subr.mxu0 0.0
    %517 = vmatpush1.msra.mxu0 0.0
    %518 = vmatprep.subr.mxu0 0.0
    %519 = vmatpush1.msra.mxu0 0.0
    %520 = vmatprep.subr.mxu0 0.0
    %521 = vmatpush1.msra.mxu0 0.0
    %522 = vmatprep.subr.mxu0 0.0
    %523 = vmatpush1.msra.mxu0 0.0
    %524 = vmatprep.subr.mxu0 0.0
    %525 = vmatpush1.msra.mxu0 0.0
    %526 = vmatprep.subr.mxu0 0.0
    %527 = vmatpush1.msra.mxu0 0.0
    %528 = vmatprep.mubr.f32.mxu0 0.0
    %529 = vmatmul.mubr.f32.gmra.mrb[0].mxu0 %v322
    %v530 = vpop.f32.mrb[0].mxu0
    %v531 = vadd.f32 %v291, %v530
    %v532 = vpop.f32.mrb[0].mxu0
    %533 = vdwg.mxu0
    %534 = vmatprep.subr.mxu0 0.0
    %535 = vmatpush1.msra.mxu0 %v244
    %536 = vmatprep.subr.mxu0 0.0
    %537 = vmatpush1.msra.mxu0 %v245
    %538 = vmatprep.subr.mxu0 0.0
    %539 = vmatpush1.msra.mxu0 %v246
    %540 = vmatprep.subr.mxu0 0.0
    %541 = vmatpush1.msra.mxu0 %v247
    %542 = vmatprep.subr.mxu0 0.0
    %543 = vmatpush1.msra.mxu0 0.0
    %544 = vmatprep.subr.mxu0 0.0
    %545 = vmatpush1.msra.mxu0 0.0
    %546 = vmatprep.subr.mxu0 0.0
    %547 = vmatpush1.msra.mxu0 0.0
    %548 = vmatprep.subr.mxu0 0.0
    %549 = vmatpush1.msra.mxu0 0.0
    %550 = vmatprep.subr.mxu0 0.0
    %551 = vmatpush1.msra.mxu0 0.0
    %552 = vmatprep.subr.mxu0 0.0
    %553 = vmatpush1.msra.mxu0 0.0
    %554 = vmatprep.subr.mxu0 0.0
    %555 = vmatpush1.msra.mxu0 0.0
    %556 = vmatprep.subr.mxu0 0.0
    %557 = vmatpush1.msra.mxu0 0.0
    %558 = vmatprep.subr.mxu0 0.0
    %559 = vmatpush1.msra.mxu0 0.0
    %560 = vmatprep.subr.mxu0 0.0
    %561 = vmatpush1.msra.mxu0 0.0
    %562 = vmatprep.subr.mxu0 0.0
    %563 = vmatpush1.msra.mxu0 0.0
    %564 = vmatprep.subr.mxu0 0.0
    %565 = vmatpush1.msra.mxu0 0.0
    %566 = vmatprep.subr.mxu0 0.0
    %567 = vmatpush1.msra.mxu0 0.0
    %568 = vmatprep.subr.mxu0 0.0
    %569 = vmatpush1.msra.mxu0 0.0
    %570 = vmatprep.subr.mxu0 0.0
    %571 = vmatpush1.msra.mxu0 0.0
    %572 = vmatprep.subr.mxu0 0.0
    %573 = vmatpush1.msra.mxu0 0.0
    %574 = vmatprep.subr.mxu0 0.0
    %575 = vmatpush1.msra.mxu0 0.0
    %576 = vmatprep.subr.mxu0 0.0
    %577 = vmatpush1.msra.mxu0 0.0
    %578 = vmatprep.subr.mxu0 0.0
    %579 = vmatpush1.msra.mxu0 0.0
    %580 = vmatprep.subr.mxu0 0.0
    %581 = vmatpush1.msra.mxu0 0.0
    %582 = vmatprep.subr.mxu0 0.0
    %583 = vmatpush1.msra.mxu0 0.0
    %584 = vmatprep.subr.mxu0 0.0
    %585 = vmatpush1.msra.mxu0 0.0
    %586 = vmatprep.subr.mxu0 0.0
    %587 = vmatpush1.msra.mxu0 0.0
    %588 = vmatprep.subr.mxu0 0.0
    %589 = vmatpush1.msra.mxu0 0.0
    %590 = vmatprep.subr.mxu0 0.0
    %591 = vmatpush1.msra.mxu0 0.0
    %592 = vmatprep.subr.mxu0 0.0
    %593 = vmatpush1.msra.mxu0 0.0
    %594 = vmatprep.subr.mxu0 0.0
    %595 = vmatpush1.msra.mxu0 0.0
    %596 = vmatprep.subr.mxu0 0.0
    %597 = vmatpush1.msra.mxu0 0.0
    %598 = vmatprep.mubr.f32.mxu0 0.0
    %599 = vmatmul.mubr.f32.gmra.mrb[0].mxu0 %v322
    %v600 = vpop.f32.mrb[0].mxu0
    %v601 = vadd.f32 %v295, %v600
    %v602 = vpop.f32.mrb[0].mxu0
    %603 = vdwg.mxu0
    %v605 = vsel %vm320, %v221, 0
    %607 = vmatprep.subr.mxu0 0.0
    %608 = vmatpush1.msra.mxu0 %v248
    %609 = vmatprep.subr.mxu0 0.0
    %610 = vmatpush1.msra.mxu0 %v249
    %611 = vmatprep.subr.mxu0 0.0
    %612 = vmatpush1.msra.mxu0 %v250
    %613 = vmatprep.subr.mxu0 0.0
    %614 = vmatpush1.msra.mxu0 %v251
    %615 = vmatprep.subr.mxu0 0.0
    %616 = vmatpush1.msra.mxu0 0.0
    %617 = vmatprep.subr.mxu0 0.0
    %618 = vmatpush1.msra.mxu0 0.0
    %619 = vmatprep.subr.mxu0 0.0
    %620 = vmatpush1.msra.mxu0 0.0
    %621 = vmatprep.subr.mxu0 0.0
    %622 = vmatpush1.msra.mxu0 0.0
    %623 = vmatprep.subr.mxu0 0.0
    %624 = vmatpush1.msra.mxu0 0.0
    %625 = vmatprep.subr.mxu0 0.0
    %626 = vmatpush1.msra.mxu0 0.0
    %627 = vmatprep.subr.mxu0 0.0
    %628 = vmatpush1.msra.mxu0 0.0
    %629 = vmatprep.subr.mxu0 0.0
    %630 = vmatpush1.msra.mxu0 0.0
    %631 = vmatprep.subr.mxu0 0.0
    %632 = vmatpush1.msra.mxu0 0.0
    %633 = vmatprep.subr.mxu0 0.0
    %634 = vmatpush1.msra.mxu0 0.0
    %635 = vmatprep.subr.mxu0 0.0
    %636 = vmatpush1.msra.mxu0 0.0
    %637 = vmatprep.subr.mxu0 0.0
    %638 = vmatpush1.msra.mxu0 0.0
    %639 = vmatprep.subr.mxu0 0.0
    %640 = vmatpush1.msra.mxu0 0.0
    %641 = vmatprep.subr.mxu0 0.0
    %642 = vmatpush1.msra.mxu0 0.0
    %643 = vmatprep.subr.mxu0 0.0
    %644 = vmatpush1.msra.mxu0 0.0
    %645 = vmatprep.subr.mxu0 0.0
    %646 = vmatpush1.msra.mxu0 0.0
    %647 = vmatprep.subr.mxu0 0.0
    %648 = vmatpush1.msra.mxu0 0.0
    %649 = vmatprep.subr.mxu0 0.0
    %650 = vmatpush1.msra.mxu0 0.0
    %651 = vmatprep.subr.mxu0 0.0
    %652 = vmatpush1.msra.mxu0 0.0
    %653 = vmatprep.subr.mxu0 0.0
    %654 = vmatpush1.msra.mxu0 0.0
    %655 = vmatprep.subr.mxu0 0.0
    %656 = vmatpush1.msra.mxu0 0.0
    %657 = vmatprep.subr.mxu0 0.0
    %658 = vmatpush1.msra.mxu0 0.0
    %659 = vmatprep.subr.mxu0 0.0
    %660 = vmatpush1.msra.mxu0 0.0
    %661 = vmatprep.subr.mxu0 0.0
    %662 = vmatpush1.msra.mxu0 0.0
    %663 = vmatprep.subr.mxu0 0.0
    %664 = vmatpush1.msra.mxu0 0.0
    %665 = vmatprep.subr.mxu0 0.0
    %666 = vmatpush1.msra.mxu0 0.0
    %667 = vmatprep.subr.mxu0 0.0
    %668 = vmatpush1.msra.mxu0 0.0
    %669 = vmatprep.subr.mxu0 0.0
    %670 = vmatpush1.msra.mxu0 0.0
    %671 = vmatprep.mubr.f32.mxu0 0.0
    %672 = vmatmul.mubr.f32.gmra.mrb[0].mxu0 %v605
    %v673 = vpop.f32.mrb[0].mxu0
    %v674 = vadd.f32 %v299, %v673
    %v675 = vpop.f32.mrb[0].mxu0
    %676 = vdwg.mxu0
    %677 = vmatprep.subr.mxu0 0.0
    %678 = vmatpush1.msra.mxu0 %v252
    %679 = vmatprep.subr.mxu0 0.0
    %680 = vmatpush1.msra.mxu0 %v253
    %681 = vmatprep.subr.mxu0 0.0
    %682 = vmatpush1.msra.mxu0 %v254
    %683 = vmatprep.subr.mxu0 0.0
    %684 = vmatpush1.msra.mxu0 %v255
    %685 = vmatprep.subr.mxu0 0.0
    %686 = vmatpush1.msra.mxu0 0.0
    %687 = vmatprep.subr.mxu0 0.0
    %688 = vmatpush1.msra.mxu0 0.0
    %689 = vmatprep.subr.mxu0 0.0
    %690 = vmatpush1.msra.mxu0 0.0
    %691 = vmatprep.subr.mxu0 0.0
    %692 = vmatpush1.msra.mxu0 0.0
    %693 = vmatprep.subr.mxu0 0.0
    %694 = vmatpush1.msra.mxu0 0.0
    %695 = vmatprep.subr.mxu0 0.0
    %696 = vmatpush1.msra.mxu0 0.0
    %697 = vmatprep.subr.mxu0 0.0
    %698 = vmatpush1.msra.mxu0 0.0
    %699 = vmatprep.subr.mxu0 0.0
    %700 = vmatpush1.msra.mxu0 0.0
    %701 = vmatprep.subr.mxu0 0.0
    %702 = vmatpush1.msra.mxu0 0.0
    %703 = vmatprep.subr.mxu0 0.0
    %704 = vmatpush1.msra.mxu0 0.0
    %705 = vmatprep.subr.mxu0 0.0
    %706 = vmatpush1.msra.mxu0 0.0
    %707 = vmatprep.subr.mxu0 0.0
    %708 = vmatpush1.msra.mxu0 0.0
    %709 = vmatprep.subr.mxu0 0.0
    %710 = vmatpush1.msra.mxu0 0.0
    %711 = vmatprep.subr.mxu0 0.0
    %712 = vmatpush1.msra.mxu0 0.0
    %713 = vmatprep.subr.mxu0 0.0
    %714 = vmatpush1.msra.mxu0 0.0
    %715 = vmatprep.subr.mxu0 0.0
    %716 = vmatpush1.msra.mxu0 0.0
    %717 = vmatprep.subr.mxu0 0.0
    %718 = vmatpush1.msra.mxu0 0.0
    %719 = vmatprep.subr.mxu0 0.0
    %720 = vmatpush1.msra.mxu0 0.0
    %721 = vmatprep.subr.mxu0 0.0
    %722 = vmatpush1.msra.mxu0 0.0
    %723 = vmatprep.subr.mxu0 0.0
    %724 = vmatpush1.msra.mxu0 0.0
    %725 = vmatprep.subr.mxu0 0.0
    %726 = vmatpush1.msra.mxu0 0.0
    %727 = vmatprep.subr.mxu0 0.0
    %728 = vmatpush1.msra.mxu0 0.0
    %729 = vmatprep.subr.mxu0 0.0
    %730 = vmatpush1.msra.mxu0 0.0
    %731 = vmatprep.subr.mxu0 0.0
    %732 = vmatpush1.msra.mxu0 0.0
    %733 = vmatprep.subr.mxu0 0.0
    %734 = vmatpush1.msra.mxu0 0.0
    %735 = vmatprep.subr.mxu0 0.0
    %736 = vmatpush1.msra.mxu0 0.0
    %737 = vmatprep.subr.mxu0 0.0
    %738 = vmatpush1.msra.mxu0 0.0
    %739 = vmatprep.subr.mxu0 0.0
    %740 = vmatpush1.msra.mxu0 0.0
    %741 = vmatprep.mubr.f32.mxu0 0.0
    %742 = vmatmul.mubr.f32.gmra.mrb[0].mxu0 %v605
    %v743 = vpop.f32.mrb[0].mxu0
    %v744 = vadd.f32 %v303, %v743
    %v745 = vpop.f32.mrb[0].mxu0
    %746 = vdwg.mxu0
    %747 = vmatprep.subr.mxu0 0.0
    %748 = vmatpush1.msra.mxu0 %v256
    %749 = vmatprep.subr.mxu0 0.0
    %750 = vmatpush1.msra.mxu0 %v257
    %751 = vmatprep.subr.mxu0 0.0
    %752 = vmatpush1.msra.mxu0 %v258
    %753 = vmatprep.subr.mxu0 0.0
    %754 = vmatpush1.msra.mxu0 %v259
    %755 = vmatprep.subr.mxu0 0.0
    %756 = vmatpush1.msra.mxu0 0.0
    %757 = vmatprep.subr.mxu0 0.0
    %758 = vmatpush1.msra.mxu0 0.0
    %759 = vmatprep.subr.mxu0 0.0
    %760 = vmatpush1.msra.mxu0 0.0
    %761 = vmatprep.subr.mxu0 0.0
    %762 = vmatpush1.msra.mxu0 0.0
    %763 = vmatprep.subr.mxu0 0.0
    %764 = vmatpush1.msra.mxu0 0.0
    %765 = vmatprep.subr.mxu0 0.0
    %766 = vmatpush1.msra.mxu0 0.0
    %767 = vmatprep.subr.mxu0 0.0
    %768 = vmatpush1.msra.mxu0 0.0
    %769 = vmatprep.subr.mxu0 0.0
    %770 = vmatpush1.msra.mxu0 0.0
    %771 = vmatprep.subr.mxu0 0.0
    %772 = vmatpush1.msra.mxu0 0.0
    %773 = vmatprep.subr.mxu0 0.0
    %774 = vmatpush1.msra.mxu0 0.0
    %775 = vmatprep.subr.mxu0 0.0
    %776 = vmatpush1.msra.mxu0 0.0
    %777 = vmatprep.subr.mxu0 0.0
    %778 = vmatpush1.msra.mxu0 0.0
    %779 = vmatprep.subr.mxu0 0.0
    %780 = vmatpush1.msra.mxu0 0.0
    %781 = vmatprep.subr.mxu0 0.0
    %782 = vmatpush1.msra.mxu0 0.0
    %783 = vmatprep.subr.mxu0 0.0
    %784 = vmatpush1.msra.mxu0 0.0
    %785 = vmatprep.subr.mxu0 0.0
    %786 = vmatpush1.msra.mxu0 0.0
    %787 = vmatprep.subr.mxu0 0.0
    %788 = vmatpush1.msra.mxu0 0.0
    %789 = vmatprep.subr.mxu0 0.0
    %790 = vmatpush1.msra.mxu0 0.0
    %791 = vmatprep.subr.mxu0 0.0
    %792 = vmatpush1.msra.mxu0 0.0
    %793 = vmatprep.subr.mxu0 0.0
    %794 = vmatpush1.msra.mxu0 0.0
    %795 = vmatprep.subr.mxu0 0.0
    %796 = vmatpush1.msra.mxu0 0.0
    %797 = vmatprep.subr.mxu0 0.0
    %798 = vmatpush1.msra.mxu0 0.0
    %799 = vmatprep.subr.mxu0 0.0
    %800 = vmatpush1.msra.mxu0 0.0
    %801 = vmatprep.subr.mxu0 0.0
    %802 = vmatpush1.msra.mxu0 0.0
    %803 = vmatprep.subr.mxu0 0.0
    %804 = vmatpush1.msra.mxu0 0.0
    %805 = vmatprep.subr.mxu0 0.0
    %806 = vmatpush1.msra.mxu0 0.0
    %807 = vmatprep.subr.mxu0 0.0
    %808 = vmatpush1.msra.mxu0 0.0
    %809 = vmatprep.subr.mxu0 0.0
    %810 = vmatpush1.msra.mxu0 0.0
    %811 = vmatprep.mubr.f32.mxu0 0.0
    %812 = vmatmul.mubr.f32.gmra.mrb[0].mxu0 %v605
    %v813 = vpop.f32.mrb[0].mxu0
    %v814 = vadd.f32 %v307, %v813
    %v815 = vpop.f32.mrb[0].mxu0
    %816 = vdwg.mxu0
    %817 = vmatprep.subr.mxu0 0.0
    %818 = vmatpush1.msra.mxu0 %v260
    %819 = vmatprep.subr.mxu0 0.0
    %820 = vmatpush1.msra.mxu0 %v261
    %821 = vmatprep.subr.mxu0 0.0
    %822 = vmatpush1.msra.mxu0 %v262
    %823 = vmatprep.subr.mxu0 0.0
    %824 = vmatpush1.msra.mxu0 %v263
    %825 = vmatprep.subr.mxu0 0.0
    %826 = vmatpush1.msra.mxu0 0.0
    %827 = vmatprep.subr.mxu0 0.0
    %828 = vmatpush1.msra.mxu0 0.0
    %829 = vmatprep.subr.mxu0 0.0
    %830 = vmatpush1.msra.mxu0 0.0
    %831 = vmatprep.subr.mxu0 0.0
    %832 = vmatpush1.msra.mxu0 0.0
    %833 = vmatprep.subr.mxu0 0.0
    %834 = vmatpush1.msra.mxu0 0.0
    %835 = vmatprep.subr.mxu0 0.0
    %836 = vmatpush1.msra.mxu0 0.0
    %837 = vmatprep.subr.mxu0 0.0
    %838 = vmatpush1.msra.mxu0 0.0
    %839 = vmatprep.subr.mxu0 0.0
    %840 = vmatpush1.msra.mxu0 0.0
    %841 = vmatprep.subr.mxu0 0.0
    %842 = vmatpush1.msra.mxu0 0.0
    %843 = vmatprep.subr.mxu0 0.0
    %844 = vmatpush1.msra.mxu0 0.0
    %845 = vmatprep.subr.mxu0 0.0
    %846 = vmatpush1.msra.mxu0 0.0
    %847 = vmatprep.subr.mxu0 0.0
    %848 = vmatpush1.msra.mxu0 0.0
    %849 = vmatprep.subr.mxu0 0.0
    %850 = vmatpush1.msra.mxu0 0.0
    %851 = vmatprep.subr.mxu0 0.0
    %852 = vmatpush1.msra.mxu0 0.0
    %853 = vmatprep.subr.mxu0 0.0
    %854 = vmatpush1.msra.mxu0 0.0
    %855 = vmatprep.subr.mxu0 0.0
    %856 = vmatpush1.msra.mxu0 0.0
    %857 = vmatprep.subr.mxu0 0.0
    %858 = vmatpush1.msra.mxu0 0.0
    %859 = vmatprep.subr.mxu0 0.0
    %860 = vmatpush1.msra.mxu0 0.0
    %861 = vmatprep.subr.mxu0 0.0
    %862 = vmatpush1.msra.mxu0 0.0
    %863 = vmatprep.subr.mxu0 0.0
    %864 = vmatpush1.msra.mxu0 0.0
    %865 = vmatprep.subr.mxu0 0.0
    %866 = vmatpush1.msra.mxu0 0.0
    %867 = vmatprep.subr.mxu0 0.0
    %868 = vmatpush1.msra.mxu0 0.0
    %869 = vmatprep.subr.mxu0 0.0
    %870 = vmatpush1.msra.mxu0 0.0
    %871 = vmatprep.subr.mxu0 0.0
    %872 = vmatpush1.msra.mxu0 0.0
    %873 = vmatprep.subr.mxu0 0.0
    %874 = vmatpush1.msra.mxu0 0.0
    %875 = vmatprep.subr.mxu0 0.0
    %876 = vmatpush1.msra.mxu0 0.0
    %877 = vmatprep.subr.mxu0 0.0
    %878 = vmatpush1.msra.mxu0 0.0
    %879 = vmatprep.subr.mxu0 0.0
    %880 = vmatpush1.msra.mxu0 0.0
    %881 = vmatprep.mubr.f32.mxu0 0.0
    %882 = vmatmul.mubr.f32.gmra.mrb[0].mxu0 %v605
    %v883 = vpop.f32.mrb[0].mxu0
    %v884 = vadd.f32 %v311, %v883
    %v885 = vpop.f32.mrb[0].mxu0
    %886 = vdwg.mxu0
    %v887 = vld [vmem:[%s10] sm:$0xff]
    %v888 = vld [vmem:[%s10 + $0x8] sm:$0xff]
    %v889 = vld [vmem:[%s10 + $0x10] sm:$0xff]
    %v890 = vld [vmem:[%s10 + $0x18] sm:$0xff]
    %v891 = vld [vmem:[%s10 + $0x20] sm:$0xff]
    %v892 = vld [vmem:[%s10 + $0x28] sm:$0xff]
    %v893 = vld [vmem:[%s10 + $0x30] sm:$0xff]
    %v894 = vld [vmem:[%s10 + $0x38] sm:$0xff]
    %v895 = vld [vmem:[%s10 + $0x40] sm:$0xff]
    %v896 = vld [vmem:[%s10 + $0x48] sm:$0xff]
    %v897 = vld [vmem:[%s10 + $0x50] sm:$0xff]
    %v898 = vld [vmem:[%s10 + $0x58] sm:$0xff]
    %v899 = vld [vmem:[%s10 + $0x60] sm:$0xff]
    %v900 = vld [vmem:[%s10 + $0x68] sm:$0xff]
    %v901 = vld [vmem:[%s10 + $0x70] sm:$0xff]
    %v902 = vld [vmem:[%s10 + $0x78] sm:$0xff]
    %v903 = vld [vmem:[%s10 + $0x80] sm:$0xff]
    %v904 = vld [vmem:[%s10 + $0x88] sm:$0xff]
    %v905 = vld [vmem:[%s10 + $0x90] sm:$0xff]
    %v906 = vld [vmem:[%s10 + $0x98] sm:$0xff]
    %v907 = vld [vmem:[%s10 + $0xa0] sm:$0xff]
    %v908 = vld [vmem:[%s10 + $0xa8] sm:$0xff]
    %v909 = vld [vmem:[%s10 + $0xb0] sm:$0xff]
    %v910 = vld [vmem:[%s10 + $0xb8] sm:$0xff]
    %v911 = vld [vmem:[%s10 + $0xc0] sm:$0xff]
    %v912 = vld [vmem:[%s10 + $0xc8] sm:$0xff]
    %v913 = vld [vmem:[%s10 + $0xd0] sm:$0xff]
    %v914 = vld [vmem:[%s10 + $0xd8] sm:$0xff]
    %v915 = vld [vmem:[%s10 + $0xe0] sm:$0xff]
    %v916 = vld [vmem:[%s10 + $0xe8] sm:$0xff]
    %v917 = vld [vmem:[%s10 + $0xf0] sm:$0xff]
    %v918 = vld [vmem:[%s10 + $0xf8] sm:$0xff]
    %v919 = vld [vmem:[%s11] sm:$0x1]
    %v920 = vld [vmem:[%s11 + $0x1] sm:$0x1]
    %v921 = vld [vmem:[%s11 + $0x2] sm:$0x1]
    %v922 = vld [vmem:[%s11 + $0x3] sm:$0x1]
    %v923 = vld [vmem:[%s11 + $0x4] sm:$0x1]
    %v924 = vld [vmem:[%s11 + $0x5] sm:$0x1]
    %v925 = vld [vmem:[%s11 + $0x6] sm:$0x1]
    %v926 = vld [vmem:[%s11 + $0x7] sm:$0x1]
    %v935 = vlaneseq
    %v936 = vshrl.u32 %v935, 7
    %v937 = vsub.s32 0, %v936
    %v938 = vrot.slane %v919, %v937
    %v939 = vlaneseq
    %v940 = vshrl.u32 %v939, 7
    %v941 = vsub.s32 0, %v940
    %v942 = vrot.slane %v920, %v941
    %v943 = vlaneseq
    %v944 = vshrl.u32 %v943, 7
    %v945 = vsub.s32 0, %v944
    %v946 = vrot.slane %v921, %v945
    %v947 = vlaneseq
    %v948 = vshrl.u32 %v947, 7
    %v949 = vsub.s32 0, %v948
    %v950 = vrot.slane %v922, %v949
    %v951 = vlaneseq
    %v952 = vshrl.u32 %v951, 7
    %v953 = vsub.s32 0, %v952
    %v954 = vrot.slane %v923, %v953
    %v955 = vlaneseq
    %v956 = vshrl.u32 %v955, 7
    %v957 = vsub.s32 0, %v956
    %v958 = vrot.slane %v924, %v957
    %v959 = vlaneseq
    %v960 = vshrl.u32 %v959, 7
    %v961 = vsub.s32 0, %v960
    %v962 = vrot.slane %v925, %v961
    %v963 = vlaneseq
    %v964 = vshrl.u32 %v963, 7
    %v965 = vsub.s32 0, %v964
    %v966 = vrot.slane %v926, %v965
    %975 = vmatprep.subr.mxu0 0.0
    %976 = vmatpush1.msra.mxu0 %v887
    %977 = vmatprep.subr.mxu0 0.0
    %978 = vmatpush1.msra.mxu0 %v888
    %979 = vmatprep.subr.mxu0 0.0
    %980 = vmatpush1.msra.mxu0 %v889
    %981 = vmatprep.subr.mxu0 0.0
    %982 = vmatpush1.msra.mxu0 %v890
    %983 = vmatprep.subr.mxu0 0.0
    %984 = vmatpush1.msra.mxu0 0.0
    %985 = vmatprep.subr.mxu0 0.0
    %986 = vmatpush1.msra.mxu0 0.0
    %987 = vmatprep.subr.mxu0 0.0
    %988 = vmatpush1.msra.mxu0 0.0
    %989 = vmatprep.subr.mxu0 0.0
    %990 = vmatpush1.msra.mxu0 0.0
    %991 = vmatprep.subr.mxu0 0.0
    %992 = vmatpush1.msra.mxu0 0.0
    %993 = vmatprep.subr.mxu0 0.0
    %994 = vmatpush1.msra.mxu0 0.0
    %995 = vmatprep.subr.mxu0 0.0
    %996 = vmatpush1.msra.mxu0 0.0
    %997 = vmatprep.subr.mxu0 0.0
    %998 = vmatpush1.msra.mxu0 0.0
    %999 = vmatprep.subr.mxu0 0.0
    %1000 = vmatpush1.msra.mxu0 0.0
    %1001 = vmatprep.subr.mxu0 0.0
    %1002 = vmatpush1.msra.mxu0 0.0
    %1003 = vmatprep.subr.mxu0 0.0
    %1004 = vmatpush1.msra.mxu0 0.0
    %1005 = vmatprep.subr.mxu0 0.0
    %1006 = vmatpush1.msra.mxu0 0.0
    %1007 = vmatprep.subr.mxu0 0.0
    %1008 = vmatpush1.msra.mxu0 0.0
    %1009 = vmatprep.subr.mxu0 0.0
    %1010 = vmatpush1.msra.mxu0 0.0
    %1011 = vmatprep.subr.mxu0 0.0
    %1012 = vmatpush1.msra.mxu0 0.0
    %1013 = vmatprep.subr.mxu0 0.0
    %1014 = vmatpush1.msra.mxu0 0.0
    %1015 = vmatprep.subr.mxu0 0.0
    %1016 = vmatpush1.msra.mxu0 0.0
    %1017 = vmatprep.subr.mxu0 0.0
    %1018 = vmatpush1.msra.mxu0 0.0
    %1019 = vmatprep.subr.mxu0 0.0
    %1020 = vmatpush1.msra.mxu0 0.0
    %1021 = vmatprep.subr.mxu0 0.0
    %1022 = vmatpush1.msra.mxu0 0.0
    %1023 = vmatprep.subr.mxu0 0.0
    %1024 = vmatpush1.msra.mxu0 0.0
    %1025 = vmatprep.subr.mxu0 0.0
    %1026 = vmatpush1.msra.mxu0 0.0
    %1027 = vmatprep.subr.mxu0 0.0
    %1028 = vmatpush1.msra.mxu0 0.0
    %1029 = vmatprep.subr.mxu0 0.0
    %1030 = vmatpush1.msra.mxu0 0.0
    %1031 = vmatprep.subr.mxu0 0.0
    %1032 = vmatpush1.msra.mxu0 0.0
    %1033 = vmatprep.subr.mxu0 0.0
    %1034 = vmatpush1.msra.mxu0 0.0
    %1035 = vmatprep.subr.mxu0 0.0
    %1036 = vmatpush1.msra.mxu0 0.0
    %1037 = vmatprep.subr.mxu0 0.0
    %1038 = vmatpush1.msra.mxu0 0.0
    %1039 = vmatprep.mubr.f32.mxu0 0.0
    %1040 = vmatmul.mubr.f32.gmra.mrb[0].mxu0 %v322
    %v1041 = vpop.f32.mrb[0].mxu0
    %v1042 = vadd.f32 %v938, %v1041
    %v1043 = vpop.f32.mrb[0].mxu0
    %1044 = vdwg.mxu0
    %1045 = vmatprep.subr.mxu0 0.0
    %1046 = vmatpush1.msra.mxu0 %v891
    %1047 = vmatprep.subr.mxu0 0.0
    %1048 = vmatpush1.msra.mxu0 %v892
    %1049 = vmatprep.subr.mxu0 0.0
    %1050 = vmatpush1.msra.mxu0 %v893
    %1051 = vmatprep.subr.mxu0 0.0
    %1052 = vmatpush1.msra.mxu0 %v894
    %1053 = vmatprep.subr.mxu0 0.0
    %1054 = vmatpush1.msra.mxu0 0.0
    %1055 = vmatprep.subr.mxu0 0.0
    %1056 = vmatpush1.msra.mxu0 0.0
    %1057 = vmatprep.subr.mxu0 0.0
    %1058 = vmatpush1.msra.mxu0 0.0
    %1059 = vmatprep.subr.mxu0 0.0
    %1060 = vmatpush1.msra.mxu0 0.0
    %1061 = vmatprep.subr.mxu0 0.0
    %1062 = vmatpush1.msra.mxu0 0.0
    %1063 = vmatprep.subr.mxu0 0.0
    %1064 = vmatpush1.msra.mxu0 0.0
    %1065 = vmatprep.subr.mxu0 0.0
    %1066 = vmatpush1.msra.mxu0 0.0
    %1067 = vmatprep.subr.mxu0 0.0
    %1068 = vmatpush1.msra.mxu0 0.0
    %1069 = vmatprep.subr.mxu0 0.0
    %1070 = vmatpush1.msra.mxu0 0.0
    %1071 = vmatprep.subr.mxu0 0.0
    %1072 = vmatpush1.msra.mxu0 0.0
    %1073 = vmatprep.subr.mxu0 0.0
    %1074 = vmatpush1.msra.mxu0 0.0
    %1075 = vmatprep.subr.mxu0 0.0
    %1076 = vmatpush1.msra.mxu0 0.0
    %1077 = vmatprep.subr.mxu0 0.0
    %1078 = vmatpush1.msra.mxu0 0.0
    %1079 = vmatprep.subr.mxu0 0.0
    %1080 = vmatpush1.msra.mxu0 0.0
    %1081 = vmatprep.subr.mxu0 0.0
    %1082 = vmatpush1.msra.mxu0 0.0
    %1083 = vmatprep.subr.mxu0 0.0
    %1084 = vmatpush1.msra.mxu0 0.0
    %1085 = vmatprep.subr.mxu0 0.0
    %1086 = vmatpush1.msra.mxu0 0.0
    %1087 = vmatprep.subr.mxu0 0.0
    %1088 = vmatpush1.msra.mxu0 0.0
    %1089 = vmatprep.subr.mxu0 0.0
    %1090 = vmatpush1.msra.mxu0 0.0
    %1091 = vmatprep.subr.mxu0 0.0
    %1092 = vmatpush1.msra.mxu0 0.0
    %1093 = vmatprep.subr.mxu0 0.0
    %1094 = vmatpush1.msra.mxu0 0.0
    %1095 = vmatprep.subr.mxu0 0.0
    %1096 = vmatpush1.msra.mxu0 0.0
    %1097 = vmatprep.subr.mxu0 0.0
    %1098 = vmatpush1.msra.mxu0 0.0
    %1099 = vmatprep.subr.mxu0 0.0
    %1100 = vmatpush1.msra.mxu0 0.0
    %1101 = vmatprep.subr.mxu0 0.0
    %1102 = vmatpush1.msra.mxu0 0.0
    %1103 = vmatprep.subr.mxu0 0.0
    %1104 = vmatpush1.msra.mxu0 0.0
    %1105 = vmatprep.subr.mxu0 0.0
    %1106 = vmatpush1.msra.mxu0 0.0
    %1107 = vmatprep.subr.mxu0 0.0
    %1108 = vmatpush1.msra.mxu0 0.0
    %1109 = vmatprep.mubr.f32.mxu0 0.0
    %1110 = vmatmul.mubr.f32.gmra.mrb[0].mxu0 %v322
    %v1111 = vpop.f32.mrb[0].mxu0
    %v1112 = vadd.f32 %v942, %v1111
    %v1113 = vpop.f32.mrb[0].mxu0
    %1114 = vdwg.mxu0
    %1115 = vmatprep.subr.mxu0 0.0
    %1116 = vmatpush1.msra.mxu0 %v895
    %1117 = vmatprep.subr.mxu0 0.0
    %1118 = vmatpush1.msra.mxu0 %v896
    %1119 = vmatprep.subr.mxu0 0.0
    %1120 = vmatpush1.msra.mxu0 %v897
    %1121 = vmatprep.subr.mxu0 0.0
    %1122 = vmatpush1.msra.mxu0 %v898
    %1123 = vmatprep.subr.mxu0 0.0
    %1124 = vmatpush1.msra.mxu0 0.0
    %1125 = vmatprep.subr.mxu0 0.0
    %1126 = vmatpush1.msra.mxu0 0.0
    %1127 = vmatprep.subr.mxu0 0.0
    %1128 = vmatpush1.msra.mxu0 0.0
    %1129 = vmatprep.subr.mxu0 0.0
    %1130 = vmatpush1.msra.mxu0 0.0
    %1131 = vmatprep.subr.mxu0 0.0
    %1132 = vmatpush1.msra.mxu0 0.0
    %1133 = vmatprep.subr.mxu0 0.0
    %1134 = vmatpush1.msra.mxu0 0.0
    %1135 = vmatprep.subr.mxu0 0.0
    %1136 = vmatpush1.msra.mxu0 0.0
    %1137 = vmatprep.subr.mxu0 0.0
    %1138 = vmatpush1.msra.mxu0 0.0
    %1139 = vmatprep.subr.mxu0 0.0
    %1140 = vmatpush1.msra.mxu0 0.0
    %1141 = vmatprep.subr.mxu0 0.0
    %1142 = vmatpush1.msra.mxu0 0.0
    %1143 = vmatprep.subr.mxu0 0.0
    %1144 = vmatpush1.msra.mxu0 0.0
    %1145 = vmatprep.subr.mxu0 0.0
    %1146 = vmatpush1.msra.mxu0 0.0
    %1147 = vmatprep.subr.mxu0 0.0
    %1148 = vmatpush1.msra.mxu0 0.0
    %1149 = vmatprep.subr.mxu0 0.0
    %1150 = vmatpush1.msra.mxu0 0.0
    %1151 = vmatprep.subr.mxu0 0.0
    %1152 = vmatpush1.msra.mxu0 0.0
    %1153 = vmatprep.subr.mxu0 0.0
    %1154 = vmatpush1.msra.mxu0 0.0
    %1155 = vmatprep.subr.mxu0 0.0
    %1156 = vmatpush1.msra.mxu0 0.0
    %1157 = vmatprep.subr.mxu0 0.0
    %1158 = vmatpush1.msra.mxu0 0.0
    %1159 = vmatprep.subr.mxu0 0.0
    %1160 = vmatpush1.msra.mxu0 0.0
    %1161 = vmatprep.subr.mxu0 0.0
    %1162 = vmatpush1.msra.mxu0 0.0
    %1163 = vmatprep.subr.mxu0 0.0
    %1164 = vmatpush1.msra.mxu0 0.0
    %1165 = vmatprep.subr.mxu0 0.0
    %1166 = vmatpush1.msra.mxu0 0.0
    %1167 = vmatprep.subr.mxu0 0.0
    %1168 = vmatpush1.msra.mxu0 0.0
    %1169 = vmatprep.subr.mxu0 0.0
    %1170 = vmatpush1.msra.mxu0 0.0
    %1171 = vmatprep.subr.mxu0 0.0
    %1172 = vmatpush1.msra.mxu0 0.0
    %1173 = vmatprep.subr.mxu0 0.0
    %1174 = vmatpush1.msra.mxu0 0.0
    %1175 = vmatprep.subr.mxu0 0.0
    %1176 = vmatpush1.msra.mxu0 0.0
    %1177 = vmatprep.subr.mxu0 0.0
    %1178 = vmatpush1.msra.mxu0 0.0
    %1179 = vmatprep.mubr.f32.mxu0 0.0
    %1180 = vmatmul.mubr.f32.gmra.mrb[0].mxu0 %v322
    %v1181 = vpop.f32.mrb[0].mxu0
    %v1182 = vadd.f32 %v946, %v1181
    %v1183 = vpop.f32.mrb[0].mxu0
    %1184 = vdwg.mxu0
    %1185 = vmatprep.subr.mxu0 0.0
    %1186 = vmatpush1.msra.mxu0 %v899
    %1187 = vmatprep.subr.mxu0 0.0
    %1188 = vmatpush1.msra.mxu0 %v900
    %1189 = vmatprep.subr.mxu0 0.0
    %1190 = vmatpush1.msra.mxu0 %v901
    %1191 = vmatprep.subr.mxu0 0.0
    %1192 = vmatpush1.msra.mxu0 %v902
    %1193 = vmatprep.subr.mxu0 0.0
    %1194 = vmatpush1.msra.mxu0 0.0
    %1195 = vmatprep.subr.mxu0 0.0
    %1196 = vmatpush1.msra.mxu0 0.0
    %1197 = vmatprep.subr.mxu0 0.0
    %1198 = vmatpush1.msra.mxu0 0.0
    %1199 = vmatprep.subr.mxu0 0.0
    %1200 = vmatpush1.msra.mxu0 0.0
    %1201 = vmatprep.subr.mxu0 0.0
    %1202 = vmatpush1.msra.mxu0 0.0
    %1203 = vmatprep.subr.mxu0 0.0
    %1204 = vmatpush1.msra.mxu0 0.0
    %1205 = vmatprep.subr.mxu0 0.0
    %1206 = vmatpush1.msra.mxu0 0.0
    %1207 = vmatprep.subr.mxu0 0.0
    %1208 = vmatpush1.msra.mxu0 0.0
    %1209 = vmatprep.subr.mxu0 0.0
    %1210 = vmatpush1.msra.mxu0 0.0
    %1211 = vmatprep.subr.mxu0 0.0
    %1212 = vmatpush1.msra.mxu0 0.0
    %1213 = vmatprep.subr.mxu0 0.0
    %1214 = vmatpush1.msra.mxu0 0.0
    %1215 = vmatprep.subr.mxu0 0.0
    %1216 = vmatpush1.msra.mxu0 0.0
    %1217 = vmatprep.subr.mxu0 0.0
    %1218 = vmatpush1.msra.mxu0 0.0
    %1219 = vmatprep.subr.mxu0 0.0
    %1220 = vmatpush1.msra.mxu0 0.0
    %1221 = vmatprep.subr.mxu0 0.0
    %1222 = vmatpush1.msra.mxu0 0.0
    %1223 = vmatprep.subr.mxu0 0.0
    %1224 = vmatpush1.msra.mxu0 0.0
    %1225 = vmatprep.subr.mxu0 0.0
    %1226 = vmatpush1.msra.mxu0 0.0
    %1227 = vmatprep.subr.mxu0 0.0
    %1228 = vmatpush1.msra.mxu0 0.0
    %1229 = vmatprep.subr.mxu0 0.0
    %1230 = vmatpush1.msra.mxu0 0.0
    %1231 = vmatprep.subr.mxu0 0.0
    %1232 = vmatpush1.msra.mxu0 0.0
    %1233 = vmatprep.subr.mxu0 0.0
    %1234 = vmatpush1.msra.mxu0 0.0
    %1235 = vmatprep.subr.mxu0 0.0
    %1236 = vmatpush1.msra.mxu0 0.0
    %1237 = vmatprep.subr.mxu0 0.0
    %1238 = vmatpush1.msra.mxu0 0.0
    %1239 = vmatprep.subr.mxu0 0.0
    %1240 = vmatpush1.msra.mxu0 0.0
    %1241 = vmatprep.subr.mxu0 0.0
    %1242 = vmatpush1.msra.mxu0 0.0
    %1243 = vmatprep.subr.mxu0 0.0
    %1244 = vmatpush1.msra.mxu0 0.0
    %1245 = vmatprep.subr.mxu0 0.0
    %1246 = vmatpush1.msra.mxu0 0.0
    %1247 = vmatprep.subr.mxu0 0.0
    %1248 = vmatpush1.msra.mxu0 0.0
    %1249 = vmatprep.mubr.f32.mxu0 0.0
    %1250 = vmatmul.mubr.f32.gmra.mrb[0].mxu0 %v322
    %v1251 = vpop.f32.mrb[0].mxu0
    %v1252 = vadd.f32 %v950, %v1251
    %v1253 = vpop.f32.mrb[0].mxu0
    %1254 = vdwg.mxu0
    %1255 = vmatprep.subr.mxu0 0.0
    %1256 = vmatpush1.msra.mxu0 %v903
    %1257 = vmatprep.subr.mxu0 0.0
    %1258 = vmatpush1.msra.mxu0 %v904
    %1259 = vmatprep.subr.mxu0 0.0
    %1260 = vmatpush1.msra.mxu0 %v905
    %1261 = vmatprep.subr.mxu0 0.0
    %1262 = vmatpush1.msra.mxu0 %v906
    %1263 = vmatprep.subr.mxu0 0.0
    %1264 = vmatpush1.msra.mxu0 0.0
    %1265 = vmatprep.subr.mxu0 0.0
    %1266 = vmatpush1.msra.mxu0 0.0
    %1267 = vmatprep.subr.mxu0 0.0
    %1268 = vmatpush1.msra.mxu0 0.0
    %1269 = vmatprep.subr.mxu0 0.0
    %1270 = vmatpush1.msra.mxu0 0.0
    %1271 = vmatprep.subr.mxu0 0.0
    %1272 = vmatpush1.msra.mxu0 0.0
    %1273 = vmatprep.subr.mxu0 0.0
    %1274 = vmatpush1.msra.mxu0 0.0
    %1275 = vmatprep.subr.mxu0 0.0
    %1276 = vmatpush1.msra.mxu0 0.0
    %1277 = vmatprep.subr.mxu0 0.0
    %1278 = vmatpush1.msra.mxu0 0.0
    %1279 = vmatprep.subr.mxu0 0.0
    %1280 = vmatpush1.msra.mxu0 0.0
    %1281 = vmatprep.subr.mxu0 0.0
    %1282 = vmatpush1.msra.mxu0 0.0
    %1283 = vmatprep.subr.mxu0 0.0
    %1284 = vmatpush1.msra.mxu0 0.0
    %1285 = vmatprep.subr.mxu0 0.0
    %1286 = vmatpush1.msra.mxu0 0.0
    %1287 = vmatprep.subr.mxu0 0.0
    %1288 = vmatpush1.msra.mxu0 0.0
    %1289 = vmatprep.subr.mxu0 0.0
    %1290 = vmatpush1.msra.mxu0 0.0
    %1291 = vmatprep.subr.mxu0 0.0
    %1292 = vmatpush1.msra.mxu0 0.0
    %1293 = vmatprep.subr.mxu0 0.0
    %1294 = vmatpush1.msra.mxu0 0.0
    %1295 = vmatprep.subr.mxu0 0.0
    %1296 = vmatpush1.msra.mxu0 0.0
    %1297 = vmatprep.subr.mxu0 0.0
    %1298 = vmatpush1.msra.mxu0 0.0
    %1299 = vmatprep.subr.mxu0 0.0
    %1300 = vmatpush1.msra.mxu0 0.0
    %1301 = vmatprep.subr.mxu0 0.0
    %1302 = vmatpush1.msra.mxu0 0.0
    %1303 = vmatprep.subr.mxu0 0.0
    %1304 = vmatpush1.msra.mxu0 0.0
    %1305 = vmatprep.subr.mxu0 0.0
    %1306 = vmatpush1.msra.mxu0 0.0
    %1307 = vmatprep.subr.mxu0 0.0
    %1308 = vmatpush1.msra.mxu0 0.0
    %1309 = vmatprep.subr.mxu0 0.0
    %1310 = vmatpush1.msra.mxu0 0.0
    %1311 = vmatprep.subr.mxu0 0.0
    %1312 = vmatpush1.msra.mxu0 0.0
    %1313 = vmatprep.subr.mxu0 0.0
    %1314 = vmatpush1.msra.mxu0 0.0
    %1315 = vmatprep.subr.mxu0 0.0
    %1316 = vmatpush1.msra.mxu0 0.0
    %1317 = vmatprep.subr.mxu0 0.0
    %1318 = vmatpush1.msra.mxu0 0.0
    %1319 = vmatprep.mubr.f32.mxu0 0.0
    %1320 = vmatmul.mubr.f32.gmra.mrb[0].mxu0 %v605
    %v1321 = vpop.f32.mrb[0].mxu0
    %v1322 = vadd.f32 %v954, %v1321
    %v1323 = vpop.f32.mrb[0].mxu0
    %1324 = vdwg.mxu0
    %1325 = vmatprep.subr.mxu0 0.0
    %1326 = vmatpush1.msra.mxu0 %v907
    %1327 = vmatprep.subr.mxu0 0.0
    %1328 = vmatpush1.msra.mxu0 %v908
    %1329 = vmatprep.subr.mxu0 0.0
    %1330 = vmatpush1.msra.mxu0 %v909
    %1331 = vmatprep.subr.mxu0 0.0
    %1332 = vmatpush1.msra.mxu0 %v910
    %1333 = vmatprep.subr.mxu0 0.0
    %1334 = vmatpush1.msra.mxu0 0.0
    %1335 = vmatprep.subr.mxu0 0.0
    %1336 = vmatpush1.msra.mxu0 0.0
    %1337 = vmatprep.subr.mxu0 0.0
    %1338 = vmatpush1.msra.mxu0 0.0
    %1339 = vmatprep.subr.mxu0 0.0
    %1340 = vmatpush1.msra.mxu0 0.0
    %1341 = vmatprep.subr.mxu0 0.0
    %1342 = vmatpush1.msra.mxu0 0.0
    %1343 = vmatprep.subr.mxu0 0.0
    %1344 = vmatpush1.msra.mxu0 0.0
    %1345 = vmatprep.subr.mxu0 0.0
    %1346 = vmatpush1.msra.mxu0 0.0
    %1347 = vmatprep.subr.mxu0 0.0
    %1348 = vmatpush1.msra.mxu0 0.0
    %1349 = vmatprep.subr.mxu0 0.0
    %1350 = vmatpush1.msra.mxu0 0.0
    %1351 = vmatprep.subr.mxu0 0.0
    %1352 = vmatpush1.msra.mxu0 0.0
    %1353 = vmatprep.subr.mxu0 0.0
    %1354 = vmatpush1.msra.mxu0 0.0
    %1355 = vmatprep.subr.mxu0 0.0
    %1356 = vmatpush1.msra.mxu0 0.0
    %1357 = vmatprep.subr.mxu0 0.0
    %1358 = vmatpush1.msra.mxu0 0.0
    %1359 = vmatprep.subr.mxu0 0.0
    %1360 = vmatpush1.msra.mxu0 0.0
    %1361 = vmatprep.subr.mxu0 0.0
    %1362 = vmatpush1.msra.mxu0 0.0
    %1363 = vmatprep.subr.mxu0 0.0
    %1364 = vmatpush1.msra.mxu0 0.0
    %1365 = vmatprep.subr.mxu0 0.0
    %1366 = vmatpush1.msra.mxu0 0.0
    %1367 = vmatprep.subr.mxu0 0.0
    %1368 = vmatpush1.msra.mxu0 0.0
    %1369 = vmatprep.subr.mxu0 0.0
    %1370 = vmatpush1.msra.mxu0 0.0
    %1371 = vmatprep.subr.mxu0 0.0
    %1372 = vmatpush1.msra.mxu0 0.0
    %1373 = vmatprep.subr.mxu0 0.0
    %1374 = vmatpush1.msra.mxu0 0.0
    %1375 = vmatprep.subr.mxu0 0.0
    %1376 = vmatpush1.msra.mxu0 0.0
    %1377 = vmatprep.subr.mxu0 0.0
    %1378 = vmatpush1.msra.mxu0 0.0
    %1379 = vmatprep.subr.mxu0 0.0
    %1380 = vmatpush1.msra.mxu0 0.0
    %1381 = vmatprep.subr.mxu0 0.0
    %1382 = vmatpush1.msra.mxu0 0.0
    %1383 = vmatprep.subr.mxu0 0.0
    %1384 = vmatpush1.msra.mxu0 0.0
    %1385 = vmatprep.subr.mxu0 0.0
    %1386 = vmatpush1.msra.mxu0 0.0
    %1387 = vmatprep.subr.mxu0 0.0
    %1388 = vmatpush1.msra.mxu0 0.0
    %1389 = vmatprep.mubr.f32.mxu0 0.0
    %1390 = vmatmul.mubr.f32.gmra.mrb[0].mxu0 %v605
    %v1391 = vpop.f32.mrb[0].mxu0
    %v1392 = vadd.f32 %v958, %v1391
    %v1393 = vpop.f32.mrb[0].mxu0
    %1394 = vdwg.mxu0
    %1395 = vmatprep.subr.mxu0 0.0
    %1396 = vmatpush1.msra.mxu0 %v911
    %1397 = vmatprep.subr.mxu0 0.0
    %1398 = vmatpush1.msra.mxu0 %v912
    %1399 = vmatprep.subr.mxu0 0.0
    %1400 = vmatpush1.msra.mxu0 %v913
    %1401 = vmatprep.subr.mxu0 0.0
    %1402 = vmatpush1.msra.mxu0 %v914
    %1403 = vmatprep.subr.mxu0 0.0
    %1404 = vmatpush1.msra.mxu0 0.0
    %1405 = vmatprep.subr.mxu0 0.0
    %1406 = vmatpush1.msra.mxu0 0.0
    %1407 = vmatprep.subr.mxu0 0.0
    %1408 = vmatpush1.msra.mxu0 0.0
    %1409 = vmatprep.subr.mxu0 0.0
    %1410 = vmatpush1.msra.mxu0 0.0
    %1411 = vmatprep.subr.mxu0 0.0
    %1412 = vmatpush1.msra.mxu0 0.0
    %1413 = vmatprep.subr.mxu0 0.0
    %1414 = vmatpush1.msra.mxu0 0.0
    %1415 = vmatprep.subr.mxu0 0.0
    %1416 = vmatpush1.msra.mxu0 0.0
    %1417 = vmatprep.subr.mxu0 0.0
    %1418 = vmatpush1.msra.mxu0 0.0
    %1419 = vmatprep.subr.mxu0 0.0
    %1420 = vmatpush1.msra.mxu0 0.0
    %1421 = vmatprep.subr.mxu0 0.0
    %1422 = vmatpush1.msra.mxu0 0.0
    %1423 = vmatprep.subr.mxu0 0.0
    %1424 = vmatpush1.msra.mxu0 0.0
    %1425 = vmatprep.subr.mxu0 0.0
    %1426 = vmatpush1.msra.mxu0 0.0
    %1427 = vmatprep.subr.mxu0 0.0
    %1428 = vmatpush1.msra.mxu0 0.0
    %1429 = vmatprep.subr.mxu0 0.0
    %1430 = vmatpush1.msra.mxu0 0.0
    %1431 = vmatprep.subr.mxu0 0.0
    %1432 = vmatpush1.msra.mxu0 0.0
    %1433 = vmatprep.subr.mxu0 0.0
    %1434 = vmatpush1.msra.mxu0 0.0
    %1435 = vmatprep.subr.mxu0 0.0
    %1436 = vmatpush1.msra.mxu0 0.0
    %1437 = vmatprep.subr.mxu0 0.0
    %1438 = vmatpush1.msra.mxu0 0.0
    %1439 = vmatprep.subr.mxu0 0.0
    %1440 = vmatpush1.msra.mxu0 0.0
    %1441 = vmatprep.subr.mxu0 0.0
    %1442 = vmatpush1.msra.mxu0 0.0
    %1443 = vmatprep.subr.mxu0 0.0
    %1444 = vmatpush1.msra.mxu0 0.0
    %1445 = vmatprep.subr.mxu0 0.0
    %1446 = vmatpush1.msra.mxu0 0.0
    %1447 = vmatprep.subr.mxu0 0.0
    %1448 = vmatpush1.msra.mxu0 0.0
    %1449 = vmatprep.subr.mxu0 0.0
    %1450 = vmatpush1.msra.mxu0 0.0
    %1451 = vmatprep.subr.mxu0 0.0
    %1452 = vmatpush1.msra.mxu0 0.0
    %1453 = vmatprep.subr.mxu0 0.0
    %1454 = vmatpush1.msra.mxu0 0.0
    %1455 = vmatprep.subr.mxu0 0.0
    %1456 = vmatpush1.msra.mxu0 0.0
    %1457 = vmatprep.subr.mxu0 0.0
    %1458 = vmatpush1.msra.mxu0 0.0
    %1459 = vmatprep.mubr.f32.mxu0 0.0
    %1460 = vmatmul.mubr.f32.gmra.mrb[0].mxu0 %v605
    %v1461 = vpop.f32.mrb[0].mxu0
    %v1462 = vadd.f32 %v962, %v1461
    %v1463 = vpop.f32.mrb[0].mxu0
    %1464 = vdwg.mxu0
    %1465 = vmatprep.subr.mxu0 0.0
    %1466 = vmatpush1.msra.mxu0 %v915
    %1467 = vmatprep.subr.mxu0 0.0
    %1468 = vmatpush1.msra.mxu0 %v916
    %1469 = vmatprep.subr.mxu0 0.0
    %1470 = vmatpush1.msra.mxu0 %v917
    %1471 = vmatprep.subr.mxu0 0.0
    %1472 = vmatpush1.msra.mxu0 %v918
    %1473 = vmatprep.subr.mxu0 0.0
    %1474 = vmatpush1.msra.mxu0 0.0
    %1475 = vmatprep.subr.mxu0 0.0
    %1476 = vmatpush1.msra.mxu0 0.0
    %1477 = vmatprep.subr.mxu0 0.0
    %1478 = vmatpush1.msra.mxu0 0.0
    %1479 = vmatprep.subr.mxu0 0.0
    %1480 = vmatpush1.msra.mxu0 0.0
    %1481 = vmatprep.subr.mxu0 0.0
    %1482 = vmatpush1.msra.mxu0 0.0
    %1483 = vmatprep.subr.mxu0 0.0
    %1484 = vmatpush1.msra.mxu0 0.0
    %1485 = vmatprep.subr.mxu0 0.0
    %1486 = vmatpush1.msra.mxu0 0.0
    %1487 = vmatprep.subr.mxu0 0.0
    %1488 = vmatpush1.msra.mxu0 0.0
    %1489 = vmatprep.subr.mxu0 0.0
    %1490 = vmatpush1.msra.mxu0 0.0
    %1491 = vmatprep.subr.mxu0 0.0
    %1492 = vmatpush1.msra.mxu0 0.0
    %1493 = vmatprep.subr.mxu0 0.0
    %1494 = vmatpush1.msra.mxu0 0.0
    %1495 = vmatprep.subr.mxu0 0.0
    %1496 = vmatpush1.msra.mxu0 0.0
    %1497 = vmatprep.subr.mxu0 0.0
    %1498 = vmatpush1.msra.mxu0 0.0
    %1499 = vmatprep.subr.mxu0 0.0
    %1500 = vmatpush1.msra.mxu0 0.0
    %1501 = vmatprep.subr.mxu0 0.0
    %1502 = vmatpush1.msra.mxu0 0.0
    %1503 = vmatprep.subr.mxu0 0.0
    %1504 = vmatpush1.msra.mxu0 0.0
    %1505 = vmatprep.subr.mxu0 0.0
    %1506 = vmatpush1.msra.mxu0 0.0
    %1507 = vmatprep.subr.mxu0 0.0
    %1508 = vmatpush1.msra.mxu0 0.0
    %1509 = vmatprep.subr.mxu0 0.0
    %1510 = vmatpush1.msra.mxu0 0.0
    %1511 = vmatprep.subr.mxu0 0.0
    %1512 = vmatpush1.msra.mxu0 0.0
    %1513 = vmatprep.subr.mxu0 0.0
    %1514 = vmatpush1.msra.mxu0 0.0
    %1515 = vmatprep.subr.mxu0 0.0
    %1516 = vmatpush1.msra.mxu0 0.0
    %1517 = vmatprep.subr.mxu0 0.0
    %1518 = vmatpush1.msra.mxu0 0.0
    %1519 = vmatprep.subr.mxu0 0.0
    %1520 = vmatpush1.msra.mxu0 0.0
    %1521 = vmatprep.subr.mxu0 0.0
    %1522 = vmatpush1.msra.mxu0 0.0
    %1523 = vmatprep.subr.mxu0 0.0
    %1524 = vmatpush1.msra.mxu0 0.0
    %1525 = vmatprep.subr.mxu0 0.0
    %1526 = vmatpush1.msra.mxu0 0.0
    %1527 = vmatprep.subr.mxu0 0.0
    %1528 = vmatpush1.msra.mxu0 0.0
    %1529 = vmatprep.mubr.f32.mxu0 0.0
    %1530 = vmatmul.mubr.f32.gmra.mrb[0].mxu0 %v605
    %v1531 = vpop.f32.mrb[0].mxu0
    %v1532 = vadd.f32 %v966, %v1531
    %v1533 = vpop.f32.mrb[0].mxu0
    %1534 = vdwg.mxu0
    %v1535 = vld [vmem:[%s12] sm:$0xff]
    %v1536 = vld [vmem:[%s12 + $0x8] sm:$0xff]
    %v1537 = vld [vmem:[%s12 + $0x10] sm:$0xff]
    %v1538 = vld [vmem:[%s12 + $0x18] sm:$0xff]
    %v1539 = vld [vmem:[%s12 + $0x20] sm:$0xff]
    %v1540 = vld [vmem:[%s12 + $0x28] sm:$0xff]
    %v1541 = vld [vmem:[%s12 + $0x30] sm:$0xff]
    %v1542 = vld [vmem:[%s12 + $0x38] sm:$0xff]
    %v1543 = vld [vmem:[%s12 + $0x40] sm:$0xff]
    %v1544 = vld [vmem:[%s12 + $0x48] sm:$0xff]
    %v1545 = vld [vmem:[%s12 + $0x50] sm:$0xff]
    %v1546 = vld [vmem:[%s12 + $0x58] sm:$0xff]
    %v1547 = vld [vmem:[%s12 + $0x60] sm:$0xff]
    %v1548 = vld [vmem:[%s12 + $0x68] sm:$0xff]
    %v1549 = vld [vmem:[%s12 + $0x70] sm:$0xff]
    %v1550 = vld [vmem:[%s12 + $0x78] sm:$0xff]
    %v1551 = vld [vmem:[%s12 + $0x80] sm:$0xff]
    %v1552 = vld [vmem:[%s12 + $0x88] sm:$0xff]
    %v1553 = vld [vmem:[%s12 + $0x90] sm:$0xff]
    %v1554 = vld [vmem:[%s12 + $0x98] sm:$0xff]
    %v1555 = vld [vmem:[%s12 + $0xa0] sm:$0xff]
    %v1556 = vld [vmem:[%s12 + $0xa8] sm:$0xff]
    %v1557 = vld [vmem:[%s12 + $0xb0] sm:$0xff]
    %v1558 = vld [vmem:[%s12 + $0xb8] sm:$0xff]
    %v1559 = vld [vmem:[%s12 + $0xc0] sm:$0xff]
    %v1560 = vld [vmem:[%s12 + $0xc8] sm:$0xff]
    %v1561 = vld [vmem:[%s12 + $0xd0] sm:$0xff]
    %v1562 = vld [vmem:[%s12 + $0xd8] sm:$0xff]
    %v1563 = vld [vmem:[%s12 + $0xe0] sm:$0xff]
    %v1564 = vld [vmem:[%s12 + $0xe8] sm:$0xff]
    %v1565 = vld [vmem:[%s12 + $0xf0] sm:$0xff]
    %v1566 = vld [vmem:[%s12 + $0xf8] sm:$0xff]
    %v1567 = vld [vmem:[%s13] sm:$0x1]
    %v1568 = vld [vmem:[%s13 + $0x1] sm:$0x1]
    %v1569 = vld [vmem:[%s13 + $0x2] sm:$0x1]
    %v1570 = vld [vmem:[%s13 + $0x3] sm:$0x1]
    %v1571 = vld [vmem:[%s13 + $0x4] sm:$0x1]
    %v1572 = vld [vmem:[%s13 + $0x5] sm:$0x1]
    %v1573 = vld [vmem:[%s13 + $0x6] sm:$0x1]
    %v1574 = vld [vmem:[%s13 + $0x7] sm:$0x1]
    %v1583 = vlaneseq
    %v1584 = vshrl.u32 %v1583, 7
    %v1585 = vsub.s32 0, %v1584
    %v1586 = vrot.slane %v1567, %v1585
    %v1587 = vlaneseq
    %v1588 = vshrl.u32 %v1587, 7
    %v1589 = vsub.s32 0, %v1588
    %v1590 = vrot.slane %v1568, %v1589
    %v1591 = vlaneseq
    %v1592 = vshrl.u32 %v1591, 7
    %v1593 = vsub.s32 0, %v1592
    %v1594 = vrot.slane %v1569, %v1593
    %v1595 = vlaneseq
    %v1596 = vshrl.u32 %v1595, 7
    %v1597 = vsub.s32 0, %v1596
    %v1598 = vrot.slane %v1570, %v1597
    %v1599 = vlaneseq
    %v1600 = vshrl.u32 %v1599, 7
    %v1601 = vsub.s32 0, %v1600
    %v1602 = vrot.slane %v1571, %v1601
    %v1603 = vlaneseq
    %v1604 = vshrl.u32 %v1603, 7
    %v1605 = vsub.s32 0, %v1604
    %v1606 = vrot.slane %v1572, %v1605
    %v1607 = vlaneseq
    %v1608 = vshrl.u32 %v1607, 7
    %v1609 = vsub.s32 0, %v1608
    %v1610 = vrot.slane %v1573, %v1609
    %v1611 = vlaneseq
    %v1612 = vshrl.u32 %v1611, 7
    %v1613 = vsub.s32 0, %v1612
    %v1614 = vrot.slane %v1574, %v1613
    %1623 = vmatprep.subr.mxu0 0.0
    %1624 = vmatpush1.msra.mxu0 %v1535
    %1625 = vmatprep.subr.mxu0 0.0
    %1626 = vmatpush1.msra.mxu0 %v1536
    %1627 = vmatprep.subr.mxu0 0.0
    %1628 = vmatpush1.msra.mxu0 %v1537
    %1629 = vmatprep.subr.mxu0 0.0
    %1630 = vmatpush1.msra.mxu0 %v1538
    %1631 = vmatprep.subr.mxu0 0.0
    %1632 = vmatpush1.msra.mxu0 0.0
    %1633 = vmatprep.subr.mxu0 0.0
    %1634 = vmatpush1.msra.mxu0 0.0
    %1635 = vmatprep.subr.mxu0 0.0
    %1636 = vmatpush1.msra.mxu0 0.0
    %1637 = vmatprep.subr.mxu0 0.0
    %1638 = vmatpush1.msra.mxu0 0.0
    %1639 = vmatprep.subr.mxu0 0.0
    %1640 = vmatpush1.msra.mxu0 0.0
    %1641 = vmatprep.subr.mxu0 0.0
    %1642 = vmatpush1.msra.mxu0 0.0
    %1643 = vmatprep.subr.mxu0 0.0
    %1644 = vmatpush1.msra.mxu0 0.0
    %1645 = vmatprep.subr.mxu0 0.0
    %1646 = vmatpush1.msra.mxu0 0.0
    %1647 = vmatprep.subr.mxu0 0.0
    %1648 = vmatpush1.msra.mxu0 0.0
    %1649 = vmatprep.subr.mxu0 0.0
    %1650 = vmatpush1.msra.mxu0 0.0
    %1651 = vmatprep.subr.mxu0 0.0
    %1652 = vmatpush1.msra.mxu0 0.0
    %1653 = vmatprep.subr.mxu0 0.0
    %1654 = vmatpush1.msra.mxu0 0.0
    %1655 = vmatprep.subr.mxu0 0.0
    %1656 = vmatpush1.msra.mxu0 0.0
    %1657 = vmatprep.subr.mxu0 0.0
    %1658 = vmatpush1.msra.mxu0 0.0
    %1659 = vmatprep.subr.mxu0 0.0
    %1660 = vmatpush1.msra.mxu0 0.0
    %1661 = vmatprep.subr.mxu0 0.0
    %1662 = vmatpush1.msra.mxu0 0.0
    %1663 = vmatprep.subr.mxu0 0.0
    %1664 = vmatpush1.msra.mxu0 0.0
    %1665 = vmatprep.subr.mxu0 0.0
    %1666 = vmatpush1.msra.mxu0 0.0
    %1667 = vmatprep.subr.mxu0 0.0
    %1668 = vmatpush1.msra.mxu0 0.0
    %1669 = vmatprep.subr.mxu0 0.0
    %1670 = vmatpush1.msra.mxu0 0.0
    %1671 = vmatprep.subr.mxu0 0.0
    %1672 = vmatpush1.msra.mxu0 0.0
    %1673 = vmatprep.subr.mxu0 0.0
    %1674 = vmatpush1.msra.mxu0 0.0
    %1675 = vmatprep.subr.mxu0 0.0
    %1676 = vmatpush1.msra.mxu0 0.0
    %1677 = vmatprep.subr.mxu0 0.0
    %1678 = vmatpush1.msra.mxu0 0.0
    %1679 = vmatprep.subr.mxu0 0.0
    %1680 = vmatpush1.msra.mxu0 0.0
    %1681 = vmatprep.subr.mxu0 0.0
    %1682 = vmatpush1.msra.mxu0 0.0
    %1683 = vmatprep.subr.mxu0 0.0
    %1684 = vmatpush1.msra.mxu0 0.0
    %1685 = vmatprep.subr.mxu0 0.0
    %1686 = vmatpush1.msra.mxu0 0.0
    %1687 = vmatprep.mubr.f32.mxu0 0.0
    %1688 = vmatmul.mubr.f32.gmra.mrb[0].mxu0 %v322
    %v1689 = vpop.f32.mrb[0].mxu0
    %v1690 = vadd.f32 %v1586, %v1689
    %v1691 = vpop.f32.mrb[0].mxu0
    %1692 = vdwg.mxu0
    %1693 = vmatprep.subr.mxu0 0.0
    %1694 = vmatpush1.msra.mxu0 %v1539
    %1695 = vmatprep.subr.mxu0 0.0
    %1696 = vmatpush1.msra.mxu0 %v1540
    %1697 = vmatprep.subr.mxu0 0.0
    %1698 = vmatpush1.msra.mxu0 %v1541
    %1699 = vmatprep.subr.mxu0 0.0
    %1700 = vmatpush1.msra.mxu0 %v1542
    %1701 = vmatprep.subr.mxu0 0.0
    %1702 = vmatpush1.msra.mxu0 0.0
    %1703 = vmatprep.subr.mxu0 0.0
    %1704 = vmatpush1.msra.mxu0 0.0
    %1705 = vmatprep.subr.mxu0 0.0
    %1706 = vmatpush1.msra.mxu0 0.0
    %1707 = vmatprep.subr.mxu0 0.0
    %1708 = vmatpush1.msra.mxu0 0.0
    %1709 = vmatprep.subr.mxu0 0.0
    %1710 = vmatpush1.msra.mxu0 0.0
    %1711 = vmatprep.subr.mxu0 0.0
    %1712 = vmatpush1.msra.mxu0 0.0
    %1713 = vmatprep.subr.mxu0 0.0
    %1714 = vmatpush1.msra.mxu0 0.0
    %1715 = vmatprep.subr.mxu0 0.0
    %1716 = vmatpush1.msra.mxu0 0.0
    %1717 = vmatprep.subr.mxu0 0.0
    %1718 = vmatpush1.msra.mxu0 0.0
    %1719 = vmatprep.subr.mxu0 0.0
    %1720 = vmatpush1.msra.mxu0 0.0
    %1721 = vmatprep.subr.mxu0 0.0
    %1722 = vmatpush1.msra.mxu0 0.0
    %1723 = vmatprep.subr.mxu0 0.0
    %1724 = vmatpush1.msra.mxu0 0.0
    %1725 = vmatprep.subr.mxu0 0.0
    %1726 = vmatpush1.msra.mxu0 0.0
    %1727 = vmatprep.subr.mxu0 0.0
    %1728 = vmatpush1.msra.mxu0 0.0
    %1729 = vmatprep.subr.mxu0 0.0
    %1730 = vmatpush1.msra.mxu0 0.0
    %1731 = vmatprep.subr.mxu0 0.0
    %1732 = vmatpush1.msra.mxu0 0.0
    %1733 = vmatprep.subr.mxu0 0.0
    %1734 = vmatpush1.msra.mxu0 0.0
    %1735 = vmatprep.subr.mxu0 0.0
    %1736 = vmatpush1.msra.mxu0 0.0
    %1737 = vmatprep.subr.mxu0 0.0
    %1738 = vmatpush1.msra.mxu0 0.0
    %1739 = vmatprep.subr.mxu0 0.0
    %1740 = vmatpush1.msra.mxu0 0.0
    %1741 = vmatprep.subr.mxu0 0.0
    %1742 = vmatpush1.msra.mxu0 0.0
    %1743 = vmatprep.subr.mxu0 0.0
    %1744 = vmatpush1.msra.mxu0 0.0
    %1745 = vmatprep.subr.mxu0 0.0
    %1746 = vmatpush1.msra.mxu0 0.0
    %1747 = vmatprep.subr.mxu0 0.0
    %1748 = vmatpush1.msra.mxu0 0.0
    %1749 = vmatprep.subr.mxu0 0.0
    %1750 = vmatpush1.msra.mxu0 0.0
    %1751 = vmatprep.subr.mxu0 0.0
    %1752 = vmatpush1.msra.mxu0 0.0
    %1753 = vmatprep.subr.mxu0 0.0
    %1754 = vmatpush1.msra.mxu0 0.0
    %1755 = vmatprep.subr.mxu0 0.0
    %1756 = vmatpush1.msra.mxu0 0.0
    %1757 = vmatprep.mubr.f32.mxu0 0.0
    %1758 = vmatmul.mubr.f32.gmra.mrb[0].mxu0 %v322
    %v1759 = vpop.f32.mrb[0].mxu0
    %v1760 = vadd.f32 %v1590, %v1759
    %v1761 = vpop.f32.mrb[0].mxu0
    %1762 = vdwg.mxu0
    %1763 = vmatprep.subr.mxu0 0.0
    %1764 = vmatpush1.msra.mxu0 %v1543
    %1765 = vmatprep.subr.mxu0 0.0
    %1766 = vmatpush1.msra.mxu0 %v1544
    %1767 = vmatprep.subr.mxu0 0.0
    %1768 = vmatpush1.msra.mxu0 %v1545
    %1769 = vmatprep.subr.mxu0 0.0
    %1770 = vmatpush1.msra.mxu0 %v1546
    %1771 = vmatprep.subr.mxu0 0.0
    %1772 = vmatpush1.msra.mxu0 0.0
    %1773 = vmatprep.subr.mxu0 0.0
    %1774 = vmatpush1.msra.mxu0 0.0
    %1775 = vmatprep.subr.mxu0 0.0
    %1776 = vmatpush1.msra.mxu0 0.0
    %1777 = vmatprep.subr.mxu0 0.0
    %1778 = vmatpush1.msra.mxu0 0.0
    %1779 = vmatprep.subr.mxu0 0.0
    %1780 = vmatpush1.msra.mxu0 0.0
    %1781 = vmatprep.subr.mxu0 0.0
    %1782 = vmatpush1.msra.mxu0 0.0
    %1783 = vmatprep.subr.mxu0 0.0
    %1784 = vmatpush1.msra.mxu0 0.0
    %1785 = vmatprep.subr.mxu0 0.0
    %1786 = vmatpush1.msra.mxu0 0.0
    %1787 = vmatprep.subr.mxu0 0.0
    %1788 = vmatpush1.msra.mxu0 0.0
    %1789 = vmatprep.subr.mxu0 0.0
    %1790 = vmatpush1.msra.mxu0 0.0
    %1791 = vmatprep.subr.mxu0 0.0
    %1792 = vmatpush1.msra.mxu0 0.0
    %1793 = vmatprep.subr.mxu0 0.0
    %1794 = vmatpush1.msra.mxu0 0.0
    %1795 = vmatprep.subr.mxu0 0.0
    %1796 = vmatpush1.msra.mxu0 0.0
    %1797 = vmatprep.subr.mxu0 0.0
    %1798 = vmatpush1.msra.mxu0 0.0
    %1799 = vmatprep.subr.mxu0 0.0
    %1800 = vmatpush1.msra.mxu0 0.0
    %1801 = vmatprep.subr.mxu0 0.0
    %1802 = vmatpush1.msra.mxu0 0.0
    %1803 = vmatprep.subr.mxu0 0.0
    %1804 = vmatpush1.msra.mxu0 0.0
    %1805 = vmatprep.subr.mxu0 0.0
    %1806 = vmatpush1.msra.mxu0 0.0
    %1807 = vmatprep.subr.mxu0 0.0
    %1808 = vmatpush1.msra.mxu0 0.0
    %1809 = vmatprep.subr.mxu0 0.0
    %1810 = vmatpush1.msra.mxu0 0.0
    %1811 = vmatprep.subr.mxu0 0.0
    %1812 = vmatpush1.msra.mxu0 0.0
    %1813 = vmatprep.subr.mxu0 0.0
    %1814 = vmatpush1.msra.mxu0 0.0
    %1815 = vmatprep.subr.mxu0 0.0
    %1816 = vmatpush1.msra.mxu0 0.0
    %1817 = vmatprep.subr.mxu0 0.0
    %1818 = vmatpush1.msra.mxu0 0.0
    %1819 = vmatprep.subr.mxu0 0.0
    %1820 = vmatpush1.msra.mxu0 0.0
    %1821 = vmatprep.subr.mxu0 0.0
    %1822 = vmatpush1.msra.mxu0 0.0
    %1823 = vmatprep.subr.mxu0 0.0
    %1824 = vmatpush1.msra.mxu0 0.0
    %1825 = vmatprep.subr.mxu0 0.0
    %1826 = vmatpush1.msra.mxu0 0.0
    %1827 = vmatprep.mubr.f32.mxu0 0.0
    %1828 = vmatmul.mubr.f32.gmra.mrb[0].mxu0 %v322
    %v1829 = vpop.f32.mrb[0].mxu0
    %v1830 = vadd.f32 %v1594, %v1829
    %v1831 = vpop.f32.mrb[0].mxu0
    %1832 = vdwg.mxu0
    %1833 = vmatprep.subr.mxu0 0.0
    %1834 = vmatpush1.msra.mxu0 %v1547
    %1835 = vmatprep.subr.mxu0 0.0
    %1836 = vmatpush1.msra.mxu0 %v1548
    %1837 = vmatprep.subr.mxu0 0.0
    %1838 = vmatpush1.msra.mxu0 %v1549
    %1839 = vmatprep.subr.mxu0 0.0
    %1840 = vmatpush1.msra.mxu0 %v1550
    %1841 = vmatprep.subr.mxu0 0.0
    %1842 = vmatpush1.msra.mxu0 0.0
    %1843 = vmatprep.subr.mxu0 0.0
    %1844 = vmatpush1.msra.mxu0 0.0
    %1845 = vmatprep.subr.mxu0 0.0
    %1846 = vmatpush1.msra.mxu0 0.0
    %1847 = vmatprep.subr.mxu0 0.0
    %1848 = vmatpush1.msra.mxu0 0.0
    %1849 = vmatprep.subr.mxu0 0.0
    %1850 = vmatpush1.msra.mxu0 0.0
    %1851 = vmatprep.subr.mxu0 0.0
    %1852 = vmatpush1.msra.mxu0 0.0
    %1853 = vmatprep.subr.mxu0 0.0
    %1854 = vmatpush1.msra.mxu0 0.0
    %1855 = vmatprep.subr.mxu0 0.0
    %1856 = vmatpush1.msra.mxu0 0.0
    %1857 = vmatprep.subr.mxu0 0.0
    %1858 = vmatpush1.msra.mxu0 0.0
    %1859 = vmatprep.subr.mxu0 0.0
    %1860 = vmatpush1.msra.mxu0 0.0
    %1861 = vmatprep.subr.mxu0 0.0
    %1862 = vmatpush1.msra.mxu0 0.0
    %1863 = vmatprep.subr.mxu0 0.0
    %1864 = vmatpush1.msra.mxu0 0.0
    %1865 = vmatprep.subr.mxu0 0.0
    %1866 = vmatpush1.msra.mxu0 0.0
    %1867 = vmatprep.subr.mxu0 0.0
    %1868 = vmatpush1.msra.mxu0 0.0
    %1869 = vmatprep.subr.mxu0 0.0
    %1870 = vmatpush1.msra.mxu0 0.0
    %1871 = vmatprep.subr.mxu0 0.0
    %1872 = vmatpush1.msra.mxu0 0.0
    %1873 = vmatprep.subr.mxu0 0.0
    %1874 = vmatpush1.msra.mxu0 0.0
    %1875 = vmatprep.subr.mxu0 0.0
    %1876 = vmatpush1.msra.mxu0 0.0
    %1877 = vmatprep.subr.mxu0 0.0
    %1878 = vmatpush1.msra.mxu0 0.0
    %1879 = vmatprep.subr.mxu0 0.0
    %1880 = vmatpush1.msra.mxu0 0.0
    %1881 = vmatprep.subr.mxu0 0.0
    %1882 = vmatpush1.msra.mxu0 0.0
    %1883 = vmatprep.subr.mxu0 0.0
    %1884 = vmatpush1.msra.mxu0 0.0
    %1885 = vmatprep.subr.mxu0 0.0
    %1886 = vmatpush1.msra.mxu0 0.0
    %1887 = vmatprep.subr.mxu0 0.0
    %1888 = vmatpush1.msra.mxu0 0.0
    %1889 = vmatprep.subr.mxu0 0.0
    %1890 = vmatpush1.msra.mxu0 0.0
    %1891 = vmatprep.subr.mxu0 0.0
    %1892 = vmatpush1.msra.mxu0 0.0
    %1893 = vmatprep.subr.mxu0 0.0
    %1894 = vmatpush1.msra.mxu0 0.0
    %1895 = vmatprep.subr.mxu0 0.0
    %1896 = vmatpush1.msra.mxu0 0.0
    %1897 = vmatprep.mubr.f32.mxu0 0.0
    %1898 = vmatmul.mubr.f32.gmra.mrb[0].mxu0 %v322
    %v1899 = vpop.f32.mrb[0].mxu0
    %v1900 = vadd.f32 %v1598, %v1899
    %v1901 = vpop.f32.mrb[0].mxu0
    %1902 = vdwg.mxu0
    %1903 = vmatprep.subr.mxu0 0.0
    %1904 = vmatpush1.msra.mxu0 %v1551
    %1905 = vmatprep.subr.mxu0 0.0
    %1906 = vmatpush1.msra.mxu0 %v1552
    %1907 = vmatprep.subr.mxu0 0.0
    %1908 = vmatpush1.msra.mxu0 %v1553
    %1909 = vmatprep.subr.mxu0 0.0
    %1910 = vmatpush1.msra.mxu0 %v1554
    %1911 = vmatprep.subr.mxu0 0.0
    %1912 = vmatpush1.msra.mxu0 0.0
    %1913 = vmatprep.subr.mxu0 0.0
    %1914 = vmatpush1.msra.mxu0 0.0
    %1915 = vmatprep.subr.mxu0 0.0
    %1916 = vmatpush1.msra.mxu0 0.0
    %1917 = vmatprep.subr.mxu0 0.0
    %1918 = vmatpush1.msra.mxu0 0.0
    %1919 = vmatprep.subr.mxu0 0.0
    %1920 = vmatpush1.msra.mxu0 0.0
    %1921 = vmatprep.subr.mxu0 0.0
    %1922 = vmatpush1.msra.mxu0 0.0
    %1923 = vmatprep.subr.mxu0 0.0
    %1924 = vmatpush1.msra.mxu0 0.0
    %1925 = vmatprep.subr.mxu0 0.0
    %1926 = vmatpush1.msra.mxu0 0.0
    %1927 = vmatprep.subr.mxu0 0.0
    %1928 = vmatpush1.msra.mxu0 0.0
    %1929 = vmatprep.subr.mxu0 0.0
    %1930 = vmatpush1.msra.mxu0 0.0
    %1931 = vmatprep.subr.mxu0 0.0
    %1932 = vmatpush1.msra.mxu0 0.0
    %1933 = vmatprep.subr.mxu0 0.0
    %1934 = vmatpush1.msra.mxu0 0.0
    %1935 = vmatprep.subr.mxu0 0.0
    %1936 = vmatpush1.msra.mxu0 0.0
    %1937 = vmatprep.subr.mxu0 0.0
    %1938 = vmatpush1.msra.mxu0 0.0
    %1939 = vmatprep.subr.mxu0 0.0
    %1940 = vmatpush1.msra.mxu0 0.0
    %1941 = vmatprep.subr.mxu0 0.0
    %1942 = vmatpush1.msra.mxu0 0.0
    %1943 = vmatprep.subr.mxu0 0.0
    %1944 = vmatpush1.msra.mxu0 0.0
    %1945 = vmatprep.subr.mxu0 0.0
    %1946 = vmatpush1.msra.mxu0 0.0
    %1947 = vmatprep.subr.mxu0 0.0
    %1948 = vmatpush1.msra.mxu0 0.0
    %1949 = vmatprep.subr.mxu0 0.0
    %1950 = vmatpush1.msra.mxu0 0.0
    %1951 = vmatprep.subr.mxu0 0.0
    %1952 = vmatpush1.msra.mxu0 0.0
    %1953 = vmatprep.subr.mxu0 0.0
    %1954 = vmatpush1.msra.mxu0 0.0
    %1955 = vmatprep.subr.mxu0 0.0
    %1956 = vmatpush1.msra.mxu0 0.0
    %1957 = vmatprep.subr.mxu0 0.0
    %1958 = vmatpush1.msra.mxu0 0.0
    %1959 = vmatprep.subr.mxu0 0.0
    %1960 = vmatpush1.msra.mxu0 0.0
    %1961 = vmatprep.subr.mxu0 0.0
    %1962 = vmatpush1.msra.mxu0 0.0
    %1963 = vmatprep.subr.mxu0 0.0
    %1964 = vmatpush1.msra.mxu0 0.0
    %1965 = vmatprep.subr.mxu0 0.0
    %1966 = vmatpush1.msra.mxu0 0.0
    %1967 = vmatprep.mubr.f32.mxu0 0.0
    %1968 = vmatmul.mubr.f32.gmra.mrb[0].mxu0 %v605
    %v1969 = vpop.f32.mrb[0].mxu0
    %v1970 = vadd.f32 %v1602, %v1969
    %v1971 = vpop.f32.mrb[0].mxu0
    %1972 = vdwg.mxu0
    %1973 = vmatprep.subr.mxu0 0.0
    %1974 = vmatpush1.msra.mxu0 %v1555
    %1975 = vmatprep.subr.mxu0 0.0
    %1976 = vmatpush1.msra.mxu0 %v1556
    %1977 = vmatprep.subr.mxu0 0.0
    %1978 = vmatpush1.msra.mxu0 %v1557
    %1979 = vmatprep.subr.mxu0 0.0
    %1980 = vmatpush1.msra.mxu0 %v1558
    %1981 = vmatprep.subr.mxu0 0.0
    %1982 = vmatpush1.msra.mxu0 0.0
    %1983 = vmatprep.subr.mxu0 0.0
    %1984 = vmatpush1.msra.mxu0 0.0
    %1985 = vmatprep.subr.mxu0 0.0
    %1986 = vmatpush1.msra.mxu0 0.0
    %1987 = vmatprep.subr.mxu0 0.0
    %1988 = vmatpush1.msra.mxu0 0.0
    %1989 = vmatprep.subr.mxu0 0.0
    %1990 = vmatpush1.msra.mxu0 0.0
    %1991 = vmatprep.subr.mxu0 0.0
    %1992 = vmatpush1.msra.mxu0 0.0
    %1993 = vmatprep.subr.mxu0 0.0
    %1994 = vmatpush1.msra.mxu0 0.0
    %1995 = vmatprep.subr.mxu0 0.0
    %1996 = vmatpush1.msra.mxu0 0.0
    %1997 = vmatprep.subr.mxu0 0.0
    %1998 = vmatpush1.msra.mxu0 0.0
    %1999 = vmatprep.subr.mxu0 0.0
    %2000 = vmatpush1.msra.mxu0 0.0
    %2001 = vmatprep.subr.mxu0 0.0
    %2002 = vmatpush1.msra.mxu0 0.0
    %2003 = vmatprep.subr.mxu0 0.0
    %2004 = vmatpush1.msra.mxu0 0.0
    %2005 = vmatprep.subr.mxu0 0.0
    %2006 = vmatpush1.msra.mxu0 0.0
    %2007 = vmatprep.subr.mxu0 0.0
    %2008 = vmatpush1.msra.mxu0 0.0
    %2009 = vmatprep.subr.mxu0 0.0
    %2010 = vmatpush1.msra.mxu0 0.0
    %2011 = vmatprep.subr.mxu0 0.0
    %2012 = vmatpush1.msra.mxu0 0.0
    %2013 = vmatprep.subr.mxu0 0.0
    %2014 = vmatpush1.msra.mxu0 0.0
    %2015 = vmatprep.subr.mxu0 0.0
    %2016 = vmatpush1.msra.mxu0 0.0
    %2017 = vmatprep.subr.mxu0 0.0
    %2018 = vmatpush1.msra.mxu0 0.0
    %2019 = vmatprep.subr.mxu0 0.0
    %2020 = vmatpush1.msra.mxu0 0.0
    %2021 = vmatprep.subr.mxu0 0.0
    %2022 = vmatpush1.msra.mxu0 0.0
    %2023 = vmatprep.subr.mxu0 0.0
    %2024 = vmatpush1.msra.mxu0 0.0
    %2025 = vmatprep.subr.mxu0 0.0
    %2026 = vmatpush1.msra.mxu0 0.0
    %2027 = vmatprep.subr.mxu0 0.0
    %2028 = vmatpush1.msra.mxu0 0.0
    %2029 = vmatprep.subr.mxu0 0.0
    %2030 = vmatpush1.msra.mxu0 0.0
    %2031 = vmatprep.subr.mxu0 0.0
    %2032 = vmatpush1.msra.mxu0 0.0
    %2033 = vmatprep.subr.mxu0 0.0
    %2034 = vmatpush1.msra.mxu0 0.0
    %2035 = vmatprep.subr.mxu0 0.0
    %2036 = vmatpush1.msra.mxu0 0.0
    %2037 = vmatprep.mubr.f32.mxu0 0.0
    %2038 = vmatmul.mubr.f32.gmra.mrb[0].mxu0 %v605
    %v2039 = vpop.f32.mrb[0].mxu0
    %v2040 = vadd.f32 %v1606, %v2039
    %v2041 = vpop.f32.mrb[0].mxu0
    %2042 = vdwg.mxu0
    %2043 = vmatprep.subr.mxu0 0.0
    %2044 = vmatpush1.msra.mxu0 %v1559
    %2045 = vmatprep.subr.mxu0 0.0
    %2046 = vmatpush1.msra.mxu0 %v1560
    %2047 = vmatprep.subr.mxu0 0.0
    %2048 = vmatpush1.msra.mxu0 %v1561
    %2049 = vmatprep.subr.mxu0 0.0
    %2050 = vmatpush1.msra.mxu0 %v1562
    %2051 = vmatprep.subr.mxu0 0.0
    %2052 = vmatpush1.msra.mxu0 0.0
    %2053 = vmatprep.subr.mxu0 0.0
    %2054 = vmatpush1.msra.mxu0 0.0
    %2055 = vmatprep.subr.mxu0 0.0
    %2056 = vmatpush1.msra.mxu0 0.0
    %2057 = vmatprep.subr.mxu0 0.0
    %2058 = vmatpush1.msra.mxu0 0.0
    %2059 = vmatprep.subr.mxu0 0.0
    %2060 = vmatpush1.msra.mxu0 0.0
    %2061 = vmatprep.subr.mxu0 0.0
    %2062 = vmatpush1.msra.mxu0 0.0
    %2063 = vmatprep.subr.mxu0 0.0
    %2064 = vmatpush1.msra.mxu0 0.0
    %2065 = vmatprep.subr.mxu0 0.0
    %2066 = vmatpush1.msra.mxu0 0.0
    %2067 = vmatprep.subr.mxu0 0.0
    %2068 = vmatpush1.msra.mxu0 0.0
    %2069 = vmatprep.subr.mxu0 0.0
    %2070 = vmatpush1.msra.mxu0 0.0
    %2071 = vmatprep.subr.mxu0 0.0
    %2072 = vmatpush1.msra.mxu0 0.0
    %2073 = vmatprep.subr.mxu0 0.0
    %2074 = vmatpush1.msra.mxu0 0.0
    %2075 = vmatprep.subr.mxu0 0.0
    %2076 = vmatpush1.msra.mxu0 0.0
    %2077 = vmatprep.subr.mxu0 0.0
    %2078 = vmatpush1.msra.mxu0 0.0
    %2079 = vmatprep.subr.mxu0 0.0
    %2080 = vmatpush1.msra.mxu0 0.0
    %2081 = vmatprep.subr.mxu0 0.0
    %2082 = vmatpush1.msra.mxu0 0.0
    %2083 = vmatprep.subr.mxu0 0.0
    %2084 = vmatpush1.msra.mxu0 0.0
    %2085 = vmatprep.subr.mxu0 0.0
    %2086 = vmatpush1.msra.mxu0 0.0
    %2087 = vmatprep.subr.mxu0 0.0
    %2088 = vmatpush1.msra.mxu0 0.0
    %2089 = vmatprep.subr.mxu0 0.0
    %2090 = vmatpush1.msra.mxu0 0.0
    %2091 = vmatprep.subr.mxu0 0.0
    %2092 = vmatpush1.msra.mxu0 0.0
    %2093 = vmatprep.subr.mxu0 0.0
    %2094 = vmatpush1.msra.mxu0 0.0
    %2095 = vmatprep.subr.mxu0 0.0
    %2096 = vmatpush1.msra.mxu0 0.0
    %2097 = vmatprep.subr.mxu0 0.0
    %2098 = vmatpush1.msra.mxu0 0.0
    %2099 = vmatprep.subr.mxu0 0.0
    %2100 = vmatpush1.msra.mxu0 0.0
    %2101 = vmatprep.subr.mxu0 0.0
    %2102 = vmatpush1.msra.mxu0 0.0
    %2103 = vmatprep.subr.mxu0 0.0
    %2104 = vmatpush1.msra.mxu0 0.0
    %2105 = vmatprep.subr.mxu0 0.0
    %2106 = vmatpush1.msra.mxu0 0.0
    %2107 = vmatprep.mubr.f32.mxu0 0.0
    %2108 = vmatmul.mubr.f32.gmra.mrb[0].mxu0 %v605
    %v2109 = vpop.f32.mrb[0].mxu0
    %v2110 = vadd.f32 %v1610, %v2109
    %v2111 = vpop.f32.mrb[0].mxu0
    %2112 = vdwg.mxu0
    %2113 = vmatprep.subr.mxu0 0.0
    %2114 = vmatpush1.msra.mxu0 %v1563
    %2115 = vmatprep.subr.mxu0 0.0
    %2116 = vmatpush1.msra.mxu0 %v1564
    %2117 = vmatprep.subr.mxu0 0.0
    %2118 = vmatpush1.msra.mxu0 %v1565
    %2119 = vmatprep.subr.mxu0 0.0
    %2120 = vmatpush1.msra.mxu0 %v1566
    %2121 = vmatprep.subr.mxu0 0.0
    %2122 = vmatpush1.msra.mxu0 0.0
    %2123 = vmatprep.subr.mxu0 0.0
    %2124 = vmatpush1.msra.mxu0 0.0
    %2125 = vmatprep.subr.mxu0 0.0
    %2126 = vmatpush1.msra.mxu0 0.0
    %2127 = vmatprep.subr.mxu0 0.0
    %2128 = vmatpush1.msra.mxu0 0.0
    %2129 = vmatprep.subr.mxu0 0.0
    %2130 = vmatpush1.msra.mxu0 0.0
    %2131 = vmatprep.subr.mxu0 0.0
    %2132 = vmatpush1.msra.mxu0 0.0
    %2133 = vmatprep.subr.mxu0 0.0
    %2134 = vmatpush1.msra.mxu0 0.0
    %2135 = vmatprep.subr.mxu0 0.0
    %2136 = vmatpush1.msra.mxu0 0.0
    %2137 = vmatprep.subr.mxu0 0.0
    %2138 = vmatpush1.msra.mxu0 0.0
    %2139 = vmatprep.subr.mxu0 0.0
    %2140 = vmatpush1.msra.mxu0 0.0
    %2141 = vmatprep.subr.mxu0 0.0
    %2142 = vmatpush1.msra.mxu0 0.0
    %2143 = vmatprep.subr.mxu0 0.0
    %2144 = vmatpush1.msra.mxu0 0.0
    %2145 = vmatprep.subr.mxu0 0.0
    %2146 = vmatpush1.msra.mxu0 0.0
    %2147 = vmatprep.subr.mxu0 0.0
    %2148 = vmatpush1.msra.mxu0 0.0
    %2149 = vmatprep.subr.mxu0 0.0
    %2150 = vmatpush1.msra.mxu0 0.0
    %2151 = vmatprep.subr.mxu0 0.0
    %2152 = vmatpush1.msra.mxu0 0.0
    %2153 = vmatprep.subr.mxu0 0.0
    %2154 = vmatpush1.msra.mxu0 0.0
    %2155 = vmatprep.subr.mxu0 0.0
    %2156 = vmatpush1.msra.mxu0 0.0
    %2157 = vmatprep.subr.mxu0 0.0
    %2158 = vmatpush1.msra.mxu0 0.0
    %2159 = vmatprep.subr.mxu0 0.0
    %2160 = vmatpush1.msra.mxu0 0.0
    %2161 = vmatprep.subr.mxu0 0.0
    %2162 = vmatpush1.msra.mxu0 0.0
    %2163 = vmatprep.subr.mxu0 0.0
    %2164 = vmatpush1.msra.mxu0 0.0
    %2165 = vmatprep.subr.mxu0 0.0
    %2166 = vmatpush1.msra.mxu0 0.0
    %2167 = vmatprep.subr.mxu0 0.0
    %2168 = vmatpush1.msra.mxu0 0.0
    %2169 = vmatprep.subr.mxu0 0.0
    %2170 = vmatpush1.msra.mxu0 0.0
    %2171 = vmatprep.subr.mxu0 0.0
    %2172 = vmatpush1.msra.mxu0 0.0
    %2173 = vmatprep.subr.mxu0 0.0
    %2174 = vmatpush1.msra.mxu0 0.0
    %2175 = vmatprep.subr.mxu0 0.0
    %2176 = vmatpush1.msra.mxu0 0.0
    %2177 = vmatprep.mubr.f32.mxu0 0.0
    %2178 = vmatmul.mubr.f32.gmra.mrb[0].mxu0 %v605
    %v2179 = vpop.f32.mrb[0].mxu0
    %v2180 = vadd.f32 %v1614, %v2179
    %v2181 = vpop.f32.mrb[0].mxu0
    %2182 = vdwg.mxu0
    %vm2183 = vcmask 64512
    %v2185 = vsel %vm2183, %v391, 0
    %v2188 = vsel %vm2183, %v1042, 0
    %2190 = vmatprep.subr.mxu0 0.0
    %2191 = vmatpush1.xpose.msra.mxu0 %v2188
    %2192 = vmatprep.subr.mxu0 0.0
    %2193 = vmatpush1.xpose.msra.mxu0 0.0
    %2194 = vmatprep.subr.mxu0 0.0
    %2195 = vmatpush1.xpose.msra.mxu0 0.0
    %2196 = vmatprep.subr.mxu0 0.0
    %2197 = vmatpush1.xpose.msra.mxu0 0.0
    %2198 = vmatprep.subr.mxu0 0.0
    %2199 = vmatpush1.xpose.msra.mxu0 0.0
    %2200 = vmatprep.subr.mxu0 0.0
    %2201 = vmatpush1.xpose.msra.mxu0 0.0
    %2202 = vmatprep.subr.mxu0 0.0
    %2203 = vmatpush1.xpose.msra.mxu0 0.0
    %2204 = vmatprep.subr.mxu0 0.0
    %2205 = vmatpush1.xpose.msra.mxu0 0.0
    %2206 = vmatprep.subr.mxu0 0.0
    %2207 = vmatpush1.xpose.msra.mxu0 0.0
    %2208 = vmatprep.subr.mxu0 0.0
    %2209 = vmatpush1.xpose.msra.mxu0 0.0
    %2210 = vmatprep.subr.mxu0 0.0
    %2211 = vmatpush1.xpose.msra.mxu0 0.0
    %2212 = vmatprep.subr.mxu0 0.0
    %2213 = vmatpush1.xpose.msra.mxu0 0.0
    %2214 = vmatprep.subr.mxu0 0.0
    %2215 = vmatpush1.xpose.msra.mxu0 0.0
    %2216 = vmatprep.subr.mxu0 0.0
    %2217 = vmatpush1.xpose.msra.mxu0 0.0
    %2218 = vmatprep.subr.mxu0 0.0
    %2219 = vmatpush1.xpose.msra.mxu0 0.0
    %2220 = vmatprep.subr.mxu0 0.0
    %2221 = vmatpush1.xpose.msra.mxu0 0.0
    %2222 = vmatprep.subr.mxu0 0.0
    %2223 = vmatpush1.xpose.msra.mxu0 0.0
    %2224 = vmatprep.subr.mxu0 0.0
    %2225 = vmatpush1.xpose.msra.mxu0 0.0
    %2226 = vmatprep.subr.mxu0 0.0
    %2227 = vmatpush1.xpose.msra.mxu0 0.0
    %2228 = vmatprep.subr.mxu0 0.0
    %2229 = vmatpush1.xpose.msra.mxu0 0.0
    %2230 = vmatprep.subr.mxu0 0.0
    %2231 = vmatpush1.xpose.msra.mxu0 0.0
    %2232 = vmatprep.subr.mxu0 0.0
    %2233 = vmatpush1.xpose.msra.mxu0 0.0
    %2234 = vmatprep.subr.mxu0 0.0
    %2235 = vmatpush1.xpose.msra.mxu0 0.0
    %2236 = vmatprep.subr.mxu0 0.0
    %2237 = vmatpush1.xpose.msra.mxu0 0.0
    %2238 = vmatprep.subr.mxu0 0.0
    %2239 = vmatpush1.xpose.msra.mxu0 0.0
    %2240 = vmatprep.subr.mxu0 0.0
    %2241 = vmatpush1.xpose.msra.mxu0 0.0
    %2242 = vmatprep.subr.mxu0 0.0
    %2243 = vmatpush1.xpose.msra.mxu0 0.0
    %2244 = vmatprep.subr.mxu0 0.0
    %2245 = vmatpush1.xpose.msra.mxu0 0.0
    %2246 = vmatprep.subr.mxu0 0.0
    %2247 = vmatpush1.xpose.msra.mxu0 0.0
    %2248 = vmatprep.subr.mxu0 0.0
    %2249 = vmatpush1.xpose.msra.mxu0 0.0
    %2250 = vmatprep.subr.mxu0 0.0
    %2251 = vmatpush1.xpose.msra.mxu0 0.0
    %2252 = vmatprep.subr.mxu0 0.0
    %2253 = vmatpush1.xpose.msra.mxu0 0.0
    %2254 = vmatprep.mubr.f32.mxu0 0.0
    %2255 = vmatmul.mubr.f32.gmra.mrb[0].mxu0 %v2185
    %v2256 = vpop.f32.mrb[0].mxu0
    %v2257 = vadd.f32 0.0, %v2256
    %v2258 = vpop.f32.mrb[0].mxu0
    %2259 = vdwg.mxu0
    %v2261 = vsel %vm2183, %v461, 0
    %v2264 = vsel %vm2183, %v1112, 0
    %2266 = vmatprep.subr.mxu0 0.0
    %2267 = vmatpush1.xpose.msra.mxu0 %v2264
    %2268 = vmatprep.subr.mxu0 0.0
    %2269 = vmatpush1.xpose.msra.mxu0 0.0
    %2270 = vmatprep.subr.mxu0 0.0
    %2271 = vmatpush1.xpose.msra.mxu0 0.0
    %2272 = vmatprep.subr.mxu0 0.0
    %2273 = vmatpush1.xpose.msra.mxu0 0.0
    %2274 = vmatprep.subr.mxu0 0.0
    %2275 = vmatpush1.xpose.msra.mxu0 0.0
    %2276 = vmatprep.subr.mxu0 0.0
    %2277 = vmatpush1.xpose.msra.mxu0 0.0
    %2278 = vmatprep.subr.mxu0 0.0
    %2279 = vmatpush1.xpose.msra.mxu0 0.0
    %2280 = vmatprep.subr.mxu0 0.0
    %2281 = vmatpush1.xpose.msra.mxu0 0.0
    %2282 = vmatprep.subr.mxu0 0.0
    %2283 = vmatpush1.xpose.msra.mxu0 0.0
    %2284 = vmatprep.subr.mxu0 0.0
    %2285 = vmatpush1.xpose.msra.mxu0 0.0
    %2286 = vmatprep.subr.mxu0 0.0
    %2287 = vmatpush1.xpose.msra.mxu0 0.0
    %2288 = vmatprep.subr.mxu0 0.0
    %2289 = vmatpush1.xpose.msra.mxu0 0.0
    %2290 = vmatprep.subr.mxu0 0.0
    %2291 = vmatpush1.xpose.msra.mxu0 0.0
    %2292 = vmatprep.subr.mxu0 0.0
    %2293 = vmatpush1.xpose.msra.mxu0 0.0
    %2294 = vmatprep.subr.mxu0 0.0
    %2295 = vmatpush1.xpose.msra.mxu0 0.0
    %2296 = vmatprep.subr.mxu0 0.0
    %2297 = vmatpush1.xpose.msra.mxu0 0.0
    %2298 = vmatprep.subr.mxu0 0.0
    %2299 = vmatpush1.xpose.msra.mxu0 0.0
    %2300 = vmatprep.subr.mxu0 0.0
    %2301 = vmatpush1.xpose.msra.mxu0 0.0
    %2302 = vmatprep.subr.mxu0 0.0
    %2303 = vmatpush1.xpose.msra.mxu0 0.0
    %2304 = vmatprep.subr.mxu0 0.0
    %2305 = vmatpush1.xpose.msra.mxu0 0.0
    %2306 = vmatprep.subr.mxu0 0.0
    %2307 = vmatpush1.xpose.msra.mxu0 0.0
    %2308 = vmatprep.subr.mxu0 0.0
    %2309 = vmatpush1.xpose.msra.mxu0 0.0
    %2310 = vmatprep.subr.mxu0 0.0
    %2311 = vmatpush1.xpose.msra.mxu0 0.0
    %2312 = vmatprep.subr.mxu0 0.0
    %2313 = vmatpush1.xpose.msra.mxu0 0.0
    %2314 = vmatprep.subr.mxu0 0.0
    %2315 = vmatpush1.xpose.msra.mxu0 0.0
    %2316 = vmatprep.subr.mxu0 0.0
    %2317 = vmatpush1.xpose.msra.mxu0 0.0
    %2318 = vmatprep.subr.mxu0 0.0
    %2319 = vmatpush1.xpose.msra.mxu0 0.0
    %2320 = vmatprep.subr.mxu0 0.0
    %2321 = vmatpush1.xpose.msra.mxu0 0.0
    %2322 = vmatprep.subr.mxu0 0.0
    %2323 = vmatpush1.xpose.msra.mxu0 0.0
    %2324 = vmatprep.subr.mxu0 0.0
    %2325 = vmatpush1.xpose.msra.mxu0 0.0
    %2326 = vmatprep.subr.mxu0 0.0
    %2327 = vmatpush1.xpose.msra.mxu0 0.0
    %2328 = vmatprep.subr.mxu0 0.0
    %2329 = vmatpush1.xpose.msra.mxu0 0.0
    %2330 = vmatprep.mubr.f32.mxu0 0.0
    %2331 = vmatmul.mubr.f32.gmra.mrb[0].mxu0 %v2261
    %v2332 = vpop.f32.mrb[0].mxu0
    %v2333 = vadd.f32 0.0, %v2332
    %v2334 = vpop.f32.mrb[0].mxu0
    %2335 = vdwg.mxu0
    %v2337 = vsel %vm2183, %v531, 0
    %v2340 = vsel %vm2183, %v1182, 0
    %2342 = vmatprep.subr.mxu0 0.0
    %2343 = vmatpush1.xpose.msra.mxu0 %v2340
    %2344 = vmatprep.subr.mxu0 0.0
    %2345 = vmatpush1.xpose.msra.mxu0 0.0
    %2346 = vmatprep.subr.mxu0 0.0
    %2347 = vmatpush1.xpose.msra.mxu0 0.0
    %2348 = vmatprep.subr.mxu0 0.0
    %2349 = vmatpush1.xpose.msra.mxu0 0.0
    %2350 = vmatprep.subr.mxu0 0.0
    %2351 = vmatpush1.xpose.msra.mxu0 0.0
    %2352 = vmatprep.subr.mxu0 0.0
    %2353 = vmatpush1.xpose.msra.mxu0 0.0
    %2354 = vmatprep.subr.mxu0 0.0
    %2355 = vmatpush1.xpose.msra.mxu0 0.0
    %2356 = vmatprep.subr.mxu0 0.0
    %2357 = vmatpush1.xpose.msra.mxu0 0.0
    %2358 = vmatprep.subr.mxu0 0.0
    %2359 = vmatpush1.xpose.msra.mxu0 0.0
    %2360 = vmatprep.subr.mxu0 0.0
    %2361 = vmatpush1.xpose.msra.mxu0 0.0
    %2362 = vmatprep.subr.mxu0 0.0
    %2363 = vmatpush1.xpose.msra.mxu0 0.0
    %2364 = vmatprep.subr.mxu0 0.0
    %2365 = vmatpush1.xpose.msra.mxu0 0.0
    %2366 = vmatprep.subr.mxu0 0.0
    %2367 = vmatpush1.xpose.msra.mxu0 0.0
    %2368 = vmatprep.subr.mxu0 0.0
    %2369 = vmatpush1.xpose.msra.mxu0 0.0
    %2370 = vmatprep.subr.mxu0 0.0
    %2371 = vmatpush1.xpose.msra.mxu0 0.0
    %2372 = vmatprep.subr.mxu0 0.0
    %2373 = vmatpush1.xpose.msra.mxu0 0.0
    %2374 = vmatprep.subr.mxu0 0.0
    %2375 = vmatpush1.xpose.msra.mxu0 0.0
    %2376 = vmatprep.subr.mxu0 0.0
    %2377 = vmatpush1.xpose.msra.mxu0 0.0
    %2378 = vmatprep.subr.mxu0 0.0
    %2379 = vmatpush1.xpose.msra.mxu0 0.0
    %2380 = vmatprep.subr.mxu0 0.0
    %2381 = vmatpush1.xpose.msra.mxu0 0.0
    %2382 = vmatprep.subr.mxu0 0.0
    %2383 = vmatpush1.xpose.msra.mxu0 0.0
    %2384 = vmatprep.subr.mxu0 0.0
    %2385 = vmatpush1.xpose.msra.mxu0 0.0
    %2386 = vmatprep.subr.mxu0 0.0
    %2387 = vmatpush1.xpose.msra.mxu0 0.0
    %2388 = vmatprep.subr.mxu0 0.0
    %2389 = vmatpush1.xpose.msra.mxu0 0.0
    %2390 = vmatprep.subr.mxu0 0.0
    %2391 = vmatpush1.xpose.msra.mxu0 0.0
    %2392 = vmatprep.subr.mxu0 0.0
    %2393 = vmatpush1.xpose.msra.mxu0 0.0
    %2394 = vmatprep.subr.mxu0 0.0
    %2395 = vmatpush1.xpose.msra.mxu0 0.0
    %2396 = vmatprep.subr.mxu0 0.0
    %2397 = vmatpush1.xpose.msra.mxu0 0.0
    %2398 = vmatprep.subr.mxu0 0.0
    %2399 = vmatpush1.xpose.msra.mxu0 0.0
    %2400 = vmatprep.subr.mxu0 0.0
    %2401 = vmatpush1.xpose.msra.mxu0 0.0
    %2402 = vmatprep.subr.mxu0 0.0
    %2403 = vmatpush1.xpose.msra.mxu0 0.0
    %2404 = vmatprep.subr.mxu0 0.0
    %2405 = vmatpush1.xpose.msra.mxu0 0.0
    %2406 = vmatprep.mubr.f32.mxu0 0.0
    %2407 = vmatmul.mubr.f32.gmra.mrb[0].mxu0 %v2337
    %v2408 = vpop.f32.mrb[0].mxu0
    %v2409 = vadd.f32 0.0, %v2408
    %v2410 = vpop.f32.mrb[0].mxu0
    %2411 = vdwg.mxu0
    %v2413 = vsel %vm2183, %v601, 0
    %v2416 = vsel %vm2183, %v1252, 0
    %2418 = vmatprep.subr.mxu0 0.0
    %2419 = vmatpush1.xpose.msra.mxu0 %v2416
    %2420 = vmatprep.subr.mxu0 0.0
    %2421 = vmatpush1.xpose.msra.mxu0 0.0
    %2422 = vmatprep.subr.mxu0 0.0
    %2423 = vmatpush1.xpose.msra.mxu0 0.0
    %2424 = vmatprep.subr.mxu0 0.0
    %2425 = vmatpush1.xpose.msra.mxu0 0.0
    %2426 = vmatprep.subr.mxu0 0.0
    %2427 = vmatpush1.xpose.msra.mxu0 0.0
    %2428 = vmatprep.subr.mxu0 0.0
    %2429 = vmatpush1.xpose.msra.mxu0 0.0
    %2430 = vmatprep.subr.mxu0 0.0
    %2431 = vmatpush1.xpose.msra.mxu0 0.0
    %2432 = vmatprep.subr.mxu0 0.0
    %2433 = vmatpush1.xpose.msra.mxu0 0.0
    %2434 = vmatprep.subr.mxu0 0.0
    %2435 = vmatpush1.xpose.msra.mxu0 0.0
    %2436 = vmatprep.subr.mxu0 0.0
    %2437 = vmatpush1.xpose.msra.mxu0 0.0
    %2438 = vmatprep.subr.mxu0 0.0
    %2439 = vmatpush1.xpose.msra.mxu0 0.0
    %2440 = vmatprep.subr.mxu0 0.0
    %2441 = vmatpush1.xpose.msra.mxu0 0.0
    %2442 = vmatprep.subr.mxu0 0.0
    %2443 = vmatpush1.xpose.msra.mxu0 0.0
    %2444 = vmatprep.subr.mxu0 0.0
    %2445 = vmatpush1.xpose.msra.mxu0 0.0
    %2446 = vmatprep.subr.mxu0 0.0
    %2447 = vmatpush1.xpose.msra.mxu0 0.0
    %2448 = vmatprep.subr.mxu0 0.0
    %2449 = vmatpush1.xpose.msra.mxu0 0.0
    %2450 = vmatprep.subr.mxu0 0.0
    %2451 = vmatpush1.xpose.msra.mxu0 0.0
    %2452 = vmatprep.subr.mxu0 0.0
    %2453 = vmatpush1.xpose.msra.mxu0 0.0
    %2454 = vmatprep.subr.mxu0 0.0
    %2455 = vmatpush1.xpose.msra.mxu0 0.0
    %2456 = vmatprep.subr.mxu0 0.0
    %2457 = vmatpush1.xpose.msra.mxu0 0.0
    %2458 = vmatprep.subr.mxu0 0.0
    %2459 = vmatpush1.xpose.msra.mxu0 0.0
    %2460 = vmatprep.subr.mxu0 0.0
    %2461 = vmatpush1.xpose.msra.mxu0 0.0
    %2462 = vmatprep.subr.mxu0 0.0
    %2463 = vmatpush1.xpose.msra.mxu0 0.0
    %2464 = vmatprep.subr.mxu0 0.0
    %2465 = vmatpush1.xpose.msra.mxu0 0.0
    %2466 = vmatprep.subr.mxu0 0.0
    %2467 = vmatpush1.xpose.msra.mxu0 0.0
    %2468 = vmatprep.subr.mxu0 0.0
    %2469 = vmatpush1.xpose.msra.mxu0 0.0
    %2470 = vmatprep.subr.mxu0 0.0
    %2471 = vmatpush1.xpose.msra.mxu0 0.0
    %2472 = vmatprep.subr.mxu0 0.0
    %2473 = vmatpush1.xpose.msra.mxu0 0.0
    %2474 = vmatprep.subr.mxu0 0.0
    %2475 = vmatpush1.xpose.msra.mxu0 0.0
    %2476 = vmatprep.subr.mxu0 0.0
    %2477 = vmatpush1.xpose.msra.mxu0 0.0
    %2478 = vmatprep.subr.mxu0 0.0
    %2479 = vmatpush1.xpose.msra.mxu0 0.0
    %2480 = vmatprep.subr.mxu0 0.0
    %2481 = vmatpush1.xpose.msra.mxu0 0.0
    %2482 = vmatprep.mubr.f32.mxu0 0.0
    %2483 = vmatmul.mubr.f32.gmra.mrb[0].mxu0 %v2413
    %v2484 = vpop.f32.mrb[0].mxu0
    %v2485 = vadd.f32 0.0, %v2484
    %v2486 = vpop.f32.mrb[0].mxu0
    %2487 = vdwg.mxu0
    %v2489 = vsel %vm2183, %v674, 0
    %v2492 = vsel %vm2183, %v1322, 0
    %2494 = vmatprep.subr.mxu0 0.0
    %2495 = vmatpush1.xpose.msra.mxu0 %v2492
    %2496 = vmatprep.subr.mxu0 0.0
    %2497 = vmatpush1.xpose.msra.mxu0 0.0
    %2498 = vmatprep.subr.mxu0 0.0
    %2499 = vmatpush1.xpose.msra.mxu0 0.0
    %2500 = vmatprep.subr.mxu0 0.0
    %2501 = vmatpush1.xpose.msra.mxu0 0.0
    %2502 = vmatprep.subr.mxu0 0.0
    %2503 = vmatpush1.xpose.msra.mxu0 0.0
    %2504 = vmatprep.subr.mxu0 0.0
    %2505 = vmatpush1.xpose.msra.mxu0 0.0
    %2506 = vmatprep.subr.mxu0 0.0
    %2507 = vmatpush1.xpose.msra.mxu0 0.0
    %2508 = vmatprep.subr.mxu0 0.0
    %2509 = vmatpush1.xpose.msra.mxu0 0.0
    %2510 = vmatprep.subr.mxu0 0.0
    %2511 = vmatpush1.xpose.msra.mxu0 0.0
    %2512 = vmatprep.subr.mxu0 0.0
    %2513 = vmatpush1.xpose.msra.mxu0 0.0
    %2514 = vmatprep.subr.mxu0 0.0
    %2515 = vmatpush1.xpose.msra.mxu0 0.0
    %2516 = vmatprep.subr.mxu0 0.0
    %2517 = vmatpush1.xpose.msra.mxu0 0.0
    %2518 = vmatprep.subr.mxu0 0.0
    %2519 = vmatpush1.xpose.msra.mxu0 0.0
    %2520 = vmatprep.subr.mxu0 0.0
    %2521 = vmatpush1.xpose.msra.mxu0 0.0
    %2522 = vmatprep.subr.mxu0 0.0
    %2523 = vmatpush1.xpose.msra.mxu0 0.0
    %2524 = vmatprep.subr.mxu0 0.0
    %2525 = vmatpush1.xpose.msra.mxu0 0.0
    %2526 = vmatprep.subr.mxu0 0.0
    %2527 = vmatpush1.xpose.msra.mxu0 0.0
    %2528 = vmatprep.subr.mxu0 0.0
    %2529 = vmatpush1.xpose.msra.mxu0 0.0
    %2530 = vmatprep.subr.mxu0 0.0
    %2531 = vmatpush1.xpose.msra.mxu0 0.0
    %2532 = vmatprep.subr.mxu0 0.0
    %2533 = vmatpush1.xpose.msra.mxu0 0.0
    %2534 = vmatprep.subr.mxu0 0.0
    %2535 = vmatpush1.xpose.msra.mxu0 0.0
    %2536 = vmatprep.subr.mxu0 0.0
    %2537 = vmatpush1.xpose.msra.mxu0 0.0
    %2538 = vmatprep.subr.mxu0 0.0
    %2539 = vmatpush1.xpose.msra.mxu0 0.0
    %2540 = vmatprep.subr.mxu0 0.0
    %2541 = vmatpush1.xpose.msra.mxu0 0.0
    %2542 = vmatprep.subr.mxu0 0.0
    %2543 = vmatpush1.xpose.msra.mxu0 0.0
    %2544 = vmatprep.subr.mxu0 0.0
    %2545 = vmatpush1.xpose.msra.mxu0 0.0
    %2546 = vmatprep.subr.mxu0 0.0
    %2547 = vmatpush1.xpose.msra.mxu0 0.0
    %2548 = vmatprep.subr.mxu0 0.0
    %2549 = vmatpush1.xpose.msra.mxu0 0.0
    %2550 = vmatprep.subr.mxu0 0.0
    %2551 = vmatpush1.xpose.msra.mxu0 0.0
    %2552 = vmatprep.subr.mxu0 0.0
    %2553 = vmatpush1.xpose.msra.mxu0 0.0
    %2554 = vmatprep.subr.mxu0 0.0
    %2555 = vmatpush1.xpose.msra.mxu0 0.0
    %2556 = vmatprep.subr.mxu0 0.0
    %2557 = vmatpush1.xpose.msra.mxu0 0.0
    %2558 = vmatprep.mubr.f32.mxu0 0.0
    %2559 = vmatmul.mubr.f32.gmra.mrb[0].mxu0 %v2489
    %v2560 = vpop.f32.mrb[0].mxu0
    %v2561 = vadd.f32 0.0, %v2560
    %v2562 = vpop.f32.mrb[0].mxu0
    %2563 = vdwg.mxu0
    %v2565 = vsel %vm2183, %v744, 0
    %v2568 = vsel %vm2183, %v1392, 0
    %2570 = vmatprep.subr.mxu0 0.0
    %2571 = vmatpush1.xpose.msra.mxu0 %v2568
    %2572 = vmatprep.subr.mxu0 0.0
    %2573 = vmatpush1.xpose.msra.mxu0 0.0
    %2574 = vmatprep.subr.mxu0 0.0
    %2575 = vmatpush1.xpose.msra.mxu0 0.0
    %2576 = vmatprep.subr.mxu0 0.0
    %2577 = vmatpush1.xpose.msra.mxu0 0.0
    %2578 = vmatprep.subr.mxu0 0.0
    %2579 = vmatpush1.xpose.msra.mxu0 0.0
    %2580 = vmatprep.subr.mxu0 0.0
    %2581 = vmatpush1.xpose.msra.mxu0 0.0
    %2582 = vmatprep.subr.mxu0 0.0
    %2583 = vmatpush1.xpose.msra.mxu0 0.0
    %2584 = vmatprep.subr.mxu0 0.0
    %2585 = vmatpush1.xpose.msra.mxu0 0.0
    %2586 = vmatprep.subr.mxu0 0.0
    %2587 = vmatpush1.xpose.msra.mxu0 0.0
    %2588 = vmatprep.subr.mxu0 0.0
    %2589 = vmatpush1.xpose.msra.mxu0 0.0
    %2590 = vmatprep.subr.mxu0 0.0
    %2591 = vmatpush1.xpose.msra.mxu0 0.0
    %2592 = vmatprep.subr.mxu0 0.0
    %2593 = vmatpush1.xpose.msra.mxu0 0.0
    %2594 = vmatprep.subr.mxu0 0.0
    %2595 = vmatpush1.xpose.msra.mxu0 0.0
    %2596 = vmatprep.subr.mxu0 0.0
    %2597 = vmatpush1.xpose.msra.mxu0 0.0
    %2598 = vmatprep.subr.mxu0 0.0
    %2599 = vmatpush1.xpose.msra.mxu0 0.0
    %2600 = vmatprep.subr.mxu0 0.0
    %2601 = vmatpush1.xpose.msra.mxu0 0.0
    %2602 = vmatprep.subr.mxu0 0.0
    %2603 = vmatpush1.xpose.msra.mxu0 0.0
    %2604 = vmatprep.subr.mxu0 0.0
    %2605 = vmatpush1.xpose.msra.mxu0 0.0
    %2606 = vmatprep.subr.mxu0 0.0
    %2607 = vmatpush1.xpose.msra.mxu0 0.0
    %2608 = vmatprep.subr.mxu0 0.0
    %2609 = vmatpush1.xpose.msra.mxu0 0.0
    %2610 = vmatprep.subr.mxu0 0.0
    %2611 = vmatpush1.xpose.msra.mxu0 0.0
    %2612 = vmatprep.subr.mxu0 0.0
    %2613 = vmatpush1.xpose.msra.mxu0 0.0
    %2614 = vmatprep.subr.mxu0 0.0
    %2615 = vmatpush1.xpose.msra.mxu0 0.0
    %2616 = vmatprep.subr.mxu0 0.0
    %2617 = vmatpush1.xpose.msra.mxu0 0.0
    %2618 = vmatprep.subr.mxu0 0.0
    %2619 = vmatpush1.xpose.msra.mxu0 0.0
    %2620 = vmatprep.subr.mxu0 0.0
    %2621 = vmatpush1.xpose.msra.mxu0 0.0
    %2622 = vmatprep.subr.mxu0 0.0
    %2623 = vmatpush1.xpose.msra.mxu0 0.0
    %2624 = vmatprep.subr.mxu0 0.0
    %2625 = vmatpush1.xpose.msra.mxu0 0.0
    %2626 = vmatprep.subr.mxu0 0.0
    %2627 = vmatpush1.xpose.msra.mxu0 0.0
    %2628 = vmatprep.subr.mxu0 0.0
    %2629 = vmatpush1.xpose.msra.mxu0 0.0
    %2630 = vmatprep.subr.mxu0 0.0
    %2631 = vmatpush1.xpose.msra.mxu0 0.0
    %2632 = vmatprep.subr.mxu0 0.0
    %2633 = vmatpush1.xpose.msra.mxu0 0.0
    %2634 = vmatprep.mubr.f32.mxu0 0.0
    %2635 = vmatmul.mubr.f32.gmra.mrb[0].mxu0 %v2565
    %v2636 = vpop.f32.mrb[0].mxu0
    %v2637 = vadd.f32 0.0, %v2636
    %v2638 = vpop.f32.mrb[0].mxu0
    %2639 = vdwg.mxu0
    %v2641 = vsel %vm2183, %v814, 0
    %v2644 = vsel %vm2183, %v1462, 0
    %2646 = vmatprep.subr.mxu0 0.0
    %2647 = vmatpush1.xpose.msra.mxu0 %v2644
    %2648 = vmatprep.subr.mxu0 0.0
    %2649 = vmatpush1.xpose.msra.mxu0 0.0
    %2650 = vmatprep.subr.mxu0 0.0
    %2651 = vmatpush1.xpose.msra.mxu0 0.0
    %2652 = vmatprep.subr.mxu0 0.0
    %2653 = vmatpush1.xpose.msra.mxu0 0.0
    %2654 = vmatprep.subr.mxu0 0.0
    %2655 = vmatpush1.xpose.msra.mxu0 0.0
    %2656 = vmatprep.subr.mxu0 0.0
    %2657 = vmatpush1.xpose.msra.mxu0 0.0
    %2658 = vmatprep.subr.mxu0 0.0
    %2659 = vmatpush1.xpose.msra.mxu0 0.0
    %2660 = vmatprep.subr.mxu0 0.0
    %2661 = vmatpush1.xpose.msra.mxu0 0.0
    %2662 = vmatprep.subr.mxu0 0.0
    %2663 = vmatpush1.xpose.msra.mxu0 0.0
    %2664 = vmatprep.subr.mxu0 0.0
    %2665 = vmatpush1.xpose.msra.mxu0 0.0
    %2666 = vmatprep.subr.mxu0 0.0
    %2667 = vmatpush1.xpose.msra.mxu0 0.0
    %2668 = vmatprep.subr.mxu0 0.0
    %2669 = vmatpush1.xpose.msra.mxu0 0.0
    %2670 = vmatprep.subr.mxu0 0.0
    %2671 = vmatpush1.xpose.msra.mxu0 0.0
    %2672 = vmatprep.subr.mxu0 0.0
    %2673 = vmatpush1.xpose.msra.mxu0 0.0
    %2674 = vmatprep.subr.mxu0 0.0
    %2675 = vmatpush1.xpose.msra.mxu0 0.0
    %2676 = vmatprep.subr.mxu0 0.0
    %2677 = vmatpush1.xpose.msra.mxu0 0.0
    %2678 = vmatprep.subr.mxu0 0.0
    %2679 = vmatpush1.xpose.msra.mxu0 0.0
    %2680 = vmatprep.subr.mxu0 0.0
    %2681 = vmatpush1.xpose.msra.mxu0 0.0
    %2682 = vmatprep.subr.mxu0 0.0
    %2683 = vmatpush1.xpose.msra.mxu0 0.0
    %2684 = vmatprep.subr.mxu0 0.0
    %2685 = vmatpush1.xpose.msra.mxu0 0.0
    %2686 = vmatprep.subr.mxu0 0.0
    %2687 = vmatpush1.xpose.msra.mxu0 0.0
    %2688 = vmatprep.subr.mxu0 0.0
    %2689 = vmatpush1.xpose.msra.mxu0 0.0
    %2690 = vmatprep.subr.mxu0 0.0
    %2691 = vmatpush1.xpose.msra.mxu0 0.0
    %2692 = vmatprep.subr.mxu0 0.0
    %2693 = vmatpush1.xpose.msra.mxu0 0.0
    %2694 = vmatprep.subr.mxu0 0.0
    %2695 = vmatpush1.xpose.msra.mxu0 0.0
    %2696 = vmatprep.subr.mxu0 0.0
    %2697 = vmatpush1.xpose.msra.mxu0 0.0
    %2698 = vmatprep.subr.mxu0 0.0
    %2699 = vmatpush1.xpose.msra.mxu0 0.0
    %2700 = vmatprep.subr.mxu0 0.0
    %2701 = vmatpush1.xpose.msra.mxu0 0.0
    %2702 = vmatprep.subr.mxu0 0.0
    %2703 = vmatpush1.xpose.msra.mxu0 0.0
    %2704 = vmatprep.subr.mxu0 0.0
    %2705 = vmatpush1.xpose.msra.mxu0 0.0
    %2706 = vmatprep.subr.mxu0 0.0
    %2707 = vmatpush1.xpose.msra.mxu0 0.0
    %2708 = vmatprep.subr.mxu0 0.0
    %2709 = vmatpush1.xpose.msra.mxu0 0.0
    %2710 = vmatprep.mubr.f32.mxu0 0.0
    %2711 = vmatmul.mubr.f32.gmra.mrb[0].mxu0 %v2641
    %v2712 = vpop.f32.mrb[0].mxu0
    %v2713 = vadd.f32 0.0, %v2712
    %v2714 = vpop.f32.mrb[0].mxu0
    %2715 = vdwg.mxu0
    %v2717 = vsel %vm2183, %v884, 0
    %v2720 = vsel %vm2183, %v1532, 0
    %2722 = vmatprep.subr.mxu0 0.0
    %2723 = vmatpush1.xpose.msra.mxu0 %v2720
    %2724 = vmatprep.subr.mxu0 0.0
    %2725 = vmatpush1.xpose.msra.mxu0 0.0
    %2726 = vmatprep.subr.mxu0 0.0
    %2727 = vmatpush1.xpose.msra.mxu0 0.0
    %2728 = vmatprep.subr.mxu0 0.0
    %2729 = vmatpush1.xpose.msra.mxu0 0.0
    %2730 = vmatprep.subr.mxu0 0.0
    %2731 = vmatpush1.xpose.msra.mxu0 0.0
    %2732 = vmatprep.subr.mxu0 0.0
    %2733 = vmatpush1.xpose.msra.mxu0 0.0
    %2734 = vmatprep.subr.mxu0 0.0
    %2735 = vmatpush1.xpose.msra.mxu0 0.0
    %2736 = vmatprep.subr.mxu0 0.0
    %2737 = vmatpush1.xpose.msra.mxu0 0.0
    %2738 = vmatprep.subr.mxu0 0.0
    %2739 = vmatpush1.xpose.msra.mxu0 0.0
    %2740 = vmatprep.subr.mxu0 0.0
    %2741 = vmatpush1.xpose.msra.mxu0 0.0
    %2742 = vmatprep.subr.mxu0 0.0
    %2743 = vmatpush1.xpose.msra.mxu0 0.0
    %2744 = vmatprep.subr.mxu0 0.0
    %2745 = vmatpush1.xpose.msra.mxu0 0.0
    %2746 = vmatprep.subr.mxu0 0.0
    %2747 = vmatpush1.xpose.msra.mxu0 0.0
    %2748 = vmatprep.subr.mxu0 0.0
    %2749 = vmatpush1.xpose.msra.mxu0 0.0
    %2750 = vmatprep.subr.mxu0 0.0
    %2751 = vmatpush1.xpose.msra.mxu0 0.0
    %2752 = vmatprep.subr.mxu0 0.0
    %2753 = vmatpush1.xpose.msra.mxu0 0.0
    %2754 = vmatprep.subr.mxu0 0.0
    %2755 = vmatpush1.xpose.msra.mxu0 0.0
    %2756 = vmatprep.subr.mxu0 0.0
    %2757 = vmatpush1.xpose.msra.mxu0 0.0
    %2758 = vmatprep.subr.mxu0 0.0
    %2759 = vmatpush1.xpose.msra.mxu0 0.0
    %2760 = vmatprep.subr.mxu0 0.0
    %2761 = vmatpush1.xpose.msra.mxu0 0.0
    %2762 = vmatprep.subr.mxu0 0.0
    %2763 = vmatpush1.xpose.msra.mxu0 0.0
    %2764 = vmatprep.subr.mxu0 0.0
    %2765 = vmatpush1.xpose.msra.mxu0 0.0
    %2766 = vmatprep.subr.mxu0 0.0
    %2767 = vmatpush1.xpose.msra.mxu0 0.0
    %2768 = vmatprep.subr.mxu0 0.0
    %2769 = vmatpush1.xpose.msra.mxu0 0.0
    %2770 = vmatprep.subr.mxu0 0.0
    %2771 = vmatpush1.xpose.msra.mxu0 0.0
    %2772 = vmatprep.subr.mxu0 0.0
    %2773 = vmatpush1.xpose.msra.mxu0 0.0
    %2774 = vmatprep.subr.mxu0 0.0
    %2775 = vmatpush1.xpose.msra.mxu0 0.0
    %2776 = vmatprep.subr.mxu0 0.0
    %2777 = vmatpush1.xpose.msra.mxu0 0.0
    %2778 = vmatprep.subr.mxu0 0.0
    %2779 = vmatpush1.xpose.msra.mxu0 0.0
    %2780 = vmatprep.subr.mxu0 0.0
    %2781 = vmatpush1.xpose.msra.mxu0 0.0
    %2782 = vmatprep.subr.mxu0 0.0
    %2783 = vmatpush1.xpose.msra.mxu0 0.0
    %2784 = vmatprep.subr.mxu0 0.0
    %2785 = vmatpush1.xpose.msra.mxu0 0.0
    %2786 = vmatprep.mubr.f32.mxu0 0.0
    %2787 = vmatmul.mubr.f32.gmra.mrb[0].mxu0 %v2717
    %v2788 = vpop.f32.mrb[0].mxu0
    %v2789 = vadd.f32 0.0, %v2788
    %v2790 = vpop.f32.mrb[0].mxu0
    %2791 = vdwg.mxu0
    %v2792 = vmul.f32 %v2257, 0.35355338
    %v2793 = vmul.f32 %v2333, 0.35355338
    %v2794 = vmul.f32 %v2409, 0.35355338
    %v2795 = vmul.f32 %v2485, 0.35355338
    %v2796 = vmul.f32 %v2561, 0.35355338
    %v2797 = vmul.f32 %v2637, 0.35355338
    %v2798 = vmul.f32 %v2713, 0.35355338
    %v2799 = vmul.f32 %v2789, 0.35355338
    %v2808 = vlaneseq
    %v2809 = vshrl.u32 %v2808, 7
    %v2810 = vsub.s32 0, %v2809
    %v2811 = vrot.slane %v224, %v2810
    %v2812 = vlaneseq
    %v2813 = vshrl.u32 %v2812, 7
    %v2814 = vsub.s32 0, %v2813
    %v2815 = vrot.slane %v225, %v2814
    %v2816 = vlaneseq
    %v2817 = vshrl.u32 %v2816, 7
    %v2818 = vsub.s32 0, %v2817
    %v2819 = vrot.slane %v226, %v2818
    %v2820 = vlaneseq
    %v2821 = vshrl.u32 %v2820, 7
    %v2822 = vsub.s32 0, %v2821
    %v2823 = vrot.slane %v227, %v2822
    %v2824 = vlaneseq
    %v2825 = vshrl.u32 %v2824, 7
    %v2826 = vsub.s32 0, %v2825
    %v2827 = vrot.slane %v228, %v2826
    %v2828 = vlaneseq
    %v2829 = vshrl.u32 %v2828, 7
    %v2830 = vsub.s32 0, %v2829
    %v2831 = vrot.slane %v229, %v2830
    %v2832 = vlaneseq
    %v2833 = vshrl.u32 %v2832, 7
    %v2834 = vsub.s32 0, %v2833
    %v2835 = vrot.slane %v230, %v2834
    %v2836 = vlaneseq
    %v2837 = vshrl.u32 %v2836, 7
    %v2838 = vsub.s32 0, %v2837
    %v2839 = vrot.slane %v231, %v2838
    %v2848 = vadd.f32 %v2792, %v2811
    %v2849 = vadd.f32 %v2793, %v2815
    %v2850 = vadd.f32 %v2794, %v2819
    %v2851 = vadd.f32 %v2795, %v2823
    %v2852 = vadd.f32 %v2796, %v2827
    %v2853 = vadd.f32 %v2797, %v2831
    %v2854 = vadd.f32 %v2798, %v2835
    %v2855 = vadd.f32 %v2799, %v2839
    %v2856 = vsel %vm2183, %v2848, -inf
    %2857 = vmax.xlane.f32.xlu0 %v2856
    %v2858 = vpop.xlane.xlu0 %2857
    %v2859 = vsel %vm2183, %v2849, -inf
    %2860 = vmax.xlane.f32.xlu0 %v2859
    %v2861 = vpop.xlane.xlu0 %2860
    %v2862 = vsel %vm2183, %v2850, -inf
    %2863 = vmax.xlane.f32.xlu0 %v2862
    %v2864 = vpop.xlane.xlu0 %2863
    %v2865 = vsel %vm2183, %v2851, -inf
    %2866 = vmax.xlane.f32.xlu0 %v2865
    %v2867 = vpop.xlane.xlu0 %2866
    %v2868 = vsel %vm2183, %v2852, -inf
    %2869 = vmax.xlane.f32.xlu0 %v2868
    %v2870 = vpop.xlane.xlu0 %2869
    %v2871 = vsel %vm2183, %v2853, -inf
    %2872 = vmax.xlane.f32.xlu0 %v2871
    %v2873 = vpop.xlane.xlu0 %2872
    %v2874 = vsel %vm2183, %v2854, -inf
    %2875 = vmax.xlane.f32.xlu0 %v2874
    %v2876 = vpop.xlane.xlu0 %2875
    %v2877 = vsel %vm2183, %v2855, -inf
    %2878 = vmax.xlane.f32.xlu0 %v2877
    %v2879 = vpop.xlane.xlu0 %2878
    %v2880 = vsub.f32 %v2848, %v2858
    %v2881 = vsub.f32 %v2849, %v2861
    %v2882 = vsub.f32 %v2850, %v2864
    %v2883 = vsub.f32 %v2851, %v2867
    %v2884 = vsub.f32 %v2852, %v2870
    %v2885 = vsub.f32 %v2853, %v2873
    %v2886 = vsub.f32 %v2854, %v2876
    %v2887 = vsub.f32 %v2855, %v2879
    %v2888 = vmul.f32 %v2880, 1.442695
    %v2889 = vpow.pop %v2888
    %v2890 = vmul.f32 %v2881, 1.442695
    %v2891 = vpow.pop %v2890
    %v2892 = vmul.f32 %v2882, 1.442695
    %v2893 = vpow.pop %v2892
    %v2894 = vmul.f32 %v2883, 1.442695
    %v2895 = vpow.pop %v2894
    %v2896 = vmul.f32 %v2884, 1.442695
    %v2897 = vpow.pop %v2896
    %v2898 = vmul.f32 %v2885, 1.442695
    %v2899 = vpow.pop %v2898
    %v2900 = vmul.f32 %v2886, 1.442695
    %v2901 = vpow.pop %v2900
    %v2902 = vmul.f32 %v2887, 1.442695
    %v2903 = vpow.pop %v2902
    %v2904 = vsel %vm2183, %v2889, 0.0
    %2905 = vadd.xlane.f32.xlu0 %v2904
    %v2906 = vpop.xlane.xlu0 %2905
    %v2907 = vsel %vm2183, %v2891, 0.0
    %2908 = vadd.xlane.f32.xlu0 %v2907
    %v2909 = vpop.xlane.xlu0 %2908
    %v2910 = vsel %vm2183, %v2893, 0.0
    %2911 = vadd.xlane.f32.xlu0 %v2910
    %v2912 = vpop.xlane.xlu0 %2911
    %v2913 = vsel %vm2183, %v2895, 0.0
    %2914 = vadd.xlane.f32.xlu0 %v2913
    %v2915 = vpop.xlane.xlu0 %2914
    %v2916 = vsel %vm2183, %v2897, 0.0
    %2917 = vadd.xlane.f32.xlu0 %v2916
    %v2918 = vpop.xlane.xlu0 %2917
    %v2919 = vsel %vm2183, %v2899, 0.0
    %2920 = vadd.xlane.f32.xlu0 %v2919
    %v2921 = vpop.xlane.xlu0 %2920
    %v2922 = vsel %vm2183, %v2901, 0.0
    %2923 = vadd.xlane.f32.xlu0 %v2922
    %v2924 = vpop.xlane.xlu0 %2923
    %v2925 = vsel %vm2183, %v2903, 0.0
    %2926 = vadd.xlane.f32.xlu0 %v2925
    %v2927 = vpop.xlane.xlu0 %2926
    %v2928 = vrcp.pop %v2906
    %v2929 = vrcp.pop %v2909
    %v2930 = vrcp.pop %v2912
    %v2931 = vrcp.pop %v2915
    %v2932 = vrcp.pop %v2918
    %v2933 = vrcp.pop %v2921
    %v2934 = vrcp.pop %v2924
    %v2935 = vrcp.pop %v2927
    %v2936 = vmul.f32 %v2889, %v2928
    %v2937 = vmul.f32 %v2891, %v2929
    %v2938 = vmul.f32 %v2893, %v2930
    %v2939 = vmul.f32 %v2895, %v2931
    %v2940 = vmul.f32 %v2897, %v2932
    %v2941 = vmul.f32 %v2899, %v2933
    %v2942 = vmul.f32 %v2901, %v2934
    %v2943 = vmul.f32 %v2903, %v2935
    %v2945 = vsel %vm2183, %v2936, 0
    %2947 = vmatprep.subr.mxu0 0.0
    %2948 = vmatpush1.msra.mxu0 %v1690
    %2949 = vmatprep.subr.mxu0 0.0
    %2950 = vmatpush1.msra.mxu0 0.0
    %2951 = vmatprep.subr.mxu0 0.0
    %2952 = vmatpush1.msra.mxu0 0.0
    %2953 = vmatprep.subr.mxu0 0.0
    %2954 = vmatpush1.msra.mxu0 0.0
    %2955 = vmatprep.subr.mxu0 0.0
    %2956 = vmatpush1.msra.mxu0 0.0
    %2957 = vmatprep.subr.mxu0 0.0
    %2958 = vmatpush1.msra.mxu0 0.0
    %2959 = vmatprep.subr.mxu0 0.0
    %2960 = vmatpush1.msra.mxu0 0.0
    %2961 = vmatprep.subr.mxu0 0.0
    %2962 = vmatpush1.msra.mxu0 0.0
    %2963 = vmatprep.subr.mxu0 0.0
    %2964 = vmatpush1.msra.mxu0 0.0
    %2965 = vmatprep.subr.mxu0 0.0
    %2966 = vmatpush1.msra.mxu0 0.0
    %2967 = vmatprep.subr.mxu0 0.0
    %2968 = vmatpush1.msra.mxu0 0.0
    %2969 = vmatprep.subr.mxu0 0.0
    %2970 = vmatpush1.msra.mxu0 0.0
    %2971 = vmatprep.subr.mxu0 0.0
    %2972 = vmatpush1.msra.mxu0 0.0
    %2973 = vmatprep.subr.mxu0 0.0
    %2974 = vmatpush1.msra.mxu0 0.0
    %2975 = vmatprep.subr.mxu0 0.0
    %2976 = vmatpush1.msra.mxu0 0.0
    %2977 = vmatprep.subr.mxu0 0.0
    %2978 = vmatpush1.msra.mxu0 0.0
    %2979 = vmatprep.subr.mxu0 0.0
    %2980 = vmatpush1.msra.mxu0 0.0
    %2981 = vmatprep.subr.mxu0 0.0
    %2982 = vmatpush1.msra.mxu0 0.0
    %2983 = vmatprep.subr.mxu0 0.0
    %2984 = vmatpush1.msra.mxu0 0.0
    %2985 = vmatprep.subr.mxu0 0.0
    %2986 = vmatpush1.msra.mxu0 0.0
    %2987 = vmatprep.subr.mxu0 0.0
    %2988 = vmatpush1.msra.mxu0 0.0
    %2989 = vmatprep.subr.mxu0 0.0
    %2990 = vmatpush1.msra.mxu0 0.0
    %2991 = vmatprep.subr.mxu0 0.0
    %2992 = vmatpush1.msra.mxu0 0.0
    %2993 = vmatprep.subr.mxu0 0.0
    %2994 = vmatpush1.msra.mxu0 0.0
    %2995 = vmatprep.subr.mxu0 0.0
    %2996 = vmatpush1.msra.mxu0 0.0
    %2997 = vmatprep.subr.mxu0 0.0
    %2998 = vmatpush1.msra.mxu0 0.0
    %2999 = vmatprep.subr.mxu0 0.0
    %3000 = vmatpush1.msra.mxu0 0.0
    %3001 = vmatprep.subr.mxu0 0.0
    %3002 = vmatpush1.msra.mxu0 0.0
    %3003 = vmatprep.subr.mxu0 0.0
    %3004 = vmatpush1.msra.mxu0 0.0
    %3005 = vmatprep.subr.mxu0 0.0
    %3006 = vmatpush1.msra.mxu0 0.0
    %3007 = vmatprep.subr.mxu0 0.0
    %3008 = vmatpush1.msra.mxu0 0.0
    %3009 = vmatprep.subr.mxu0 0.0
    %3010 = vmatpush1.msra.mxu0 0.0
    %3011 = vmatprep.mubr.f32.mxu0 0.0
    %3012 = vmatmul.mubr.f32.gmra.mrb[0].mxu0 %v2945
    %v3013 = vpop.f32.mrb[0].mxu0
    %v3014 = vadd.f32 0.0, %v3013
    %v3015 = vpop.f32.mrb[0].mxu0
    %3016 = vdwg.mxu0
    %v3018 = vsel %vm2183, %v2937, 0
    %3020 = vmatprep.subr.mxu0 0.0
    %3021 = vmatpush1.msra.mxu0 %v1760
    %3022 = vmatprep.subr.mxu0 0.0
    %3023 = vmatpush1.msra.mxu0 0.0
    %3024 = vmatprep.subr.mxu0 0.0
    %3025 = vmatpush1.msra.mxu0 0.0
    %3026 = vmatprep.subr.mxu0 0.0
    %3027 = vmatpush1.msra.mxu0 0.0
    %3028 = vmatprep.subr.mxu0 0.0
    %3029 = vmatpush1.msra.mxu0 0.0
    %3030 = vmatprep.subr.mxu0 0.0
    %3031 = vmatpush1.msra.mxu0 0.0
    %3032 = vmatprep.subr.mxu0 0.0
    %3033 = vmatpush1.msra.mxu0 0.0
    %3034 = vmatprep.subr.mxu0 0.0
    %3035 = vmatpush1.msra.mxu0 0.0
    %3036 = vmatprep.subr.mxu0 0.0
    %3037 = vmatpush1.msra.mxu0 0.0
    %3038 = vmatprep.subr.mxu0 0.0
    %3039 = vmatpush1.msra.mxu0 0.0
    %3040 = vmatprep.subr.mxu0 0.0
    %3041 = vmatpush1.msra.mxu0 0.0
    %3042 = vmatprep.subr.mxu0 0.0
    %3043 = vmatpush1.msra.mxu0 0.0
    %3044 = vmatprep.subr.mxu0 0.0
    %3045 = vmatpush1.msra.mxu0 0.0
    %3046 = vmatprep.subr.mxu0 0.0
    %3047 = vmatpush1.msra.mxu0 0.0
    %3048 = vmatprep.subr.mxu0 0.0
    %3049 = vmatpush1.msra.mxu0 0.0
    %3050 = vmatprep.subr.mxu0 0.0
    %3051 = vmatpush1.msra.mxu0 0.0
    %3052 = vmatprep.subr.mxu0 0.0
    %3053 = vmatpush1.msra.mxu0 0.0
    %3054 = vmatprep.subr.mxu0 0.0
    %3055 = vmatpush1.msra.mxu0 0.0
    %3056 = vmatprep.subr.mxu0 0.0
    %3057 = vmatpush1.msra.mxu0 0.0
    %3058 = vmatprep.subr.mxu0 0.0
    %3059 = vmatpush1.msra.mxu0 0.0
    %3060 = vmatprep.subr.mxu0 0.0
    %3061 = vmatpush1.msra.mxu0 0.0
    %3062 = vmatprep.subr.mxu0 0.0
    %3063 = vmatpush1.msra.mxu0 0.0
    %3064 = vmatprep.subr.mxu0 0.0
    %3065 = vmatpush1.msra.mxu0 0.0
    %3066 = vmatprep.subr.mxu0 0.0
    %3067 = vmatpush1.msra.mxu0 0.0
    %3068 = vmatprep.subr.mxu0 0.0
    %3069 = vmatpush1.msra.mxu0 0.0
    %3070 = vmatprep.subr.mxu0 0.0
    %3071 = vmatpush1.msra.mxu0 0.0
    %3072 = vmatprep.subr.mxu0 0.0
    %3073 = vmatpush1.msra.mxu0 0.0
    %3074 = vmatprep.subr.mxu0 0.0
    %3075 = vmatpush1.msra.mxu0 0.0
    %3076 = vmatprep.subr.mxu0 0.0
    %3077 = vmatpush1.msra.mxu0 0.0
    %3078 = vmatprep.subr.mxu0 0.0
    %3079 = vmatpush1.msra.mxu0 0.0
    %3080 = vmatprep.subr.mxu0 0.0
    %3081 = vmatpush1.msra.mxu0 0.0
    %3082 = vmatprep.subr.mxu0 0.0
    %3083 = vmatpush1.msra.mxu0 0.0
    %3084 = vmatprep.mubr.f32.mxu0 0.0
    %3085 = vmatmul.mubr.f32.gmra.mrb[0].mxu0 %v3018
    %v3086 = vpop.f32.mrb[0].mxu0
    %v3087 = vadd.f32 0.0, %v3086
    %v3088 = vpop.f32.mrb[0].mxu0
    %3089 = vdwg.mxu0
    %v3091 = vsel %vm2183, %v2938, 0
    %3093 = vmatprep.subr.mxu0 0.0
    %3094 = vmatpush1.msra.mxu0 %v1830
    %3095 = vmatprep.subr.mxu0 0.0
    %3096 = vmatpush1.msra.mxu0 0.0
    %3097 = vmatprep.subr.mxu0 0.0
    %3098 = vmatpush1.msra.mxu0 0.0
    %3099 = vmatprep.subr.mxu0 0.0
    %3100 = vmatpush1.msra.mxu0 0.0
    %3101 = vmatprep.subr.mxu0 0.0
    %3102 = vmatpush1.msra.mxu0 0.0
    %3103 = vmatprep.subr.mxu0 0.0
    %3104 = vmatpush1.msra.mxu0 0.0
    %3105 = vmatprep.subr.mxu0 0.0
    %3106 = vmatpush1.msra.mxu0 0.0
    %3107 = vmatprep.subr.mxu0 0.0
    %3108 = vmatpush1.msra.mxu0 0.0
    %3109 = vmatprep.subr.mxu0 0.0
    %3110 = vmatpush1.msra.mxu0 0.0
    %3111 = vmatprep.subr.mxu0 0.0
    %3112 = vmatpush1.msra.mxu0 0.0
    %3113 = vmatprep.subr.mxu0 0.0
    %3114 = vmatpush1.msra.mxu0 0.0
    %3115 = vmatprep.subr.mxu0 0.0
    %3116 = vmatpush1.msra.mxu0 0.0
    %3117 = vmatprep.subr.mxu0 0.0
    %3118 = vmatpush1.msra.mxu0 0.0
    %3119 = vmatprep.subr.mxu0 0.0
    %3120 = vmatpush1.msra.mxu0 0.0
    %3121 = vmatprep.subr.mxu0 0.0
    %3122 = vmatpush1.msra.mxu0 0.0
    %3123 = vmatprep.subr.mxu0 0.0
    %3124 = vmatpush1.msra.mxu0 0.0
    %3125 = vmatprep.subr.mxu0 0.0
    %3126 = vmatpush1.msra.mxu0 0.0
    %3127 = vmatprep.subr.mxu0 0.0
    %3128 = vmatpush1.msra.mxu0 0.0
    %3129 = vmatprep.subr.mxu0 0.0
    %3130 = vmatpush1.msra.mxu0 0.0
    %3131 = vmatprep.subr.mxu0 0.0
    %3132 = vmatpush1.msra.mxu0 0.0
    %3133 = vmatprep.subr.mxu0 0.0
    %3134 = vmatpush1.msra.mxu0 0.0
    %3135 = vmatprep.subr.mxu0 0.0
    %3136 = vmatpush1.msra.mxu0 0.0
    %3137 = vmatprep.subr.mxu0 0.0
    %3138 = vmatpush1.msra.mxu0 0.0
    %3139 = vmatprep.subr.mxu0 0.0
    %3140 = vmatpush1.msra.mxu0 0.0
    %3141 = vmatprep.subr.mxu0 0.0
    %3142 = vmatpush1.msra.mxu0 0.0
    %3143 = vmatprep.subr.mxu0 0.0
    %3144 = vmatpush1.msra.mxu0 0.0
    %3145 = vmatprep.subr.mxu0 0.0
    %3146 = vmatpush1.msra.mxu0 0.0
    %3147 = vmatprep.subr.mxu0 0.0
    %3148 = vmatpush1.msra.mxu0 0.0
    %3149 = vmatprep.subr.mxu0 0.0
    %3150 = vmatpush1.msra.mxu0 0.0
    %3151 = vmatprep.subr.mxu0 0.0
    %3152 = vmatpush1.msra.mxu0 0.0
    %3153 = vmatprep.subr.mxu0 0.0
    %3154 = vmatpush1.msra.mxu0 0.0
    %3155 = vmatprep.subr.mxu0 0.0
    %3156 = vmatpush1.msra.mxu0 0.0
    %3157 = vmatprep.mubr.f32.mxu0 0.0
    %3158 = vmatmul.mubr.f32.gmra.mrb[0].mxu0 %v3091
    %v3159 = vpop.f32.mrb[0].mxu0
    %v3160 = vadd.f32 0.0, %v3159
    %v3161 = vpop.f32.mrb[0].mxu0
    %3162 = vdwg.mxu0
    %v3164 = vsel %vm2183, %v2939, 0
    %3166 = vmatprep.subr.mxu0 0.0
    %3167 = vmatpush1.msra.mxu0 %v1900
    %3168 = vmatprep.subr.mxu0 0.0
    %3169 = vmatpush1.msra.mxu0 0.0
    %3170 = vmatprep.subr.mxu0 0.0
    %3171 = vmatpush1.msra.mxu0 0.0
    %3172 = vmatprep.subr.mxu0 0.0
    %3173 = vmatpush1.msra.mxu0 0.0
    %3174 = vmatprep.subr.mxu0 0.0
    %3175 = vmatpush1.msra.mxu0 0.0
    %3176 = vmatprep.subr.mxu0 0.0
    %3177 = vmatpush1.msra.mxu0 0.0
    %3178 = vmatprep.subr.mxu0 0.0
    %3179 = vmatpush1.msra.mxu0 0.0
    %3180 = vmatprep.subr.mxu0 0.0
    %3181 = vmatpush1.msra.mxu0 0.0
    %3182 = vmatprep.subr.mxu0 0.0
    %3183 = vmatpush1.msra.mxu0 0.0
    %3184 = vmatprep.subr.mxu0 0.0
    %3185 = vmatpush1.msra.mxu0 0.0
    %3186 = vmatprep.subr.mxu0 0.0
    %3187 = vmatpush1.msra.mxu0 0.0
    %3188 = vmatprep.subr.mxu0 0.0
    %3189 = vmatpush1.msra.mxu0 0.0
    %3190 = vmatprep.subr.mxu0 0.0
    %3191 = vmatpush1.msra.mxu0 0.0
    %3192 = vmatprep.subr.mxu0 0.0
    %3193 = vmatpush1.msra.mxu0 0.0
    %3194 = vmatprep.subr.mxu0 0.0
    %3195 = vmatpush1.msra.mxu0 0.0
    %3196 = vmatprep.subr.mxu0 0.0
    %3197 = vmatpush1.msra.mxu0 0.0
    %3198 = vmatprep.subr.mxu0 0.0
    %3199 = vmatpush1.msra.mxu0 0.0
    %3200 = vmatprep.subr.mxu0 0.0
    %3201 = vmatpush1.msra.mxu0 0.0
    %3202 = vmatprep.subr.mxu0 0.0
    %3203 = vmatpush1.msra.mxu0 0.0
    %3204 = vmatprep.subr.mxu0 0.0
    %3205 = vmatpush1.msra.mxu0 0.0
    %3206 = vmatprep.subr.mxu0 0.0
    %3207 = vmatpush1.msra.mxu0 0.0
    %3208 = vmatprep.subr.mxu0 0.0
    %3209 = vmatpush1.msra.mxu0 0.0
    %3210 = vmatprep.subr.mxu0 0.0
    %3211 = vmatpush1.msra.mxu0 0.0
    %3212 = vmatprep.subr.mxu0 0.0
    %3213 = vmatpush1.msra.mxu0 0.0
    %3214 = vmatprep.subr.mxu0 0.0
    %3215 = vmatpush1.msra.mxu0 0.0
    %3216 = vmatprep.subr.mxu0 0.0
    %3217 = vmatpush1.msra.mxu0 0.0
    %3218 = vmatprep.subr.mxu0 0.0
    %3219 = vmatpush1.msra.mxu0 0.0
    %3220 = vmatprep.subr.mxu0 0.0
    %3221 = vmatpush1.msra.mxu0 0.0
    %3222 = vmatprep.subr.mxu0 0.0
    %3223 = vmatpush1.msra.mxu0 0.0
    %3224 = vmatprep.subr.mxu0 0.0
    %3225 = vmatpush1.msra.mxu0 0.0
    %3226 = vmatprep.subr.mxu0 0.0
    %3227 = vmatpush1.msra.mxu0 0.0
    %3228 = vmatprep.subr.mxu0 0.0
    %3229 = vmatpush1.msra.mxu0 0.0
    %3230 = vmatprep.mubr.f32.mxu0 0.0
    %3231 = vmatmul.mubr.f32.gmra.mrb[0].mxu0 %v3164
    %v3232 = vpop.f32.mrb[0].mxu0
    %v3233 = vadd.f32 0.0, %v3232
    %v3234 = vpop.f32.mrb[0].mxu0
    %3235 = vdwg.mxu0
    %v3237 = vsel %vm2183, %v2940, 0
    %3239 = vmatprep.subr.mxu0 0.0
    %3240 = vmatpush1.msra.mxu0 %v1970
    %3241 = vmatprep.subr.mxu0 0.0
    %3242 = vmatpush1.msra.mxu0 0.0
    %3243 = vmatprep.subr.mxu0 0.0
    %3244 = vmatpush1.msra.mxu0 0.0
    %3245 = vmatprep.subr.mxu0 0.0
    %3246 = vmatpush1.msra.mxu0 0.0
    %3247 = vmatprep.subr.mxu0 0.0
    %3248 = vmatpush1.msra.mxu0 0.0
    %3249 = vmatprep.subr.mxu0 0.0
    %3250 = vmatpush1.msra.mxu0 0.0
    %3251 = vmatprep.subr.mxu0 0.0
    %3252 = vmatpush1.msra.mxu0 0.0
    %3253 = vmatprep.subr.mxu0 0.0
    %3254 = vmatpush1.msra.mxu0 0.0
    %3255 = vmatprep.subr.mxu0 0.0
    %3256 = vmatpush1.msra.mxu0 0.0
    %3257 = vmatprep.subr.mxu0 0.0
    %3258 = vmatpush1.msra.mxu0 0.0
    %3259 = vmatprep.subr.mxu0 0.0
    %3260 = vmatpush1.msra.mxu0 0.0
    %3261 = vmatprep.subr.mxu0 0.0
    %3262 = vmatpush1.msra.mxu0 0.0
    %3263 = vmatprep.subr.mxu0 0.0
    %3264 = vmatpush1.msra.mxu0 0.0
    %3265 = vmatprep.subr.mxu0 0.0
    %3266 = vmatpush1.msra.mxu0 0.0
    %3267 = vmatprep.subr.mxu0 0.0
    %3268 = vmatpush1.msra.mxu0 0.0
    %3269 = vmatprep.subr.mxu0 0.0
    %3270 = vmatpush1.msra.mxu0 0.0
    %3271 = vmatprep.subr.mxu0 0.0
    %3272 = vmatpush1.msra.mxu0 0.0
    %3273 = vmatprep.subr.mxu0 0.0
    %3274 = vmatpush1.msra.mxu0 0.0
    %3275 = vmatprep.subr.mxu0 0.0
    %3276 = vmatpush1.msra.mxu0 0.0
    %3277 = vmatprep.subr.mxu0 0.0
    %3278 = vmatpush1.msra.mxu0 0.0
    %3279 = vmatprep.subr.mxu0 0.0
    %3280 = vmatpush1.msra.mxu0 0.0
    %3281 = vmatprep.subr.mxu0 0.0
    %3282 = vmatpush1.msra.mxu0 0.0
    %3283 = vmatprep.subr.mxu0 0.0
    %3284 = vmatpush1.msra.mxu0 0.0
    %3285 = vmatprep.subr.mxu0 0.0
    %3286 = vmatpush1.msra.mxu0 0.0
    %3287 = vmatprep.subr.mxu0 0.0
    %3288 = vmatpush1.msra.mxu0 0.0
    %3289 = vmatprep.subr.mxu0 0.0
    %3290 = vmatpush1.msra.mxu0 0.0
    %3291 = vmatprep.subr.mxu0 0.0
    %3292 = vmatpush1.msra.mxu0 0.0
    %3293 = vmatprep.subr.mxu0 0.0
    %3294 = vmatpush1.msra.mxu0 0.0
    %3295 = vmatprep.subr.mxu0 0.0
    %3296 = vmatpush1.msra.mxu0 0.0
    %3297 = vmatprep.subr.mxu0 0.0
    %3298 = vmatpush1.msra.mxu0 0.0
    %3299 = vmatprep.subr.mxu0 0.0
    %3300 = vmatpush1.msra.mxu0 0.0
    %3301 = vmatprep.subr.mxu0 0.0
    %3302 = vmatpush1.msra.mxu0 0.0
    %3303 = vmatprep.mubr.f32.mxu0 0.0
    %3304 = vmatmul.mubr.f32.gmra.mrb[0].mxu0 %v3237
    %v3305 = vpop.f32.mrb[0].mxu0
    %v3306 = vadd.f32 0.0, %v3305
    %v3307 = vpop.f32.mrb[0].mxu0
    %3308 = vdwg.mxu0
    %v3310 = vsel %vm2183, %v2941, 0
    %3312 = vmatprep.subr.mxu0 0.0
    %3313 = vmatpush1.msra.mxu0 %v2040
    %3314 = vmatprep.subr.mxu0 0.0
    %3315 = vmatpush1.msra.mxu0 0.0
    %3316 = vmatprep.subr.mxu0 0.0
    %3317 = vmatpush1.msra.mxu0 0.0
    %3318 = vmatprep.subr.mxu0 0.0
    %3319 = vmatpush1.msra.mxu0 0.0
    %3320 = vmatprep.subr.mxu0 0.0
    %3321 = vmatpush1.msra.mxu0 0.0
    %3322 = vmatprep.subr.mxu0 0.0
    %3323 = vmatpush1.msra.mxu0 0.0
    %3324 = vmatprep.subr.mxu0 0.0
    %3325 = vmatpush1.msra.mxu0 0.0
    %3326 = vmatprep.subr.mxu0 0.0
    %3327 = vmatpush1.msra.mxu0 0.0
    %3328 = vmatprep.subr.mxu0 0.0
    %3329 = vmatpush1.msra.mxu0 0.0
    %3330 = vmatprep.subr.mxu0 0.0
    %3331 = vmatpush1.msra.mxu0 0.0
    %3332 = vmatprep.subr.mxu0 0.0
    %3333 = vmatpush1.msra.mxu0 0.0
    %3334 = vmatprep.subr.mxu0 0.0
    %3335 = vmatpush1.msra.mxu0 0.0
    %3336 = vmatprep.subr.mxu0 0.0
    %3337 = vmatpush1.msra.mxu0 0.0
    %3338 = vmatprep.subr.mxu0 0.0
    %3339 = vmatpush1.msra.mxu0 0.0
    %3340 = vmatprep.subr.mxu0 0.0
    %3341 = vmatpush1.msra.mxu0 0.0
    %3342 = vmatprep.subr.mxu0 0.0
    %3343 = vmatpush1.msra.mxu0 0.0
    %3344 = vmatprep.subr.mxu0 0.0
    %3345 = vmatpush1.msra.mxu0 0.0
    %3346 = vmatprep.subr.mxu0 0.0
    %3347 = vmatpush1.msra.mxu0 0.0
    %3348 = vmatprep.subr.mxu0 0.0
    %3349 = vmatpush1.msra.mxu0 0.0
    %3350 = vmatprep.subr.mxu0 0.0
    %3351 = vmatpush1.msra.mxu0 0.0
    %3352 = vmatprep.subr.mxu0 0.0
    %3353 = vmatpush1.msra.mxu0 0.0
    %3354 = vmatprep.subr.mxu0 0.0
    %3355 = vmatpush1.msra.mxu0 0.0
    %3356 = vmatprep.subr.mxu0 0.0
    %3357 = vmatpush1.msra.mxu0 0.0
    %3358 = vmatprep.subr.mxu0 0.0
    %3359 = vmatpush1.msra.mxu0 0.0
    %3360 = vmatprep.subr.mxu0 0.0
    %3361 = vmatpush1.msra.mxu0 0.0
    %3362 = vmatprep.subr.mxu0 0.0
    %3363 = vmatpush1.msra.mxu0 0.0
    %3364 = vmatprep.subr.mxu0 0.0
    %3365 = vmatpush1.msra.mxu0 0.0
    %3366 = vmatprep.subr.mxu0 0.0
    %3367 = vmatpush1.msra.mxu0 0.0
    %3368 = vmatprep.subr.mxu0 0.0
    %3369 = vmatpush1.msra.mxu0 0.0
    %3370 = vmatprep.subr.mxu0 0.0
    %3371 = vmatpush1.msra.mxu0 0.0
    %3372 = vmatprep.subr.mxu0 0.0
    %3373 = vmatpush1.msra.mxu0 0.0
    %3374 = vmatprep.subr.mxu0 0.0
    %3375 = vmatpush1.msra.mxu0 0.0
    %3376 = vmatprep.mubr.f32.mxu0 0.0
    %3377 = vmatmul.mubr.f32.gmra.mrb[0].mxu0 %v3310
    %v3378 = vpop.f32.mrb[0].mxu0
    %v3379 = vadd.f32 0.0, %v3378
    %v3380 = vpop.f32.mrb[0].mxu0
    %3381 = vdwg.mxu0
    %v3383 = vsel %vm2183, %v2942, 0
    %3385 = vmatprep.subr.mxu0 0.0
    %3386 = vmatpush1.msra.mxu0 %v2110
    %3387 = vmatprep.subr.mxu0 0.0
    %3388 = vmatpush1.msra.mxu0 0.0
    %3389 = vmatprep.subr.mxu0 0.0
    %3390 = vmatpush1.msra.mxu0 0.0
    %3391 = vmatprep.subr.mxu0 0.0
    %3392 = vmatpush1.msra.mxu0 0.0
    %3393 = vmatprep.subr.mxu0 0.0
    %3394 = vmatpush1.msra.mxu0 0.0
    %3395 = vmatprep.subr.mxu0 0.0
    %3396 = vmatpush1.msra.mxu0 0.0
    %3397 = vmatprep.subr.mxu0 0.0
    %3398 = vmatpush1.msra.mxu0 0.0
    %3399 = vmatprep.subr.mxu0 0.0
    %3400 = vmatpush1.msra.mxu0 0.0
    %3401 = vmatprep.subr.mxu0 0.0
    %3402 = vmatpush1.msra.mxu0 0.0
    %3403 = vmatprep.subr.mxu0 0.0
    %3404 = vmatpush1.msra.mxu0 0.0
    %3405 = vmatprep.subr.mxu0 0.0
    %3406 = vmatpush1.msra.mxu0 0.0
    %3407 = vmatprep.subr.mxu0 0.0
    %3408 = vmatpush1.msra.mxu0 0.0
    %3409 = vmatprep.subr.mxu0 0.0
    %3410 = vmatpush1.msra.mxu0 0.0
    %3411 = vmatprep.subr.mxu0 0.0
    %3412 = vmatpush1.msra.mxu0 0.0
    %3413 = vmatprep.subr.mxu0 0.0
    %3414 = vmatpush1.msra.mxu0 0.0
    %3415 = vmatprep.subr.mxu0 0.0
    %3416 = vmatpush1.msra.mxu0 0.0
    %3417 = vmatprep.subr.mxu0 0.0
    %3418 = vmatpush1.msra.mxu0 0.0
    %3419 = vmatprep.subr.mxu0 0.0
    %3420 = vmatpush1.msra.mxu0 0.0
    %3421 = vmatprep.subr.mxu0 0.0
    %3422 = vmatpush1.msra.mxu0 0.0
    %3423 = vmatprep.subr.mxu0 0.0
    %3424 = vmatpush1.msra.mxu0 0.0
    %3425 = vmatprep.subr.mxu0 0.0
    %3426 = vmatpush1.msra.mxu0 0.0
    %3427 = vmatprep.subr.mxu0 0.0
    %3428 = vmatpush1.msra.mxu0 0.0
    %3429 = vmatprep.subr.mxu0 0.0
    %3430 = vmatpush1.msra.mxu0 0.0
    %3431 = vmatprep.subr.mxu0 0.0
    %3432 = vmatpush1.msra.mxu0 0.0
    %3433 = vmatprep.subr.mxu0 0.0
    %3434 = vmatpush1.msra.mxu0 0.0
    %3435 = vmatprep.subr.mxu0 0.0
    %3436 = vmatpush1.msra.mxu0 0.0
    %3437 = vmatprep.subr.mxu0 0.0
    %3438 = vmatpush1.msra.mxu0 0.0
    %3439 = vmatprep.subr.mxu0 0.0
    %3440 = vmatpush1.msra.mxu0 0.0
    %3441 = vmatprep.subr.mxu0 0.0
    %3442 = vmatpush1.msra.mxu0 0.0
    %3443 = vmatprep.subr.mxu0 0.0
    %3444 = vmatpush1.msra.mxu0 0.0
    %3445 = vmatprep.subr.mxu0 0.0
    %3446 = vmatpush1.msra.mxu0 0.0
    %3447 = vmatprep.subr.mxu0 0.0
    %3448 = vmatpush1.msra.mxu0 0.0
    %3449 = vmatprep.mubr.f32.mxu0 0.0
    %3450 = vmatmul.mubr.f32.gmra.mrb[0].mxu0 %v3383
    %v3451 = vpop.f32.mrb[0].mxu0
    %v3452 = vadd.f32 0.0, %v3451
    %v3453 = vpop.f32.mrb[0].mxu0
    %3454 = vdwg.mxu0
    %v3456 = vsel %vm2183, %v2943, 0
    %3458 = vmatprep.subr.mxu0 0.0
    %3459 = vmatpush1.msra.mxu0 %v2180
    %3460 = vmatprep.subr.mxu0 0.0
    %3461 = vmatpush1.msra.mxu0 0.0
    %3462 = vmatprep.subr.mxu0 0.0
    %3463 = vmatpush1.msra.mxu0 0.0
    %3464 = vmatprep.subr.mxu0 0.0
    %3465 = vmatpush1.msra.mxu0 0.0
    %3466 = vmatprep.subr.mxu0 0.0
    %3467 = vmatpush1.msra.mxu0 0.0
    %3468 = vmatprep.subr.mxu0 0.0
    %3469 = vmatpush1.msra.mxu0 0.0
    %3470 = vmatprep.subr.mxu0 0.0
    %3471 = vmatpush1.msra.mxu0 0.0
    %3472 = vmatprep.subr.mxu0 0.0
    %3473 = vmatpush1.msra.mxu0 0.0
    %3474 = vmatprep.subr.mxu0 0.0
    %3475 = vmatpush1.msra.mxu0 0.0
    %3476 = vmatprep.subr.mxu0 0.0
    %3477 = vmatpush1.msra.mxu0 0.0
    %3478 = vmatprep.subr.mxu0 0.0
    %3479 = vmatpush1.msra.mxu0 0.0
    %3480 = vmatprep.subr.mxu0 0.0
    %3481 = vmatpush1.msra.mxu0 0.0
    %3482 = vmatprep.subr.mxu0 0.0
    %3483 = vmatpush1.msra.mxu0 0.0
    %3484 = vmatprep.subr.mxu0 0.0
    %3485 = vmatpush1.msra.mxu0 0.0
    %3486 = vmatprep.subr.mxu0 0.0
    %3487 = vmatpush1.msra.mxu0 0.0
    %3488 = vmatprep.subr.mxu0 0.0
    %3489 = vmatpush1.msra.mxu0 0.0
    %3490 = vmatprep.subr.mxu0 0.0
    %3491 = vmatpush1.msra.mxu0 0.0
    %3492 = vmatprep.subr.mxu0 0.0
    %3493 = vmatpush1.msra.mxu0 0.0
    %3494 = vmatprep.subr.mxu0 0.0
    %3495 = vmatpush1.msra.mxu0 0.0
    %3496 = vmatprep.subr.mxu0 0.0
    %3497 = vmatpush1.msra.mxu0 0.0
    %3498 = vmatprep.subr.mxu0 0.0
    %3499 = vmatpush1.msra.mxu0 0.0
    %3500 = vmatprep.subr.mxu0 0.0
    %3501 = vmatpush1.msra.mxu0 0.0
    %3502 = vmatprep.subr.mxu0 0.0
    %3503 = vmatpush1.msra.mxu0 0.0
    %3504 = vmatprep.subr.mxu0 0.0
    %3505 = vmatpush1.msra.mxu0 0.0
    %3506 = vmatprep.subr.mxu0 0.0
    %3507 = vmatpush1.msra.mxu0 0.0
    %3508 = vmatprep.subr.mxu0 0.0
    %3509 = vmatpush1.msra.mxu0 0.0
    %3510 = vmatprep.subr.mxu0 0.0
    %3511 = vmatpush1.msra.mxu0 0.0
    %3512 = vmatprep.subr.mxu0 0.0
    %3513 = vmatpush1.msra.mxu0 0.0
    %3514 = vmatprep.subr.mxu0 0.0
    %3515 = vmatpush1.msra.mxu0 0.0
    %3516 = vmatprep.subr.mxu0 0.0
    %3517 = vmatpush1.msra.mxu0 0.0
    %3518 = vmatprep.subr.mxu0 0.0
    %3519 = vmatpush1.msra.mxu0 0.0
    %3520 = vmatprep.subr.mxu0 0.0
    %3521 = vmatpush1.msra.mxu0 0.0
    %3522 = vmatprep.mubr.f32.mxu0 0.0
    %3523 = vmatmul.mubr.f32.gmra.mrb[0].mxu0 %v3456
    %v3524 = vpop.f32.mrb[0].mxu0
    %v3525 = vadd.f32 0.0, %v3524
    %v3526 = vpop.f32.mrb[0].mxu0
    %3527 = vdwg.mxu0
    %v3528 = vld [vmem:[%s14] sm:$0xff]
    %v3529 = vld [vmem:[%s14 + $0x8] sm:$0xff]
    %v3530 = vld [vmem:[%s14 + $0x10] sm:$0xff]
    %v3531 = vld [vmem:[%s14 + $0x18] sm:$0xff]
    %v3532 = vld [vmem:[%s14 + $0x20] sm:$0xff]
    %v3533 = vld [vmem:[%s14 + $0x28] sm:$0xff]
    %v3534 = vld [vmem:[%s14 + $0x30] sm:$0xff]
    %v3535 = vld [vmem:[%s14 + $0x38] sm:$0xff]
    %v3537 = vsel %vm2183, %v3014, 0
    %3539 = vmatprep.subr.mxu0 0.0
    %3540 = vmatpush1.msra.mxu0 %v3528
    %3541 = vmatprep.subr.mxu0 0.0
    %3542 = vmatpush1.msra.mxu0 0.0
    %3543 = vmatprep.subr.mxu0 0.0
    %3544 = vmatpush1.msra.mxu0 0.0
    %3545 = vmatprep.subr.mxu0 0.0
    %3546 = vmatpush1.msra.mxu0 0.0
    %3547 = vmatprep.subr.mxu0 0.0
    %3548 = vmatpush1.msra.mxu0 0.0
    %3549 = vmatprep.subr.mxu0 0.0
    %3550 = vmatpush1.msra.mxu0 0.0
    %3551 = vmatprep.subr.mxu0 0.0
    %3552 = vmatpush1.msra.mxu0 0.0
    %3553 = vmatprep.subr.mxu0 0.0
    %3554 = vmatpush1.msra.mxu0 0.0
    %3555 = vmatprep.subr.mxu0 0.0
    %3556 = vmatpush1.msra.mxu0 0.0
    %3557 = vmatprep.subr.mxu0 0.0
    %3558 = vmatpush1.msra.mxu0 0.0
    %3559 = vmatprep.subr.mxu0 0.0
    %3560 = vmatpush1.msra.mxu0 0.0
    %3561 = vmatprep.subr.mxu0 0.0
    %3562 = vmatpush1.msra.mxu0 0.0
    %3563 = vmatprep.subr.mxu0 0.0
    %3564 = vmatpush1.msra.mxu0 0.0
    %3565 = vmatprep.subr.mxu0 0.0
    %3566 = vmatpush1.msra.mxu0 0.0
    %3567 = vmatprep.subr.mxu0 0.0
    %3568 = vmatpush1.msra.mxu0 0.0
    %3569 = vmatprep.subr.mxu0 0.0
    %3570 = vmatpush1.msra.mxu0 0.0
    %3571 = vmatprep.subr.mxu0 0.0
    %3572 = vmatpush1.msra.mxu0 0.0
    %3573 = vmatprep.subr.mxu0 0.0
    %3574 = vmatpush1.msra.mxu0 0.0
    %3575 = vmatprep.subr.mxu0 0.0
    %3576 = vmatpush1.msra.mxu0 0.0
    %3577 = vmatprep.subr.mxu0 0.0
    %3578 = vmatpush1.msra.mxu0 0.0
    %3579 = vmatprep.subr.mxu0 0.0
    %3580 = vmatpush1.msra.mxu0 0.0
    %3581 = vmatprep.subr.mxu0 0.0
    %3582 = vmatpush1.msra.mxu0 0.0
    %3583 = vmatprep.subr.mxu0 0.0
    %3584 = vmatpush1.msra.mxu0 0.0
    %3585 = vmatprep.subr.mxu0 0.0
    %3586 = vmatpush1.msra.mxu0 0.0
    %3587 = vmatprep.subr.mxu0 0.0
    %3588 = vmatpush1.msra.mxu0 0.0
    %3589 = vmatprep.subr.mxu0 0.0
    %3590 = vmatpush1.msra.mxu0 0.0
    %3591 = vmatprep.subr.mxu0 0.0
    %3592 = vmatpush1.msra.mxu0 0.0
    %3593 = vmatprep.subr.mxu0 0.0
    %3594 = vmatpush1.msra.mxu0 0.0
    %3595 = vmatprep.subr.mxu0 0.0
    %3596 = vmatpush1.msra.mxu0 0.0
    %3597 = vmatprep.subr.mxu0 0.0
    %3598 = vmatpush1.msra.mxu0 0.0
    %3599 = vmatprep.subr.mxu0 0.0
    %3600 = vmatpush1.msra.mxu0 0.0
    %3601 = vmatprep.subr.mxu0 0.0
    %3602 = vmatpush1.msra.mxu0 0.0
    %3603 = vmatprep.mubr.f32.mxu0 0.0
    %3604 = vmatmul.mubr.f32.gmra.mrb[0].mxu0 %v3537
    %v3605 = vpop.f32.mrb[0].mxu0
    %v3606 = vadd.f32 0.0, %v3605
    %v3607 = vpop.f32.mrb[0].mxu0
    %3608 = vdwg.mxu0
    %v3610 = vsel %vm2183, %v3087, 0
    %3612 = vmatprep.subr.mxu0 0.0
    %3613 = vmatpush1.msra.mxu0 %v3529
    %3614 = vmatprep.subr.mxu0 0.0
    %3615 = vmatpush1.msra.mxu0 0.0
    %3616 = vmatprep.subr.mxu0 0.0
    %3617 = vmatpush1.msra.mxu0 0.0
    %3618 = vmatprep.subr.mxu0 0.0
    %3619 = vmatpush1.msra.mxu0 0.0
    %3620 = vmatprep.subr.mxu0 0.0
    %3621 = vmatpush1.msra.mxu0 0.0
    %3622 = vmatprep.subr.mxu0 0.0
    %3623 = vmatpush1.msra.mxu0 0.0
    %3624 = vmatprep.subr.mxu0 0.0
    %3625 = vmatpush1.msra.mxu0 0.0
    %3626 = vmatprep.subr.mxu0 0.0
    %3627 = vmatpush1.msra.mxu0 0.0
    %3628 = vmatprep.subr.mxu0 0.0
    %3629 = vmatpush1.msra.mxu0 0.0
    %3630 = vmatprep.subr.mxu0 0.0
    %3631 = vmatpush1.msra.mxu0 0.0
    %3632 = vmatprep.subr.mxu0 0.0
    %3633 = vmatpush1.msra.mxu0 0.0
    %3634 = vmatprep.subr.mxu0 0.0
    %3635 = vmatpush1.msra.mxu0 0.0
    %3636 = vmatprep.subr.mxu0 0.0
    %3637 = vmatpush1.msra.mxu0 0.0
    %3638 = vmatprep.subr.mxu0 0.0
    %3639 = vmatpush1.msra.mxu0 0.0
    %3640 = vmatprep.subr.mxu0 0.0
    %3641 = vmatpush1.msra.mxu0 0.0
    %3642 = vmatprep.subr.mxu0 0.0
    %3643 = vmatpush1.msra.mxu0 0.0
    %3644 = vmatprep.subr.mxu0 0.0
    %3645 = vmatpush1.msra.mxu0 0.0
    %3646 = vmatprep.subr.mxu0 0.0
    %3647 = vmatpush1.msra.mxu0 0.0
    %3648 = vmatprep.subr.mxu0 0.0
    %3649 = vmatpush1.msra.mxu0 0.0
    %3650 = vmatprep.subr.mxu0 0.0
    %3651 = vmatpush1.msra.mxu0 0.0
    %3652 = vmatprep.subr.mxu0 0.0
    %3653 = vmatpush1.msra.mxu0 0.0
    %3654 = vmatprep.subr.mxu0 0.0
    %3655 = vmatpush1.msra.mxu0 0.0
    %3656 = vmatprep.subr.mxu0 0.0
    %3657 = vmatpush1.msra.mxu0 0.0
    %3658 = vmatprep.subr.mxu0 0.0
    %3659 = vmatpush1.msra.mxu0 0.0
    %3660 = vmatprep.subr.mxu0 0.0
    %3661 = vmatpush1.msra.mxu0 0.0
    %3662 = vmatprep.subr.mxu0 0.0
    %3663 = vmatpush1.msra.mxu0 0.0
    %3664 = vmatprep.subr.mxu0 0.0
    %3665 = vmatpush1.msra.mxu0 0.0
    %3666 = vmatprep.subr.mxu0 0.0
    %3667 = vmatpush1.msra.mxu0 0.0
    %3668 = vmatprep.subr.mxu0 0.0
    %3669 = vmatpush1.msra.mxu0 0.0
    %3670 = vmatprep.subr.mxu0 0.0
    %3671 = vmatpush1.msra.mxu0 0.0
    %3672 = vmatprep.subr.mxu0 0.0
    %3673 = vmatpush1.msra.mxu0 0.0
    %3674 = vmatprep.subr.mxu0 0.0
    %3675 = vmatpush1.msra.mxu0 0.0
    %3676 = vmatprep.mubr.f32.mxu0 0.0
    %3677 = vmatmul.mubr.f32.gmra.mrb[0].mxu0 %v3610
    %v3678 = vpop.f32.mrb[0].mxu0
    %v3679 = vadd.f32 0.0, %v3678
    %v3680 = vpop.f32.mrb[0].mxu0
    %3681 = vdwg.mxu0
    %v3683 = vsel %vm2183, %v3160, 0
    %3685 = vmatprep.subr.mxu0 0.0
    %3686 = vmatpush1.msra.mxu0 %v3530
    %3687 = vmatprep.subr.mxu0 0.0
    %3688 = vmatpush1.msra.mxu0 0.0
    %3689 = vmatprep.subr.mxu0 0.0
    %3690 = vmatpush1.msra.mxu0 0.0
    %3691 = vmatprep.subr.mxu0 0.0
    %3692 = vmatpush1.msra.mxu0 0.0
    %3693 = vmatprep.subr.mxu0 0.0
    %3694 = vmatpush1.msra.mxu0 0.0
    %3695 = vmatprep.subr.mxu0 0.0
    %3696 = vmatpush1.msra.mxu0 0.0
    %3697 = vmatprep.subr.mxu0 0.0
    %3698 = vmatpush1.msra.mxu0 0.0
    %3699 = vmatprep.subr.mxu0 0.0
    %3700 = vmatpush1.msra.mxu0 0.0
    %3701 = vmatprep.subr.mxu0 0.0
    %3702 = vmatpush1.msra.mxu0 0.0
    %3703 = vmatprep.subr.mxu0 0.0
    %3704 = vmatpush1.msra.mxu0 0.0
    %3705 = vmatprep.subr.mxu0 0.0
    %3706 = vmatpush1.msra.mxu0 0.0
    %3707 = vmatprep.subr.mxu0 0.0
    %3708 = vmatpush1.msra.mxu0 0.0
    %3709 = vmatprep.subr.mxu0 0.0
    %3710 = vmatpush1.msra.mxu0 0.0
    %3711 = vmatprep.subr.mxu0 0.0
    %3712 = vmatpush1.msra.mxu0 0.0
    %3713 = vmatprep.subr.mxu0 0.0
    %3714 = vmatpush1.msra.mxu0 0.0
    %3715 = vmatprep.subr.mxu0 0.0
    %3716 = vmatpush1.msra.mxu0 0.0
    %3717 = vmatprep.subr.mxu0 0.0
    %3718 = vmatpush1.msra.mxu0 0.0
    %3719 = vmatprep.subr.mxu0 0.0
    %3720 = vmatpush1.msra.mxu0 0.0
    %3721 = vmatprep.subr.mxu0 0.0
    %3722 = vmatpush1.msra.mxu0 0.0
    %3723 = vmatprep.subr.mxu0 0.0
    %3724 = vmatpush1.msra.mxu0 0.0
    %3725 = vmatprep.subr.mxu0 0.0
    %3726 = vmatpush1.msra.mxu0 0.0
    %3727 = vmatprep.subr.mxu0 0.0
    %3728 = vmatpush1.msra.mxu0 0.0
    %3729 = vmatprep.subr.mxu0 0.0
    %3730 = vmatpush1.msra.mxu0 0.0
    %3731 = vmatprep.subr.mxu0 0.0
    %3732 = vmatpush1.msra.mxu0 0.0
    %3733 = vmatprep.subr.mxu0 0.0
    %3734 = vmatpush1.msra.mxu0 0.0
    %3735 = vmatprep.subr.mxu0 0.0
    %3736 = vmatpush1.msra.mxu0 0.0
    %3737 = vmatprep.subr.mxu0 0.0
    %3738 = vmatpush1.msra.mxu0 0.0
    %3739 = vmatprep.subr.mxu0 0.0
    %3740 = vmatpush1.msra.mxu0 0.0
    %3741 = vmatprep.subr.mxu0 0.0
    %3742 = vmatpush1.msra.mxu0 0.0
    %3743 = vmatprep.subr.mxu0 0.0
    %3744 = vmatpush1.msra.mxu0 0.0
    %3745 = vmatprep.subr.mxu0 0.0
    %3746 = vmatpush1.msra.mxu0 0.0
    %3747 = vmatprep.subr.mxu0 0.0
    %3748 = vmatpush1.msra.mxu0 0.0
    %3749 = vmatprep.mubr.f32.mxu0 0.0
    %3750 = vmatmul.mubr.f32.gmra.mrb[0].mxu0 %v3683
    %v3751 = vpop.f32.mrb[0].mxu0
    %v3752 = vadd.f32 0.0, %v3751
    %v3753 = vpop.f32.mrb[0].mxu0
    %3754 = vdwg.mxu0
    %v3756 = vsel %vm2183, %v3233, 0
    %3758 = vmatprep.subr.mxu0 0.0
    %3759 = vmatpush1.msra.mxu0 %v3531
    %3760 = vmatprep.subr.mxu0 0.0
    %3761 = vmatpush1.msra.mxu0 0.0
    %3762 = vmatprep.subr.mxu0 0.0
    %3763 = vmatpush1.msra.mxu0 0.0
    %3764 = vmatprep.subr.mxu0 0.0
    %3765 = vmatpush1.msra.mxu0 0.0
    %3766 = vmatprep.subr.mxu0 0.0
    %3767 = vmatpush1.msra.mxu0 0.0
    %3768 = vmatprep.subr.mxu0 0.0
    %3769 = vmatpush1.msra.mxu0 0.0
    %3770 = vmatprep.subr.mxu0 0.0
    %3771 = vmatpush1.msra.mxu0 0.0
    %3772 = vmatprep.subr.mxu0 0.0
    %3773 = vmatpush1.msra.mxu0 0.0
    %3774 = vmatprep.subr.mxu0 0.0
    %3775 = vmatpush1.msra.mxu0 0.0
    %3776 = vmatprep.subr.mxu0 0.0
    %3777 = vmatpush1.msra.mxu0 0.0
    %3778 = vmatprep.subr.mxu0 0.0
    %3779 = vmatpush1.msra.mxu0 0.0
    %3780 = vmatprep.subr.mxu0 0.0
    %3781 = vmatpush1.msra.mxu0 0.0
    %3782 = vmatprep.subr.mxu0 0.0
    %3783 = vmatpush1.msra.mxu0 0.0
    %3784 = vmatprep.subr.mxu0 0.0
    %3785 = vmatpush1.msra.mxu0 0.0
    %3786 = vmatprep.subr.mxu0 0.0
    %3787 = vmatpush1.msra.mxu0 0.0
    %3788 = vmatprep.subr.mxu0 0.0
    %3789 = vmatpush1.msra.mxu0 0.0
    %3790 = vmatprep.subr.mxu0 0.0
    %3791 = vmatpush1.msra.mxu0 0.0
    %3792 = vmatprep.subr.mxu0 0.0
    %3793 = vmatpush1.msra.mxu0 0.0
    %3794 = vmatprep.subr.mxu0 0.0
    %3795 = vmatpush1.msra.mxu0 0.0
    %3796 = vmatprep.subr.mxu0 0.0
    %3797 = vmatpush1.msra.mxu0 0.0
    %3798 = vmatprep.subr.mxu0 0.0
    %3799 = vmatpush1.msra.mxu0 0.0
    %3800 = vmatprep.subr.mxu0 0.0
    %3801 = vmatpush1.msra.mxu0 0.0
    %3802 = vmatprep.subr.mxu0 0.0
    %3803 = vmatpush1.msra.mxu0 0.0
    %3804 = vmatprep.subr.mxu0 0.0
    %3805 = vmatpush1.msra.mxu0 0.0
    %3806 = vmatprep.subr.mxu0 0.0
    %3807 = vmatpush1.msra.mxu0 0.0
    %3808 = vmatprep.subr.mxu0 0.0
    %3809 = vmatpush1.msra.mxu0 0.0
    %3810 = vmatprep.subr.mxu0 0.0
    %3811 = vmatpush1.msra.mxu0 0.0
    %3812 = vmatprep.subr.mxu0 0.0
    %3813 = vmatpush1.msra.mxu0 0.0
    %3814 = vmatprep.subr.mxu0 0.0
    %3815 = vmatpush1.msra.mxu0 0.0
    %3816 = vmatprep.subr.mxu0 0.0
    %3817 = vmatpush1.msra.mxu0 0.0
    %3818 = vmatprep.subr.mxu0 0.0
    %3819 = vmatpush1.msra.mxu0 0.0
    %3820 = vmatprep.subr.mxu0 0.0
    %3821 = vmatpush1.msra.mxu0 0.0
    %3822 = vmatprep.mubr.f32.mxu0 0.0
    %3823 = vmatmul.mubr.f32.gmra.mrb[0].mxu0 %v3756
    %v3824 = vpop.f32.mrb[0].mxu0
    %v3825 = vadd.f32 0.0, %v3824
    %v3826 = vpop.f32.mrb[0].mxu0
    %3827 = vdwg.mxu0
    %v3829 = vsel %vm2183, %v3306, 0
    %3831 = vmatprep.subr.mxu0 0.0
    %3832 = vmatpush1.msra.mxu0 %v3532
    %3833 = vmatprep.subr.mxu0 0.0
    %3834 = vmatpush1.msra.mxu0 0.0
    %3835 = vmatprep.subr.mxu0 0.0
    %3836 = vmatpush1.msra.mxu0 0.0
    %3837 = vmatprep.subr.mxu0 0.0
    %3838 = vmatpush1.msra.mxu0 0.0
    %3839 = vmatprep.subr.mxu0 0.0
    %3840 = vmatpush1.msra.mxu0 0.0
    %3841 = vmatprep.subr.mxu0 0.0
    %3842 = vmatpush1.msra.mxu0 0.0
    %3843 = vmatprep.subr.mxu0 0.0
    %3844 = vmatpush1.msra.mxu0 0.0
    %3845 = vmatprep.subr.mxu0 0.0
    %3846 = vmatpush1.msra.mxu0 0.0
    %3847 = vmatprep.subr.mxu0 0.0
    %3848 = vmatpush1.msra.mxu0 0.0
    %3849 = vmatprep.subr.mxu0 0.0
    %3850 = vmatpush1.msra.mxu0 0.0
    %3851 = vmatprep.subr.mxu0 0.0
    %3852 = vmatpush1.msra.mxu0 0.0
    %3853 = vmatprep.subr.mxu0 0.0
    %3854 = vmatpush1.msra.mxu0 0.0
    %3855 = vmatprep.subr.mxu0 0.0
    %3856 = vmatpush1.msra.mxu0 0.0
    %3857 = vmatprep.subr.mxu0 0.0
    %3858 = vmatpush1.msra.mxu0 0.0
    %3859 = vmatprep.subr.mxu0 0.0
    %3860 = vmatpush1.msra.mxu0 0.0
    %3861 = vmatprep.subr.mxu0 0.0
    %3862 = vmatpush1.msra.mxu0 0.0
    %3863 = vmatprep.subr.mxu0 0.0
    %3864 = vmatpush1.msra.mxu0 0.0
    %3865 = vmatprep.subr.mxu0 0.0
    %3866 = vmatpush1.msra.mxu0 0.0
    %3867 = vmatprep.subr.mxu0 0.0
    %3868 = vmatpush1.msra.mxu0 0.0
    %3869 = vmatprep.subr.mxu0 0.0
    %3870 = vmatpush1.msra.mxu0 0.0
    %3871 = vmatprep.subr.mxu0 0.0
    %3872 = vmatpush1.msra.mxu0 0.0
    %3873 = vmatprep.subr.mxu0 0.0
    %3874 = vmatpush1.msra.mxu0 0.0
    %3875 = vmatprep.subr.mxu0 0.0
    %3876 = vmatpush1.msra.mxu0 0.0
    %3877 = vmatprep.subr.mxu0 0.0
    %3878 = vmatpush1.msra.mxu0 0.0
    %3879 = vmatprep.subr.mxu0 0.0
    %3880 = vmatpush1.msra.mxu0 0.0
    %3881 = vmatprep.subr.mxu0 0.0
    %3882 = vmatpush1.msra.mxu0 0.0
    %3883 = vmatprep.subr.mxu0 0.0
    %3884 = vmatpush1.msra.mxu0 0.0
    %3885 = vmatprep.subr.mxu0 0.0
    %3886 = vmatpush1.msra.mxu0 0.0
    %3887 = vmatprep.subr.mxu0 0.0
    %3888 = vmatpush1.msra.mxu0 0.0
    %3889 = vmatprep.subr.mxu0 0.0
    %3890 = vmatpush1.msra.mxu0 0.0
    %3891 = vmatprep.subr.mxu0 0.0
    %3892 = vmatpush1.msra.mxu0 0.0
    %3893 = vmatprep.subr.mxu0 0.0
    %3894 = vmatpush1.msra.mxu0 0.0
    %3895 = vmatprep.mubr.f32.mxu0 0.0
    %3896 = vmatmul.mubr.f32.gmra.mrb[0].mxu0 %v3829
    %v3897 = vpop.f32.mrb[0].mxu0
    %v3898 = vadd.f32 0.0, %v3897
    %v3899 = vpop.f32.mrb[0].mxu0
    %3900 = vdwg.mxu0
    %v3902 = vsel %vm2183, %v3379, 0
    %3904 = vmatprep.subr.mxu0 0.0
    %3905 = vmatpush1.msra.mxu0 %v3533
    %3906 = vmatprep.subr.mxu0 0.0
    %3907 = vmatpush1.msra.mxu0 0.0
    %3908 = vmatprep.subr.mxu0 0.0
    %3909 = vmatpush1.msra.mxu0 0.0
    %3910 = vmatprep.subr.mxu0 0.0
    %3911 = vmatpush1.msra.mxu0 0.0
    %3912 = vmatprep.subr.mxu0 0.0
    %3913 = vmatpush1.msra.mxu0 0.0
    %3914 = vmatprep.subr.mxu0 0.0
    %3915 = vmatpush1.msra.mxu0 0.0
    %3916 = vmatprep.subr.mxu0 0.0
    %3917 = vmatpush1.msra.mxu0 0.0
    %3918 = vmatprep.subr.mxu0 0.0
    %3919 = vmatpush1.msra.mxu0 0.0
    %3920 = vmatprep.subr.mxu0 0.0
    %3921 = vmatpush1.msra.mxu0 0.0
    %3922 = vmatprep.subr.mxu0 0.0
    %3923 = vmatpush1.msra.mxu0 0.0
    %3924 = vmatprep.subr.mxu0 0.0
    %3925 = vmatpush1.msra.mxu0 0.0
    %3926 = vmatprep.subr.mxu0 0.0
    %3927 = vmatpush1.msra.mxu0 0.0
    %3928 = vmatprep.subr.mxu0 0.0
    %3929 = vmatpush1.msra.mxu0 0.0
    %3930 = vmatprep.subr.mxu0 0.0
    %3931 = vmatpush1.msra.mxu0 0.0
    %3932 = vmatprep.subr.mxu0 0.0
    %3933 = vmatpush1.msra.mxu0 0.0
    %3934 = vmatprep.subr.mxu0 0.0
    %3935 = vmatpush1.msra.mxu0 0.0
    %3936 = vmatprep.subr.mxu0 0.0
    %3937 = vmatpush1.msra.mxu0 0.0
    %3938 = vmatprep.subr.mxu0 0.0
    %3939 = vmatpush1.msra.mxu0 0.0
    %3940 = vmatprep.subr.mxu0 0.0
    %3941 = vmatpush1.msra.mxu0 0.0
    %3942 = vmatprep.subr.mxu0 0.0
    %3943 = vmatpush1.msra.mxu0 0.0
    %3944 = vmatprep.subr.mxu0 0.0
    %3945 = vmatpush1.msra.mxu0 0.0
    %3946 = vmatprep.subr.mxu0 0.0
    %3947 = vmatpush1.msra.mxu0 0.0
    %3948 = vmatprep.subr.mxu0 0.0
    %3949 = vmatpush1.msra.mxu0 0.0
    %3950 = vmatprep.subr.mxu0 0.0
    %3951 = vmatpush1.msra.mxu0 0.0
    %3952 = vmatprep.subr.mxu0 0.0
    %3953 = vmatpush1.msra.mxu0 0.0
    %3954 = vmatprep.subr.mxu0 0.0
    %3955 = vmatpush1.msra.mxu0 0.0
    %3956 = vmatprep.subr.mxu0 0.0
    %3957 = vmatpush1.msra.mxu0 0.0
    %3958 = vmatprep.subr.mxu0 0.0
    %3959 = vmatpush1.msra.mxu0 0.0
    %3960 = vmatprep.subr.mxu0 0.0
    %3961 = vmatpush1.msra.mxu0 0.0
    %3962 = vmatprep.subr.mxu0 0.0
    %3963 = vmatpush1.msra.mxu0 0.0
    %3964 = vmatprep.subr.mxu0 0.0
    %3965 = vmatpush1.msra.mxu0 0.0
    %3966 = vmatprep.subr.mxu0 0.0
    %3967 = vmatpush1.msra.mxu0 0.0
    %3968 = vmatprep.mubr.f32.mxu0 0.0
    %3969 = vmatmul.mubr.f32.gmra.mrb[0].mxu0 %v3902
    %v3970 = vpop.f32.mrb[0].mxu0
    %v3971 = vadd.f32 0.0, %v3970
    %v3972 = vpop.f32.mrb[0].mxu0
    %3973 = vdwg.mxu0
    %v3975 = vsel %vm2183, %v3452, 0
    %3977 = vmatprep.subr.mxu0 0.0
    %3978 = vmatpush1.msra.mxu0 %v3534
    %3979 = vmatprep.subr.mxu0 0.0
    %3980 = vmatpush1.msra.mxu0 0.0
    %3981 = vmatprep.subr.mxu0 0.0
    %3982 = vmatpush1.msra.mxu0 0.0
    %3983 = vmatprep.subr.mxu0 0.0
    %3984 = vmatpush1.msra.mxu0 0.0
    %3985 = vmatprep.subr.mxu0 0.0
    %3986 = vmatpush1.msra.mxu0 0.0
    %3987 = vmatprep.subr.mxu0 0.0
    %3988 = vmatpush1.msra.mxu0 0.0
    %3989 = vmatprep.subr.mxu0 0.0
    %3990 = vmatpush1.msra.mxu0 0.0
    %3991 = vmatprep.subr.mxu0 0.0
    %3992 = vmatpush1.msra.mxu0 0.0
    %3993 = vmatprep.subr.mxu0 0.0
    %3994 = vmatpush1.msra.mxu0 0.0
    %3995 = vmatprep.subr.mxu0 0.0
    %3996 = vmatpush1.msra.mxu0 0.0
    %3997 = vmatprep.subr.mxu0 0.0
    %3998 = vmatpush1.msra.mxu0 0.0
    %3999 = vmatprep.subr.mxu0 0.0
    %4000 = vmatpush1.msra.mxu0 0.0
    %4001 = vmatprep.subr.mxu0 0.0
    %4002 = vmatpush1.msra.mxu0 0.0
    %4003 = vmatprep.subr.mxu0 0.0
    %4004 = vmatpush1.msra.mxu0 0.0
    %4005 = vmatprep.subr.mxu0 0.0
    %4006 = vmatpush1.msra.mxu0 0.0
    %4007 = vmatprep.subr.mxu0 0.0
    %4008 = vmatpush1.msra.mxu0 0.0
    %4009 = vmatprep.subr.mxu0 0.0
    %4010 = vmatpush1.msra.mxu0 0.0
    %4011 = vmatprep.subr.mxu0 0.0
    %4012 = vmatpush1.msra.mxu0 0.0
    %4013 = vmatprep.subr.mxu0 0.0
    %4014 = vmatpush1.msra.mxu0 0.0
    %4015 = vmatprep.subr.mxu0 0.0
    %4016 = vmatpush1.msra.mxu0 0.0
    %4017 = vmatprep.subr.mxu0 0.0
    %4018 = vmatpush1.msra.mxu0 0.0
    %4019 = vmatprep.subr.mxu0 0.0
    %4020 = vmatpush1.msra.mxu0 0.0
    %4021 = vmatprep.subr.mxu0 0.0
    %4022 = vmatpush1.msra.mxu0 0.0
    %4023 = vmatprep.subr.mxu0 0.0
    %4024 = vmatpush1.msra.mxu0 0.0
    %4025 = vmatprep.subr.mxu0 0.0
    %4026 = vmatpush1.msra.mxu0 0.0
    %4027 = vmatprep.subr.mxu0 0.0
    %4028 = vmatpush1.msra.mxu0 0.0
    %4029 = vmatprep.subr.mxu0 0.0
    %4030 = vmatpush1.msra.mxu0 0.0
    %4031 = vmatprep.subr.mxu0 0.0
    %4032 = vmatpush1.msra.mxu0 0.0
    %4033 = vmatprep.subr.mxu0 0.0
    %4034 = vmatpush1.msra.mxu0 0.0
    %4035 = vmatprep.subr.mxu0 0.0
    %4036 = vmatpush1.msra.mxu0 0.0
    %4037 = vmatprep.subr.mxu0 0.0
    %4038 = vmatpush1.msra.mxu0 0.0
    %4039 = vmatprep.subr.mxu0 0.0
    %4040 = vmatpush1.msra.mxu0 0.0
    %4041 = vmatprep.mubr.f32.mxu0 0.0
    %4042 = vmatmul.mubr.f32.gmra.mrb[0].mxu0 %v3975
    %v4043 = vpop.f32.mrb[0].mxu0
    %v4044 = vadd.f32 0.0, %v4043
    %v4045 = vpop.f32.mrb[0].mxu0
    %4046 = vdwg.mxu0
    %v4048 = vsel %vm2183, %v3525, 0
    %4050 = vmatprep.subr.mxu0 0.0
    %4051 = vmatpush1.msra.mxu0 %v3535
    %4052 = vmatprep.subr.mxu0 0.0
    %4053 = vmatpush1.msra.mxu0 0.0
    %4054 = vmatprep.subr.mxu0 0.0
    %4055 = vmatpush1.msra.mxu0 0.0
    %4056 = vmatprep.subr.mxu0 0.0
    %4057 = vmatpush1.msra.mxu0 0.0
    %4058 = vmatprep.subr.mxu0 0.0
    %4059 = vmatpush1.msra.mxu0 0.0
    %4060 = vmatprep.subr.mxu0 0.0
    %4061 = vmatpush1.msra.mxu0 0.0
    %4062 = vmatprep.subr.mxu0 0.0
    %4063 = vmatpush1.msra.mxu0 0.0
    %4064 = vmatprep.subr.mxu0 0.0
    %4065 = vmatpush1.msra.mxu0 0.0
    %4066 = vmatprep.subr.mxu0 0.0
    %4067 = vmatpush1.msra.mxu0 0.0
    %4068 = vmatprep.subr.mxu0 0.0
    %4069 = vmatpush1.msra.mxu0 0.0
    %4070 = vmatprep.subr.mxu0 0.0
    %4071 = vmatpush1.msra.mxu0 0.0
    %4072 = vmatprep.subr.mxu0 0.0
    %4073 = vmatpush1.msra.mxu0 0.0
    %4074 = vmatprep.subr.mxu0 0.0
    %4075 = vmatpush1.msra.mxu0 0.0
    %4076 = vmatprep.subr.mxu0 0.0
    %4077 = vmatpush1.msra.mxu0 0.0
    %4078 = vmatprep.subr.mxu0 0.0
    %4079 = vmatpush1.msra.mxu0 0.0
    %4080 = vmatprep.subr.mxu0 0.0
    %4081 = vmatpush1.msra.mxu0 0.0
    %4082 = vmatprep.subr.mxu0 0.0
    %4083 = vmatpush1.msra.mxu0 0.0
    %4084 = vmatprep.subr.mxu0 0.0
    %4085 = vmatpush1.msra.mxu0 0.0
    %4086 = vmatprep.subr.mxu0 0.0
    %4087 = vmatpush1.msra.mxu0 0.0
    %4088 = vmatprep.subr.mxu0 0.0
    %4089 = vmatpush1.msra.mxu0 0.0
    %4090 = vmatprep.subr.mxu0 0.0
    %4091 = vmatpush1.msra.mxu0 0.0
    %4092 = vmatprep.subr.mxu0 0.0
    %4093 = vmatpush1.msra.mxu0 0.0
    %4094 = vmatprep.subr.mxu0 0.0
    %4095 = vmatpush1.msra.mxu0 0.0
    %4096 = vmatprep.subr.mxu0 0.0
    %4097 = vmatpush1.msra.mxu0 0.0
    %4098 = vmatprep.subr.mxu0 0.0
    %4099 = vmatpush1.msra.mxu0 0.0
    %4100 = vmatprep.subr.mxu0 0.0
    %4101 = vmatpush1.msra.mxu0 0.0
    %4102 = vmatprep.subr.mxu0 0.0
    %4103 = vmatpush1.msra.mxu0 0.0
    %4104 = vmatprep.subr.mxu0 0.0
    %4105 = vmatpush1.msra.mxu0 0.0
    %4106 = vmatprep.subr.mxu0 0.0
    %4107 = vmatpush1.msra.mxu0 0.0
    %4108 = vmatprep.subr.mxu0 0.0
    %4109 = vmatpush1.msra.mxu0 0.0
    %4110 = vmatprep.subr.mxu0 0.0
    %4111 = vmatpush1.msra.mxu0 0.0
    %4112 = vmatprep.subr.mxu0 0.0
    %4113 = vmatpush1.msra.mxu0 0.0
    %4114 = vmatprep.mubr.f32.mxu0 0.0
    %4115 = vmatmul.mubr.f32.gmra.mrb[0].mxu0 %v4048
    %v4116 = vpop.f32.mrb[0].mxu0
    %v4117 = vadd.f32 0.0, %v4116
    %v4118 = vpop.f32.mrb[0].mxu0
    %4119 = vdwg.mxu0
    %v4120 = vsel %vm320, %v3606, 0.0
    %v4121 = vsel %vm320, %v3679, 0.0
    %v4122 = vadd.f32 %v4120, %v4121
    %v4123 = vsel %vm320, %v3752, 0.0
    %v4124 = vadd.f32 %v4122, %v4123
    %v4125 = vsel %vm320, %v3825, 0.0
    %v4126 = vadd.f32 %v4124, %v4125
    %v4127 = vsel %vm320, %v3898, 0.0
    %v4128 = vsel %vm320, %v3971, 0.0
    %v4129 = vadd.f32 %v4127, %v4128
    %v4130 = vsel %vm320, %v4044, 0.0
    %v4131 = vadd.f32 %v4129, %v4130
    %v4132 = vsel %vm320, %v4117, 0.0
    %v4133 = vadd.f32 %v4131, %v4132
    %v4134 = vld [vmem:[%s15] sm:$0x1]
    %v4136 = vlaneseq
    %v4137 = vshrl.u32 %v4136, 7
    %v4138 = vsub.s32 0, %v4137
    %v4139 = vrot.slane %v4134, %v4138
    %v4141 = vadd.f32 %v4126, %v4139
    %v4142 = vadd.f32 %v4133, %v4139
    %v4143 = vadd.f32 %v4141, %v216
    %v4144 = vadd.f32 %v4142, %v221
    %v4145 = vld [vmem:[%s16] sm:$0x1]
    %v4146 = vld [vmem:[%s17] sm:$0x1]
    %v4147 = vsel %vm320, %v4143, 0.0
    %4148 = vadd.xlane.f32.xlu0 %v4147
    %v4149 = vpop.xlane.xlu0 %4148
    %v4150 = vsel %vm320, %v4144, 0.0
    %4151 = vadd.xlane.f32.xlu0 %v4150
    %v4152 = vpop.xlane.xlu0 %4151
    %v4153 = vrcp.pop 32.0
    %v4154 = vmul.f32 %v4149, %v4153
    %v4155 = vmul.f32 %v4152, %v4153
    %v4156 = vsub.f32 %v4143, %v4154
    %v4157 = vsub.f32 %v4144, %v4155
    %v4158 = vmul.f32 %v4156, %v4156
    %v4159 = vmul.f32 %v4157, %v4157
    %v4160 = vsel %vm320, %v4158, 0.0
    %4161 = vadd.xlane.f32.xlu0 %v4160
    %v4162 = vpop.xlane.xlu0 %4161
    %v4163 = vsel %vm320, %v4159, 0.0
    %4164 = vadd.xlane.f32.xlu0 %v4163
    %v4165 = vpop.xlane.xlu0 %4164
    %v4166 = vmul.f32 %v4162, %v4153
    %v4167 = vmul.f32 %v4165, %v4153
    %v4168 = vadd.f32 %v4166, 1e-12
    %v4169 = vadd.f32 %v4167, 1e-12
    %v4170 = vrsqrt.pop %v4168
    %v4171 = vrsqrt.pop %v4169
    %v4172 = vmul.f32 %v4156, %v4170
    %v4173 = vmul.f32 %v4157, %v4171
    %v4175 = vlaneseq
    %v4176 = vshrl.u32 %v4175, 7
    %v4177 = vsub.s32 0, %v4176
    %v4178 = vrot.slane %v4145, %v4177
    %v4180 = vmul.f32 %v4178, %v4172
    %v4181 = vmul.f32 %v4178, %v4173
    %v4183 = vlaneseq
    %v4184 = vshrl.u32 %v4183, 7
    %v4185 = vsub.s32 0, %v4184
    %v4186 = vrot.slane %v4146, %v4185
    %v4188 = vadd.f32 %v4180, %v4186
    %v4189 = vadd.f32 %v4181, %v4186
    %v4190 = vld [vmem:[%s18] sm:$0xff]
    %v4191 = vld [vmem:[%s18 + $0x8] sm:$0xff]
    %v4192 = vld [vmem:[%s18 + $0x10] sm:$0xff]
    %v4193 = vld [vmem:[%s18 + $0x18] sm:$0xff]
    %v4194 = vld [vmem:[%s19] sm:$0x1]
    %v4196 = vlaneseq
    %v4197 = vshrl.u32 %v4196, 7
    %v4198 = vsub.s32 0, %v4197
    %v4199 = vrot.slane %v4194, %v4198
    %v4202 = vsel %vm320, %v4188, 0
    %v4205 = vsel %vm320, %v4189, 0
    %4207 = vmatprep.subr.mxu0 0.0
    %4208 = vmatpush1.msra.mxu0 %v4190
    %4209 = vmatprep.subr.mxu0 0.0
    %4210 = vmatpush1.msra.mxu0 %v4191
    %4211 = vmatprep.subr.mxu0 0.0
    %4212 = vmatpush1.msra.mxu0 %v4192
    %4213 = vmatprep.subr.mxu0 0.0
    %4214 = vmatpush1.msra.mxu0 %v4193
    %4215 = vmatprep.subr.mxu0 0.0
    %4216 = vmatpush1.msra.mxu0 0.0
    %4217 = vmatprep.subr.mxu0 0.0
    %4218 = vmatpush1.msra.mxu0 0.0
    %4219 = vmatprep.subr.mxu0 0.0
    %4220 = vmatpush1.msra.mxu0 0.0
    %4221 = vmatprep.subr.mxu0 0.0
    %4222 = vmatpush1.msra.mxu0 0.0
    %4223 = vmatprep.subr.mxu0 0.0
    %4224 = vmatpush1.msra.mxu0 0.0
    %4225 = vmatprep.subr.mxu0 0.0
    %4226 = vmatpush1.msra.mxu0 0.0
    %4227 = vmatprep.subr.mxu0 0.0
    %4228 = vmatpush1.msra.mxu0 0.0
    %4229 = vmatprep.subr.mxu0 0.0
    %4230 = vmatpush1.msra.mxu0 0.0
    %4231 = vmatprep.subr.mxu0 0.0
    %4232 = vmatpush1.msra.mxu0 0.0
    %4233 = vmatprep.subr.mxu0 0.0
    %4234 = vmatpush1.msra.mxu0 0.0
    %4235 = vmatprep.subr.mxu0 0.0
    %4236 = vmatpush1.msra.mxu0 0.0
    %4237 = vmatprep.subr.mxu0 0.0
    %4238 = vmatpush1.msra.mxu0 0.0
    %4239 = vmatprep.subr.mxu0 0.0
    %4240 = vmatpush1.msra.mxu0 0.0
    %4241 = vmatprep.subr.mxu0 0.0
    %4242 = vmatpush1.msra.mxu0 0.0
    %4243 = vmatprep.subr.mxu0 0.0
    %4244 = vmatpush1.msra.mxu0 0.0
    %4245 = vmatprep.subr.mxu0 0.0
    %4246 = vmatpush1.msra.mxu0 0.0
    %4247 = vmatprep.subr.mxu0 0.0
    %4248 = vmatpush1.msra.mxu0 0.0
    %4249 = vmatprep.subr.mxu0 0.0
    %4250 = vmatpush1.msra.mxu0 0.0
    %4251 = vmatprep.subr.mxu0 0.0
    %4252 = vmatpush1.msra.mxu0 0.0
    %4253 = vmatprep.subr.mxu0 0.0
    %4254 = vmatpush1.msra.mxu0 0.0
    %4255 = vmatprep.subr.mxu0 0.0
    %4256 = vmatpush1.msra.mxu0 0.0
    %4257 = vmatprep.subr.mxu0 0.0
    %4258 = vmatpush1.msra.mxu0 0.0
    %4259 = vmatprep.subr.mxu0 0.0
    %4260 = vmatpush1.msra.mxu0 0.0
    %4261 = vmatprep.subr.mxu0 0.0
    %4262 = vmatpush1.msra.mxu0 0.0
    %4263 = vmatprep.subr.mxu0 0.0
    %4264 = vmatpush1.msra.mxu0 0.0
    %4265 = vmatprep.subr.mxu0 0.0
    %4266 = vmatpush1.msra.mxu0 0.0
    %4267 = vmatprep.subr.mxu0 0.0
    %4268 = vmatpush1.msra.mxu0 0.0
    %4269 = vmatprep.subr.mxu0 0.0
    %4270 = vmatpush1.msra.mxu0 0.0
    %4271 = vmatprep.mubr.f32.mxu0 0.0
    %4272 = vmatmul.mubr.f32.gmra.mrb[0].mxu0 %v4202
    %v4273 = vpop.f32.mrb[0].mxu0
    %v4274 = vadd.f32 %v4199, %v4273
    %v4275 = vpop.f32.mrb[0].mxu0
    %4276 = vmatprep.mubr.f32.mxu0 0.0
    %4277 = vmatmul.mubr.f32.gmra.mrb[0].mxu0 %v4205
    %v4278 = vpop.f32.mrb[0].mxu0
    %v4279 = vadd.f32 %v4199, %v4278
    %v4280 = vpop.f32.mrb[0].mxu0
    %4281 = vdwg.mxu0
    %v4282 = vmul.f32 %v4274, 0.5
    %v4283 = vmul.f32 %v4279, 0.5
    %v4284 = vrcp.pop 1.41421
    %v4285 = vmul.f32 %v4274, %v4284
    %v4286 = vmul.f32 %v4279, %v4284
    %v4287 = verf.f32.pop %v4285
    %v4288 = verf.f32.pop %v4286
    %v4289 = vadd.f32 %v4287, 1.0
    %v4290 = vadd.f32 %v4288, 1.0
    %v4291 = vmul.f32 %v4282, %v4289
    %v4292 = vmul.f32 %v4283, %v4290
    %v4293 = vld [vmem:[%s20] sm:$0xff]
    %v4294 = vld [vmem:[%s20 + $0x8] sm:$0xff]
    %v4295 = vld [vmem:[%s20 + $0x10] sm:$0xff]
    %v4296 = vld [vmem:[%s20 + $0x18] sm:$0xff]
    %v4297 = vld [vmem:[%s20 + $0x20] sm:$0xff]
    %v4298 = vld [vmem:[%s20 + $0x28] sm:$0xff]
    %v4299 = vld [vmem:[%s20 + $0x30] sm:$0xff]
    %v4300 = vld [vmem:[%s20 + $0x38] sm:$0xff]
    %v4301 = vld [vmem:[%s20 + $0x40] sm:$0xff]
    %v4302 = vld [vmem:[%s20 + $0x48] sm:$0xff]
    %v4303 = vld [vmem:[%s20 + $0x50] sm:$0xff]
    %v4304 = vld [vmem:[%s20 + $0x58] sm:$0xff]
    %v4305 = vld [vmem:[%s20 + $0x60] sm:$0xff]
    %v4306 = vld [vmem:[%s20 + $0x68] sm:$0xff]
    %v4307 = vld [vmem:[%s20 + $0x70] sm:$0xff]
    %v4308 = vld [vmem:[%s20 + $0x78] sm:$0xff]
    %v4309 = vld [vmem:[%s21] sm:$0x1]
    %v4311 = vlaneseq
    %v4312 = vshrl.u32 %v4311, 7
    %v4313 = vsub.s32 0, %v4312
    %v4314 = vrot.slane %v4309, %v4313
    %4316 = vmatprep.subr.mxu0 0.0
    %4317 = vmatpush1.msra.mxu0 %v4293
    %4318 = vmatprep.subr.mxu0 0.0
    %4319 = vmatpush1.msra.mxu0 %v4294
    %4320 = vmatprep.subr.mxu0 0.0
    %4321 = vmatpush1.msra.mxu0 %v4295
    %4322 = vmatprep.subr.mxu0 0.0
    %4323 = vmatpush1.msra.mxu0 %v4296
    %4324 = vmatprep.subr.mxu0 0.0
    %4325 = vmatpush1.msra.mxu0 %v4297
    %4326 = vmatprep.subr.mxu0 0.0
    %4327 = vmatpush1.msra.mxu0 %v4298
    %4328 = vmatprep.subr.mxu0 0.0
    %4329 = vmatpush1.msra.mxu0 %v4299
    %4330 = vmatprep.subr.mxu0 0.0
    %4331 = vmatpush1.msra.mxu0 %v4300
    %4332 = vmatprep.subr.mxu0 0.0
    %4333 = vmatpush1.msra.mxu0 %v4301
    %4334 = vmatprep.subr.mxu0 0.0
    %4335 = vmatpush1.msra.mxu0 %v4302
    %4336 = vmatprep.subr.mxu0 0.0
    %4337 = vmatpush1.msra.mxu0 %v4303
    %4338 = vmatprep.subr.mxu0 0.0
    %4339 = vmatpush1.msra.mxu0 %v4304
    %4340 = vmatprep.subr.mxu0 0.0
    %4341 = vmatpush1.msra.mxu0 %v4305
    %4342 = vmatprep.subr.mxu0 0.0
    %4343 = vmatpush1.msra.mxu0 %v4306
    %4344 = vmatprep.subr.mxu0 0.0
    %4345 = vmatpush1.msra.mxu0 %v4307
    %4346 = vmatprep.subr.mxu0 0.0
    %4347 = vmatpush1.msra.mxu0 %v4308
    %4348 = vmatprep.subr.mxu0 0.0
    %4349 = vmatpush1.msra.mxu0 0.0
    %4350 = vmatprep.subr.mxu0 0.0
    %4351 = vmatpush1.msra.mxu0 0.0
    %4352 = vmatprep.subr.mxu0 0.0
    %4353 = vmatpush1.msra.mxu0 0.0
    %4354 = vmatprep.subr.mxu0 0.0
    %4355 = vmatpush1.msra.mxu0 0.0
    %4356 = vmatprep.subr.mxu0 0.0
    %4357 = vmatpush1.msra.mxu0 0.0
    %4358 = vmatprep.subr.mxu0 0.0
    %4359 = vmatpush1.msra.mxu0 0.0
    %4360 = vmatprep.subr.mxu0 0.0
    %4361 = vmatpush1.msra.mxu0 0.0
    %4362 = vmatprep.subr.mxu0 0.0
    %4363 = vmatpush1.msra.mxu0 0.0
    %4364 = vmatprep.subr.mxu0 0.0
    %4365 = vmatpush1.msra.mxu0 0.0
    %4366 = vmatprep.subr.mxu0 0.0
    %4367 = vmatpush1.msra.mxu0 0.0
    %4368 = vmatprep.subr.mxu0 0.0
    %4369 = vmatpush1.msra.mxu0 0.0
    %4370 = vmatprep.subr.mxu0 0.0
    %4371 = vmatpush1.msra.mxu0 0.0
    %4372 = vmatprep.subr.mxu0 0.0
    %4373 = vmatpush1.msra.mxu0 0.0
    %4374 = vmatprep.subr.mxu0 0.0
    %4375 = vmatpush1.msra.mxu0 0.0
    %4376 = vmatprep.subr.mxu0 0.0
    %4377 = vmatpush1.msra.mxu0 0.0
    %4378 = vmatprep.subr.mxu0 0.0
    %4379 = vmatpush1.msra.mxu0 0.0
    %4380 = vmatprep.mubr.f32.mxu0 0.0
    %4381 = vmatmul.mubr.f32.gmra.mrb[0].mxu0 %v4291
    %v4382 = vpop.f32.mrb[0].mxu0
    %v4383 = vadd.f32 %v4314, %v4382
    %v4384 = vpop.f32.mrb[0].mxu0
    %4385 = vmatprep.mubr.f32.mxu0 0.0
    %4386 = vmatmul.mubr.f32.gmra.mrb[0].mxu0 %v4292
    %v4387 = vpop.f32.mrb[0].mxu0
    %v4388 = vadd.f32 %v4314, %v4387
    %v4389 = vpop.f32.mrb[0].mxu0
    %4390 = vdwg.mxu0
    %v4391 = vadd.f32 %v4383, %v4188
    %v4392 = vadd.f32 %v4388, %v4189
    %v4393 = vld [vmem:[%s22] sm:$0x1]
    %v4394 = vld [vmem:[%s23] sm:$0x1]
    %v4395 = vsel %vm320, %v4391, 0.0
    %4396 = vadd.xlane.f32.xlu0 %v4395
    %v4397 = vpop.xlane.xlu0 %4396
    %v4398 = vsel %vm320, %v4392, 0.0
    %4399 = vadd.xlane.f32.xlu0 %v4398
    %v4400 = vpop.xlane.xlu0 %4399
    %v4401 = vmul.f32 %v4397, %v4153
    %v4402 = vmul.f32 %v4400, %v4153
    %v4403 = vsub.f32 %v4391, %v4401
    %v4404 = vsub.f32 %v4392, %v4402
    %v4405 = vmul.f32 %v4403, %v4403
    %v4406 = vmul.f32 %v4404, %v4404
    %v4407 = vsel %vm320, %v4405, 0.0
    %4408 = vadd.xlane.f32.xlu0 %v4407
    %v4409 = vpop.xlane.xlu0 %4408
    %v4410 = vsel %vm320, %v4406, 0.0
    %4411 = vadd.xlane.f32.xlu0 %v4410
    %v4412 = vpop.xlane.xlu0 %4411
    %v4413 = vmul.f32 %v4409, %v4153
    %v4414 = vmul.f32 %v4412, %v4153
    %v4415 = vadd.f32 %v4413, 1e-12
    %v4416 = vadd.f32 %v4414, 1e-12
    %v4417 = vrsqrt.pop %v4415
    %v4418 = vrsqrt.pop %v4416
    %v4419 = vmul.f32 %v4403, %v4417
    %v4420 = vmul.f32 %v4404, %v4418
    %v4422 = vlaneseq
    %v4423 = vshrl.u32 %v4422, 7
    %v4424 = vsub.s32 0, %v4423
    %v4425 = vrot.slane %v4393, %v4424
    %v4427 = vmul.f32 %v4425, %v4419
    %v4428 = vmul.f32 %v4425, %v4420
    %v4430 = vlaneseq
    %v4431 = vshrl.u32 %v4430, 7
    %v4432 = vsub.s32 0, %v4431
    %v4433 = vrot.slane %v4394, %v4432
    %v4435 = vadd.f32 %v4427, %v4433
    %v4436 = vadd.f32 %v4428, %v4433
    %s4437 = scalar_lea.vmem %s8, 256
    %v4438 = vld [vmem:[%s4437] sm:$0xff]
    %v4439 = vld [vmem:[%s4437 + $0x8] sm:$0xff]
    %v4440 = vld [vmem:[%s4437 + $0x10] sm:$0xff]
    %v4441 = vld [vmem:[%s4437 + $0x18] sm:$0xff]
    %v4442 = vld [vmem:[%s4437 + $0x20] sm:$0xff]
    %v4443 = vld [vmem:[%s4437 + $0x28] sm:$0xff]
    %v4444 = vld [vmem:[%s4437 + $0x30] sm:$0xff]
    %v4445 = vld [vmem:[%s4437 + $0x38] sm:$0xff]
    %v4446 = vld [vmem:[%s4437 + $0x40] sm:$0xff]
    %v4447 = vld [vmem:[%s4437 + $0x48] sm:$0xff]
    %v4448 = vld [vmem:[%s4437 + $0x50] sm:$0xff]
    %v4449 = vld [vmem:[%s4437 + $0x58] sm:$0xff]
    %v4450 = vld [vmem:[%s4437 + $0x60] sm:$0xff]
    %v4451 = vld [vmem:[%s4437 + $0x68] sm:$0xff]
    %v4452 = vld [vmem:[%s4437 + $0x70] sm:$0xff]
    %v4453 = vld [vmem:[%s4437 + $0x78] sm:$0xff]
    %v4454 = vld [vmem:[%s4437 + $0x80] sm:$0xff]
    %v4455 = vld [vmem:[%s4437 + $0x88] sm:$0xff]
    %v4456 = vld [vmem:[%s4437 + $0x90] sm:$0xff]
    %v4457 = vld [vmem:[%s4437 + $0x98] sm:$0xff]
    %v4458 = vld [vmem:[%s4437 + $0xa0] sm:$0xff]
    %v4459 = vld [vmem:[%s4437 + $0xa8] sm:$0xff]
    %v4460 = vld [vmem:[%s4437 + $0xb0] sm:$0xff]
    %v4461 = vld [vmem:[%s4437 + $0xb8] sm:$0xff]
    %v4462 = vld [vmem:[%s4437 + $0xc0] sm:$0xff]
    %v4463 = vld [vmem:[%s4437 + $0xc8] sm:$0xff]
    %v4464 = vld [vmem:[%s4437 + $0xd0] sm:$0xff]
    %v4465 = vld [vmem:[%s4437 + $0xd8] sm:$0xff]
    %v4466 = vld [vmem:[%s4437 + $0xe0] sm:$0xff]
    %v4467 = vld [vmem:[%s4437 + $0xe8] sm:$0xff]
    %v4468 = vld [vmem:[%s4437 + $0xf0] sm:$0xff]
    %v4469 = vld [vmem:[%s4437 + $0xf8] sm:$0xff]
    %s4470 = scalar_lea.vmem %s9, 8
    %v4471 = vld [vmem:[%s4470] sm:$0x1]
    %v4472 = vld [vmem:[%s4470 + $0x1] sm:$0x1]
    %v4473 = vld [vmem:[%s4470 + $0x2] sm:$0x1]
    %v4474 = vld [vmem:[%s4470 + $0x3] sm:$0x1]
    %v4475 = vld [vmem:[%s4470 + $0x4] sm:$0x1]
    %v4476 = vld [vmem:[%s4470 + $0x5] sm:$0x1]
    %v4477 = vld [vmem:[%s4470 + $0x6] sm:$0x1]
    %v4478 = vld [vmem:[%s4470 + $0x7] sm:$0x1]
    %v4487 = vlaneseq
    %v4488 = vshrl.u32 %v4487, 7
    %v4489 = vsub.s32 0, %v4488
    %v4490 = vrot.slane %v4471, %v4489
    %v4491 = vlaneseq
    %v4492 = vshrl.u32 %v4491, 7
    %v4493 = vsub.s32 0, %v4492
    %v4494 = vrot.slane %v4472, %v4493
    %v4495 = vlaneseq
    %v4496 = vshrl.u32 %v4495, 7
    %v4497 = vsub.s32 0, %v4496
    %v4498 = vrot.slane %v4473, %v4497
    %v4499 = vlaneseq
    %v4500 = vshrl.u32 %v4499, 7
    %v4501 = vsub.s32 0, %v4500
    %v4502 = vrot.slane %v4474, %v4501
    %v4503 = vlaneseq
    %v4504 = vshrl.u32 %v4503, 7
    %v4505 = vsub.s32 0, %v4504
    %v4506 = vrot.slane %v4475, %v4505
    %v4507 = vlaneseq
    %v4508 = vshrl.u32 %v4507, 7
    %v4509 = vsub.s32 0, %v4508
    %v4510 = vrot.slane %v4476, %v4509
    %v4511 = vlaneseq
    %v4512 = vshrl.u32 %v4511, 7
    %v4513 = vsub.s32 0, %v4512
    %v4514 = vrot.slane %v4477, %v4513
    %v4515 = vlaneseq
    %v4516 = vshrl.u32 %v4515, 7
    %v4517 = vsub.s32 0, %v4516
    %v4518 = vrot.slane %v4478, %v4517
    %v4528 = vsel %vm320, %v4435, 0
    %4530 = vmatprep.subr.mxu0 0.0
    %4531 = vmatpush1.msra.mxu0 %v4438
    %4532 = vmatprep.subr.mxu0 0.0
    %4533 = vmatpush1.msra.mxu0 %v4439
    %4534 = vmatprep.subr.mxu0 0.0
    %4535 = vmatpush1.msra.mxu0 %v4440
    %4536 = vmatprep.subr.mxu0 0.0
    %4537 = vmatpush1.msra.mxu0 %v4441
    %4538 = vmatprep.subr.mxu0 0.0
    %4539 = vmatpush1.msra.mxu0 0.0
    %4540 = vmatprep.subr.mxu0 0.0
    %4541 = vmatpush1.msra.mxu0 0.0
    %4542 = vmatprep.subr.mxu0 0.0
    %4543 = vmatpush1.msra.mxu0 0.0
    %4544 = vmatprep.subr.mxu0 0.0
    %4545 = vmatpush1.msra.mxu0 0.0
    %4546 = vmatprep.subr.mxu0 0.0
    %4547 = vmatpush1.msra.mxu0 0.0
    %4548 = vmatprep.subr.mxu0 0.0
    %4549 = vmatpush1.msra.mxu0 0.0
    %4550 = vmatprep.subr.mxu0 0.0
    %4551 = vmatpush1.msra.mxu0 0.0
    %4552 = vmatprep.subr.mxu0 0.0
    %4553 = vmatpush1.msra.mxu0 0.0
    %4554 = vmatprep.subr.mxu0 0.0
    %4555 = vmatpush1.msra.mxu0 0.0
    %4556 = vmatprep.subr.mxu0 0.0
    %4557 = vmatpush1.msra.mxu0 0.0
    %4558 = vmatprep.subr.mxu0 0.0
    %4559 = vmatpush1.msra.mxu0 0.0
    %4560 = vmatprep.subr.mxu0 0.0
    %4561 = vmatpush1.msra.mxu0 0.0
    %4562 = vmatprep.subr.mxu0 0.0
    %4563 = vmatpush1.msra.mxu0 0.0
    %4564 = vmatprep.subr.mxu0 0.0
    %4565 = vmatpush1.msra.mxu0 0.0
    %4566 = vmatprep.subr.mxu0 0.0
    %4567 = vmatpush1.msra.mxu0 0.0
    %4568 = vmatprep.subr.mxu0 0.0
    %4569 = vmatpush1.msra.mxu0 0.0
    %4570 = vmatprep.subr.mxu0 0.0
    %4571 = vmatpush1.msra.mxu0 0.0
    %4572 = vmatprep.subr.mxu0 0.0
    %4573 = vmatpush1.msra.mxu0 0.0
    %4574 = vmatprep.subr.mxu0 0.0
    %4575 = vmatpush1.msra.mxu0 0.0
    %4576 = vmatprep.subr.mxu0 0.0
    %4577 = vmatpush1.msra.mxu0 0.0
    %4578 = vmatprep.subr.mxu0 0.0
    %4579 = vmatpush1.msra.mxu0 0.0
    %4580 = vmatprep.subr.mxu0 0.0
    %4581 = vmatpush1.msra.mxu0 0.0
    %4582 = vmatprep.subr.mxu0 0.0
    %4583 = vmatpush1.msra.mxu0 0.0
    %4584 = vmatprep.subr.mxu0 0.0
    %4585 = vmatpush1.msra.mxu0 0.0
    %4586 = vmatprep.subr.mxu0 0.0
    %4587 = vmatpush1.msra.mxu0 0.0
    %4588 = vmatprep.subr.mxu0 0.0
    %4589 = vmatpush1.msra.mxu0 0.0
    %4590 = vmatprep.subr.mxu0 0.0
    %4591 = vmatpush1.msra.mxu0 0.0
    %4592 = vmatprep.subr.mxu0 0.0
    %4593 = vmatpush1.msra.mxu0 0.0
    %4594 = vmatprep.mubr.f32.mxu0 0.0
    %4595 = vmatmul.mubr.f32.gmra.mrb[0].mxu0 %v4528
    %v4596 = vpop.f32.mrb[0].mxu0
    %v4597 = vadd.f32 %v4490, %v4596
    %v4598 = vpop.f32.mrb[0].mxu0
    %4599 = vdwg.mxu0
    %4600 = vmatprep.subr.mxu0 0.0
    %4601 = vmatpush1.msra.mxu0 %v4442
    %4602 = vmatprep.subr.mxu0 0.0
    %4603 = vmatpush1.msra.mxu0 %v4443
    %4604 = vmatprep.subr.mxu0 0.0
    %4605 = vmatpush1.msra.mxu0 %v4444
    %4606 = vmatprep.subr.mxu0 0.0
    %4607 = vmatpush1.msra.mxu0 %v4445
    %4608 = vmatprep.subr.mxu0 0.0
    %4609 = vmatpush1.msra.mxu0 0.0
    %4610 = vmatprep.subr.mxu0 0.0
    %4611 = vmatpush1.msra.mxu0 0.0
    %4612 = vmatprep.subr.mxu0 0.0
    %4613 = vmatpush1.msra.mxu0 0.0
    %4614 = vmatprep.subr.mxu0 0.0
    %4615 = vmatpush1.msra.mxu0 0.0
    %4616 = vmatprep.subr.mxu0 0.0
    %4617 = vmatpush1.msra.mxu0 0.0
    %4618 = vmatprep.subr.mxu0 0.0
    %4619 = vmatpush1.msra.mxu0 0.0
    %4620 = vmatprep.subr.mxu0 0.0
    %4621 = vmatpush1.msra.mxu0 0.0
    %4622 = vmatprep.subr.mxu0 0.0
    %4623 = vmatpush1.msra.mxu0 0.0
    %4624 = vmatprep.subr.mxu0 0.0
    %4625 = vmatpush1.msra.mxu0 0.0
    %4626 = vmatprep.subr.mxu0 0.0
    %4627 = vmatpush1.msra.mxu0 0.0
    %4628 = vmatprep.subr.mxu0 0.0
    %4629 = vmatpush1.msra.mxu0 0.0
    %4630 = vmatprep.subr.mxu0 0.0
    %4631 = vmatpush1.msra.mxu0 0.0
    %4632 = vmatprep.subr.mxu0 0.0
    %4633 = vmatpush1.msra.mxu0 0.0
    %4634 = vmatprep.subr.mxu0 0.0
    %4635 = vmatpush1.msra.mxu0 0.0
    %4636 = vmatprep.subr.mxu0 0.0
    %4637 = vmatpush1.msra.mxu0 0.0
    %4638 = vmatprep.subr.mxu0 0.0
    %4639 = vmatpush1.msra.mxu0 0.0
    %4640 = vmatprep.subr.mxu0 0.0
    %4641 = vmatpush1.msra.mxu0 0.0
    %4642 = vmatprep.subr.mxu0 0.0
    %4643 = vmatpush1.msra.mxu0 0.0
    %4644 = vmatprep.subr.mxu0 0.0
    %4645 = vmatpush1.msra.mxu0 0.0
    %4646 = vmatprep.subr.mxu0 0.0
    %4647 = vmatpush1.msra.mxu0 0.0
    %4648 = vmatprep.subr.mxu0 0.0
    %4649 = vmatpush1.msra.mxu0 0.0
    %4650 = vmatprep.subr.mxu0 0.0
    %4651 = vmatpush1.msra.mxu0 0.0
    %4652 = vmatprep.subr.mxu0 0.0
    %4653 = vmatpush1.msra.mxu0 0.0
    %4654 = vmatprep.subr.mxu0 0.0
    %4655 = vmatpush1.msra.mxu0 0.0
    %4656 = vmatprep.subr.mxu0 0.0
    %4657 = vmatpush1.msra.mxu0 0.0
    %4658 = vmatprep.subr.mxu0 0.0
    %4659 = vmatpush1.msra.mxu0 0.0
    %4660 = vmatprep.subr.mxu0 0.0
    %4661 = vmatpush1.msra.mxu0 0.0
    %4662 = vmatprep.subr.mxu0 0.0
    %4663 = vmatpush1.msra.mxu0 0.0
    %4664 = vmatprep.mubr.f32.mxu0 0.0
    %4665 = vmatmul.mubr.f32.gmra.mrb[0].mxu0 %v4528
    %v4666 = vpop.f32.mrb[0].mxu0
    %v4667 = vadd.f32 %v4494, %v4666
    %v4668 = vpop.f32.mrb[0].mxu0
    %4669 = vdwg.mxu0
    %4670 = vmatprep.subr.mxu0 0.0
    %4671 = vmatpush1.msra.mxu0 %v4446
    %4672 = vmatprep.subr.mxu0 0.0
    %4673 = vmatpush1.msra.mxu0 %v4447
    %4674 = vmatprep.subr.mxu0 0.0
    %4675 = vmatpush1.msra.mxu0 %v4448
    %4676 = vmatprep.subr.mxu0 0.0
    %4677 = vmatpush1.msra.mxu0 %v4449
    %4678 = vmatprep.subr.mxu0 0.0
    %4679 = vmatpush1.msra.mxu0 0.0
    %4680 = vmatprep.subr.mxu0 0.0
    %4681 = vmatpush1.msra.mxu0 0.0
    %4682 = vmatprep.subr.mxu0 0.0
    %4683 = vmatpush1.msra.mxu0 0.0
    %4684 = vmatprep.subr.mxu0 0.0
    %4685 = vmatpush1.msra.mxu0 0.0
    %4686 = vmatprep.subr.mxu0 0.0
    %4687 = vmatpush1.msra.mxu0 0.0
    %4688 = vmatprep.subr.mxu0 0.0
    %4689 = vmatpush1.msra.mxu0 0.0
    %4690 = vmatprep.subr.mxu0 0.0
    %4691 = vmatpush1.msra.mxu0 0.0
    %4692 = vmatprep.subr.mxu0 0.0
    %4693 = vmatpush1.msra.mxu0 0.0
    %4694 = vmatprep.subr.mxu0 0.0
    %4695 = vmatpush1.msra.mxu0 0.0
    %4696 = vmatprep.subr.mxu0 0.0
    %4697 = vmatpush1.msra.mxu0 0.0
    %4698 = vmatprep.subr.mxu0 0.0
    %4699 = vmatpush1.msra.mxu0 0.0
    %4700 = vmatprep.subr.mxu0 0.0
    %4701 = vmatpush1.msra.mxu0 0.0
    %4702 = vmatprep.subr.mxu0 0.0
    %4703 = vmatpush1.msra.mxu0 0.0
    %4704 = vmatprep.subr.mxu0 0.0
    %4705 = vmatpush1.msra.mxu0 0.0
    %4706 = vmatprep.subr.mxu0 0.0
    %4707 = vmatpush1.msra.mxu0 0.0
    %4708 = vmatprep.subr.mxu0 0.0
    %4709 = vmatpush1.msra.mxu0 0.0
    %4710 = vmatprep.subr.mxu0 0.0
    %4711 = vmatpush1.msra.mxu0 0.0
    %4712 = vmatprep.subr.mxu0 0.0
    %4713 = vmatpush1.msra.mxu0 0.0
    %4714 = vmatprep.subr.mxu0 0.0
    %4715 = vmatpush1.msra.mxu0 0.0
    %4716 = vmatprep.subr.mxu0 0.0
    %4717 = vmatpush1.msra.mxu0 0.0
    %4718 = vmatprep.subr.mxu0 0.0
    %4719 = vmatpush1.msra.mxu0 0.0
    %4720 = vmatprep.subr.mxu0 0.0
    %4721 = vmatpush1.msra.mxu0 0.0
    %4722 = vmatprep.subr.mxu0 0.0
    %4723 = vmatpush1.msra.mxu0 0.0
    %4724 = vmatprep.subr.mxu0 0.0
    %4725 = vmatpush1.msra.mxu0 0.0
    %4726 = vmatprep.subr.mxu0 0.0
    %4727 = vmatpush1.msra.mxu0 0.0
    %4728 = vmatprep.subr.mxu0 0.0
    %4729 = vmatpush1.msra.mxu0 0.0
    %4730 = vmatprep.subr.mxu0 0.0
    %4731 = vmatpush1.msra.mxu0 0.0
    %4732 = vmatprep.subr.mxu0 0.0
    %4733 = vmatpush1.msra.mxu0 0.0
    %4734 = vmatprep.mubr.f32.mxu0 0.0
    %4735 = vmatmul.mubr.f32.gmra.mrb[0].mxu0 %v4528
    %v4736 = vpop.f32.mrb[0].mxu0
    %v4737 = vadd.f32 %v4498, %v4736
    %v4738 = vpop.f32.mrb[0].mxu0
    %4739 = vdwg.mxu0
    %4740 = vmatprep.subr.mxu0 0.0
    %4741 = vmatpush1.msra.mxu0 %v4450
    %4742 = vmatprep.subr.mxu0 0.0
    %4743 = vmatpush1.msra.mxu0 %v4451
    %4744 = vmatprep.subr.mxu0 0.0
    %4745 = vmatpush1.msra.mxu0 %v4452
    %4746 = vmatprep.subr.mxu0 0.0
    %4747 = vmatpush1.msra.mxu0 %v4453
    %4748 = vmatprep.subr.mxu0 0.0
    %4749 = vmatpush1.msra.mxu0 0.0
    %4750 = vmatprep.subr.mxu0 0.0
    %4751 = vmatpush1.msra.mxu0 0.0
    %4752 = vmatprep.subr.mxu0 0.0
    %4753 = vmatpush1.msra.mxu0 0.0
    %4754 = vmatprep.subr.mxu0 0.0
    %4755 = vmatpush1.msra.mxu0 0.0
    %4756 = vmatprep.subr.mxu0 0.0
    %4757 = vmatpush1.msra.mxu0 0.0
    %4758 = vmatprep.subr.mxu0 0.0
    %4759 = vmatpush1.msra.mxu0 0.0
    %4760 = vmatprep.subr.mxu0 0.0
    %4761 = vmatpush1.msra.mxu0 0.0
    %4762 = vmatprep.subr.mxu0 0.0
    %4763 = vmatpush1.msra.mxu0 0.0
    %4764 = vmatprep.subr.mxu0 0.0
    %4765 = vmatpush1.msra.mxu0 0.0
    %4766 = vmatprep.subr.mxu0 0.0
    %4767 = vmatpush1.msra.mxu0 0.0
    %4768 = vmatprep.subr.mxu0 0.0
    %4769 = vmatpush1.msra.mxu0 0.0
    %4770 = vmatprep.subr.mxu0 0.0
    %4771 = vmatpush1.msra.mxu0 0.0
    %4772 = vmatprep.subr.mxu0 0.0
    %4773 = vmatpush1.msra.mxu0 0.0
    %4774 = vmatprep.subr.mxu0 0.0
    %4775 = vmatpush1.msra.mxu0 0.0
    %4776 = vmatprep.subr.mxu0 0.0
    %4777 = vmatpush1.msra.mxu0 0.0
    %4778 = vmatprep.subr.mxu0 0.0
    %4779 = vmatpush1.msra.mxu0 0.0
    %4780 = vmatprep.subr.mxu0 0.0
    %4781 = vmatpush1.msra.mxu0 0.0
    %4782 = vmatprep.subr.mxu0 0.0
    %4783 = vmatpush1.msra.mxu0 0.0
    %4784 = vmatprep.subr.mxu0 0.0
    %4785 = vmatpush1.msra.mxu0 0.0
    %4786 = vmatprep.subr.mxu0 0.0
    %4787 = vmatpush1.msra.mxu0 0.0
    %4788 = vmatprep.subr.mxu0 0.0
    %4789 = vmatpush1.msra.mxu0 0.0
    %4790 = vmatprep.subr.mxu0 0.0
    %4791 = vmatpush1.msra.mxu0 0.0
    %4792 = vmatprep.subr.mxu0 0.0
    %4793 = vmatpush1.msra.mxu0 0.0
    %4794 = vmatprep.subr.mxu0 0.0
    %4795 = vmatpush1.msra.mxu0 0.0
    %4796 = vmatprep.subr.mxu0 0.0
    %4797 = vmatpush1.msra.mxu0 0.0
    %4798 = vmatprep.subr.mxu0 0.0
    %4799 = vmatpush1.msra.mxu0 0.0
    %4800 = vmatprep.subr.mxu0 0.0
    %4801 = vmatpush1.msra.mxu0 0.0
    %4802 = vmatprep.subr.mxu0 0.0
    %4803 = vmatpush1.msra.mxu0 0.0
    %4804 = vmatprep.mubr.f32.mxu0 0.0
    %4805 = vmatmul.mubr.f32.gmra.mrb[0].mxu0 %v4528
    %v4806 = vpop.f32.mrb[0].mxu0
    %v4807 = vadd.f32 %v4502, %v4806
    %v4808 = vpop.f32.mrb[0].mxu0
    %4809 = vdwg.mxu0
    %v4811 = vsel %vm320, %v4436, 0
    %4813 = vmatprep.subr.mxu0 0.0
    %4814 = vmatpush1.msra.mxu0 %v4454
    %4815 = vmatprep.subr.mxu0 0.0
    %4816 = vmatpush1.msra.mxu0 %v4455
    %4817 = vmatprep.subr.mxu0 0.0
    %4818 = vmatpush1.msra.mxu0 %v4456
    %4819 = vmatprep.subr.mxu0 0.0
    %4820 = vmatpush1.msra.mxu0 %v4457
    %4821 = vmatprep.subr.mxu0 0.0
    %4822 = vmatpush1.msra.mxu0 0.0
    %4823 = vmatprep.subr.mxu0 0.0
    %4824 = vmatpush1.msra.mxu0 0.0
    %4825 = vmatprep.subr.mxu0 0.0
    %4826 = vmatpush1.msra.mxu0 0.0
    %4827 = vmatprep.subr.mxu0 0.0
    %4828 = vmatpush1.msra.mxu0 0.0
    %4829 = vmatprep.subr.mxu0 0.0
    %4830 = vmatpush1.msra.mxu0 0.0
    %4831 = vmatprep.subr.mxu0 0.0
    %4832 = vmatpush1.msra.mxu0 0.0
    %4833 = vmatprep.subr.mxu0 0.0
    %4834 = vmatpush1.msra.mxu0 0.0
    %4835 = vmatprep.subr.mxu0 0.0
    %4836 = vmatpush1.msra.mxu0 0.0
    %4837 = vmatprep.subr.mxu0 0.0
    %4838 = vmatpush1.msra.mxu0 0.0
    %4839 = vmatprep.subr.mxu0 0.0
    %4840 = vmatpush1.msra.mxu0 0.0
    %4841 = vmatprep.subr.mxu0 0.0
    %4842 = vmatpush1.msra.mxu0 0.0
    %4843 = vmatprep.subr.mxu0 0.0
    %4844 = vmatpush1.msra.mxu0 0.0
    %4845 = vmatprep.subr.mxu0 0.0
    %4846 = vmatpush1.msra.mxu0 0.0
    %4847 = vmatprep.subr.mxu0 0.0
    %4848 = vmatpush1.msra.mxu0 0.0
    %4849 = vmatprep.subr.mxu0 0.0
    %4850 = vmatpush1.msra.mxu0 0.0
    %4851 = vmatprep.subr.mxu0 0.0
    %4852 = vmatpush1.msra.mxu0 0.0
    %4853 = vmatprep.subr.mxu0 0.0
    %4854 = vmatpush1.msra.mxu0 0.0
    %4855 = vmatprep.subr.mxu0 0.0
    %4856 = vmatpush1.msra.mxu0 0.0
    %4857 = vmatprep.subr.mxu0 0.0
    %4858 = vmatpush1.msra.mxu0 0.0
    %4859 = vmatprep.subr.mxu0 0.0
    %4860 = vmatpush1.msra.mxu0 0.0
    %4861 = vmatprep.subr.mxu0 0.0
    %4862 = vmatpush1.msra.mxu0 0.0
    %4863 = vmatprep.subr.mxu0 0.0
    %4864 = vmatpush1.msra.mxu0 0.0
    %4865 = vmatprep.subr.mxu0 0.0
    %4866 = vmatpush1.msra.mxu0 0.0
    %4867 = vmatprep.subr.mxu0 0.0
    %4868 = vmatpush1.msra.mxu0 0.0
    %4869 = vmatprep.subr.mxu0 0.0
    %4870 = vmatpush1.msra.mxu0 0.0
    %4871 = vmatprep.subr.mxu0 0.0
    %4872 = vmatpush1.msra.mxu0 0.0
    %4873 = vmatprep.subr.mxu0 0.0
    %4874 = vmatpush1.msra.mxu0 0.0
    %4875 = vmatprep.subr.mxu0 0.0
    %4876 = vmatpush1.msra.mxu0 0.0
    %4877 = vmatprep.mubr.f32.mxu0 0.0
    %4878 = vmatmul.mubr.f32.gmra.mrb[0].mxu0 %v4811
    %v4879 = vpop.f32.mrb[0].mxu0
    %v4880 = vadd.f32 %v4506, %v4879
    %v4881 = vpop.f32.mrb[0].mxu0
    %4882 = vdwg.mxu0
    %4883 = vmatprep.subr.mxu0 0.0
    %4884 = vmatpush1.msra.mxu0 %v4458
    %4885 = vmatprep.subr.mxu0 0.0
    %4886 = vmatpush1.msra.mxu0 %v4459
    %4887 = vmatprep.subr.mxu0 0.0
    %4888 = vmatpush1.msra.mxu0 %v4460
    %4889 = vmatprep.subr.mxu0 0.0
    %4890 = vmatpush1.msra.mxu0 %v4461
    %4891 = vmatprep.subr.mxu0 0.0
    %4892 = vmatpush1.msra.mxu0 0.0
    %4893 = vmatprep.subr.mxu0 0.0
    %4894 = vmatpush1.msra.mxu0 0.0
    %4895 = vmatprep.subr.mxu0 0.0
    %4896 = vmatpush1.msra.mxu0 0.0
    %4897 = vmatprep.subr.mxu0 0.0
    %4898 = vmatpush1.msra.mxu0 0.0
    %4899 = vmatprep.subr.mxu0 0.0
    %4900 = vmatpush1.msra.mxu0 0.0
    %4901 = vmatprep.subr.mxu0 0.0
    %4902 = vmatpush1.msra.mxu0 0.0
    %4903 = vmatprep.subr.mxu0 0.0
    %4904 = vmatpush1.msra.mxu0 0.0
    %4905 = vmatprep.subr.mxu0 0.0
    %4906 = vmatpush1.msra.mxu0 0.0
    %4907 = vmatprep.subr.mxu0 0.0
    %4908 = vmatpush1.msra.mxu0 0.0
    %4909 = vmatprep.subr.mxu0 0.0
    %4910 = vmatpush1.msra.mxu0 0.0
    %4911 = vmatprep.subr.mxu0 0.0
    %4912 = vmatpush1.msra.mxu0 0.0
    %4913 = vmatprep.subr.mxu0 0.0
    %4914 = vmatpush1.msra.mxu0 0.0
    %4915 = vmatprep.subr.mxu0 0.0
    %4916 = vmatpush1.msra.mxu0 0.0
    %4917 = vmatprep.subr.mxu0 0.0
    %4918 = vmatpush1.msra.mxu0 0.0
    %4919 = vmatprep.subr.mxu0 0.0
    %4920 = vmatpush1.msra.mxu0 0.0
    %4921 = vmatprep.subr.mxu0 0.0
    %4922 = vmatpush1.msra.mxu0 0.0
    %4923 = vmatprep.subr.mxu0 0.0
    %4924 = vmatpush1.msra.mxu0 0.0
    %4925 = vmatprep.subr.mxu0 0.0
    %4926 = vmatpush1.msra.mxu0 0.0
    %4927 = vmatprep.subr.mxu0 0.0
    %4928 = vmatpush1.msra.mxu0 0.0
    %4929 = vmatprep.subr.mxu0 0.0
    %4930 = vmatpush1.msra.mxu0 0.0
    %4931 = vmatprep.subr.mxu0 0.0
    %4932 = vmatpush1.msra.mxu0 0.0
    %4933 = vmatprep.subr.mxu0 0.0
    %4934 = vmatpush1.msra.mxu0 0.0
    %4935 = vmatprep.subr.mxu0 0.0
    %4936 = vmatpush1.msra.mxu0 0.0
    %4937 = vmatprep.subr.mxu0 0.0
    %4938 = vmatpush1.msra.mxu0 0.0
    %4939 = vmatprep.subr.mxu0 0.0
    %4940 = vmatpush1.msra.mxu0 0.0
    %4941 = vmatprep.subr.mxu0 0.0
    %4942 = vmatpush1.msra.mxu0 0.0
    %4943 = vmatprep.subr.mxu0 0.0
    %4944 = vmatpush1.msra.mxu0 0.0
    %4945 = vmatprep.subr.mxu0 0.0
    %4946 = vmatpush1.msra.mxu0 0.0
    %4947 = vmatprep.mubr.f32.mxu0 0.0
    %4948 = vmatmul.mubr.f32.gmra.mrb[0].mxu0 %v4811
    %v4949 = vpop.f32.mrb[0].mxu0
    %v4950 = vadd.f32 %v4510, %v4949
    %v4951 = vpop.f32.mrb[0].mxu0
    %4952 = vdwg.mxu0
    %4953 = vmatprep.subr.mxu0 0.0
    %4954 = vmatpush1.msra.mxu0 %v4462
    %4955 = vmatprep.subr.mxu0 0.0
    %4956 = vmatpush1.msra.mxu0 %v4463
    %4957 = vmatprep.subr.mxu0 0.0
    %4958 = vmatpush1.msra.mxu0 %v4464
    %4959 = vmatprep.subr.mxu0 0.0
    %4960 = vmatpush1.msra.mxu0 %v4465
    %4961 = vmatprep.subr.mxu0 0.0
    %4962 = vmatpush1.msra.mxu0 0.0
    %4963 = vmatprep.subr.mxu0 0.0
    %4964 = vmatpush1.msra.mxu0 0.0
    %4965 = vmatprep.subr.mxu0 0.0
    %4966 = vmatpush1.msra.mxu0 0.0
    %4967 = vmatprep.subr.mxu0 0.0
    %4968 = vmatpush1.msra.mxu0 0.0
    %4969 = vmatprep.subr.mxu0 0.0
    %4970 = vmatpush1.msra.mxu0 0.0
    %4971 = vmatprep.subr.mxu0 0.0
    %4972 = vmatpush1.msra.mxu0 0.0
    %4973 = vmatprep.subr.mxu0 0.0
    %4974 = vmatpush1.msra.mxu0 0.0
    %4975 = vmatprep.subr.mxu0 0.0
    %4976 = vmatpush1.msra.mxu0 0.0
    %4977 = vmatprep.subr.mxu0 0.0
    %4978 = vmatpush1.msra.mxu0 0.0
    %4979 = vmatprep.subr.mxu0 0.0
    %4980 = vmatpush1.msra.mxu0 0.0
    %4981 = vmatprep.subr.mxu0 0.0
    %4982 = vmatpush1.msra.mxu0 0.0
    %4983 = vmatprep.subr.mxu0 0.0
    %4984 = vmatpush1.msra.mxu0 0.0
    %4985 = vmatprep.subr.mxu0 0.0
    %4986 = vmatpush1.msra.mxu0 0.0
    %4987 = vmatprep.subr.mxu0 0.0
    %4988 = vmatpush1.msra.mxu0 0.0
    %4989 = vmatprep.subr.mxu0 0.0
    %4990 = vmatpush1.msra.mxu0 0.0
    %4991 = vmatprep.subr.mxu0 0.0
    %4992 = vmatpush1.msra.mxu0 0.0
    %4993 = vmatprep.subr.mxu0 0.0
    %4994 = vmatpush1.msra.mxu0 0.0
    %4995 = vmatprep.subr.mxu0 0.0
    %4996 = vmatpush1.msra.mxu0 0.0
    %4997 = vmatprep.subr.mxu0 0.0
    %4998 = vmatpush1.msra.mxu0 0.0
    %4999 = vmatprep.subr.mxu0 0.0
    %5000 = vmatpush1.msra.mxu0 0.0
    %5001 = vmatprep.subr.mxu0 0.0
    %5002 = vmatpush1.msra.mxu0 0.0
    %5003 = vmatprep.subr.mxu0 0.0
    %5004 = vmatpush1.msra.mxu0 0.0
    %5005 = vmatprep.subr.mxu0 0.0
    %5006 = vmatpush1.msra.mxu0 0.0
    %5007 = vmatprep.subr.mxu0 0.0
    %5008 = vmatpush1.msra.mxu0 0.0
    %5009 = vmatprep.subr.mxu0 0.0
    %5010 = vmatpush1.msra.mxu0 0.0
    %5011 = vmatprep.subr.mxu0 0.0
    %5012 = vmatpush1.msra.mxu0 0.0
    %5013 = vmatprep.subr.mxu0 0.0
    %5014 = vmatpush1.msra.mxu0 0.0
    %5015 = vmatprep.subr.mxu0 0.0
    %5016 = vmatpush1.msra.mxu0 0.0
    %5017 = vmatprep.mubr.f32.mxu0 0.0
    %5018 = vmatmul.mubr.f32.gmra.mrb[0].mxu0 %v4811
    %v5019 = vpop.f32.mrb[0].mxu0
    %v5020 = vadd.f32 %v4514, %v5019
    %v5021 = vpop.f32.mrb[0].mxu0
    %5022 = vdwg.mxu0
    %5023 = vmatprep.subr.mxu0 0.0
    %5024 = vmatpush1.msra.mxu0 %v4466
    %5025 = vmatprep.subr.mxu0 0.0
    %5026 = vmatpush1.msra.mxu0 %v4467
    %5027 = vmatprep.subr.mxu0 0.0
    %5028 = vmatpush1.msra.mxu0 %v4468
    %5029 = vmatprep.subr.mxu0 0.0
    %5030 = vmatpush1.msra.mxu0 %v4469
    %5031 = vmatprep.subr.mxu0 0.0
    %5032 = vmatpush1.msra.mxu0 0.0
    %5033 = vmatprep.subr.mxu0 0.0
    %5034 = vmatpush1.msra.mxu0 0.0
    %5035 = vmatprep.subr.mxu0 0.0
    %5036 = vmatpush1.msra.mxu0 0.0
    %5037 = vmatprep.subr.mxu0 0.0
    %5038 = vmatpush1.msra.mxu0 0.0
    %5039 = vmatprep.subr.mxu0 0.0
    %5040 = vmatpush1.msra.mxu0 0.0
    %5041 = vmatprep.subr.mxu0 0.0
    %5042 = vmatpush1.msra.mxu0 0.0
    %5043 = vmatprep.subr.mxu0 0.0
    %5044 = vmatpush1.msra.mxu0 0.0
    %5045 = vmatprep.subr.mxu0 0.0
    %5046 = vmatpush1.msra.mxu0 0.0
    %5047 = vmatprep.subr.mxu0 0.0
    %5048 = vmatpush1.msra.mxu0 0.0
    %5049 = vmatprep.subr.mxu0 0.0
    %5050 = vmatpush1.msra.mxu0 0.0
    %5051 = vmatprep.subr.mxu0 0.0
    %5052 = vmatpush1.msra.mxu0 0.0
    %5053 = vmatprep.subr.mxu0 0.0
    %5054 = vmatpush1.msra.mxu0 0.0
    %5055 = vmatprep.subr.mxu0 0.0
    %5056 = vmatpush1.msra.mxu0 0.0
    %5057 = vmatprep.subr.mxu0 0.0
    %5058 = vmatpush1.msra.mxu0 0.0
    %5059 = vmatprep.subr.mxu0 0.0
    %5060 = vmatpush1.msra.mxu0 0.0
    %5061 = vmatprep.subr.mxu0 0.0
    %5062 = vmatpush1.msra.mxu0 0.0
    %5063 = vmatprep.subr.mxu0 0.0
    %5064 = vmatpush1.msra.mxu0 0.0
    %5065 = vmatprep.subr.mxu0 0.0
    %5066 = vmatpush1.msra.mxu0 0.0
    %5067 = vmatprep.subr.mxu0 0.0
    %5068 = vmatpush1.msra.mxu0 0.0
    %5069 = vmatprep.subr.mxu0 0.0
    %5070 = vmatpush1.msra.mxu0 0.0
    %5071 = vmatprep.subr.mxu0 0.0
    %5072 = vmatpush1.msra.mxu0 0.0
    %5073 = vmatprep.subr.mxu0 0.0
    %5074 = vmatpush1.msra.mxu0 0.0
    %5075 = vmatprep.subr.mxu0 0.0
    %5076 = vmatpush1.msra.mxu0 0.0
    %5077 = vmatprep.subr.mxu0 0.0
    %5078 = vmatpush1.msra.mxu0 0.0
    %5079 = vmatprep.subr.mxu0 0.0
    %5080 = vmatpush1.msra.mxu0 0.0
    %5081 = vmatprep.subr.mxu0 0.0
    %5082 = vmatpush1.msra.mxu0 0.0
    %5083 = vmatprep.subr.mxu0 0.0
    %5084 = vmatpush1.msra.mxu0 0.0
    %5085 = vmatprep.subr.mxu0 0.0
    %5086 = vmatpush1.msra.mxu0 0.0
    %5087 = vmatprep.mubr.f32.mxu0 0.0
    %5088 = vmatmul.mubr.f32.gmra.mrb[0].mxu0 %v4811
    %v5089 = vpop.f32.mrb[0].mxu0
    %v5090 = vadd.f32 %v4518, %v5089
    %v5091 = vpop.f32.mrb[0].mxu0
    %5092 = vdwg.mxu0
    %s5093 = scalar_lea.vmem %s10, 256
    %v5094 = vld [vmem:[%s5093] sm:$0xff]
    %v5095 = vld [vmem:[%s5093 + $0x8] sm:$0xff]
    %v5096 = vld [vmem:[%s5093 + $0x10] sm:$0xff]
    %v5097 = vld [vmem:[%s5093 + $0x18] sm:$0xff]
    %v5098 = vld [vmem:[%s5093 + $0x20] sm:$0xff]
    %v5099 = vld [vmem:[%s5093 + $0x28] sm:$0xff]
    %v5100 = vld [vmem:[%s5093 + $0x30] sm:$0xff]
    %v5101 = vld [vmem:[%s5093 + $0x38] sm:$0xff]
    %v5102 = vld [vmem:[%s5093 + $0x40] sm:$0xff]
    %v5103 = vld [vmem:[%s5093 + $0x48] sm:$0xff]
    %v5104 = vld [vmem:[%s5093 + $0x50] sm:$0xff]
    %v5105 = vld [vmem:[%s5093 + $0x58] sm:$0xff]
    %v5106 = vld [vmem:[%s5093 + $0x60] sm:$0xff]
    %v5107 = vld [vmem:[%s5093 + $0x68] sm:$0xff]
    %v5108 = vld [vmem:[%s5093 + $0x70] sm:$0xff]
    %v5109 = vld [vmem:[%s5093 + $0x78] sm:$0xff]
    %v5110 = vld [vmem:[%s5093 + $0x80] sm:$0xff]
    %v5111 = vld [vmem:[%s5093 + $0x88] sm:$0xff]
    %v5112 = vld [vmem:[%s5093 + $0x90] sm:$0xff]
    %v5113 = vld [vmem:[%s5093 + $0x98] sm:$0xff]
    %v5114 = vld [vmem:[%s5093 + $0xa0] sm:$0xff]
    %v5115 = vld [vmem:[%s5093 + $0xa8] sm:$0xff]
    %v5116 = vld [vmem:[%s5093 + $0xb0] sm:$0xff]
    %v5117 = vld [vmem:[%s5093 + $0xb8] sm:$0xff]
    %v5118 = vld [vmem:[%s5093 + $0xc0] sm:$0xff]
    %v5119 = vld [vmem:[%s5093 + $0xc8] sm:$0xff]
    %v5120 = vld [vmem:[%s5093 + $0xd0] sm:$0xff]
    %v5121 = vld [vmem:[%s5093 + $0xd8] sm:$0xff]
    %v5122 = vld [vmem:[%s5093 + $0xe0] sm:$0xff]
    %v5123 = vld [vmem:[%s5093 + $0xe8] sm:$0xff]
    %v5124 = vld [vmem:[%s5093 + $0xf0] sm:$0xff]
    %v5125 = vld [vmem:[%s5093 + $0xf8] sm:$0xff]
    %s5126 = scalar_lea.vmem %s11, 8
    %v5127 = vld [vmem:[%s5126] sm:$0x1]
    %v5128 = vld [vmem:[%s5126 + $0x1] sm:$0x1]
    %v5129 = vld [vmem:[%s5126 + $0x2] sm:$0x1]
    %v5130 = vld [vmem:[%s5126 + $0x3] sm:$0x1]
    %v5131 = vld [vmem:[%s5126 + $0x4] sm:$0x1]
    %v5132 = vld [vmem:[%s5126 + $0x5] sm:$0x1]
    %v5133 = vld [vmem:[%s5126 + $0x6] sm:$0x1]
    %v5134 = vld [vmem:[%s5126 + $0x7] sm:$0x1]
    %v5143 = vlaneseq
    %v5144 = vshrl.u32 %v5143, 7
    %v5145 = vsub.s32 0, %v5144
    %v5146 = vrot.slane %v5127, %v5145
    %v5147 = vlaneseq
    %v5148 = vshrl.u32 %v5147, 7
    %v5149 = vsub.s32 0, %v5148
    %v5150 = vrot.slane %v5128, %v5149
    %v5151 = vlaneseq
    %v5152 = vshrl.u32 %v5151, 7
    %v5153 = vsub.s32 0, %v5152
    %v5154 = vrot.slane %v5129, %v5153
    %v5155 = vlaneseq
    %v5156 = vshrl.u32 %v5155, 7
    %v5157 = vsub.s32 0, %v5156
    %v5158 = vrot.slane %v5130, %v5157
    %v5159 = vlaneseq
    %v5160 = vshrl.u32 %v5159, 7
    %v5161 = vsub.s32 0, %v5160
    %v5162 = vrot.slane %v5131, %v5161
    %v5163 = vlaneseq
    %v5164 = vshrl.u32 %v5163, 7
    %v5165 = vsub.s32 0, %v5164
    %v5166 = vrot.slane %v5132, %v5165
    %v5167 = vlaneseq
    %v5168 = vshrl.u32 %v5167, 7
    %v5169 = vsub.s32 0, %v5168
    %v5170 = vrot.slane %v5133, %v5169
    %v5171 = vlaneseq
    %v5172 = vshrl.u32 %v5171, 7
    %v5173 = vsub.s32 0, %v5172
    %v5174 = vrot.slane %v5134, %v5173
    %5183 = vmatprep.subr.mxu0 0.0
    %5184 = vmatpush1.msra.mxu0 %v5094
    %5185 = vmatprep.subr.mxu0 0.0
    %5186 = vmatpush1.msra.mxu0 %v5095
    %5187 = vmatprep.subr.mxu0 0.0
    %5188 = vmatpush1.msra.mxu0 %v5096
    %5189 = vmatprep.subr.mxu0 0.0
    %5190 = vmatpush1.msra.mxu0 %v5097
    %5191 = vmatprep.subr.mxu0 0.0
    %5192 = vmatpush1.msra.mxu0 0.0
    %5193 = vmatprep.subr.mxu0 0.0
    %5194 = vmatpush1.msra.mxu0 0.0
    %5195 = vmatprep.subr.mxu0 0.0
    %5196 = vmatpush1.msra.mxu0 0.0
    %5197 = vmatprep.subr.mxu0 0.0
    %5198 = vmatpush1.msra.mxu0 0.0
    %5199 = vmatprep.subr.mxu0 0.0
    %5200 = vmatpush1.msra.mxu0 0.0
    %5201 = vmatprep.subr.mxu0 0.0
    %5202 = vmatpush1.msra.mxu0 0.0
    %5203 = vmatprep.subr.mxu0 0.0
    %5204 = vmatpush1.msra.mxu0 0.0
    %5205 = vmatprep.subr.mxu0 0.0
    %5206 = vmatpush1.msra.mxu0 0.0
    %5207 = vmatprep.subr.mxu0 0.0
    %5208 = vmatpush1.msra.mxu0 0.0
    %5209 = vmatprep.subr.mxu0 0.0
    %5210 = vmatpush1.msra.mxu0 0.0
    %5211 = vmatprep.subr.mxu0 0.0
    %5212 = vmatpush1.msra.mxu0 0.0
    %5213 = vmatprep.subr.mxu0 0.0
    %5214 = vmatpush1.msra.mxu0 0.0
    %5215 = vmatprep.subr.mxu0 0.0
    %5216 = vmatpush1.msra.mxu0 0.0
    %5217 = vmatprep.subr.mxu0 0.0
    %5218 = vmatpush1.msra.mxu0 0.0
    %5219 = vmatprep.subr.mxu0 0.0
    %5220 = vmatpush1.msra.mxu0 0.0
    %5221 = vmatprep.subr.mxu0 0.0
    %5222 = vmatpush1.msra.mxu0 0.0
    %5223 = vmatprep.subr.mxu0 0.0
    %5224 = vmatpush1.msra.mxu0 0.0
    %5225 = vmatprep.subr.mxu0 0.0
    %5226 = vmatpush1.msra.mxu0 0.0
    %5227 = vmatprep.subr.mxu0 0.0
    %5228 = vmatpush1.msra.mxu0 0.0
    %5229 = vmatprep.subr.mxu0 0.0
    %5230 = vmatpush1.msra.mxu0 0.0
    %5231 = vmatprep.subr.mxu0 0.0
    %5232 = vmatpush1.msra.mxu0 0.0
    %5233 = vmatprep.subr.mxu0 0.0
    %5234 = vmatpush1.msra.mxu0 0.0
    %5235 = vmatprep.subr.mxu0 0.0
    %5236 = vmatpush1.msra.mxu0 0.0
    %5237 = vmatprep.subr.mxu0 0.0
    %5238 = vmatpush1.msra.mxu0 0.0
    %5239 = vmatprep.subr.mxu0 0.0
    %5240 = vmatpush1.msra.mxu0 0.0
    %5241 = vmatprep.subr.mxu0 0.0
    %5242 = vmatpush1.msra.mxu0 0.0
    %5243 = vmatprep.subr.mxu0 0.0
    %5244 = vmatpush1.msra.mxu0 0.0
    %5245 = vmatprep.subr.mxu0 0.0
    %5246 = vmatpush1.msra.mxu0 0.0
    %5247 = vmatprep.mubr.f32.mxu0 0.0
    %5248 = vmatmul.mubr.f32.gmra.mrb[0].mxu0 %v4528
    %v5249 = vpop.f32.mrb[0].mxu0
    %v5250 = vadd.f32 %v5146, %v5249
    %v5251 = vpop.f32.mrb[0].mxu0
    %5252 = vdwg.mxu0
    %5253 = vmatprep.subr.mxu0 0.0
    %5254 = vmatpush1.msra.mxu0 %v5098
    %5255 = vmatprep.subr.mxu0 0.0
    %5256 = vmatpush1.msra.mxu0 %v5099
    %5257 = vmatprep.subr.mxu0 0.0
    %5258 = vmatpush1.msra.mxu0 %v5100
    %5259 = vmatprep.subr.mxu0 0.0
    %5260 = vmatpush1.msra.mxu0 %v5101
    %5261 = vmatprep.subr.mxu0 0.0
    %5262 = vmatpush1.msra.mxu0 0.0
    %5263 = vmatprep.subr.mxu0 0.0
    %5264 = vmatpush1.msra.mxu0 0.0
    %5265 = vmatprep.subr.mxu0 0.0
    %5266 = vmatpush1.msra.mxu0 0.0
    %5267 = vmatprep.subr.mxu0 0.0
    %5268 = vmatpush1.msra.mxu0 0.0
    %5269 = vmatprep.subr.mxu0 0.0
    %5270 = vmatpush1.msra.mxu0 0.0
    %5271 = vmatprep.subr.mxu0 0.0
    %5272 = vmatpush1.msra.mxu0 0.0
    %5273 = vmatprep.subr.mxu0 0.0
    %5274 = vmatpush1.msra.mxu0 0.0
    %5275 = vmatprep.subr.mxu0 0.0
    %5276 = vmatpush1.msra.mxu0 0.0
    %5277 = vmatprep.subr.mxu0 0.0
    %5278 = vmatpush1.msra.mxu0 0.0
    %5279 = vmatprep.subr.mxu0 0.0
    %5280 = vmatpush1.msra.mxu0 0.0
    %5281 = vmatprep.subr.mxu0 0.0
    %5282 = vmatpush1.msra.mxu0 0.0
    %5283 = vmatprep.subr.mxu0 0.0
    %5284 = vmatpush1.msra.mxu0 0.0
    %5285 = vmatprep.subr.mxu0 0.0
    %5286 = vmatpush1.msra.mxu0 0.0
    %5287 = vmatprep.subr.mxu0 0.0
    %5288 = vmatpush1.msra.mxu0 0.0
    %5289 = vmatprep.subr.mxu0 0.0
    %5290 = vmatpush1.msra.mxu0 0.0
    %5291 = vmatprep.subr.mxu0 0.0
    %5292 = vmatpush1.msra.mxu0 0.0
    %5293 = vmatprep.subr.mxu0 0.0
    %5294 = vmatpush1.msra.mxu0 0.0
    %5295 = vmatprep.subr.mxu0 0.0
    %5296 = vmatpush1.msra.mxu0 0.0
    %5297 = vmatprep.subr.mxu0 0.0
    %5298 = vmatpush1.msra.mxu0 0.0
    %5299 = vmatprep.subr.mxu0 0.0
    %5300 = vmatpush1.msra.mxu0 0.0
    %5301 = vmatprep.subr.mxu0 0.0
    %5302 = vmatpush1.msra.mxu0 0.0
    %5303 = vmatprep.subr.mxu0 0.0
    %5304 = vmatpush1.msra.mxu0 0.0
    %5305 = vmatprep.subr.mxu0 0.0
    %5306 = vmatpush1.msra.mxu0 0.0
    %5307 = vmatprep.subr.mxu0 0.0
    %5308 = vmatpush1.msra.mxu0 0.0
    %5309 = vmatprep.subr.mxu0 0.0
    %5310 = vmatpush1.msra.mxu0 0.0
    %5311 = vmatprep.subr.mxu0 0.0
    %5312 = vmatpush1.msra.mxu0 0.0
    %5313 = vmatprep.subr.mxu0 0.0
    %5314 = vmatpush1.msra.mxu0 0.0
    %5315 = vmatprep.subr.mxu0 0.0
    %5316 = vmatpush1.msra.mxu0 0.0
    %5317 = vmatprep.mubr.f32.mxu0 0.0
    %5318 = vmatmul.mubr.f32.gmra.mrb[0].mxu0 %v4528
    %v5319 = vpop.f32.mrb[0].mxu0
    %v5320 = vadd.f32 %v5150, %v5319
    %v5321 = vpop.f32.mrb[0].mxu0
    %5322 = vdwg.mxu0
    %5323 = vmatprep.subr.mxu0 0.0
    %5324 = vmatpush1.msra.mxu0 %v5102
    %5325 = vmatprep.subr.mxu0 0.0
    %5326 = vmatpush1.msra.mxu0 %v5103
    %5327 = vmatprep.subr.mxu0 0.0
    %5328 = vmatpush1.msra.mxu0 %v5104
    %5329 = vmatprep.subr.mxu0 0.0
    %5330 = vmatpush1.msra.mxu0 %v5105
    %5331 = vmatprep.subr.mxu0 0.0
    %5332 = vmatpush1.msra.mxu0 0.0
    %5333 = vmatprep.subr.mxu0 0.0
    %5334 = vmatpush1.msra.mxu0 0.0
    %5335 = vmatprep.subr.mxu0 0.0
    %5336 = vmatpush1.msra.mxu0 0.0
    %5337 = vmatprep.subr.mxu0 0.0
    %5338 = vmatpush1.msra.mxu0 0.0
    %5339 = vmatprep.subr.mxu0 0.0
    %5340 = vmatpush1.msra.mxu0 0.0
    %5341 = vmatprep.subr.mxu0 0.0
    %5342 = vmatpush1.msra.mxu0 0.0
    %5343 = vmatprep.subr.mxu0 0.0
    %5344 = vmatpush1.msra.mxu0 0.0
    %5345 = vmatprep.subr.mxu0 0.0
    %5346 = vmatpush1.msra.mxu0 0.0
    %5347 = vmatprep.subr.mxu0 0.0
    %5348 = vmatpush1.msra.mxu0 0.0
    %5349 = vmatprep.subr.mxu0 0.0
    %5350 = vmatpush1.msra.mxu0 0.0
    %5351 = vmatprep.subr.mxu0 0.0
    %5352 = vmatpush1.msra.mxu0 0.0
    %5353 = vmatprep.subr.mxu0 0.0
    %5354 = vmatpush1.msra.mxu0 0.0
    %5355 = vmatprep.subr.mxu0 0.0
    %5356 = vmatpush1.msra.mxu0 0.0
    %5357 = vmatprep.subr.mxu0 0.0
    %5358 = vmatpush1.msra.mxu0 0.0
    %5359 = vmatprep.subr.mxu0 0.0
    %5360 = vmatpush1.msra.mxu0 0.0
    %5361 = vmatprep.subr.mxu0 0.0
    %5362 = vmatpush1.msra.mxu0 0.0
    %5363 = vmatprep.subr.mxu0 0.0
    %5364 = vmatpush1.msra.mxu0 0.0
    %5365 = vmatprep.subr.mxu0 0.0
    %5366 = vmatpush1.msra.mxu0 0.0
    %5367 = vmatprep.subr.mxu0 0.0
    %5368 = vmatpush1.msra.mxu0 0.0
    %5369 = vmatprep.subr.mxu0 0.0
    %5370 = vmatpush1.msra.mxu0 0.0
    %5371 = vmatprep.subr.mxu0 0.0
    %5372 = vmatpush1.msra.mxu0 0.0
    %5373 = vmatprep.subr.mxu0 0.0
    %5374 = vmatpush1.msra.mxu0 0.0
    %5375 = vmatprep.subr.mxu0 0.0
    %5376 = vmatpush1.msra.mxu0 0.0
    %5377 = vmatprep.subr.mxu0 0.0
    %5378 = vmatpush1.msra.mxu0 0.0
    %5379 = vmatprep.subr.mxu0 0.0
    %5380 = vmatpush1.msra.mxu0 0.0
    %5381 = vmatprep.subr.mxu0 0.0
    %5382 = vmatpush1.msra.mxu0 0.0
    %5383 = vmatprep.subr.mxu0 0.0
    %5384 = vmatpush1.msra.mxu0 0.0
    %5385 = vmatprep.subr.mxu0 0.0
    %5386 = vmatpush1.msra.mxu0 0.0
    %5387 = vmatprep.mubr.f32.mxu0 0.0
    %5388 = vmatmul.mubr.f32.gmra.mrb[0].mxu0 %v4528
    %v5389 = vpop.f32.mrb[0].mxu0
    %v5390 = vadd.f32 %v5154, %v5389
    %v5391 = vpop.f32.mrb[0].mxu0
    %5392 = vdwg.mxu0
    %5393 = vmatprep.subr.mxu0 0.0
    %5394 = vmatpush1.msra.mxu0 %v5106
    %5395 = vmatprep.subr.mxu0 0.0
    %5396 = vmatpush1.msra.mxu0 %v5107
    %5397 = vmatprep.subr.mxu0 0.0
    %5398 = vmatpush1.msra.mxu0 %v5108
    %5399 = vmatprep.subr.mxu0 0.0
    %5400 = vmatpush1.msra.mxu0 %v5109
    %5401 = vmatprep.subr.mxu0 0.0
    %5402 = vmatpush1.msra.mxu0 0.0
    %5403 = vmatprep.subr.mxu0 0.0
    %5404 = vmatpush1.msra.mxu0 0.0
    %5405 = vmatprep.subr.mxu0 0.0
    %5406 = vmatpush1.msra.mxu0 0.0
    %5407 = vmatprep.subr.mxu0 0.0
    %5408 = vmatpush1.msra.mxu0 0.0
    %5409 = vmatprep.subr.mxu0 0.0
    %5410 = vmatpush1.msra.mxu0 0.0
    %5411 = vmatprep.subr.mxu0 0.0
    %5412 = vmatpush1.msra.mxu0 0.0
    %5413 = vmatprep.subr.mxu0 0.0
    %5414 = vmatpush1.msra.mxu0 0.0
    %5415 = vmatprep.subr.mxu0 0.0
    %5416 = vmatpush1.msra.mxu0 0.0
    %5417 = vmatprep.subr.mxu0 0.0
    %5418 = vmatpush1.msra.mxu0 0.0
    %5419 = vmatprep.subr.mxu0 0.0
    %5420 = vmatpush1.msra.mxu0 0.0
    %5421 = vmatprep.subr.mxu0 0.0
    %5422 = vmatpush1.msra.mxu0 0.0
    %5423 = vmatprep.subr.mxu0 0.0
    %5424 = vmatpush1.msra.mxu0 0.0
    %5425 = vmatprep.subr.mxu0 0.0
    %5426 = vmatpush1.msra.mxu0 0.0
    %5427 = vmatprep.subr.mxu0 0.0
    %5428 = vmatpush1.msra.mxu0 0.0
    %5429 = vmatprep.subr.mxu0 0.0
    %5430 = vmatpush1.msra.mxu0 0.0
    %5431 = vmatprep.subr.mxu0 0.0
    %5432 = vmatpush1.msra.mxu0 0.0
    %5433 = vmatprep.subr.mxu0 0.0
    %5434 = vmatpush1.msra.mxu0 0.0
    %5435 = vmatprep.subr.mxu0 0.0
    %5436 = vmatpush1.msra.mxu0 0.0
    %5437 = vmatprep.subr.mxu0 0.0
    %5438 = vmatpush1.msra.mxu0 0.0
    %5439 = vmatprep.subr.mxu0 0.0
    %5440 = vmatpush1.msra.mxu0 0.0
    %5441 = vmatprep.subr.mxu0 0.0
    %5442 = vmatpush1.msra.mxu0 0.0
    %5443 = vmatprep.subr.mxu0 0.0
    %5444 = vmatpush1.msra.mxu0 0.0
    %5445 = vmatprep.subr.mxu0 0.0
    %5446 = vmatpush1.msra.mxu0 0.0
    %5447 = vmatprep.subr.mxu0 0.0
    %5448 = vmatpush1.msra.mxu0 0.0
    %5449 = vmatprep.subr.mxu0 0.0
    %5450 = vmatpush1.msra.mxu0 0.0
    %5451 = vmatprep.subr.mxu0 0.0
    %5452 = vmatpush1.msra.mxu0 0.0
    %5453 = vmatprep.subr.mxu0 0.0
    %5454 = vmatpush1.msra.mxu0 0.0
    %5455 = vmatprep.subr.mxu0 0.0
    %5456 = vmatpush1.msra.mxu0 0.0
    %5457 = vmatprep.mubr.f32.mxu0 0.0
    %5458 = vmatmul.mubr.f32.gmra.mrb[0].mxu0 %v4528
    %v5459 = vpop.f32.mrb[0].mxu0
    %v5460 = vadd.f32 %v5158, %v5459
    %v5461 = vpop.f32.mrb[0].mxu0
    %5462 = vdwg.mxu0
    %5463 = vmatprep.subr.mxu0 0.0
    %5464 = vmatpush1.msra.mxu0 %v5110
    %5465 = vmatprep.subr.mxu0 0.0
    %5466 = vmatpush1.msra.mxu0 %v5111
    %5467 = vmatprep.subr.mxu0 0.0
    %5468 = vmatpush1.msra.mxu0 %v5112
    %5469 = vmatprep.subr.mxu0 0.0
    %5470 = vmatpush1.msra.mxu0 %v5113
    %5471 = vmatprep.subr.mxu0 0.0
    %5472 = vmatpush1.msra.mxu0 0.0
    %5473 = vmatprep.subr.mxu0 0.0
    %5474 = vmatpush1.msra.mxu0 0.0
    %5475 = vmatprep.subr.mxu0 0.0
    %5476 = vmatpush1.msra.mxu0 0.0
    %5477 = vmatprep.subr.mxu0 0.0
    %5478 = vmatpush1.msra.mxu0 0.0
    %5479 = vmatprep.subr.mxu0 0.0
    %5480 = vmatpush1.msra.mxu0 0.0
    %5481 = vmatprep.subr.mxu0 0.0
    %5482 = vmatpush1.msra.mxu0 0.0
    %5483 = vmatprep.subr.mxu0 0.0
    %5484 = vmatpush1.msra.mxu0 0.0
    %5485 = vmatprep.subr.mxu0 0.0
    %5486 = vmatpush1.msra.mxu0 0.0
    %5487 = vmatprep.subr.mxu0 0.0
    %5488 = vmatpush1.msra.mxu0 0.0
    %5489 = vmatprep.subr.mxu0 0.0
    %5490 = vmatpush1.msra.mxu0 0.0
    %5491 = vmatprep.subr.mxu0 0.0
    %5492 = vmatpush1.msra.mxu0 0.0
    %5493 = vmatprep.subr.mxu0 0.0
    %5494 = vmatpush1.msra.mxu0 0.0
    %5495 = vmatprep.subr.mxu0 0.0
    %5496 = vmatpush1.msra.mxu0 0.0
    %5497 = vmatprep.subr.mxu0 0.0
    %5498 = vmatpush1.msra.mxu0 0.0
    %5499 = vmatprep.subr.mxu0 0.0
    %5500 = vmatpush1.msra.mxu0 0.0
    %5501 = vmatprep.subr.mxu0 0.0
    %5502 = vmatpush1.msra.mxu0 0.0
    %5503 = vmatprep.subr.mxu0 0.0
    %5504 = vmatpush1.msra.mxu0 0.0
    %5505 = vmatprep.subr.mxu0 0.0
    %5506 = vmatpush1.msra.mxu0 0.0
    %5507 = vmatprep.subr.mxu0 0.0
    %5508 = vmatpush1.msra.mxu0 0.0
    %5509 = vmatprep.subr.mxu0 0.0
    %5510 = vmatpush1.msra.mxu0 0.0
    %5511 = vmatprep.subr.mxu0 0.0
    %5512 = vmatpush1.msra.mxu0 0.0
    %5513 = vmatprep.subr.mxu0 0.0
    %5514 = vmatpush1.msra.mxu0 0.0
    %5515 = vmatprep.subr.mxu0 0.0
    %5516 = vmatpush1.msra.mxu0 0.0
    %5517 = vmatprep.subr.mxu0 0.0
    %5518 = vmatpush1.msra.mxu0 0.0
    %5519 = vmatprep.subr.mxu0 0.0
    %5520 = vmatpush1.msra.mxu0 0.0
    %5521 = vmatprep.subr.mxu0 0.0
    %5522 = vmatpush1.msra.mxu0 0.0
    %5523 = vmatprep.subr.mxu0 0.0
    %5524 = vmatpush1.msra.mxu0 0.0
    %5525 = vmatprep.subr.mxu0 0.0
    %5526 = vmatpush1.msra.mxu0 0.0
    %5527 = vmatprep.mubr.f32.mxu0 0.0
    %5528 = vmatmul.mubr.f32.gmra.mrb[0].mxu0 %v4811
    %v5529 = vpop.f32.mrb[0].mxu0
    %v5530 = vadd.f32 %v5162, %v5529
    %v5531 = vpop.f32.mrb[0].mxu0
    %5532 = vdwg.mxu0
    %5533 = vmatprep.subr.mxu0 0.0
    %5534 = vmatpush1.msra.mxu0 %v5114
    %5535 = vmatprep.subr.mxu0 0.0
    %5536 = vmatpush1.msra.mxu0 %v5115
    %5537 = vmatprep.subr.mxu0 0.0
    %5538 = vmatpush1.msra.mxu0 %v5116
    %5539 = vmatprep.subr.mxu0 0.0
    %5540 = vmatpush1.msra.mxu0 %v5117
    %5541 = vmatprep.subr.mxu0 0.0
    %5542 = vmatpush1.msra.mxu0 0.0
    %5543 = vmatprep.subr.mxu0 0.0
    %5544 = vmatpush1.msra.mxu0 0.0
    %5545 = vmatprep.subr.mxu0 0.0
    %5546 = vmatpush1.msra.mxu0 0.0
    %5547 = vmatprep.subr.mxu0 0.0
    %5548 = vmatpush1.msra.mxu0 0.0
    %5549 = vmatprep.subr.mxu0 0.0
    %5550 = vmatpush1.msra.mxu0 0.0
    %5551 = vmatprep.subr.mxu0 0.0
    %5552 = vmatpush1.msra.mxu0 0.0
    %5553 = vmatprep.subr.mxu0 0.0
    %5554 = vmatpush1.msra.mxu0 0.0
    %5555 = vmatprep.subr.mxu0 0.0
    %5556 = vmatpush1.msra.mxu0 0.0
    %5557 = vmatprep.subr.mxu0 0.0
    %5558 = vmatpush1.msra.mxu0 0.0
    %5559 = vmatprep.subr.mxu0 0.0
    %5560 = vmatpush1.msra.mxu0 0.0
    %5561 = vmatprep.subr.mxu0 0.0
    %5562 = vmatpush1.msra.mxu0 0.0
    %5563 = vmatprep.subr.mxu0 0.0
    %5564 = vmatpush1.msra.mxu0 0.0
    %5565 = vmatprep.subr.mxu0 0.0
    %5566 = vmatpush1.msra.mxu0 0.0
    %5567 = vmatprep.subr.mxu0 0.0
    %5568 = vmatpush1.msra.mxu0 0.0
    %5569 = vmatprep.subr.mxu0 0.0
    %5570 = vmatpush1.msra.mxu0 0.0
    %5571 = vmatprep.subr.mxu0 0.0
    %5572 = vmatpush1.msra.mxu0 0.0
    %5573 = vmatprep.subr.mxu0 0.0
    %5574 = vmatpush1.msra.mxu0 0.0
    %5575 = vmatprep.subr.mxu0 0.0
    %5576 = vmatpush1.msra.mxu0 0.0
    %5577 = vmatprep.subr.mxu0 0.0
    %5578 = vmatpush1.msra.mxu0 0.0
    %5579 = vmatprep.subr.mxu0 0.0
    %5580 = vmatpush1.msra.mxu0 0.0
    %5581 = vmatprep.subr.mxu0 0.0
    %5582 = vmatpush1.msra.mxu0 0.0
    %5583 = vmatprep.subr.mxu0 0.0
    %5584 = vmatpush1.msra.mxu0 0.0
    %5585 = vmatprep.subr.mxu0 0.0
    %5586 = vmatpush1.msra.mxu0 0.0
    %5587 = vmatprep.subr.mxu0 0.0
    %5588 = vmatpush1.msra.mxu0 0.0
    %5589 = vmatprep.subr.mxu0 0.0
    %5590 = vmatpush1.msra.mxu0 0.0
    %5591 = vmatprep.subr.mxu0 0.0
    %5592 = vmatpush1.msra.mxu0 0.0
    %5593 = vmatprep.subr.mxu0 0.0
    %5594 = vmatpush1.msra.mxu0 0.0
    %5595 = vmatprep.subr.mxu0 0.0
    %5596 = vmatpush1.msra.mxu0 0.0
    %5597 = vmatprep.mubr.f32.mxu0 0.0
    %5598 = vmatmul.mubr.f32.gmra.mrb[0].mxu0 %v4811
    %v5599 = vpop.f32.mrb[0].mxu0
    %v5600 = vadd.f32 %v5166, %v5599
    %v5601 = vpop.f32.mrb[0].mxu0
    %5602 = vdwg.mxu0
    %5603 = vmatprep.subr.mxu0 0.0
    %5604 = vmatpush1.msra.mxu0 %v5118
    %5605 = vmatprep.subr.mxu0 0.0
    %5606 = vmatpush1.msra.mxu0 %v5119
    %5607 = vmatprep.subr.mxu0 0.0
    %5608 = vmatpush1.msra.mxu0 %v5120
    %5609 = vmatprep.subr.mxu0 0.0
    %5610 = vmatpush1.msra.mxu0 %v5121
    %5611 = vmatprep.subr.mxu0 0.0
    %5612 = vmatpush1.msra.mxu0 0.0
    %5613 = vmatprep.subr.mxu0 0.0
    %5614 = vmatpush1.msra.mxu0 0.0
    %5615 = vmatprep.subr.mxu0 0.0
    %5616 = vmatpush1.msra.mxu0 0.0
    %5617 = vmatprep.subr.mxu0 0.0
    %5618 = vmatpush1.msra.mxu0 0.0
    %5619 = vmatprep.subr.mxu0 0.0
    %5620 = vmatpush1.msra.mxu0 0.0
    %5621 = vmatprep.subr.mxu0 0.0
    %5622 = vmatpush1.msra.mxu0 0.0
    %5623 = vmatprep.subr.mxu0 0.0
    %5624 = vmatpush1.msra.mxu0 0.0
    %5625 = vmatprep.subr.mxu0 0.0
    %5626 = vmatpush1.msra.mxu0 0.0
    %5627 = vmatprep.subr.mxu0 0.0
    %5628 = vmatpush1.msra.mxu0 0.0
    %5629 = vmatprep.subr.mxu0 0.0
    %5630 = vmatpush1.msra.mxu0 0.0
    %5631 = vmatprep.subr.mxu0 0.0
    %5632 = vmatpush1.msra.mxu0 0.0
    %5633 = vmatprep.subr.mxu0 0.0
    %5634 = vmatpush1.msra.mxu0 0.0
    %5635 = vmatprep.subr.mxu0 0.0
    %5636 = vmatpush1.msra.mxu0 0.0
    %5637 = vmatprep.subr.mxu0 0.0
    %5638 = vmatpush1.msra.mxu0 0.0
    %5639 = vmatprep.subr.mxu0 0.0
    %5640 = vmatpush1.msra.mxu0 0.0
    %5641 = vmatprep.subr.mxu0 0.0
    %5642 = vmatpush1.msra.mxu0 0.0
    %5643 = vmatprep.subr.mxu0 0.0
    %5644 = vmatpush1.msra.mxu0 0.0
    %5645 = vmatprep.subr.mxu0 0.0
    %5646 = vmatpush1.msra.mxu0 0.0
    %5647 = vmatprep.subr.mxu0 0.0
    %5648 = vmatpush1.msra.mxu0 0.0
    %5649 = vmatprep.subr.mxu0 0.0
    %5650 = vmatpush1.msra.mxu0 0.0
    %5651 = vmatprep.subr.mxu0 0.0
    %5652 = vmatpush1.msra.mxu0 0.0
    %5653 = vmatprep.subr.mxu0 0.0
    %5654 = vmatpush1.msra.mxu0 0.0
    %5655 = vmatprep.subr.mxu0 0.0
    %5656 = vmatpush1.msra.mxu0 0.0
    %5657 = vmatprep.subr.mxu0 0.0
    %5658 = vmatpush1.msra.mxu0 0.0
    %5659 = vmatprep.subr.mxu0 0.0
    %5660 = vmatpush1.msra.mxu0 0.0
    %5661 = vmatprep.subr.mxu0 0.0
    %5662 = vmatpush1.msra.mxu0 0.0
    %5663 = vmatprep.subr.mxu0 0.0
    %5664 = vmatpush1.msra.mxu0 0.0
    %5665 = vmatprep.subr.mxu0 0.0
    %5666 = vmatpush1.msra.mxu0 0.0
    %5667 = vmatprep.mubr.f32.mxu0 0.0
    %5668 = vmatmul.mubr.f32.gmra.mrb[0].mxu0 %v4811
    %v5669 = vpop.f32.mrb[0].mxu0
    %v5670 = vadd.f32 %v5170, %v5669
    %v5671 = vpop.f32.mrb[0].mxu0
    %5672 = vdwg.mxu0
    %5673 = vmatprep.subr.mxu0 0.0
    %5674 = vmatpush1.msra.mxu0 %v5122
    %5675 = vmatprep.subr.mxu0 0.0
    %5676 = vmatpush1.msra.mxu0 %v5123
    %5677 = vmatprep.subr.mxu0 0.0
    %5678 = vmatpush1.msra.mxu0 %v5124
    %5679 = vmatprep.subr.mxu0 0.0
    %5680 = vmatpush1.msra.mxu0 %v5125
    %5681 = vmatprep.subr.mxu0 0.0
    %5682 = vmatpush1.msra.mxu0 0.0
    %5683 = vmatprep.subr.mxu0 0.0
    %5684 = vmatpush1.msra.mxu0 0.0
    %5685 = vmatprep.subr.mxu0 0.0
    %5686 = vmatpush1.msra.mxu0 0.0
    %5687 = vmatprep.subr.mxu0 0.0
    %5688 = vmatpush1.msra.mxu0 0.0
    %5689 = vmatprep.subr.mxu0 0.0
    %5690 = vmatpush1.msra.mxu0 0.0
    %5691 = vmatprep.subr.mxu0 0.0
    %5692 = vmatpush1.msra.mxu0 0.0
    %5693 = vmatprep.subr.mxu0 0.0
    %5694 = vmatpush1.msra.mxu0 0.0
    %5695 = vmatprep.subr.mxu0 0.0
    %5696 = vmatpush1.msra.mxu0 0.0
    %5697 = vmatprep.subr.mxu0 0.0
    %5698 = vmatpush1.msra.mxu0 0.0
    %5699 = vmatprep.subr.mxu0 0.0
    %5700 = vmatpush1.msra.mxu0 0.0
    %5701 = vmatprep.subr.mxu0 0.0
    %5702 = vmatpush1.msra.mxu0 0.0
    %5703 = vmatprep.subr.mxu0 0.0
    %5704 = vmatpush1.msra.mxu0 0.0
    %5705 = vmatprep.subr.mxu0 0.0
    %5706 = vmatpush1.msra.mxu0 0.0
    %5707 = vmatprep.subr.mxu0 0.0
    %5708 = vmatpush1.msra.mxu0 0.0
    %5709 = vmatprep.subr.mxu0 0.0
    %5710 = vmatpush1.msra.mxu0 0.0
    %5711 = vmatprep.subr.mxu0 0.0
    %5712 = vmatpush1.msra.mxu0 0.0
    %5713 = vmatprep.subr.mxu0 0.0
    %5714 = vmatpush1.msra.mxu0 0.0
    %5715 = vmatprep.subr.mxu0 0.0
    %5716 = vmatpush1.msra.mxu0 0.0
    %5717 = vmatprep.subr.mxu0 0.0
    %5718 = vmatpush1.msra.mxu0 0.0
    %5719 = vmatprep.subr.mxu0 0.0
    %5720 = vmatpush1.msra.mxu0 0.0
    %5721 = vmatprep.subr.mxu0 0.0
    %5722 = vmatpush1.msra.mxu0 0.0
    %5723 = vmatprep.subr.mxu0 0.0
    %5724 = vmatpush1.msra.mxu0 0.0
    %5725 = vmatprep.subr.mxu0 0.0
    %5726 = vmatpush1.msra.mxu0 0.0
    %5727 = vmatprep.subr.mxu0 0.0
    %5728 = vmatpush1.msra.mxu0 0.0
    %5729 = vmatprep.subr.mxu0 0.0
    %5730 = vmatpush1.msra.mxu0 0.0
    %5731 = vmatprep.subr.mxu0 0.0
    %5732 = vmatpush1.msra.mxu0 0.0
    %5733 = vmatprep.subr.mxu0 0.0
    %5734 = vmatpush1.msra.mxu0 0.0
    %5735 = vmatprep.subr.mxu0 0.0
    %5736 = vmatpush1.msra.mxu0 0.0
    %5737 = vmatprep.mubr.f32.mxu0 0.0
    %5738 = vmatmul.mubr.f32.gmra.mrb[0].mxu0 %v4811
    %v5739 = vpop.f32.mrb[0].mxu0
    %v5740 = vadd.f32 %v5174, %v5739
    %v5741 = vpop.f32.mrb[0].mxu0
    %5742 = vdwg.mxu0
    %s5743 = scalar_lea.vmem %s12, 256
    %v5744 = vld [vmem:[%s5743] sm:$0xff]
    %v5745 = vld [vmem:[%s5743 + $0x8] sm:$0xff]
    %v5746 = vld [vmem:[%s5743 + $0x10] sm:$0xff]
    %v5747 = vld [vmem:[%s5743 + $0x18] sm:$0xff]
    %v5748 = vld [vmem:[%s5743 + $0x20] sm:$0xff]
    %v5749 = vld [vmem:[%s5743 + $0x28] sm:$0xff]
    %v5750 = vld [vmem:[%s5743 + $0x30] sm:$0xff]
    %v5751 = vld [vmem:[%s5743 + $0x38] sm:$0xff]
    %v5752 = vld [vmem:[%s5743 + $0x40] sm:$0xff]
    %v5753 = vld [vmem:[%s5743 + $0x48] sm:$0xff]
    %v5754 = vld [vmem:[%s5743 + $0x50] sm:$0xff]
    %v5755 = vld [vmem:[%s5743 + $0x58] sm:$0xff]
    %v5756 = vld [vmem:[%s5743 + $0x60] sm:$0xff]
    %v5757 = vld [vmem:[%s5743 + $0x68] sm:$0xff]
    %v5758 = vld [vmem:[%s5743 + $0x70] sm:$0xff]
    %v5759 = vld [vmem:[%s5743 + $0x78] sm:$0xff]
    %v5760 = vld [vmem:[%s5743 + $0x80] sm:$0xff]
    %v5761 = vld [vmem:[%s5743 + $0x88] sm:$0xff]
    %v5762 = vld [vmem:[%s5743 + $0x90] sm:$0xff]
    %v5763 = vld [vmem:[%s5743 + $0x98] sm:$0xff]
    %v5764 = vld [vmem:[%s5743 + $0xa0] sm:$0xff]
    %v5765 = vld [vmem:[%s5743 + $0xa8] sm:$0xff]
    %v5766 = vld [vmem:[%s5743 + $0xb0] sm:$0xff]
    %v5767 = vld [vmem:[%s5743 + $0xb8] sm:$0xff]
    %v5768 = vld [vmem:[%s5743 + $0xc0] sm:$0xff]
    %v5769 = vld [vmem:[%s5743 + $0xc8] sm:$0xff]
    %v5770 = vld [vmem:[%s5743 + $0xd0] sm:$0xff]
    %v5771 = vld [vmem:[%s5743 + $0xd8] sm:$0xff]
    %v5772 = vld [vmem:[%s5743 + $0xe0] sm:$0xff]
    %v5773 = vld [vmem:[%s5743 + $0xe8] sm:$0xff]
    %v5774 = vld [vmem:[%s5743 + $0xf0] sm:$0xff]
    %v5775 = vld [vmem:[%s5743 + $0xf8] sm:$0xff]
    %s5776 = scalar_lea.vmem %s13, 8
    %v5777 = vld [vmem:[%s5776] sm:$0x1]
    %v5778 = vld [vmem:[%s5776 + $0x1] sm:$0x1]
    %v5779 = vld [vmem:[%s5776 + $0x2] sm:$0x1]
    %v5780 = vld [vmem:[%s5776 + $0x3] sm:$0x1]
    %v5781 = vld [vmem:[%s5776 + $0x4] sm:$0x1]
    %v5782 = vld [vmem:[%s5776 + $0x5] sm:$0x1]
    %v5783 = vld [vmem:[%s5776 + $0x6] sm:$0x1]
    %v5784 = vld [vmem:[%s5776 + $0x7] sm:$0x1]
    %v5793 = vlaneseq
    %v5794 = vshrl.u32 %v5793, 7
    %v5795 = vsub.s32 0, %v5794
    %v5796 = vrot.slane %v5777, %v5795
    %v5797 = vlaneseq
    %v5798 = vshrl.u32 %v5797, 7
    %v5799 = vsub.s32 0, %v5798
    %v5800 = vrot.slane %v5778, %v5799
    %v5801 = vlaneseq
    %v5802 = vshrl.u32 %v5801, 7
    %v5803 = vsub.s32 0, %v5802
    %v5804 = vrot.slane %v5779, %v5803
    %v5805 = vlaneseq
    %v5806 = vshrl.u32 %v5805, 7
    %v5807 = vsub.s32 0, %v5806
    %v5808 = vrot.slane %v5780, %v5807
    %v5809 = vlaneseq
    %v5810 = vshrl.u32 %v5809, 7
    %v5811 = vsub.s32 0, %v5810
    %v5812 = vrot.slane %v5781, %v5811
    %v5813 = vlaneseq
    %v5814 = vshrl.u32 %v5813, 7
    %v5815 = vsub.s32 0, %v5814
    %v5816 = vrot.slane %v5782, %v5815
    %v5817 = vlaneseq
    %v5818 = vshrl.u32 %v5817, 7
    %v5819 = vsub.s32 0, %v5818
    %v5820 = vrot.slane %v5783, %v5819
    %v5821 = vlaneseq
    %v5822 = vshrl.u32 %v5821, 7
    %v5823 = vsub.s32 0, %v5822
    %v5824 = vrot.slane %v5784, %v5823
    %5833 = vmatprep.subr.mxu0 0.0
    %5834 = vmatpush1.msra.mxu0 %v5744
    %5835 = vmatprep.subr.mxu0 0.0
    %5836 = vmatpush1.msra.mxu0 %v5745
    %5837 = vmatprep.subr.mxu0 0.0
    %5838 = vmatpush1.msra.mxu0 %v5746
    %5839 = vmatprep.subr.mxu0 0.0
    %5840 = vmatpush1.msra.mxu0 %v5747
    %5841 = vmatprep.subr.mxu0 0.0
    %5842 = vmatpush1.msra.mxu0 0.0
    %5843 = vmatprep.subr.mxu0 0.0
    %5844 = vmatpush1.msra.mxu0 0.0
    %5845 = vmatprep.subr.mxu0 0.0
    %5846 = vmatpush1.msra.mxu0 0.0
    %5847 = vmatprep.subr.mxu0 0.0
    %5848 = vmatpush1.msra.mxu0 0.0
    %5849 = vmatprep.subr.mxu0 0.0
    %5850 = vmatpush1.msra.mxu0 0.0
    %5851 = vmatprep.subr.mxu0 0.0
    %5852 = vmatpush1.msra.mxu0 0.0
    %5853 = vmatprep.subr.mxu0 0.0
    %5854 = vmatpush1.msra.mxu0 0.0
    %5855 = vmatprep.subr.mxu0 0.0
    %5856 = vmatpush1.msra.mxu0 0.0
    %5857 = vmatprep.subr.mxu0 0.0
    %5858 = vmatpush1.msra.mxu0 0.0
    %5859 = vmatprep.subr.mxu0 0.0
    %5860 = vmatpush1.msra.mxu0 0.0
    %5861 = vmatprep.subr.mxu0 0.0
    %5862 = vmatpush1.msra.mxu0 0.0
    %5863 = vmatprep.subr.mxu0 0.0
    %5864 = vmatpush1.msra.mxu0 0.0
    %5865 = vmatprep.subr.mxu0 0.0
    %5866 = vmatpush1.msra.mxu0 0.0
    %5867 = vmatprep.subr.mxu0 0.0
    %5868 = vmatpush1.msra.mxu0 0.0
    %5869 = vmatprep.subr.mxu0 0.0
    %5870 = vmatpush1.msra.mxu0 0.0
    %5871 = vmatprep.subr.mxu0 0.0
    %5872 = vmatpush1.msra.mxu0 0.0
    %5873 = vmatprep.subr.mxu0 0.0
    %5874 = vmatpush1.msra.mxu0 0.0
    %5875 = vmatprep.subr.mxu0 0.0
    %5876 = vmatpush1.msra.mxu0 0.0
    %5877 = vmatprep.subr.mxu0 0.0
    %5878 = vmatpush1.msra.mxu0 0.0
    %5879 = vmatprep.subr.mxu0 0.0
    %5880 = vmatpush1.msra.mxu0 0.0
    %5881 = vmatprep.subr.mxu0 0.0
    %5882 = vmatpush1.msra.mxu0 0.0
    %5883 = vmatprep.subr.mxu0 0.0
    %5884 = vmatpush1.msra.mxu0 0.0
    %5885 = vmatprep.subr.mxu0 0.0
    %5886 = vmatpush1.msra.mxu0 0.0
    %5887 = vmatprep.subr.mxu0 0.0
    %5888 = vmatpush1.msra.mxu0 0.0
    %5889 = vmatprep.subr.mxu0 0.0
    %5890 = vmatpush1.msra.mxu0 0.0
    %5891 = vmatprep.subr.mxu0 0.0
    %5892 = vmatpush1.msra.mxu0 0.0
    %5893 = vmatprep.subr.mxu0 0.0
    %5894 = vmatpush1.msra.mxu0 0.0
    %5895 = vmatprep.subr.mxu0 0.0
    %5896 = vmatpush1.msra.mxu0 0.0
    %5897 = vmatprep.mubr.f32.mxu0 0.0
    %5898 = vmatmul.mubr.f32.gmra.mrb[0].mxu0 %v4528
    %v5899 = vpop.f32.mrb[0].mxu0
    %v5900 = vadd.f32 %v5796, %v5899
    %v5901 = vpop.f32.mrb[0].mxu0
    %5902 = vdwg.mxu0
    %5903 = vmatprep.subr.mxu0 0.0
    %5904 = vmatpush1.msra.mxu0 %v5748
    %5905 = vmatprep.subr.mxu0 0.0
    %5906 = vmatpush1.msra.mxu0 %v5749
    %5907 = vmatprep.subr.mxu0 0.0
    %5908 = vmatpush1.msra.mxu0 %v5750
    %5909 = vmatprep.subr.mxu0 0.0
    %5910 = vmatpush1.msra.mxu0 %v5751
    %5911 = vmatprep.subr.mxu0 0.0
    %5912 = vmatpush1.msra.mxu0 0.0
    %5913 = vmatprep.subr.mxu0 0.0
    %5914 = vmatpush1.msra.mxu0 0.0
    %5915 = vmatprep.subr.mxu0 0.0
    %5916 = vmatpush1.msra.mxu0 0.0
    %5917 = vmatprep.subr.mxu0 0.0
    %5918 = vmatpush1.msra.mxu0 0.0
    %5919 = vmatprep.subr.mxu0 0.0
    %5920 = vmatpush1.msra.mxu0 0.0
    %5921 = vmatprep.subr.mxu0 0.0
    %5922 = vmatpush1.msra.mxu0 0.0
    %5923 = vmatprep.subr.mxu0 0.0
    %5924 = vmatpush1.msra.mxu0 0.0
    %5925 = vmatprep.subr.mxu0 0.0
    %5926 = vmatpush1.msra.mxu0 0.0
    %5927 = vmatprep.subr.mxu0 0.0
    %5928 = vmatpush1.msra.mxu0 0.0
    %5929 = vmatprep.subr.mxu0 0.0
    %5930 = vmatpush1.msra.mxu0 0.0
    %5931 = vmatprep.subr.mxu0 0.0
    %5932 = vmatpush1.msra.mxu0 0.0
    %5933 = vmatprep.subr.mxu0 0.0
    %5934 = vmatpush1.msra.mxu0 0.0
    %5935 = vmatprep.subr.mxu0 0.0
    %5936 = vmatpush1.msra.mxu0 0.0
    %5937 = vmatprep.subr.mxu0 0.0
    %5938 = vmatpush1.msra.mxu0 0.0
    %5939 = vmatprep.subr.mxu0 0.0
    %5940 = vmatpush1.msra.mxu0 0.0
    %5941 = vmatprep.subr.mxu0 0.0
    %5942 = vmatpush1.msra.mxu0 0.0
    %5943 = vmatprep.subr.mxu0 0.0
    %5944 = vmatpush1.msra.mxu0 0.0
    %5945 = vmatprep.subr.mxu0 0.0
    %5946 = vmatpush1.msra.mxu0 0.0
    %5947 = vmatprep.subr.mxu0 0.0
    %5948 = vmatpush1.msra.mxu0 0.0
    %5949 = vmatprep.subr.mxu0 0.0
    %5950 = vmatpush1.msra.mxu0 0.0
    %5951 = vmatprep.subr.mxu0 0.0
    %5952 = vmatpush1.msra.mxu0 0.0
    %5953 = vmatprep.subr.mxu0 0.0
    %5954 = vmatpush1.msra.mxu0 0.0
    %5955 = vmatprep.subr.mxu0 0.0
    %5956 = vmatpush1.msra.mxu0 0.0
    %5957 = vmatprep.subr.mxu0 0.0
    %5958 = vmatpush1.msra.mxu0 0.0
    %5959 = vmatprep.subr.mxu0 0.0
    %5960 = vmatpush1.msra.mxu0 0.0
    %5961 = vmatprep.subr.mxu0 0.0
    %5962 = vmatpush1.msra.mxu0 0.0
    %5963 = vmatprep.subr.mxu0 0.0
    %5964 = vmatpush1.msra.mxu0 0.0
    %5965 = vmatprep.subr.mxu0 0.0
    %5966 = vmatpush1.msra.mxu0 0.0
    %5967 = vmatprep.mubr.f32.mxu0 0.0
    %5968 = vmatmul.mubr.f32.gmra.mrb[0].mxu0 %v4528
    %v5969 = vpop.f32.mrb[0].mxu0
    %v5970 = vadd.f32 %v5800, %v5969
    %v5971 = vpop.f32.mrb[0].mxu0
    %5972 = vdwg.mxu0
    %5973 = vmatprep.subr.mxu0 0.0
    %5974 = vmatpush1.msra.mxu0 %v5752
    %5975 = vmatprep.subr.mxu0 0.0
    %5976 = vmatpush1.msra.mxu0 %v5753
    %5977 = vmatprep.subr.mxu0 0.0
    %5978 = vmatpush1.msra.mxu0 %v5754
    %5979 = vmatprep.subr.mxu0 0.0
    %5980 = vmatpush1.msra.mxu0 %v5755
    %5981 = vmatprep.subr.mxu0 0.0
    %5982 = vmatpush1.msra.mxu0 0.0
    %5983 = vmatprep.subr.mxu0 0.0
    %5984 = vmatpush1.msra.mxu0 0.0
    %5985 = vmatprep.subr.mxu0 0.0
    %5986 = vmatpush1.msra.mxu0 0.0
    %5987 = vmatprep.subr.mxu0 0.0
    %5988 = vmatpush1.msra.mxu0 0.0
    %5989 = vmatprep.subr.mxu0 0.0
    %5990 = vmatpush1.msra.mxu0 0.0
    %5991 = vmatprep.subr.mxu0 0.0
    %5992 = vmatpush1.msra.mxu0 0.0
    %5993 = vmatprep.subr.mxu0 0.0
    %5994 = vmatpush1.msra.mxu0 0.0
    %5995 = vmatprep.subr.mxu0 0.0
    %5996 = vmatpush1.msra.mxu0 0.0
    %5997 = vmatprep.subr.mxu0 0.0
    %5998 = vmatpush1.msra.mxu0 0.0
    %5999 = vmatprep.subr.mxu0 0.0
    %6000 = vmatpush1.msra.mxu0 0.0
    %6001 = vmatprep.subr.mxu0 0.0
    %6002 = vmatpush1.msra.mxu0 0.0
    %6003 = vmatprep.subr.mxu0 0.0
    %6004 = vmatpush1.msra.mxu0 0.0
    %6005 = vmatprep.subr.mxu0 0.0
    %6006 = vmatpush1.msra.mxu0 0.0
    %6007 = vmatprep.subr.mxu0 0.0
    %6008 = vmatpush1.msra.mxu0 0.0
    %6009 = vmatprep.subr.mxu0 0.0
    %6010 = vmatpush1.msra.mxu0 0.0
    %6011 = vmatprep.subr.mxu0 0.0
    %6012 = vmatpush1.msra.mxu0 0.0
    %6013 = vmatprep.subr.mxu0 0.0
    %6014 = vmatpush1.msra.mxu0 0.0
    %6015 = vmatprep.subr.mxu0 0.0
    %6016 = vmatpush1.msra.mxu0 0.0
    %6017 = vmatprep.subr.mxu0 0.0
    %6018 = vmatpush1.msra.mxu0 0.0
    %6019 = vmatprep.subr.mxu0 0.0
    %6020 = vmatpush1.msra.mxu0 0.0
    %6021 = vmatprep.subr.mxu0 0.0
    %6022 = vmatpush1.msra.mxu0 0.0
    %6023 = vmatprep.subr.mxu0 0.0
    %6024 = vmatpush1.msra.mxu0 0.0
    %6025 = vmatprep.subr.mxu0 0.0
    %6026 = vmatpush1.msra.mxu0 0.0
    %6027 = vmatprep.subr.mxu0 0.0
    %6028 = vmatpush1.msra.mxu0 0.0
    %6029 = vmatprep.subr.mxu0 0.0
    %6030 = vmatpush1.msra.mxu0 0.0
    %6031 = vmatprep.subr.mxu0 0.0
    %6032 = vmatpush1.msra.mxu0 0.0
    %6033 = vmatprep.subr.mxu0 0.0
    %6034 = vmatpush1.msra.mxu0 0.0
    %6035 = vmatprep.subr.mxu0 0.0
    %6036 = vmatpush1.msra.mxu0 0.0
    %6037 = vmatprep.mubr.f32.mxu0 0.0
    %6038 = vmatmul.mubr.f32.gmra.mrb[0].mxu0 %v4528
    %v6039 = vpop.f32.mrb[0].mxu0
    %v6040 = vadd.f32 %v5804, %v6039
    %v6041 = vpop.f32.mrb[0].mxu0
    %6042 = vdwg.mxu0
    %6043 = vmatprep.subr.mxu0 0.0
    %6044 = vmatpush1.msra.mxu0 %v5756
    %6045 = vmatprep.subr.mxu0 0.0
    %6046 = vmatpush1.msra.mxu0 %v5757
    %6047 = vmatprep.subr.mxu0 0.0
    %6048 = vmatpush1.msra.mxu0 %v5758
    %6049 = vmatprep.subr.mxu0 0.0
    %6050 = vmatpush1.msra.mxu0 %v5759
    %6051 = vmatprep.subr.mxu0 0.0
    %6052 = vmatpush1.msra.mxu0 0.0
    %6053 = vmatprep.subr.mxu0 0.0
    %6054 = vmatpush1.msra.mxu0 0.0
    %6055 = vmatprep.subr.mxu0 0.0
    %6056 = vmatpush1.msra.mxu0 0.0
    %6057 = vmatprep.subr.mxu0 0.0
    %6058 = vmatpush1.msra.mxu0 0.0
    %6059 = vmatprep.subr.mxu0 0.0
    %6060 = vmatpush1.msra.mxu0 0.0
    %6061 = vmatprep.subr.mxu0 0.0
    %6062 = vmatpush1.msra.mxu0 0.0
    %6063 = vmatprep.subr.mxu0 0.0
    %6064 = vmatpush1.msra.mxu0 0.0
    %6065 = vmatprep.subr.mxu0 0.0
    %6066 = vmatpush1.msra.mxu0 0.0
    %6067 = vmatprep.subr.mxu0 0.0
    %6068 = vmatpush1.msra.mxu0 0.0
    %6069 = vmatprep.subr.mxu0 0.0
    %6070 = vmatpush1.msra.mxu0 0.0
    %6071 = vmatprep.subr.mxu0 0.0
    %6072 = vmatpush1.msra.mxu0 0.0
    %6073 = vmatprep.subr.mxu0 0.0
    %6074 = vmatpush1.msra.mxu0 0.0
    %6075 = vmatprep.subr.mxu0 0.0
    %6076 = vmatpush1.msra.mxu0 0.0
    %6077 = vmatprep.subr.mxu0 0.0
    %6078 = vmatpush1.msra.mxu0 0.0
    %6079 = vmatprep.subr.mxu0 0.0
    %6080 = vmatpush1.msra.mxu0 0.0
    %6081 = vmatprep.subr.mxu0 0.0
    %6082 = vmatpush1.msra.mxu0 0.0
    %6083 = vmatprep.subr.mxu0 0.0
    %6084 = vmatpush1.msra.mxu0 0.0
    %6085 = vmatprep.subr.mxu0 0.0
    %6086 = vmatpush1.msra.mxu0 0.0
    %6087 = vmatprep.subr.mxu0 0.0
    %6088 = vmatpush1.msra.mxu0 0.0
    %6089 = vmatprep.subr.mxu0 0.0
    %6090 = vmatpush1.msra.mxu0 0.0
    %6091 = vmatprep.subr.mxu0 0.0
    %6092 = vmatpush1.msra.mxu0 0.0
    %6093 = vmatprep.subr.mxu0 0.0
    %6094 = vmatpush1.msra.mxu0 0.0
    %6095 = vmatprep.subr.mxu0 0.0
    %6096 = vmatpush1.msra.mxu0 0.0
    %6097 = vmatprep.subr.mxu0 0.0
    %6098 = vmatpush1.msra.mxu0 0.0
    %6099 = vmatprep.subr.mxu0 0.0
    %6100 = vmatpush1.msra.mxu0 0.0
    %6101 = vmatprep.subr.mxu0 0.0
    %6102 = vmatpush1.msra.mxu0 0.0
    %6103 = vmatprep.subr.mxu0 0.0
    %6104 = vmatpush1.msra.mxu0 0.0
    %6105 = vmatprep.subr.mxu0 0.0
    %6106 = vmatpush1.msra.mxu0 0.0
    %6107 = vmatprep.mubr.f32.mxu0 0.0
    %6108 = vmatmul.mubr.f32.gmra.mrb[0].mxu0 %v4528
    %v6109 = vpop.f32.mrb[0].mxu0
    %v6110 = vadd.f32 %v5808, %v6109
    %v6111 = vpop.f32.mrb[0].mxu0
    %6112 = vdwg.mxu0
    %6113 = vmatprep.subr.mxu0 0.0
    %6114 = vmatpush1.msra.mxu0 %v5760
    %6115 = vmatprep.subr.mxu0 0.0
    %6116 = vmatpush1.msra.mxu0 %v5761
    %6117 = vmatprep.subr.mxu0 0.0
    %6118 = vmatpush1.msra.mxu0 %v5762
    %6119 = vmatprep.subr.mxu0 0.0
    %6120 = vmatpush1.msra.mxu0 %v5763
    %6121 = vmatprep.subr.mxu0 0.0
    %6122 = vmatpush1.msra.mxu0 0.0
    %6123 = vmatprep.subr.mxu0 0.0
    %6124 = vmatpush1.msra.mxu0 0.0
    %6125 = vmatprep.subr.mxu0 0.0
    %6126 = vmatpush1.msra.mxu0 0.0
    %6127 = vmatprep.subr.mxu0 0.0
    %6128 = vmatpush1.msra.mxu0 0.0
    %6129 = vmatprep.subr.mxu0 0.0
    %6130 = vmatpush1.msra.mxu0 0.0
    %6131 = vmatprep.subr.mxu0 0.0
    %6132 = vmatpush1.msra.mxu0 0.0
    %6133 = vmatprep.subr.mxu0 0.0
    %6134 = vmatpush1.msra.mxu0 0.0
    %6135 = vmatprep.subr.mxu0 0.0
    %6136 = vmatpush1.msra.mxu0 0.0
    %6137 = vmatprep.subr.mxu0 0.0
    %6138 = vmatpush1.msra.mxu0 0.0
    %6139 = vmatprep.subr.mxu0 0.0
    %6140 = vmatpush1.msra.mxu0 0.0
    %6141 = vmatprep.subr.mxu0 0.0
    %6142 = vmatpush1.msra.mxu0 0.0
    %6143 = vmatprep.subr.mxu0 0.0
    %6144 = vmatpush1.msra.mxu0 0.0
    %6145 = vmatprep.subr.mxu0 0.0
    %6146 = vmatpush1.msra.mxu0 0.0
    %6147 = vmatprep.subr.mxu0 0.0
    %6148 = vmatpush1.msra.mxu0 0.0
    %6149 = vmatprep.subr.mxu0 0.0
    %6150 = vmatpush1.msra.mxu0 0.0
    %6151 = vmatprep.subr.mxu0 0.0
    %6152 = vmatpush1.msra.mxu0 0.0
    %6153 = vmatprep.subr.mxu0 0.0
    %6154 = vmatpush1.msra.mxu0 0.0
    %6155 = vmatprep.subr.mxu0 0.0
    %6156 = vmatpush1.msra.mxu0 0.0
    %6157 = vmatprep.subr.mxu0 0.0
    %6158 = vmatpush1.msra.mxu0 0.0
    %6159 = vmatprep.subr.mxu0 0.0
    %6160 = vmatpush1.msra.mxu0 0.0
    %6161 = vmatprep.subr.mxu0 0.0
    %6162 = vmatpush1.msra.mxu0 0.0
    %6163 = vmatprep.subr.mxu0 0.0
    %6164 = vmatpush1.msra.mxu0 0.0
    %6165 = vmatprep.subr.mxu0 0.0
    %6166 = vmatpush1.msra.mxu0 0.0
    %6167 = vmatprep.subr.mxu0 0.0
    %6168 = vmatpush1.msra.mxu0 0.0
    %6169 = vmatprep.subr.mxu0 0.0
    %6170 = vmatpush1.msra.mxu0 0.0
    %6171 = vmatprep.subr.mxu0 0.0
    %6172 = vmatpush1.msra.mxu0 0.0
    %6173 = vmatprep.subr.mxu0 0.0
    %6174 = vmatpush1.msra.mxu0 0.0
    %6175 = vmatprep.subr.mxu0 0.0
    %6176 = vmatpush1.msra.mxu0 0.0
    %6177 = vmatprep.mubr.f32.mxu0 0.0
    %6178 = vmatmul.mubr.f32.gmra.mrb[0].mxu0 %v4811
    %v6179 = vpop.f32.mrb[0].mxu0
    %v6180 = vadd.f32 %v5812, %v6179
    %v6181 = vpop.f32.mrb[0].mxu0
    %6182 = vdwg.mxu0
    %6183 = vmatprep.subr.mxu0 0.0
    %6184 = vmatpush1.msra.mxu0 %v5764
    %6185 = vmatprep.subr.mxu0 0.0
    %6186 = vmatpush1.msra.mxu0 %v5765
    %6187 = vmatprep.subr.mxu0 0.0
    %6188 = vmatpush1.msra.mxu0 %v5766
    %6189 = vmatprep.subr.mxu0 0.0
    %6190 = vmatpush1.msra.mxu0 %v5767
    %6191 = vmatprep.subr.mxu0 0.0
    %6192 = vmatpush1.msra.mxu0 0.0
    %6193 = vmatprep.subr.mxu0 0.0
    %6194 = vmatpush1.msra.mxu0 0.0
    %6195 = vmatprep.subr.mxu0 0.0
    %6196 = vmatpush1.msra.mxu0 0.0
    %6197 = vmatprep.subr.mxu0 0.0
    %6198 = vmatpush1.msra.mxu0 0.0
    %6199 = vmatprep.subr.mxu0 0.0
    %6200 = vmatpush1.msra.mxu0 0.0
    %6201 = vmatprep.subr.mxu0 0.0
    %6202 = vmatpush1.msra.mxu0 0.0
    %6203 = vmatprep.subr.mxu0 0.0
    %6204 = vmatpush1.msra.mxu0 0.0
    %6205 = vmatprep.subr.mxu0 0.0
    %6206 = vmatpush1.msra.mxu0 0.0
    %6207 = vmatprep.subr.mxu0 0.0
    %6208 = vmatpush1.msra.mxu0 0.0
    %6209 = vmatprep.subr.mxu0 0.0
    %6210 = vmatpush1.msra.mxu0 0.0
    %6211 = vmatprep.subr.mxu0 0.0
    %6212 = vmatpush1.msra.mxu0 0.0
    %6213 = vmatprep.subr.mxu0 0.0
    %6214 = vmatpush1.msra.mxu0 0.0
    %6215 = vmatprep.subr.mxu0 0.0
    %6216 = vmatpush1.msra.mxu0 0.0
    %6217 = vmatprep.subr.mxu0 0.0
    %6218 = vmatpush1.msra.mxu0 0.0
    %6219 = vmatprep.subr.mxu0 0.0
    %6220 = vmatpush1.msra.mxu0 0.0
    %6221 = vmatprep.subr.mxu0 0.0
    %6222 = vmatpush1.msra.mxu0 0.0
    %6223 = vmatprep.subr.mxu0 0.0
    %6224 = vmatpush1.msra.mxu0 0.0
    %6225 = vmatprep.subr.mxu0 0.0
    %6226 = vmatpush1.msra.mxu0 0.0
    %6227 = vmatprep.subr.mxu0 0.0
    %6228 = vmatpush1.msra.mxu0 0.0
    %6229 = vmatprep.subr.mxu0 0.0
    %6230 = vmatpush1.msra.mxu0 0.0
    %6231 = vmatprep.subr.mxu0 0.0
    %6232 = vmatpush1.msra.mxu0 0.0
    %6233 = vmatprep.subr.mxu0 0.0
    %6234 = vmatpush1.msra.mxu0 0.0
    %6235 = vmatprep.subr.mxu0 0.0
    %6236 = vmatpush1.msra.mxu0 0.0
    %6237 = vmatprep.subr.mxu0 0.0
    %6238 = vmatpush1.msra.mxu0 0.0
    %6239 = vmatprep.subr.mxu0 0.0
    %6240 = vmatpush1.msra.mxu0 0.0
    %6241 = vmatprep.subr.mxu0 0.0
    %6242 = vmatpush1.msra.mxu0 0.0
    %6243 = vmatprep.subr.mxu0 0.0
    %6244 = vmatpush1.msra.mxu0 0.0
    %6245 = vmatprep.subr.mxu0 0.0
    %6246 = vmatpush1.msra.mxu0 0.0
    %6247 = vmatprep.mubr.f32.mxu0 0.0
    %6248 = vmatmul.mubr.f32.gmra.mrb[0].mxu0 %v4811
    %v6249 = vpop.f32.mrb[0].mxu0
    %v6250 = vadd.f32 %v5816, %v6249
    %v6251 = vpop.f32.mrb[0].mxu0
    %6252 = vdwg.mxu0
    %6253 = vmatprep.subr.mxu0 0.0
    %6254 = vmatpush1.msra.mxu0 %v5768
    %6255 = vmatprep.subr.mxu0 0.0
    %6256 = vmatpush1.msra.mxu0 %v5769
    %6257 = vmatprep.subr.mxu0 0.0
    %6258 = vmatpush1.msra.mxu0 %v5770
    %6259 = vmatprep.subr.mxu0 0.0
    %6260 = vmatpush1.msra.mxu0 %v5771
    %6261 = vmatprep.subr.mxu0 0.0
    %6262 = vmatpush1.msra.mxu0 0.0
    %6263 = vmatprep.subr.mxu0 0.0
    %6264 = vmatpush1.msra.mxu0 0.0
    %6265 = vmatprep.subr.mxu0 0.0
    %6266 = vmatpush1.msra.mxu0 0.0
    %6267 = vmatprep.subr.mxu0 0.0
    %6268 = vmatpush1.msra.mxu0 0.0
    %6269 = vmatprep.subr.mxu0 0.0
    %6270 = vmatpush1.msra.mxu0 0.0
    %6271 = vmatprep.subr.mxu0 0.0
    %6272 = vmatpush1.msra.mxu0 0.0
    %6273 = vmatprep.subr.mxu0 0.0
    %6274 = vmatpush1.msra.mxu0 0.0
    %6275 = vmatprep.subr.mxu0 0.0
    %6276 = vmatpush1.msra.mxu0 0.0
    %6277 = vmatprep.subr.mxu0 0.0
    %6278 = vmatpush1.msra.mxu0 0.0
    %6279 = vmatprep.subr.mxu0 0.0
    %6280 = vmatpush1.msra.mxu0 0.0
    %6281 = vmatprep.subr.mxu0 0.0
    %6282 = vmatpush1.msra.mxu0 0.0
    %6283 = vmatprep.subr.mxu0 0.0
    %6284 = vmatpush1.msra.mxu0 0.0
    %6285 = vmatprep.subr.mxu0 0.0
    %6286 = vmatpush1.msra.mxu0 0.0
    %6287 = vmatprep.subr.mxu0 0.0
    %6288 = vmatpush1.msra.mxu0 0.0
    %6289 = vmatprep.subr.mxu0 0.0
    %6290 = vmatpush1.msra.mxu0 0.0
    %6291 = vmatprep.subr.mxu0 0.0
    %6292 = vmatpush1.msra.mxu0 0.0
    %6293 = vmatprep.subr.mxu0 0.0
    %6294 = vmatpush1.msra.mxu0 0.0
    %6295 = vmatprep.subr.mxu0 0.0
    %6296 = vmatpush1.msra.mxu0 0.0
    %6297 = vmatprep.subr.mxu0 0.0
    %6298 = vmatpush1.msra.mxu0 0.0
    %6299 = vmatprep.subr.mxu0 0.0
    %6300 = vmatpush1.msra.mxu0 0.0
    %6301 = vmatprep.subr.mxu0 0.0
    %6302 = vmatpush1.msra.mxu0 0.0
    %6303 = vmatprep.subr.mxu0 0.0
    %6304 = vmatpush1.msra.mxu0 0.0
    %6305 = vmatprep.subr.mxu0 0.0
    %6306 = vmatpush1.msra.mxu0 0.0
    %6307 = vmatprep.subr.mxu0 0.0
    %6308 = vmatpush1.msra.mxu0 0.0
    %6309 = vmatprep.subr.mxu0 0.0
    %6310 = vmatpush1.msra.mxu0 0.0
    %6311 = vmatprep.subr.mxu0 0.0
    %6312 = vmatpush1.msra.mxu0 0.0
    %6313 = vmatprep.subr.mxu0 0.0
    %6314 = vmatpush1.msra.mxu0 0.0
    %6315 = vmatprep.subr.mxu0 0.0
    %6316 = vmatpush1.msra.mxu0 0.0
    %6317 = vmatprep.mubr.f32.mxu0 0.0
    %6318 = vmatmul.mubr.f32.gmra.mrb[0].mxu0 %v4811
    %v6319 = vpop.f32.mrb[0].mxu0
    %v6320 = vadd.f32 %v5820, %v6319
    %v6321 = vpop.f32.mrb[0].mxu0
    %6322 = vdwg.mxu0
    %6323 = vmatprep.subr.mxu0 0.0
    %6324 = vmatpush1.msra.mxu0 %v5772
    %6325 = vmatprep.subr.mxu0 0.0
    %6326 = vmatpush1.msra.mxu0 %v5773
    %6327 = vmatprep.subr.mxu0 0.0
    %6328 = vmatpush1.msra.mxu0 %v5774
    %6329 = vmatprep.subr.mxu0 0.0
    %6330 = vmatpush1.msra.mxu0 %v5775
    %6331 = vmatprep.subr.mxu0 0.0
    %6332 = vmatpush1.msra.mxu0 0.0
    %6333 = vmatprep.subr.mxu0 0.0
    %6334 = vmatpush1.msra.mxu0 0.0
    %6335 = vmatprep.subr.mxu0 0.0
    %6336 = vmatpush1.msra.mxu0 0.0
    %6337 = vmatprep.subr.mxu0 0.0
    %6338 = vmatpush1.msra.mxu0 0.0
    %6339 = vmatprep.subr.mxu0 0.0
    %6340 = vmatpush1.msra.mxu0 0.0
    %6341 = vmatprep.subr.mxu0 0.0
    %6342 = vmatpush1.msra.mxu0 0.0
    %6343 = vmatprep.subr.mxu0 0.0
    %6344 = vmatpush1.msra.mxu0 0.0
    %6345 = vmatprep.subr.mxu0 0.0
    %6346 = vmatpush1.msra.mxu0 0.0
    %6347 = vmatprep.subr.mxu0 0.0
    %6348 = vmatpush1.msra.mxu0 0.0
    %6349 = vmatprep.subr.mxu0 0.0
    %6350 = vmatpush1.msra.mxu0 0.0
    %6351 = vmatprep.subr.mxu0 0.0
    %6352 = vmatpush1.msra.mxu0 0.0
    %6353 = vmatprep.subr.mxu0 0.0
    %6354 = vmatpush1.msra.mxu0 0.0
    %6355 = vmatprep.subr.mxu0 0.0
    %6356 = vmatpush1.msra.mxu0 0.0
    %6357 = vmatprep.subr.mxu0 0.0
    %6358 = vmatpush1.msra.mxu0 0.0
    %6359 = vmatprep.subr.mxu0 0.0
    %6360 = vmatpush1.msra.mxu0 0.0
    %6361 = vmatprep.subr.mxu0 0.0
    %6362 = vmatpush1.msra.mxu0 0.0
    %6363 = vmatprep.subr.mxu0 0.0
    %6364 = vmatpush1.msra.mxu0 0.0
    %6365 = vmatprep.subr.mxu0 0.0
    %6366 = vmatpush1.msra.mxu0 0.0
    %6367 = vmatprep.subr.mxu0 0.0
    %6368 = vmatpush1.msra.mxu0 0.0
    %6369 = vmatprep.subr.mxu0 0.0
    %6370 = vmatpush1.msra.mxu0 0.0
    %6371 = vmatprep.subr.mxu0 0.0
    %6372 = vmatpush1.msra.mxu0 0.0
    %6373 = vmatprep.subr.mxu0 0.0
    %6374 = vmatpush1.msra.mxu0 0.0
    %6375 = vmatprep.subr.mxu0 0.0
    %6376 = vmatpush1.msra.mxu0 0.0
    %6377 = vmatprep.subr.mxu0 0.0
    %6378 = vmatpush1.msra.mxu0 0.0
    %6379 = vmatprep.subr.mxu0 0.0
    %6380 = vmatpush1.msra.mxu0 0.0
    %6381 = vmatprep.subr.mxu0 0.0
    %6382 = vmatpush1.msra.mxu0 0.0
    %6383 = vmatprep.subr.mxu0 0.0
    %6384 = vmatpush1.msra.mxu0 0.0
    %6385 = vmatprep.subr.mxu0 0.0
    %6386 = vmatpush1.msra.mxu0 0.0
    %6387 = vmatprep.mubr.f32.mxu0 0.0
    %6388 = vmatmul.mubr.f32.gmra.mrb[0].mxu0 %v4811
    %v6389 = vpop.f32.mrb[0].mxu0
    %v6390 = vadd.f32 %v5824, %v6389
    %v6391 = vpop.f32.mrb[0].mxu0
    %6392 = vdwg.mxu0
    %v6394 = vsel %vm2183, %v4597, 0
    %v6397 = vsel %vm2183, %v5250, 0
    %6399 = vmatprep.subr.mxu0 0.0
    %6400 = vmatpush1.xpose.msra.mxu0 %v6397
    %6401 = vmatprep.subr.mxu0 0.0
    %6402 = vmatpush1.xpose.msra.mxu0 0.0
    %6403 = vmatprep.subr.mxu0 0.0
    %6404 = vmatpush1.xpose.msra.mxu0 0.0
    %6405 = vmatprep.subr.mxu0 0.0
    %6406 = vmatpush1.xpose.msra.mxu0 0.0
    %6407 = vmatprep.subr.mxu0 0.0
    %6408 = vmatpush1.xpose.msra.mxu0 0.0
    %6409 = vmatprep.subr.mxu0 0.0
    %6410 = vmatpush1.xpose.msra.mxu0 0.0
    %6411 = vmatprep.subr.mxu0 0.0
    %6412 = vmatpush1.xpose.msra.mxu0 0.0
    %6413 = vmatprep.subr.mxu0 0.0
    %6414 = vmatpush1.xpose.msra.mxu0 0.0
    %6415 = vmatprep.subr.mxu0 0.0
    %6416 = vmatpush1.xpose.msra.mxu0 0.0
    %6417 = vmatprep.subr.mxu0 0.0
    %6418 = vmatpush1.xpose.msra.mxu0 0.0
    %6419 = vmatprep.subr.mxu0 0.0
    %6420 = vmatpush1.xpose.msra.mxu0 0.0
    %6421 = vmatprep.subr.mxu0 0.0
    %6422 = vmatpush1.xpose.msra.mxu0 0.0
    %6423 = vmatprep.subr.mxu0 0.0
    %6424 = vmatpush1.xpose.msra.mxu0 0.0
    %6425 = vmatprep.subr.mxu0 0.0
    %6426 = vmatpush1.xpose.msra.mxu0 0.0
    %6427 = vmatprep.subr.mxu0 0.0
    %6428 = vmatpush1.xpose.msra.mxu0 0.0
    %6429 = vmatprep.subr.mxu0 0.0
    %6430 = vmatpush1.xpose.msra.mxu0 0.0
    %6431 = vmatprep.subr.mxu0 0.0
    %6432 = vmatpush1.xpose.msra.mxu0 0.0
    %6433 = vmatprep.subr.mxu0 0.0
    %6434 = vmatpush1.xpose.msra.mxu0 0.0
    %6435 = vmatprep.subr.mxu0 0.0
    %6436 = vmatpush1.xpose.msra.mxu0 0.0
    %6437 = vmatprep.subr.mxu0 0.0
    %6438 = vmatpush1.xpose.msra.mxu0 0.0
    %6439 = vmatprep.subr.mxu0 0.0
    %6440 = vmatpush1.xpose.msra.mxu0 0.0
    %6441 = vmatprep.subr.mxu0 0.0
    %6442 = vmatpush1.xpose.msra.mxu0 0.0
    %6443 = vmatprep.subr.mxu0 0.0
    %6444 = vmatpush1.xpose.msra.mxu0 0.0
    %6445 = vmatprep.subr.mxu0 0.0
    %6446 = vmatpush1.xpose.msra.mxu0 0.0
    %6447 = vmatprep.subr.mxu0 0.0
    %6448 = vmatpush1.xpose.msra.mxu0 0.0
    %6449 = vmatprep.subr.mxu0 0.0
    %6450 = vmatpush1.xpose.msra.mxu0 0.0
    %6451 = vmatprep.subr.mxu0 0.0
    %6452 = vmatpush1.xpose.msra.mxu0 0.0
    %6453 = vmatprep.subr.mxu0 0.0
    %6454 = vmatpush1.xpose.msra.mxu0 0.0
    %6455 = vmatprep.subr.mxu0 0.0
    %6456 = vmatpush1.xpose.msra.mxu0 0.0
    %6457 = vmatprep.subr.mxu0 0.0
    %6458 = vmatpush1.xpose.msra.mxu0 0.0
    %6459 = vmatprep.subr.mxu0 0.0
    %6460 = vmatpush1.xpose.msra.mxu0 0.0
    %6461 = vmatprep.subr.mxu0 0.0
    %6462 = vmatpush1.xpose.msra.mxu0 0.0
    %6463 = vmatprep.mubr.f32.mxu0 0.0
    %6464 = vmatmul.mubr.f32.gmra.mrb[0].mxu0 %v6394
    %v6465 = vpop.f32.mrb[0].mxu0
    %v6466 = vadd.f32 0.0, %v6465
    %v6467 = vpop.f32.mrb[0].mxu0
    %6468 = vdwg.mxu0
    %v6470 = vsel %vm2183, %v4667, 0
    %v6473 = vsel %vm2183, %v5320, 0
    %6475 = vmatprep.subr.mxu0 0.0
    %6476 = vmatpush1.xpose.msra.mxu0 %v6473
    %6477 = vmatprep.subr.mxu0 0.0
    %6478 = vmatpush1.xpose.msra.mxu0 0.0
    %6479 = vmatprep.subr.mxu0 0.0
    %6480 = vmatpush1.xpose.msra.mxu0 0.0
    %6481 = vmatprep.subr.mxu0 0.0
    %6482 = vmatpush1.xpose.msra.mxu0 0.0
    %6483 = vmatprep.subr.mxu0 0.0
    %6484 = vmatpush1.xpose.msra.mxu0 0.0
    %6485 = vmatprep.subr.mxu0 0.0
    %6486 = vmatpush1.xpose.msra.mxu0 0.0
    %6487 = vmatprep.subr.mxu0 0.0
    %6488 = vmatpush1.xpose.msra.mxu0 0.0
    %6489 = vmatprep.subr.mxu0 0.0
    %6490 = vmatpush1.xpose.msra.mxu0 0.0
    %6491 = vmatprep.subr.mxu0 0.0
    %6492 = vmatpush1.xpose.msra.mxu0 0.0
    %6493 = vmatprep.subr.mxu0 0.0
    %6494 = vmatpush1.xpose.msra.mxu0 0.0
    %6495 = vmatprep.subr.mxu0 0.0
    %6496 = vmatpush1.xpose.msra.mxu0 0.0
    %6497 = vmatprep.subr.mxu0 0.0
    %6498 = vmatpush1.xpose.msra.mxu0 0.0
    %6499 = vmatprep.subr.mxu0 0.0
    %6500 = vmatpush1.xpose.msra.mxu0 0.0
    %6501 = vmatprep.subr.mxu0 0.0
    %6502 = vmatpush1.xpose.msra.mxu0 0.0
    %6503 = vmatprep.subr.mxu0 0.0
    %6504 = vmatpush1.xpose.msra.mxu0 0.0
    %6505 = vmatprep.subr.mxu0 0.0
    %6506 = vmatpush1.xpose.msra.mxu0 0.0
    %6507 = vmatprep.subr.mxu0 0.0
    %6508 = vmatpush1.xpose.msra.mxu0 0.0
    %6509 = vmatprep.subr.mxu0 0.0
    %6510 = vmatpush1.xpose.msra.mxu0 0.0
    %6511 = vmatprep.subr.mxu0 0.0
    %6512 = vmatpush1.xpose.msra.mxu0 0.0
    %6513 = vmatprep.subr.mxu0 0.0
    %6514 = vmatpush1.xpose.msra.mxu0 0.0
    %6515 = vmatprep.subr.mxu0 0.0
    %6516 = vmatpush1.xpose.msra.mxu0 0.0
    %6517 = vmatprep.subr.mxu0 0.0
    %6518 = vmatpush1.xpose.msra.mxu0 0.0
    %6519 = vmatprep.subr.mxu0 0.0
    %6520 = vmatpush1.xpose.msra.mxu0 0.0
    %6521 = vmatprep.subr.mxu0 0.0
    %6522 = vmatpush1.xpose.msra.mxu0 0.0
    %6523 = vmatprep.subr.mxu0 0.0
    %6524 = vmatpush1.xpose.msra.mxu0 0.0
    %6525 = vmatprep.subr.mxu0 0.0
    %6526 = vmatpush1.xpose.msra.mxu0 0.0
    %6527 = vmatprep.subr.mxu0 0.0
    %6528 = vmatpush1.xpose.msra.mxu0 0.0
    %6529 = vmatprep.subr.mxu0 0.0
    %6530 = vmatpush1.xpose.msra.mxu0 0.0
    %6531 = vmatprep.subr.mxu0 0.0
    %6532 = vmatpush1.xpose.msra.mxu0 0.0
    %6533 = vmatprep.subr.mxu0 0.0
    %6534 = vmatpush1.xpose.msra.mxu0 0.0
    %6535 = vmatprep.subr.mxu0 0.0
    %6536 = vmatpush1.xpose.msra.mxu0 0.0
    %6537 = vmatprep.subr.mxu0 0.0
    %6538 = vmatpush1.xpose.msra.mxu0 0.0
    %6539 = vmatprep.mubr.f32.mxu0 0.0
    %6540 = vmatmul.mubr.f32.gmra.mrb[0].mxu0 %v6470
    %v6541 = vpop.f32.mrb[0].mxu0
    %v6542 = vadd.f32 0.0, %v6541
    %v6543 = vpop.f32.mrb[0].mxu0
    %6544 = vdwg.mxu0
    %v6546 = vsel %vm2183, %v4737, 0
    %v6549 = vsel %vm2183, %v5390, 0
    %6551 = vmatprep.subr.mxu0 0.0
    %6552 = vmatpush1.xpose.msra.mxu0 %v6549
    %6553 = vmatprep.subr.mxu0 0.0
    %6554 = vmatpush1.xpose.msra.mxu0 0.0
    %6555 = vmatprep.subr.mxu0 0.0
    %6556 = vmatpush1.xpose.msra.mxu0 0.0
    %6557 = vmatprep.subr.mxu0 0.0
    %6558 = vmatpush1.xpose.msra.mxu0 0.0
    %6559 = vmatprep.subr.mxu0 0.0
    %6560 = vmatpush1.xpose.msra.mxu0 0.0
    %6561 = vmatprep.subr.mxu0 0.0
    %6562 = vmatpush1.xpose.msra.mxu0 0.0
    %6563 = vmatprep.subr.mxu0 0.0
    %6564 = vmatpush1.xpose.msra.mxu0 0.0
    %6565 = vmatprep.subr.mxu0 0.0
    %6566 = vmatpush1.xpose.msra.mxu0 0.0
    %6567 = vmatprep.subr.mxu0 0.0
    %6568 = vmatpush1.xpose.msra.mxu0 0.0
    %6569 = vmatprep.subr.mxu0 0.0
    %6570 = vmatpush1.xpose.msra.mxu0 0.0
    %6571 = vmatprep.subr.mxu0 0.0
    %6572 = vmatpush1.xpose.msra.mxu0 0.0
    %6573 = vmatprep.subr.mxu0 0.0
    %6574 = vmatpush1.xpose.msra.mxu0 0.0
    %6575 = vmatprep.subr.mxu0 0.0
    %6576 = vmatpush1.xpose.msra.mxu0 0.0
    %6577 = vmatprep.subr.mxu0 0.0
    %6578 = vmatpush1.xpose.msra.mxu0 0.0
    %6579 = vmatprep.subr.mxu0 0.0
    %6580 = vmatpush1.xpose.msra.mxu0 0.0
    %6581 = vmatprep.subr.mxu0 0.0
    %6582 = vmatpush1.xpose.msra.mxu0 0.0
    %6583 = vmatprep.subr.mxu0 0.0
    %6584 = vmatpush1.xpose.msra.mxu0 0.0
    %6585 = vmatprep.subr.mxu0 0.0
    %6586 = vmatpush1.xpose.msra.mxu0 0.0
    %6587 = vmatprep.subr.mxu0 0.0
    %6588 = vmatpush1.xpose.msra.mxu0 0.0
    %6589 = vmatprep.subr.mxu0 0.0
    %6590 = vmatpush1.xpose.msra.mxu0 0.0
    %6591 = vmatprep.subr.mxu0 0.0
    %6592 = vmatpush1.xpose.msra.mxu0 0.0
    %6593 = vmatprep.subr.mxu0 0.0
    %6594 = vmatpush1.xpose.msra.mxu0 0.0
    %6595 = vmatprep.subr.mxu0 0.0
    %6596 = vmatpush1.xpose.msra.mxu0 0.0
    %6597 = vmatprep.subr.mxu0 0.0
    %6598 = vmatpush1.xpose.msra.mxu0 0.0
    %6599 = vmatprep.subr.mxu0 0.0
    %6600 = vmatpush1.xpose.msra.mxu0 0.0
    %6601 = vmatprep.subr.mxu0 0.0
    %6602 = vmatpush1.xpose.msra.mxu0 0.0
    %6603 = vmatprep.subr.mxu0 0.0
    %6604 = vmatpush1.xpose.msra.mxu0 0.0
    %6605 = vmatprep.subr.mxu0 0.0
    %6606 = vmatpush1.xpose.msra.mxu0 0.0
    %6607 = vmatprep.subr.mxu0 0.0
    %6608 = vmatpush1.xpose.msra.mxu0 0.0
    %6609 = vmatprep.subr.mxu0 0.0
    %6610 = vmatpush1.xpose.msra.mxu0 0.0
    %6611 = vmatprep.subr.mxu0 0.0
    %6612 = vmatpush1.xpose.msra.mxu0 0.0
    %6613 = vmatprep.subr.mxu0 0.0
    %6614 = vmatpush1.xpose.msra.mxu0 0.0
    %6615 = vmatprep.mubr.f32.mxu0 0.0
    %6616 = vmatmul.mubr.f32.gmra.mrb[0].mxu0 %v6546
    %v6617 = vpop.f32.mrb[0].mxu0
    %v6618 = vadd.f32 0.0, %v6617
    %v6619 = vpop.f32.mrb[0].mxu0
    %6620 = vdwg.mxu0
    %v6622 = vsel %vm2183, %v4807, 0
    %v6625 = vsel %vm2183, %v5460, 0
    %6627 = vmatprep.subr.mxu0 0.0
    %6628 = vmatpush1.xpose.msra.mxu0 %v6625
    %6629 = vmatprep.subr.mxu0 0.0
    %6630 = vmatpush1.xpose.msra.mxu0 0.0
    %6631 = vmatprep.subr.mxu0 0.0
    %6632 = vmatpush1.xpose.msra.mxu0 0.0
    %6633 = vmatprep.subr.mxu0 0.0
    %6634 = vmatpush1.xpose.msra.mxu0 0.0
    %6635 = vmatprep.subr.mxu0 0.0
    %6636 = vmatpush1.xpose.msra.mxu0 0.0
    %6637 = vmatprep.subr.mxu0 0.0
    %6638 = vmatpush1.xpose.msra.mxu0 0.0
    %6639 = vmatprep.subr.mxu0 0.0
    %6640 = vmatpush1.xpose.msra.mxu0 0.0
    %6641 = vmatprep.subr.mxu0 0.0
    %6642 = vmatpush1.xpose.msra.mxu0 0.0
    %6643 = vmatprep.subr.mxu0 0.0
    %6644 = vmatpush1.xpose.msra.mxu0 0.0
    %6645 = vmatprep.subr.mxu0 0.0
    %6646 = vmatpush1.xpose.msra.mxu0 0.0
    %6647 = vmatprep.subr.mxu0 0.0
    %6648 = vmatpush1.xpose.msra.mxu0 0.0
    %6649 = vmatprep.subr.mxu0 0.0
    %6650 = vmatpush1.xpose.msra.mxu0 0.0
    %6651 = vmatprep.subr.mxu0 0.0
    %6652 = vmatpush1.xpose.msra.mxu0 0.0
    %6653 = vmatprep.subr.mxu0 0.0
    %6654 = vmatpush1.xpose.msra.mxu0 0.0
    %6655 = vmatprep.subr.mxu0 0.0
    %6656 = vmatpush1.xpose.msra.mxu0 0.0
    %6657 = vmatprep.subr.mxu0 0.0
    %6658 = vmatpush1.xpose.msra.mxu0 0.0
    %6659 = vmatprep.subr.mxu0 0.0
    %6660 = vmatpush1.xpose.msra.mxu0 0.0
    %6661 = vmatprep.subr.mxu0 0.0
    %6662 = vmatpush1.xpose.msra.mxu0 0.0
    %6663 = vmatprep.subr.mxu0 0.0
    %6664 = vmatpush1.xpose.msra.mxu0 0.0
    %6665 = vmatprep.subr.mxu0 0.0
    %6666 = vmatpush1.xpose.msra.mxu0 0.0
    %6667 = vmatprep.subr.mxu0 0.0
    %6668 = vmatpush1.xpose.msra.mxu0 0.0
    %6669 = vmatprep.subr.mxu0 0.0
    %6670 = vmatpush1.xpose.msra.mxu0 0.0
    %6671 = vmatprep.subr.mxu0 0.0
    %6672 = vmatpush1.xpose.msra.mxu0 0.0
    %6673 = vmatprep.subr.mxu0 0.0
    %6674 = vmatpush1.xpose.msra.mxu0 0.0
    %6675 = vmatprep.subr.mxu0 0.0
    %6676 = vmatpush1.xpose.msra.mxu0 0.0
    %6677 = vmatprep.subr.mxu0 0.0
    %6678 = vmatpush1.xpose.msra.mxu0 0.0
    %6679 = vmatprep.subr.mxu0 0.0
    %6680 = vmatpush1.xpose.msra.mxu0 0.0
    %6681 = vmatprep.subr.mxu0 0.0
    %6682 = vmatpush1.xpose.msra.mxu0 0.0
    %6683 = vmatprep.subr.mxu0 0.0
    %6684 = vmatpush1.xpose.msra.mxu0 0.0
    %6685 = vmatprep.subr.mxu0 0.0
    %6686 = vmatpush1.xpose.msra.mxu0 0.0
    %6687 = vmatprep.subr.mxu0 0.0
    %6688 = vmatpush1.xpose.msra.mxu0 0.0
    %6689 = vmatprep.subr.mxu0 0.0
    %6690 = vmatpush1.xpose.msra.mxu0 0.0
    %6691 = vmatprep.mubr.f32.mxu0 0.0
    %6692 = vmatmul.mubr.f32.gmra.mrb[0].mxu0 %v6622
    %v6693 = vpop.f32.mrb[0].mxu0
    %v6694 = vadd.f32 0.0, %v6693
    %v6695 = vpop.f32.mrb[0].mxu0
    %6696 = vdwg.mxu0
    %v6698 = vsel %vm2183, %v4880, 0
    %v6701 = vsel %vm2183, %v5530, 0
    %6703 = vmatprep.subr.mxu0 0.0
    %6704 = vmatpush1.xpose.msra.mxu0 %v6701
    %6705 = vmatprep.subr.mxu0 0.0
    %6706 = vmatpush1.xpose.msra.mxu0 0.0
    %6707 = vmatprep.subr.mxu0 0.0
    %6708 = vmatpush1.xpose.msra.mxu0 0.0
    %6709 = vmatprep.subr.mxu0 0.0
    %6710 = vmatpush1.xpose.msra.mxu0 0.0
    %6711 = vmatprep.subr.mxu0 0.0
    %6712 = vmatpush1.xpose.msra.mxu0 0.0
    %6713 = vmatprep.subr.mxu0 0.0
    %6714 = vmatpush1.xpose.msra.mxu0 0.0
    %6715 = vmatprep.subr.mxu0 0.0
    %6716 = vmatpush1.xpose.msra.mxu0 0.0
    %6717 = vmatprep.subr.mxu0 0.0
    %6718 = vmatpush1.xpose.msra.mxu0 0.0
    %6719 = vmatprep.subr.mxu0 0.0
    %6720 = vmatpush1.xpose.msra.mxu0 0.0
    %6721 = vmatprep.subr.mxu0 0.0
    %6722 = vmatpush1.xpose.msra.mxu0 0.0
    %6723 = vmatprep.subr.mxu0 0.0
    %6724 = vmatpush1.xpose.msra.mxu0 0.0
    %6725 = vmatprep.subr.mxu0 0.0
    %6726 = vmatpush1.xpose.msra.mxu0 0.0
    %6727 = vmatprep.subr.mxu0 0.0
    %6728 = vmatpush1.xpose.msra.mxu0 0.0
    %6729 = vmatprep.subr.mxu0 0.0
    %6730 = vmatpush1.xpose.msra.mxu0 0.0
    %6731 = vmatprep.subr.mxu0 0.0
    %6732 = vmatpush1.xpose.msra.mxu0 0.0
    %6733 = vmatprep.subr.mxu0 0.0
    %6734 = vmatpush1.xpose.msra.mxu0 0.0
    %6735 = vmatprep.subr.mxu0 0.0
    %6736 = vmatpush1.xpose.msra.mxu0 0.0
    %6737 = vmatprep.subr.mxu0 0.0
    %6738 = vmatpush1.xpose.msra.mxu0 0.0
    %6739 = vmatprep.subr.mxu0 0.0
    %6740 = vmatpush1.xpose.msra.mxu0 0.0
    %6741 = vmatprep.subr.mxu0 0.0
    %6742 = vmatpush1.xpose.msra.mxu0 0.0
    %6743 = vmatprep.subr.mxu0 0.0
    %6744 = vmatpush1.xpose.msra.mxu0 0.0
    %6745 = vmatprep.subr.mxu0 0.0
    %6746 = vmatpush1.xpose.msra.mxu0 0.0
    %6747 = vmatprep.subr.mxu0 0.0
    %6748 = vmatpush1.xpose.msra.mxu0 0.0
    %6749 = vmatprep.subr.mxu0 0.0
    %6750 = vmatpush1.xpose.msra.mxu0 0.0
    %6751 = vmatprep.subr.mxu0 0.0
    %6752 = vmatpush1.xpose.msra.mxu0 0.0
    %6753 = vmatprep.subr.mxu0 0.0
    %6754 = vmatpush1.xpose.msra.mxu0 0.0
    %6755 = vmatprep.subr.mxu0 0.0
    %6756 = vmatpush1.xpose.msra.mxu0 0.0
    %6757 = vmatprep.subr.mxu0 0.0
    %6758 = vmatpush1.xpose.msra.mxu0 0.0
    %6759 = vmatprep.subr.mxu0 0.0
    %6760 = vmatpush1.xpose.msra.mxu0 0.0
    %6761 = vmatprep.subr.mxu0 0.0
    %6762 = vmatpush1.xpose.msra.mxu0 0.0
    %6763 = vmatprep.subr.mxu0 0.0
    %6764 = vmatpush1.xpose.msra.mxu0 0.0
    %6765 = vmatprep.subr.mxu0 0.0
    %6766 = vmatpush1.xpose.msra.mxu0 0.0
    %6767 = vmatprep.mubr.f32.mxu0 0.0
    %6768 = vmatmul.mubr.f32.gmra.mrb[0].mxu0 %v6698
    %v6769 = vpop.f32.mrb[0].mxu0
    %v6770 = vadd.f32 0.0, %v6769
    %v6771 = vpop.f32.mrb[0].mxu0
    %6772 = vdwg.mxu0
    %v6774 = vsel %vm2183, %v4950, 0
    %v6777 = vsel %vm2183, %v5600, 0
    %6779 = vmatprep.subr.mxu0 0.0
    %6780 = vmatpush1.xpose.msra.mxu0 %v6777
    %6781 = vmatprep.subr.mxu0 0.0
    %6782 = vmatpush1.xpose.msra.mxu0 0.0
    %6783 = vmatprep.subr.mxu0 0.0
    %6784 = vmatpush1.xpose.msra.mxu0 0.0
    %6785 = vmatprep.subr.mxu0 0.0
    %6786 = vmatpush1.xpose.msra.mxu0 0.0
    %6787 = vmatprep.subr.mxu0 0.0
    %6788 = vmatpush1.xpose.msra.mxu0 0.0
    %6789 = vmatprep.subr.mxu0 0.0
    %6790 = vmatpush1.xpose.msra.mxu0 0.0
    %6791 = vmatprep.subr.mxu0 0.0
    %6792 = vmatpush1.xpose.msra.mxu0 0.0
    %6793 = vmatprep.subr.mxu0 0.0
    %6794 = vmatpush1.xpose.msra.mxu0 0.0
    %6795 = vmatprep.subr.mxu0 0.0
    %6796 = vmatpush1.xpose.msra.mxu0 0.0
    %6797 = vmatprep.subr.mxu0 0.0
    %6798 = vmatpush1.xpose.msra.mxu0 0.0
    %6799 = vmatprep.subr.mxu0 0.0
    %6800 = vmatpush1.xpose.msra.mxu0 0.0
    %6801 = vmatprep.subr.mxu0 0.0
    %6802 = vmatpush1.xpose.msra.mxu0 0.0
    %6803 = vmatprep.subr.mxu0 0.0
    %6804 = vmatpush1.xpose.msra.mxu0 0.0
    %6805 = vmatprep.subr.mxu0 0.0
    %6806 = vmatpush1.xpose.msra.mxu0 0.0
    %6807 = vmatprep.subr.mxu0 0.0
    %6808 = vmatpush1.xpose.msra.mxu0 0.0
    %6809 = vmatprep.subr.mxu0 0.0
    %6810 = vmatpush1.xpose.msra.mxu0 0.0
    %6811 = vmatprep.subr.mxu0 0.0
    %6812 = vmatpush1.xpose.msra.mxu0 0.0
    %6813 = vmatprep.subr.mxu0 0.0
    %6814 = vmatpush1.xpose.msra.mxu0 0.0
    %6815 = vmatprep.subr.mxu0 0.0
    %6816 = vmatpush1.xpose.msra.mxu0 0.0
    %6817 = vmatprep.subr.mxu0 0.0
    %6818 = vmatpush1.xpose.msra.mxu0 0.0
    %6819 = vmatprep.subr.mxu0 0.0
    %6820 = vmatpush1.xpose.msra.mxu0 0.0
    %6821 = vmatprep.subr.mxu0 0.0
    %6822 = vmatpush1.xpose.msra.mxu0 0.0
    %6823 = vmatprep.subr.mxu0 0.0
    %6824 = vmatpush1.xpose.msra.mxu0 0.0
    %6825 = vmatprep.subr.mxu0 0.0
    %6826 = vmatpush1.xpose.msra.mxu0 0.0
    %6827 = vmatprep.subr.mxu0 0.0
    %6828 = vmatpush1.xpose.msra.mxu0 0.0
    %6829 = vmatprep.subr.mxu0 0.0
    %6830 = vmatpush1.xpose.msra.mxu0 0.0
    %6831 = vmatprep.subr.mxu0 0.0
    %6832 = vmatpush1.xpose.msra.mxu0 0.0
    %6833 = vmatprep.subr.mxu0 0.0
    %6834 = vmatpush1.xpose.msra.mxu0 0.0
    %6835 = vmatprep.subr.mxu0 0.0
    %6836 = vmatpush1.xpose.msra.mxu0 0.0
    %6837 = vmatprep.subr.mxu0 0.0
    %6838 = vmatpush1.xpose.msra.mxu0 0.0
    %6839 = vmatprep.subr.mxu0 0.0
    %6840 = vmatpush1.xpose.msra.mxu0 0.0
    %6841 = vmatprep.subr.mxu0 0.0
    %6842 = vmatpush1.xpose.msra.mxu0 0.0
    %6843 = vmatprep.mubr.f32.mxu0 0.0
    %6844 = vmatmul.mubr.f32.gmra.mrb[0].mxu0 %v6774
    %v6845 = vpop.f32.mrb[0].mxu0
    %v6846 = vadd.f32 0.0, %v6845
    %v6847 = vpop.f32.mrb[0].mxu0
    %6848 = vdwg.mxu0
    %v6850 = vsel %vm2183, %v5020, 0
    %v6853 = vsel %vm2183, %v5670, 0
    %6855 = vmatprep.subr.mxu0 0.0
    %6856 = vmatpush1.xpose.msra.mxu0 %v6853
    %6857 = vmatprep.subr.mxu0 0.0
    %6858 = vmatpush1.xpose.msra.mxu0 0.0
    %6859 = vmatprep.subr.mxu0 0.0
    %6860 = vmatpush1.xpose.msra.mxu0 0.0
    %6861 = vmatprep.subr.mxu0 0.0
    %6862 = vmatpush1.xpose.msra.mxu0 0.0
    %6863 = vmatprep.subr.mxu0 0.0
    %6864 = vmatpush1.xpose.msra.mxu0 0.0
    %6865 = vmatprep.subr.mxu0 0.0
    %6866 = vmatpush1.xpose.msra.mxu0 0.0
    %6867 = vmatprep.subr.mxu0 0.0
    %6868 = vmatpush1.xpose.msra.mxu0 0.0
    %6869 = vmatprep.subr.mxu0 0.0
    %6870 = vmatpush1.xpose.msra.mxu0 0.0
    %6871 = vmatprep.subr.mxu0 0.0
    %6872 = vmatpush1.xpose.msra.mxu0 0.0
    %6873 = vmatprep.subr.mxu0 0.0
    %6874 = vmatpush1.xpose.msra.mxu0 0.0
    %6875 = vmatprep.subr.mxu0 0.0
    %6876 = vmatpush1.xpose.msra.mxu0 0.0
    %6877 = vmatprep.subr.mxu0 0.0
    %6878 = vmatpush1.xpose.msra.mxu0 0.0
    %6879 = vmatprep.subr.mxu0 0.0
    %6880 = vmatpush1.xpose.msra.mxu0 0.0
    %6881 = vmatprep.subr.mxu0 0.0
    %6882 = vmatpush1.xpose.msra.mxu0 0.0
    %6883 = vmatprep.subr.mxu0 0.0
    %6884 = vmatpush1.xpose.msra.mxu0 0.0
    %6885 = vmatprep.subr.mxu0 0.0
    %6886 = vmatpush1.xpose.msra.mxu0 0.0
    %6887 = vmatprep.subr.mxu0 0.0
    %6888 = vmatpush1.xpose.msra.mxu0 0.0
    %6889 = vmatprep.subr.mxu0 0.0
    %6890 = vmatpush1.xpose.msra.mxu0 0.0
    %6891 = vmatprep.subr.mxu0 0.0
    %6892 = vmatpush1.xpose.msra.mxu0 0.0
    %6893 = vmatprep.subr.mxu0 0.0
    %6894 = vmatpush1.xpose.msra.mxu0 0.0
    %6895 = vmatprep.subr.mxu0 0.0
    %6896 = vmatpush1.xpose.msra.mxu0 0.0
    %6897 = vmatprep.subr.mxu0 0.0
    %6898 = vmatpush1.xpose.msra.mxu0 0.0
    %6899 = vmatprep.subr.mxu0 0.0
    %6900 = vmatpush1.xpose.msra.mxu0 0.0
    %6901 = vmatprep.subr.mxu0 0.0
    %6902 = vmatpush1.xpose.msra.mxu0 0.0
    %6903 = vmatprep.subr.mxu0 0.0
    %6904 = vmatpush1.xpose.msra.mxu0 0.0
    %6905 = vmatprep.subr.mxu0 0.0
    %6906 = vmatpush1.xpose.msra.mxu0 0.0
    %6907 = vmatprep.subr.mxu0 0.0
    %6908 = vmatpush1.xpose.msra.mxu0 0.0
    %6909 = vmatprep.subr.mxu0 0.0
    %6910 = vmatpush1.xpose.msra.mxu0 0.0
    %6911 = vmatprep.subr.mxu0 0.0
    %6912 = vmatpush1.xpose.msra.mxu0 0.0
    %6913 = vmatprep.subr.mxu0 0.0
    %6914 = vmatpush1.xpose.msra.mxu0 0.0
    %6915 = vmatprep.subr.mxu0 0.0
    %6916 = vmatpush1.xpose.msra.mxu0 0.0
    %6917 = vmatprep.subr.mxu0 0.0
    %6918 = vmatpush1.xpose.msra.mxu0 0.0
    %6919 = vmatprep.mubr.f32.mxu0 0.0
    %6920 = vmatmul.mubr.f32.gmra.mrb[0].mxu0 %v6850
    %v6921 = vpop.f32.mrb[0].mxu0
    %v6922 = vadd.f32 0.0, %v6921
    %v6923 = vpop.f32.mrb[0].mxu0
    %6924 = vdwg.mxu0
    %v6926 = vsel %vm2183, %v5090, 0
    %v6929 = vsel %vm2183, %v5740, 0
    %6931 = vmatprep.subr.mxu0 0.0
    %6932 = vmatpush1.xpose.msra.mxu0 %v6929
    %6933 = vmatprep.subr.mxu0 0.0
    %6934 = vmatpush1.xpose.msra.mxu0 0.0
    %6935 = vmatprep.subr.mxu0 0.0
    %6936 = vmatpush1.xpose.msra.mxu0 0.0
    %6937 = vmatprep.subr.mxu0 0.0
    %6938 = vmatpush1.xpose.msra.mxu0 0.0
    %6939 = vmatprep.subr.mxu0 0.0
    %6940 = vmatpush1.xpose.msra.mxu0 0.0
    %6941 = vmatprep.subr.mxu0 0.0
    %6942 = vmatpush1.xpose.msra.mxu0 0.0
    %6943 = vmatprep.subr.mxu0 0.0
    %6944 = vmatpush1.xpose.msra.mxu0 0.0
    %6945 = vmatprep.subr.mxu0 0.0
    %6946 = vmatpush1.xpose.msra.mxu0 0.0
    %6947 = vmatprep.subr.mxu0 0.0
    %6948 = vmatpush1.xpose.msra.mxu0 0.0
    %6949 = vmatprep.subr.mxu0 0.0
    %6950 = vmatpush1.xpose.msra.mxu0 0.0
    %6951 = vmatprep.subr.mxu0 0.0
    %6952 = vmatpush1.xpose.msra.mxu0 0.0
    %6953 = vmatprep.subr.mxu0 0.0
    %6954 = vmatpush1.xpose.msra.mxu0 0.0
    %6955 = vmatprep.subr.mxu0 0.0
    %6956 = vmatpush1.xpose.msra.mxu0 0.0
    %6957 = vmatprep.subr.mxu0 0.0
    %6958 = vmatpush1.xpose.msra.mxu0 0.0
    %6959 = vmatprep.subr.mxu0 0.0
    %6960 = vmatpush1.xpose.msra.mxu0 0.0
    %6961 = vmatprep.subr.mxu0 0.0
    %6962 = vmatpush1.xpose.msra.mxu0 0.0
    %6963 = vmatprep.subr.mxu0 0.0
    %6964 = vmatpush1.xpose.msra.mxu0 0.0
    %6965 = vmatprep.subr.mxu0 0.0
    %6966 = vmatpush1.xpose.msra.mxu0 0.0
    %6967 = vmatprep.subr.mxu0 0.0
    %6968 = vmatpush1.xpose.msra.mxu0 0.0
    %6969 = vmatprep.subr.mxu0 0.0
    %6970 = vmatpush1.xpose.msra.mxu0 0.0
    %6971 = vmatprep.subr.mxu0 0.0
    %6972 = vmatpush1.xpose.msra.mxu0 0.0
    %6973 = vmatprep.subr.mxu0 0.0
    %6974 = vmatpush1.xpose.msra.mxu0 0.0
    %6975 = vmatprep.subr.mxu0 0.0
    %6976 = vmatpush1.xpose.msra.mxu0 0.0
    %6977 = vmatprep.subr.mxu0 0.0
    %6978 = vmatpush1.xpose.msra.mxu0 0.0
    %6979 = vmatprep.subr.mxu0 0.0
    %6980 = vmatpush1.xpose.msra.mxu0 0.0
    %6981 = vmatprep.subr.mxu0 0.0
    %6982 = vmatpush1.xpose.msra.mxu0 0.0
    %6983 = vmatprep.subr.mxu0 0.0
    %6984 = vmatpush1.xpose.msra.mxu0 0.0
    %6985 = vmatprep.subr.mxu0 0.0
    %6986 = vmatpush1.xpose.msra.mxu0 0.0
    %6987 = vmatprep.subr.mxu0 0.0
    %6988 = vmatpush1.xpose.msra.mxu0 0.0
    %6989 = vmatprep.subr.mxu0 0.0
    %6990 = vmatpush1.xpose.msra.mxu0 0.0
    %6991 = vmatprep.subr.mxu0 0.0
    %6992 = vmatpush1.xpose.msra.mxu0 0.0
    %6993 = vmatprep.subr.mxu0 0.0
    %6994 = vmatpush1.xpose.msra.mxu0 0.0
    %6995 = vmatprep.mubr.f32.mxu0 0.0
    %6996 = vmatmul.mubr.f32.gmra.mrb[0].mxu0 %v6926
    %v6997 = vpop.f32.mrb[0].mxu0
    %v6998 = vadd.f32 0.0, %v6997
    %v6999 = vpop.f32.mrb[0].mxu0
    %7000 = vdwg.mxu0
    %v7001 = vmul.f32 %v6466, 0.35355338
    %v7002 = vmul.f32 %v6542, 0.35355338
    %v7003 = vmul.f32 %v6618, 0.35355338
    %v7004 = vmul.f32 %v6694, 0.35355338
    %v7005 = vmul.f32 %v6770, 0.35355338
    %v7006 = vmul.f32 %v6846, 0.35355338
    %v7007 = vmul.f32 %v6922, 0.35355338
    %v7008 = vmul.f32 %v6998, 0.35355338
    %v7009 = vadd.f32 %v7001, %v2811
    %v7010 = vadd.f32 %v7002, %v2815
    %v7011 = vadd.f32 %v7003, %v2819
    %v7012 = vadd.f32 %v7004, %v2823
    %v7013 = vadd.f32 %v7005, %v2827
    %v7014 = vadd.f32 %v7006, %v2831
    %v7015 = vadd.f32 %v7007, %v2835
    %v7016 = vadd.f32 %v7008, %v2839
    %v7017 = vsel %vm2183, %v7009, -inf
    %7018 = vmax.xlane.f32.xlu0 %v7017
    %v7019 = vpop.xlane.xlu0 %7018
    %v7020 = vsel %vm2183, %v7010, -inf
    %7021 = vmax.xlane.f32.xlu0 %v7020
    %v7022 = vpop.xlane.xlu0 %7021
    %v7023 = vsel %vm2183, %v7011, -inf
    %7024 = vmax.xlane.f32.xlu0 %v7023
    %v7025 = vpop.xlane.xlu0 %7024
    %v7026 = vsel %vm2183, %v7012, -inf
    %7027 = vmax.xlane.f32.xlu0 %v7026
    %v7028 = vpop.xlane.xlu0 %7027
    %v7029 = vsel %vm2183, %v7013, -inf
    %7030 = vmax.xlane.f32.xlu0 %v7029
    %v7031 = vpop.xlane.xlu0 %7030
    %v7032 = vsel %vm2183, %v7014, -inf
    %7033 = vmax.xlane.f32.xlu0 %v7032
    %v7034 = vpop.xlane.xlu0 %7033
    %v7035 = vsel %vm2183, %v7015, -inf
    %7036 = vmax.xlane.f32.xlu0 %v7035
    %v7037 = vpop.xlane.xlu0 %7036
    %v7038 = vsel %vm2183, %v7016, -inf
    %7039 = vmax.xlane.f32.xlu0 %v7038
    %v7040 = vpop.xlane.xlu0 %7039
    %v7041 = vsub.f32 %v7009, %v7019
    %v7042 = vsub.f32 %v7010, %v7022
    %v7043 = vsub.f32 %v7011, %v7025
    %v7044 = vsub.f32 %v7012, %v7028
    %v7045 = vsub.f32 %v7013, %v7031
    %v7046 = vsub.f32 %v7014, %v7034
    %v7047 = vsub.f32 %v7015, %v7037
    %v7048 = vsub.f32 %v7016, %v7040
    %v7049 = vmul.f32 %v7041, 1.442695
    %v7050 = vpow.pop %v7049
    %v7051 = vmul.f32 %v7042, 1.442695
    %v7052 = vpow.pop %v7051
    %v7053 = vmul.f32 %v7043, 1.442695
    %v7054 = vpow.pop %v7053
    %v7055 = vmul.f32 %v7044, 1.442695
    %v7056 = vpow.pop %v7055
    %v7057 = vmul.f32 %v7045, 1.442695
    %v7058 = vpow.pop %v7057
    %v7059 = vmul.f32 %v7046, 1.442695
    %v7060 = vpow.pop %v7059
    %v7061 = vmul.f32 %v7047, 1.442695
    %v7062 = vpow.pop %v7061
    %v7063 = vmul.f32 %v7048, 1.442695
    %v7064 = vpow.pop %v7063
    %v7065 = vsel %vm2183, %v7050, 0.0
    %7066 = vadd.xlane.f32.xlu0 %v7065
    %v7067 = vpop.xlane.xlu0 %7066
    %v7068 = vsel %vm2183, %v7052, 0.0
    %7069 = vadd.xlane.f32.xlu0 %v7068
    %v7070 = vpop.xlane.xlu0 %7069
    %v7071 = vsel %vm2183, %v7054, 0.0
    %7072 = vadd.xlane.f32.xlu0 %v7071
    %v7073 = vpop.xlane.xlu0 %7072
    %v7074 = vsel %vm2183, %v7056, 0.0
    %7075 = vadd.xlane.f32.xlu0 %v7074
    %v7076 = vpop.xlane.xlu0 %7075
    %v7077 = vsel %vm2183, %v7058, 0.0
    %7078 = vadd.xlane.f32.xlu0 %v7077
    %v7079 = vpop.xlane.xlu0 %7078
    %v7080 = vsel %vm2183, %v7060, 0.0
    %7081 = vadd.xlane.f32.xlu0 %v7080
    %v7082 = vpop.xlane.xlu0 %7081
    %v7083 = vsel %vm2183, %v7062, 0.0
    %7084 = vadd.xlane.f32.xlu0 %v7083
    %v7085 = vpop.xlane.xlu0 %7084
    %v7086 = vsel %vm2183, %v7064, 0.0
    %7087 = vadd.xlane.f32.xlu0 %v7086
    %v7088 = vpop.xlane.xlu0 %7087
    %v7089 = vrcp.pop %v7067
    %v7090 = vrcp.pop %v7070
    %v7091 = vrcp.pop %v7073
    %v7092 = vrcp.pop %v7076
    %v7093 = vrcp.pop %v7079
    %v7094 = vrcp.pop %v7082
    %v7095 = vrcp.pop %v7085
    %v7096 = vrcp.pop %v7088
    %v7097 = vmul.f32 %v7050, %v7089
    %v7098 = vmul.f32 %v7052, %v7090
    %v7099 = vmul.f32 %v7054, %v7091
    %v7100 = vmul.f32 %v7056, %v7092
    %v7101 = vmul.f32 %v7058, %v7093
    %v7102 = vmul.f32 %v7060, %v7094
    %v7103 = vmul.f32 %v7062, %v7095
    %v7104 = vmul.f32 %v7064, %v7096
    %v7106 = vsel %vm2183, %v7097, 0
    %7108 = vmatprep.subr.mxu0 0.0
    %7109 = vmatpush1.msra.mxu0 %v5900
    %7110 = vmatprep.subr.mxu0 0.0
    %7111 = vmatpush1.msra.mxu0 0.0
    %7112 = vmatprep.subr.mxu0 0.0
    %7113 = vmatpush1.msra.mxu0 0.0
    %7114 = vmatprep.subr.mxu0 0.0
    %7115 = vmatpush1.msra.mxu0 0.0
    %7116 = vmatprep.subr.mxu0 0.0
    %7117 = vmatpush1.msra.mxu0 0.0
    %7118 = vmatprep.subr.mxu0 0.0
    %7119 = vmatpush1.msra.mxu0 0.0
    %7120 = vmatprep.subr.mxu0 0.0
    %7121 = vmatpush1.msra.mxu0 0.0
    %7122 = vmatprep.subr.mxu0 0.0
    %7123 = vmatpush1.msra.mxu0 0.0
    %7124 = vmatprep.subr.mxu0 0.0
    %7125 = vmatpush1.msra.mxu0 0.0
    %7126 = vmatprep.subr.mxu0 0.0
    %7127 = vmatpush1.msra.mxu0 0.0
    %7128 = vmatprep.subr.mxu0 0.0
    %7129 = vmatpush1.msra.mxu0 0.0
    %7130 = vmatprep.subr.mxu0 0.0
    %7131 = vmatpush1.msra.mxu0 0.0
    %7132 = vmatprep.subr.mxu0 0.0
    %7133 = vmatpush1.msra.mxu0 0.0
    %7134 = vmatprep.subr.mxu0 0.0
    %7135 = vmatpush1.msra.mxu0 0.0
    %7136 = vmatprep.subr.mxu0 0.0
    %7137 = vmatpush1.msra.mxu0 0.0
    %7138 = vmatprep.subr.mxu0 0.0
    %7139 = vmatpush1.msra.mxu0 0.0
    %7140 = vmatprep.subr.mxu0 0.0
    %7141 = vmatpush1.msra.mxu0 0.0
    %7142 = vmatprep.subr.mxu0 0.0
    %7143 = vmatpush1.msra.mxu0 0.0
    %7144 = vmatprep.subr.mxu0 0.0
    %7145 = vmatpush1.msra.mxu0 0.0
    %7146 = vmatprep.subr.mxu0 0.0
    %7147 = vmatpush1.msra.mxu0 0.0
    %7148 = vmatprep.subr.mxu0 0.0
    %7149 = vmatpush1.msra.mxu0 0.0
    %7150 = vmatprep.subr.mxu0 0.0
    %7151 = vmatpush1.msra.mxu0 0.0
    %7152 = vmatprep.subr.mxu0 0.0
    %7153 = vmatpush1.msra.mxu0 0.0
    %7154 = vmatprep.subr.mxu0 0.0
    %7155 = vmatpush1.msra.mxu0 0.0
    %7156 = vmatprep.subr.mxu0 0.0
    %7157 = vmatpush1.msra.mxu0 0.0
    %7158 = vmatprep.subr.mxu0 0.0
    %7159 = vmatpush1.msra.mxu0 0.0
    %7160 = vmatprep.subr.mxu0 0.0
    %7161 = vmatpush1.msra.mxu0 0.0
    %7162 = vmatprep.subr.mxu0 0.0
    %7163 = vmatpush1.msra.mxu0 0.0
    %7164 = vmatprep.subr.mxu0 0.0
    %7165 = vmatpush1.msra.mxu0 0.0
    %7166 = vmatprep.subr.mxu0 0.0
    %7167 = vmatpush1.msra.mxu0 0.0
    %7168 = vmatprep.subr.mxu0 0.0
    %7169 = vmatpush1.msra.mxu0 0.0
    %7170 = vmatprep.subr.mxu0 0.0
    %7171 = vmatpush1.msra.mxu0 0.0
    %7172 = vmatprep.mubr.f32.mxu0 0.0
    %7173 = vmatmul.mubr.f32.gmra.mrb[0].mxu0 %v7106
    %v7174 = vpop.f32.mrb[0].mxu0
    %v7175 = vadd.f32 0.0, %v7174
    %v7176 = vpop.f32.mrb[0].mxu0
    %7177 = vdwg.mxu0
    %v7179 = vsel %vm2183, %v7098, 0
    %7181 = vmatprep.subr.mxu0 0.0
    %7182 = vmatpush1.msra.mxu0 %v5970
    %7183 = vmatprep.subr.mxu0 0.0
    %7184 = vmatpush1.msra.mxu0 0.0
    %7185 = vmatprep.subr.mxu0 0.0
    %7186 = vmatpush1.msra.mxu0 0.0
    %7187 = vmatprep.subr.mxu0 0.0
    %7188 = vmatpush1.msra.mxu0 0.0
    %7189 = vmatprep.subr.mxu0 0.0
    %7190 = vmatpush1.msra.mxu0 0.0
    %7191 = vmatprep.subr.mxu0 0.0
    %7192 = vmatpush1.msra.mxu0 0.0
    %7193 = vmatprep.subr.mxu0 0.0
    %7194 = vmatpush1.msra.mxu0 0.0
    %7195 = vmatprep.subr.mxu0 0.0
    %7196 = vmatpush1.msra.mxu0 0.0
    %7197 = vmatprep.subr.mxu0 0.0
    %7198 = vmatpush1.msra.mxu0 0.0
    %7199 = vmatprep.subr.mxu0 0.0
    %7200 = vmatpush1.msra.mxu0 0.0
    %7201 = vmatprep.subr.mxu0 0.0
    %7202 = vmatpush1.msra.mxu0 0.0
    %7203 = vmatprep.subr.mxu0 0.0
    %7204 = vmatpush1.msra.mxu0 0.0
    %7205 = vmatprep.subr.mxu0 0.0
    %7206 = vmatpush1.msra.mxu0 0.0
    %7207 = vmatprep.subr.mxu0 0.0
    %7208 = vmatpush1.msra.mxu0 0.0
    %7209 = vmatprep.subr.mxu0 0.0
    %7210 = vmatpush1.msra.mxu0 0.0
    %7211 = vmatprep.subr.mxu0 0.0
    %7212 = vmatpush1.msra.mxu0 0.0
    %7213 = vmatprep.subr.mxu0 0.0
    %7214 = vmatpush1.msra.mxu0 0.0
    %7215 = vmatprep.subr.mxu0 0.0
    %7216 = vmatpush1.msra.mxu0 0.0
    %7217 = vmatprep.subr.mxu0 0.0
    %7218 = vmatpush1.msra.mxu0 0.0
    %7219 = vmatprep.subr.mxu0 0.0
    %7220 = vmatpush1.msra.mxu0 0.0
    %7221 = vmatprep.subr.mxu0 0.0
    %7222 = vmatpush1.msra.mxu0 0.0
    %7223 = vmatprep.subr.mxu0 0.0
    %7224 = vmatpush1.msra.mxu0 0.0
    %7225 = vmatprep.subr.mxu0 0.0
    %7226 = vmatpush1.msra.mxu0 0.0
    %7227 = vmatprep.subr.mxu0 0.0
    %7228 = vmatpush1.msra.mxu0 0.0
    %7229 = vmatprep.subr.mxu0 0.0
    %7230 = vmatpush1.msra.mxu0 0.0
    %7231 = vmatprep.subr.mxu0 0.0
    %7232 = vmatpush1.msra.mxu0 0.0
    %7233 = vmatprep.subr.mxu0 0.0
    %7234 = vmatpush1.msra.mxu0 0.0
    %7235 = vmatprep.subr.mxu0 0.0
    %7236 = vmatpush1.msra.mxu0 0.0
    %7237 = vmatprep.subr.mxu0 0.0
    %7238 = vmatpush1.msra.mxu0 0.0
    %7239 = vmatprep.subr.mxu0 0.0
    %7240 = vmatpush1.msra.mxu0 0.0
    %7241 = vmatprep.subr.mxu0 0.0
    %7242 = vmatpush1.msra.mxu0 0.0
    %7243 = vmatprep.subr.mxu0 0.0
    %7244 = vmatpush1.msra.mxu0 0.0
    %7245 = vmatprep.mubr.f32.mxu0 0.0
    %7246 = vmatmul.mubr.f32.gmra.mrb[0].mxu0 %v7179
    %v7247 = vpop.f32.mrb[0].mxu0
    %v7248 = vadd.f32 0.0, %v7247
    %v7249 = vpop.f32.mrb[0].mxu0
    %7250 = vdwg.mxu0
    %v7252 = vsel %vm2183, %v7099, 0
    %7254 = vmatprep.subr.mxu0 0.0
    %7255 = vmatpush1.msra.mxu0 %v6040
    %7256 = vmatprep.subr.mxu0 0.0
    %7257 = vmatpush1.msra.mxu0 0.0
    %7258 = vmatprep.subr.mxu0 0.0
    %7259 = vmatpush1.msra.mxu0 0.0
    %7260 = vmatprep.subr.mxu0 0.0
    %7261 = vmatpush1.msra.mxu0 0.0
    %7262 = vmatprep.subr.mxu0 0.0
    %7263 = vmatpush1.msra.mxu0 0.0
    %7264 = vmatprep.subr.mxu0 0.0
    %7265 = vmatpush1.msra.mxu0 0.0
    %7266 = vmatprep.subr.mxu0 0.0
    %7267 = vmatpush1.msra.mxu0 0.0
    %7268 = vmatprep.subr.mxu0 0.0
    %7269 = vmatpush1.msra.mxu0 0.0
    %7270 = vmatprep.subr.mxu0 0.0
    %7271 = vmatpush1.msra.mxu0 0.0
    %7272 = vmatprep.subr.mxu0 0.0
    %7273 = vmatpush1.msra.mxu0 0.0
    %7274 = vmatprep.subr.mxu0 0.0
    %7275 = vmatpush1.msra.mxu0 0.0
    %7276 = vmatprep.subr.mxu0 0.0
    %7277 = vmatpush1.msra.mxu0 0.0
    %7278 = vmatprep.subr.mxu0 0.0
    %7279 = vmatpush1.msra.mxu0 0.0
    %7280 = vmatprep.subr.mxu0 0.0
    %7281 = vmatpush1.msra.mxu0 0.0
    %7282 = vmatprep.subr.mxu0 0.0
    %7283 = vmatpush1.msra.mxu0 0.0
    %7284 = vmatprep.subr.mxu0 0.0
    %7285 = vmatpush1.msra.mxu0 0.0
    %7286 = vmatprep.subr.mxu0 0.0
    %7287 = vmatpush1.msra.mxu0 0.0
    %7288 = vmatprep.subr.mxu0 0.0
    %7289 = vmatpush1.msra.mxu0 0.0
    %7290 = vmatprep.subr.mxu0 0.0
    %7291 = vmatpush1.msra.mxu0 0.0
    %7292 = vmatprep.subr.mxu0 0.0
    %7293 = vmatpush1.msra.mxu0 0.0
    %7294 = vmatprep.subr.mxu0 0.0
    %7295 = vmatpush1.msra.mxu0 0.0
    %7296 = vmatprep.subr.mxu0 0.0
    %7297 = vmatpush1.msra.mxu0 0.0
    %7298 = vmatprep.subr.mxu0 0.0
    %7299 = vmatpush1.msra.mxu0 0.0
    %7300 = vmatprep.subr.mxu0 0.0
    %7301 = vmatpush1.msra.mxu0 0.0
    %7302 = vmatprep.subr.mxu0 0.0
    %7303 = vmatpush1.msra.mxu0 0.0
    %7304 = vmatprep.subr.mxu0 0.0
    %7305 = vmatpush1.msra.mxu0 0.0
    %7306 = vmatprep.subr.mxu0 0.0
    %7307 = vmatpush1.msra.mxu0 0.0
    %7308 = vmatprep.subr.mxu0 0.0
    %7309 = vmatpush1.msra.mxu0 0.0
    %7310 = vmatprep.subr.mxu0 0.0
    %7311 = vmatpush1.msra.mxu0 0.0
    %7312 = vmatprep.subr.mxu0 0.0
    %7313 = vmatpush1.msra.mxu0 0.0
    %7314 = vmatprep.subr.mxu0 0.0
    %7315 = vmatpush1.msra.mxu0 0.0
    %7316 = vmatprep.subr.mxu0 0.0
    %7317 = vmatpush1.msra.mxu0 0.0
    %7318 = vmatprep.mubr.f32.mxu0 0.0
    %7319 = vmatmul.mubr.f32.gmra.mrb[0].mxu0 %v7252
    %v7320 = vpop.f32.mrb[0].mxu0
    %v7321 = vadd.f32 0.0, %v7320
    %v7322 = vpop.f32.mrb[0].mxu0
    %7323 = vdwg.mxu0
    %v7325 = vsel %vm2183, %v7100, 0
    %7327 = vmatprep.subr.mxu0 0.0
    %7328 = vmatpush1.msra.mxu0 %v6110
    %7329 = vmatprep.subr.mxu0 0.0
    %7330 = vmatpush1.msra.mxu0 0.0
    %7331 = vmatprep.subr.mxu0 0.0
    %7332 = vmatpush1.msra.mxu0 0.0
    %7333 = vmatprep.subr.mxu0 0.0
    %7334 = vmatpush1.msra.mxu0 0.0
    %7335 = vmatprep.subr.mxu0 0.0
    %7336 = vmatpush1.msra.mxu0 0.0
    %7337 = vmatprep.subr.mxu0 0.0
    %7338 = vmatpush1.msra.mxu0 0.0
    %7339 = vmatprep.subr.mxu0 0.0
    %7340 = vmatpush1.msra.mxu0 0.0
    %7341 = vmatprep.subr.mxu0 0.0
    %7342 = vmatpush1.msra.mxu0 0.0
    %7343 = vmatprep.subr.mxu0 0.0
    %7344 = vmatpush1.msra.mxu0 0.0
    %7345 = vmatprep.subr.mxu0 0.0
    %7346 = vmatpush1.msra.mxu0 0.0
    %7347 = vmatprep.subr.mxu0 0.0
    %7348 = vmatpush1.msra.mxu0 0.0
    %7349 = vmatprep.subr.mxu0 0.0
    %7350 = vmatpush1.msra.mxu0 0.0
    %7351 = vmatprep.subr.mxu0 0.0
    %7352 = vmatpush1.msra.mxu0 0.0
    %7353 = vmatprep.subr.mxu0 0.0
    %7354 = vmatpush1.msra.mxu0 0.0
    %7355 = vmatprep.subr.mxu0 0.0
    %7356 = vmatpush1.msra.mxu0 0.0
    %7357 = vmatprep.subr.mxu0 0.0
    %7358 = vmatpush1.msra.mxu0 0.0
    %7359 = vmatprep.subr.mxu0 0.0
    %7360 = vmatpush1.msra.mxu0 0.0
    %7361 = vmatprep.subr.mxu0 0.0
    %7362 = vmatpush1.msra.mxu0 0.0
    %7363 = vmatprep.subr.mxu0 0.0
    %7364 = vmatpush1.msra.mxu0 0.0
    %7365 = vmatprep.subr.mxu0 0.0
    %7366 = vmatpush1.msra.mxu0 0.0
    %7367 = vmatprep.subr.mxu0 0.0
    %7368 = vmatpush1.msra.mxu0 0.0
    %7369 = vmatprep.subr.mxu0 0.0
    %7370 = vmatpush1.msra.mxu0 0.0
    %7371 = vmatprep.subr.mxu0 0.0
    %7372 = vmatpush1.msra.mxu0 0.0
    %7373 = vmatprep.subr.mxu0 0.0
    %7374 = vmatpush1.msra.mxu0 0.0
    %7375 = vmatprep.subr.mxu0 0.0
    %7376 = vmatpush1.msra.mxu0 0.0
    %7377 = vmatprep.subr.mxu0 0.0
    %7378 = vmatpush1.msra.mxu0 0.0
    %7379 = vmatprep.subr.mxu0 0.0
    %7380 = vmatpush1.msra.mxu0 0.0
    %7381 = vmatprep.subr.mxu0 0.0
    %7382 = vmatpush1.msra.mxu0 0.0
    %7383 = vmatprep.subr.mxu0 0.0
    %7384 = vmatpush1.msra.mxu0 0.0
    %7385 = vmatprep.subr.mxu0 0.0
    %7386 = vmatpush1.msra.mxu0 0.0
    %7387 = vmatprep.subr.mxu0 0.0
    %7388 = vmatpush1.msra.mxu0 0.0
    %7389 = vmatprep.subr.mxu0 0.0
    %7390 = vmatpush1.msra.mxu0 0.0
    %7391 = vmatprep.mubr.f32.mxu0 0.0
    %7392 = vmatmul.mubr.f32.gmra.mrb[0].mxu0 %v7325
    %v7393 = vpop.f32.mrb[0].mxu0
    %v7394 = vadd.f32 0.0, %v7393
    %v7395 = vpop.f32.mrb[0].mxu0
    %7396 = vdwg.mxu0
    %v7398 = vsel %vm2183, %v7101, 0
    %7400 = vmatprep.subr.mxu0 0.0
    %7401 = vmatpush1.msra.mxu0 %v6180
    %7402 = vmatprep.subr.mxu0 0.0
    %7403 = vmatpush1.msra.mxu0 0.0
    %7404 = vmatprep.subr.mxu0 0.0
    %7405 = vmatpush1.msra.mxu0 0.0
    %7406 = vmatprep.subr.mxu0 0.0
    %7407 = vmatpush1.msra.mxu0 0.0
    %7408 = vmatprep.subr.mxu0 0.0
    %7409 = vmatpush1.msra.mxu0 0.0
    %7410 = vmatprep.subr.mxu0 0.0
    %7411 = vmatpush1.msra.mxu0 0.0
    %7412 = vmatprep.subr.mxu0 0.0
    %7413 = vmatpush1.msra.mxu0 0.0
    %7414 = vmatprep.subr.mxu0 0.0
    %7415 = vmatpush1.msra.mxu0 0.0
    %7416 = vmatprep.subr.mxu0 0.0
    %7417 = vmatpush1.msra.mxu0 0.0
    %7418 = vmatprep.subr.mxu0 0.0
    %7419 = vmatpush1.msra.mxu0 0.0
    %7420 = vmatprep.subr.mxu0 0.0
    %7421 = vmatpush1.msra.mxu0 0.0
    %7422 = vmatprep.subr.mxu0 0.0
    %7423 = vmatpush1.msra.mxu0 0.0
    %7424 = vmatprep.subr.mxu0 0.0
    %7425 = vmatpush1.msra.mxu0 0.0
    %7426 = vmatprep.subr.mxu0 0.0
    %7427 = vmatpush1.msra.mxu0 0.0
    %7428 = vmatprep.subr.mxu0 0.0
    %7429 = vmatpush1.msra.mxu0 0.0
    %7430 = vmatprep.subr.mxu0 0.0
    %7431 = vmatpush1.msra.mxu0 0.0
    %7432 = vmatprep.subr.mxu0 0.0
    %7433 = vmatpush1.msra.mxu0 0.0
    %7434 = vmatprep.subr.mxu0 0.0
    %7435 = vmatpush1.msra.mxu0 0.0
    %7436 = vmatprep.subr.mxu0 0.0
    %7437 = vmatpush1.msra.mxu0 0.0
    %7438 = vmatprep.subr.mxu0 0.0
    %7439 = vmatpush1.msra.mxu0 0.0
    %7440 = vmatprep.subr.mxu0 0.0
    %7441 = vmatpush1.msra.mxu0 0.0
    %7442 = vmatprep.subr.mxu0 0.0
    %7443 = vmatpush1.msra.mxu0 0.0
    %7444 = vmatprep.subr.mxu0 0.0
    %7445 = vmatpush1.msra.mxu0 0.0
    %7446 = vmatprep.subr.mxu0 0.0
    %7447 = vmatpush1.msra.mxu0 0.0
    %7448 = vmatprep.subr.mxu0 0.0
    %7449 = vmatpush1.msra.mxu0 0.0
    %7450 = vmatprep.subr.mxu0 0.0
    %7451 = vmatpush1.msra.mxu0 0.0
    %7452 = vmatprep.subr.mxu0 0.0
    %7453 = vmatpush1.msra.mxu0 0.0
    %7454 = vmatprep.subr.mxu0 0.0
    %7455 = vmatpush1.msra.mxu0 0.0
    %7456 = vmatprep.subr.mxu0 0.0
    %7457 = vmatpush1.msra.mxu0 0.0
    %7458 = vmatprep.subr.mxu0 0.0
    %7459 = vmatpush1.msra.mxu0 0.0
    %7460 = vmatprep.subr.mxu0 0.0
    %7461 = vmatpush1.msra.mxu0 0.0
    %7462 = vmatprep.subr.mxu0 0.0
    %7463 = vmatpush1.msra.mxu0 0.0
    %7464 = vmatprep.mubr.f32.mxu0 0.0
    %7465 = vmatmul.mubr.f32.gmra.mrb[0].mxu0 %v7398
    %v7466 = vpop.f32.mrb[0].mxu0
    %v7467 = vadd.f32 0.0, %v7466
    %v7468 = vpop.f32.mrb[0].mxu0
    %7469 = vdwg.mxu0
    %v7471 = vsel %vm2183, %v7102, 0
    %7473 = vmatprep.subr.mxu0 0.0
    %7474 = vmatpush1.msra.mxu0 %v6250
    %7475 = vmatprep.subr.mxu0 0.0
    %7476 = vmatpush1.msra.mxu0 0.0
    %7477 = vmatprep.subr.mxu0 0.0
    %7478 = vmatpush1.msra.mxu0 0.0
    %7479 = vmatprep.subr.mxu0 0.0
    %7480 = vmatpush1.msra.mxu0 0.0
    %7481 = vmatprep.subr.mxu0 0.0
    %7482 = vmatpush1.msra.mxu0 0.0
    %7483 = vmatprep.subr.mxu0 0.0
    %7484 = vmatpush1.msra.mxu0 0.0
    %7485 = vmatprep.subr.mxu0 0.0
    %7486 = vmatpush1.msra.mxu0 0.0
    %7487 = vmatprep.subr.mxu0 0.0
    %7488 = vmatpush1.msra.mxu0 0.0
    %7489 = vmatprep.subr.mxu0 0.0
    %7490 = vmatpush1.msra.mxu0 0.0
    %7491 = vmatprep.subr.mxu0 0.0
    %7492 = vmatpush1.msra.mxu0 0.0
    %7493 = vmatprep.subr.mxu0 0.0
    %7494 = vmatpush1.msra.mxu0 0.0
    %7495 = vmatprep.subr.mxu0 0.0
    %7496 = vmatpush1.msra.mxu0 0.0
    %7497 = vmatprep.subr.mxu0 0.0
    %7498 = vmatpush1.msra.mxu0 0.0
    %7499 = vmatprep.subr.mxu0 0.0
    %7500 = vmatpush1.msra.mxu0 0.0
    %7501 = vmatprep.subr.mxu0 0.0
    %7502 = vmatpush1.msra.mxu0 0.0
    %7503 = vmatprep.subr.mxu0 0.0
    %7504 = vmatpush1.msra.mxu0 0.0
    %7505 = vmatprep.subr.mxu0 0.0
    %7506 = vmatpush1.msra.mxu0 0.0
    %7507 = vmatprep.subr.mxu0 0.0
    %7508 = vmatpush1.msra.mxu0 0.0
    %7509 = vmatprep.subr.mxu0 0.0
    %7510 = vmatpush1.msra.mxu0 0.0
    %7511 = vmatprep.subr.mxu0 0.0
    %7512 = vmatpush1.msra.mxu0 0.0
    %7513 = vmatprep.subr.mxu0 0.0
    %7514 = vmatpush1.msra.mxu0 0.0
    %7515 = vmatprep.subr.mxu0 0.0
    %7516 = vmatpush1.msra.mxu0 0.0
    %7517 = vmatprep.subr.mxu0 0.0
    %7518 = vmatpush1.msra.mxu0 0.0
    %7519 = vmatprep.subr.mxu0 0.0
    %7520 = vmatpush1.msra.mxu0 0.0
    %7521 = vmatprep.subr.mxu0 0.0
    %7522 = vmatpush1.msra.mxu0 0.0
    %7523 = vmatprep.subr.mxu0 0.0
    %7524 = vmatpush1.msra.mxu0 0.0
    %7525 = vmatprep.subr.mxu0 0.0
    %7526 = vmatpush1.msra.mxu0 0.0
    %7527 = vmatprep.subr.mxu0 0.0
    %7528 = vmatpush1.msra.mxu0 0.0
    %7529 = vmatprep.subr.mxu0 0.0
    %7530 = vmatpush1.msra.mxu0 0.0
    %7531 = vmatprep.subr.mxu0 0.0
    %7532 = vmatpush1.msra.mxu0 0.0
    %7533 = vmatprep.subr.mxu0 0.0
    %7534 = vmatpush1.msra.mxu0 0.0
    %7535 = vmatprep.subr.mxu0 0.0
    %7536 = vmatpush1.msra.mxu0 0.0
    %7537 = vmatprep.mubr.f32.mxu0 0.0
    %7538 = vmatmul.mubr.f32.gmra.mrb[0].mxu0 %v7471
    %v7539 = vpop.f32.mrb[0].mxu0
    %v7540 = vadd.f32 0.0, %v7539
    %v7541 = vpop.f32.mrb[0].mxu0
    %7542 = vdwg.mxu0
    %v7544 = vsel %vm2183, %v7103, 0
    %7546 = vmatprep.subr.mxu0 0.0
    %7547 = vmatpush1.msra.mxu0 %v6320
    %7548 = vmatprep.subr.mxu0 0.0
    %7549 = vmatpush1.msra.mxu0 0.0
    %7550 = vmatprep.subr.mxu0 0.0
    %7551 = vmatpush1.msra.mxu0 0.0
    %7552 = vmatprep.subr.mxu0 0.0
    %7553 = vmatpush1.msra.mxu0 0.0
    %7554 = vmatprep.subr.mxu0 0.0
    %7555 = vmatpush1.msra.mxu0 0.0
    %7556 = vmatprep.subr.mxu0 0.0
    %7557 = vmatpush1.msra.mxu0 0.0
    %7558 = vmatprep.subr.mxu0 0.0
    %7559 = vmatpush1.msra.mxu0 0.0
    %7560 = vmatprep.subr.mxu0 0.0
    %7561 = vmatpush1.msra.mxu0 0.0
    %7562 = vmatprep.subr.mxu0 0.0
    %7563 = vmatpush1.msra.mxu0 0.0
    %7564 = vmatprep.subr.mxu0 0.0
    %7565 = vmatpush1.msra.mxu0 0.0
    %7566 = vmatprep.subr.mxu0 0.0
    %7567 = vmatpush1.msra.mxu0 0.0
    %7568 = vmatprep.subr.mxu0 0.0
    %7569 = vmatpush1.msra.mxu0 0.0
    %7570 = vmatprep.subr.mxu0 0.0
    %7571 = vmatpush1.msra.mxu0 0.0
    %7572 = vmatprep.subr.mxu0 0.0
    %7573 = vmatpush1.msra.mxu0 0.0
    %7574 = vmatprep.subr.mxu0 0.0
    %7575 = vmatpush1.msra.mxu0 0.0
    %7576 = vmatprep.subr.mxu0 0.0
    %7577 = vmatpush1.msra.mxu0 0.0
    %7578 = vmatprep.subr.mxu0 0.0
    %7579 = vmatpush1.msra.mxu0 0.0
    %7580 = vmatprep.subr.mxu0 0.0
    %7581 = vmatpush1.msra.mxu0 0.0
    %7582 = vmatprep.subr.mxu0 0.0
    %7583 = vmatpush1.msra.mxu0 0.0
    %7584 = vmatprep.subr.mxu0 0.0
    %7585 = vmatpush1.msra.mxu0 0.0
    %7586 = vmatprep.subr.mxu0 0.0
    %7587 = vmatpush1.msra.mxu0 0.0
    %7588 = vmatprep.subr.mxu0 0.0
    %7589 = vmatpush1.msra.mxu0 0.0
    %7590 = vmatprep.subr.mxu0 0.0
    %7591 = vmatpush1.msra.mxu0 0.0
    %7592 = vmatprep.subr.mxu0 0.0
    %7593 = vmatpush1.msra.mxu0 0.0
    %7594 = vmatprep.subr.mxu0 0.0
    %7595 = vmatpush1.msra.mxu0 0.0
    %7596 = vmatprep.subr.mxu0 0.0
    %7597 = vmatpush1.msra.mxu0 0.0
    %7598 = vmatprep.subr.mxu0 0.0
    %7599 = vmatpush1.msra.mxu0 0.0
    %7600 = vmatprep.subr.mxu0 0.0
    %7601 = vmatpush1.msra.mxu0 0.0
    %7602 = vmatprep.subr.mxu0 0.0
    %7603 = vmatpush1.msra.mxu0 0.0
    %7604 = vmatprep.subr.mxu0 0.0
    %7605 = vmatpush1.msra.mxu0 0.0
    %7606 = vmatprep.subr.mxu0 0.0
    %7607 = vmatpush1.msra.mxu0 0.0
    %7608 = vmatprep.subr.mxu0 0.0
    %7609 = vmatpush1.msra.mxu0 0.0
    %7610 = vmatprep.mubr.f32.mxu0 0.0
    %7611 = vmatmul.mubr.f32.gmra.mrb[0].mxu0 %v7544
    %v7612 = vpop.f32.mrb[0].mxu0
    %v7613 = vadd.f32 0.0, %v7612
    %v7614 = vpop.f32.mrb[0].mxu0
    %7615 = vdwg.mxu0
    %v7617 = vsel %vm2183, %v7104, 0
    %7619 = vmatprep.subr.mxu0 0.0
    %7620 = vmatpush1.msra.mxu0 %v6390
    %7621 = vmatprep.subr.mxu0 0.0
    %7622 = vmatpush1.msra.mxu0 0.0
    %7623 = vmatprep.subr.mxu0 0.0
    %7624 = vmatpush1.msra.mxu0 0.0
    %7625 = vmatprep.subr.mxu0 0.0
    %7626 = vmatpush1.msra.mxu0 0.0
    %7627 = vmatprep.subr.mxu0 0.0
    %7628 = vmatpush1.msra.mxu0 0.0
    %7629 = vmatprep.subr.mxu0 0.0
    %7630 = vmatpush1.msra.mxu0 0.0
    %7631 = vmatprep.subr.mxu0 0.0
    %7632 = vmatpush1.msra.mxu0 0.0
    %7633 = vmatprep.subr.mxu0 0.0
    %7634 = vmatpush1.msra.mxu0 0.0
    %7635 = vmatprep.subr.mxu0 0.0
    %7636 = vmatpush1.msra.mxu0 0.0
    %7637 = vmatprep.subr.mxu0 0.0
    %7638 = vmatpush1.msra.mxu0 0.0
    %7639 = vmatprep.subr.mxu0 0.0
    %7640 = vmatpush1.msra.mxu0 0.0
    %7641 = vmatprep.subr.mxu0 0.0
    %7642 = vmatpush1.msra.mxu0 0.0
    %7643 = vmatprep.subr.mxu0 0.0
    %7644 = vmatpush1.msra.mxu0 0.0
    %7645 = vmatprep.subr.mxu0 0.0
    %7646 = vmatpush1.msra.mxu0 0.0
    %7647 = vmatprep.subr.mxu0 0.0
    %7648 = vmatpush1.msra.mxu0 0.0
    %7649 = vmatprep.subr.mxu0 0.0
    %7650 = vmatpush1.msra.mxu0 0.0
    %7651 = vmatprep.subr.mxu0 0.0
    %7652 = vmatpush1.msra.mxu0 0.0
    %7653 = vmatprep.subr.mxu0 0.0
    %7654 = vmatpush1.msra.mxu0 0.0
    %7655 = vmatprep.subr.mxu0 0.0
    %7656 = vmatpush1.msra.mxu0 0.0
    %7657 = vmatprep.subr.mxu0 0.0
    %7658 = vmatpush1.msra.mxu0 0.0
    %7659 = vmatprep.subr.mxu0 0.0
    %7660 = vmatpush1.msra.mxu0 0.0
    %7661 = vmatprep.subr.mxu0 0.0
    %7662 = vmatpush1.msra.mxu0 0.0
    %7663 = vmatprep.subr.mxu0 0.0
    %7664 = vmatpush1.msra.mxu0 0.0
    %7665 = vmatprep.subr.mxu0 0.0
    %7666 = vmatpush1.msra.mxu0 0.0
    %7667 = vmatprep.subr.mxu0 0.0
    %7668 = vmatpush1.msra.mxu0 0.0
    %7669 = vmatprep.subr.mxu0 0.0
    %7670 = vmatpush1.msra.mxu0 0.0
    %7671 = vmatprep.subr.mxu0 0.0
    %7672 = vmatpush1.msra.mxu0 0.0
    %7673 = vmatprep.subr.mxu0 0.0
    %7674 = vmatpush1.msra.mxu0 0.0
    %7675 = vmatprep.subr.mxu0 0.0
    %7676 = vmatpush1.msra.mxu0 0.0
    %7677 = vmatprep.subr.mxu0 0.0
    %7678 = vmatpush1.msra.mxu0 0.0
    %7679 = vmatprep.subr.mxu0 0.0
    %7680 = vmatpush1.msra.mxu0 0.0
    %7681 = vmatprep.subr.mxu0 0.0
    %7682 = vmatpush1.msra.mxu0 0.0
    %7683 = vmatprep.mubr.f32.mxu0 0.0
    %7684 = vmatmul.mubr.f32.gmra.mrb[0].mxu0 %v7617
    %v7685 = vpop.f32.mrb[0].mxu0
    %v7686 = vadd.f32 0.0, %v7685
    %v7687 = vpop.f32.mrb[0].mxu0
    %7688 = vdwg.mxu0
    %s7689 = scalar_lea.vmem %s14, 64
    %v7690 = vld [vmem:[%s7689] sm:$0xff]
    %v7691 = vld [vmem:[%s7689 + $0x8] sm:$0xff]
    %v7692 = vld [vmem:[%s7689 + $0x10] sm:$0xff]
    %v7693 = vld [vmem:[%s7689 + $0x18] sm:$0xff]
    %v7694 = vld [vmem:[%s7689 + $0x20] sm:$0xff]
    %v7695 = vld [vmem:[%s7689 + $0x28] sm:$0xff]
    %v7696 = vld [vmem:[%s7689 + $0x30] sm:$0xff]
    %v7697 = vld [vmem:[%s7689 + $0x38] sm:$0xff]
    %v7699 = vsel %vm2183, %v7175, 0
    %7701 = vmatprep.subr.mxu0 0.0
    %7702 = vmatpush1.msra.mxu0 %v7690
    %7703 = vmatprep.subr.mxu0 0.0
    %7704 = vmatpush1.msra.mxu0 0.0
    %7705 = vmatprep.subr.mxu0 0.0
    %7706 = vmatpush1.msra.mxu0 0.0
    %7707 = vmatprep.subr.mxu0 0.0
    %7708 = vmatpush1.msra.mxu0 0.0
    %7709 = vmatprep.subr.mxu0 0.0
    %7710 = vmatpush1.msra.mxu0 0.0
    %7711 = vmatprep.subr.mxu0 0.0
    %7712 = vmatpush1.msra.mxu0 0.0
    %7713 = vmatprep.subr.mxu0 0.0
    %7714 = vmatpush1.msra.mxu0 0.0
    %7715 = vmatprep.subr.mxu0 0.0
    %7716 = vmatpush1.msra.mxu0 0.0
    %7717 = vmatprep.subr.mxu0 0.0
    %7718 = vmatpush1.msra.mxu0 0.0
    %7719 = vmatprep.subr.mxu0 0.0
    %7720 = vmatpush1.msra.mxu0 0.0
    %7721 = vmatprep.subr.mxu0 0.0
    %7722 = vmatpush1.msra.mxu0 0.0
    %7723 = vmatprep.subr.mxu0 0.0
    %7724 = vmatpush1.msra.mxu0 0.0
    %7725 = vmatprep.subr.mxu0 0.0
    %7726 = vmatpush1.msra.mxu0 0.0
    %7727 = vmatprep.subr.mxu0 0.0
    %7728 = vmatpush1.msra.mxu0 0.0
    %7729 = vmatprep.subr.mxu0 0.0
    %7730 = vmatpush1.msra.mxu0 0.0
    %7731 = vmatprep.subr.mxu0 0.0
    %7732 = vmatpush1.msra.mxu0 0.0
    %7733 = vmatprep.subr.mxu0 0.0
    %7734 = vmatpush1.msra.mxu0 0.0
    %7735 = vmatprep.subr.mxu0 0.0
    %7736 = vmatpush1.msra.mxu0 0.0
    %7737 = vmatprep.subr.mxu0 0.0
    %7738 = vmatpush1.msra.mxu0 0.0
    %7739 = vmatprep.subr.mxu0 0.0
    %7740 = vmatpush1.msra.mxu0 0.0
    %7741 = vmatprep.subr.mxu0 0.0
    %7742 = vmatpush1.msra.mxu0 0.0
    %7743 = vmatprep.subr.mxu0 0.0
    %7744 = vmatpush1.msra.mxu0 0.0
    %7745 = vmatprep.subr.mxu0 0.0
    %7746 = vmatpush1.msra.mxu0 0.0
    %7747 = vmatprep.subr.mxu0 0.0
    %7748 = vmatpush1.msra.mxu0 0.0
    %7749 = vmatprep.subr.mxu0 0.0
    %7750 = vmatpush1.msra.mxu0 0.0
    %7751 = vmatprep.subr.mxu0 0.0
    %7752 = vmatpush1.msra.mxu0 0.0
    %7753 = vmatprep.subr.mxu0 0.0
    %7754 = vmatpush1.msra.mxu0 0.0
    %7755 = vmatprep.subr.mxu0 0.0
    %7756 = vmatpush1.msra.mxu0 0.0
    %7757 = vmatprep.subr.mxu0 0.0
    %7758 = vmatpush1.msra.mxu0 0.0
    %7759 = vmatprep.subr.mxu0 0.0
    %7760 = vmatpush1.msra.mxu0 0.0
    %7761 = vmatprep.subr.mxu0 0.0
    %7762 = vmatpush1.msra.mxu0 0.0
    %7763 = vmatprep.subr.mxu0 0.0
    %7764 = vmatpush1.msra.mxu0 0.0
    %7765 = vmatprep.mubr.f32.mxu0 0.0
    %7766 = vmatmul.mubr.f32.gmra.mrb[0].mxu0 %v7699
    %v7767 = vpop.f32.mrb[0].mxu0
    %v7768 = vadd.f32 0.0, %v7767
    %v7769 = vpop.f32.mrb[0].mxu0
    %7770 = vdwg.mxu0
    %v7772 = vsel %vm2183, %v7248, 0
    %7774 = vmatprep.subr.mxu0 0.0
    %7775 = vmatpush1.msra.mxu0 %v7691
    %7776 = vmatprep.subr.mxu0 0.0
    %7777 = vmatpush1.msra.mxu0 0.0
    %7778 = vmatprep.subr.mxu0 0.0
    %7779 = vmatpush1.msra.mxu0 0.0
    %7780 = vmatprep.subr.mxu0 0.0
    %7781 = vmatpush1.msra.mxu0 0.0
    %7782 = vmatprep.subr.mxu0 0.0
    %7783 = vmatpush1.msra.mxu0 0.0
    %7784 = vmatprep.subr.mxu0 0.0
    %7785 = vmatpush1.msra.mxu0 0.0
    %7786 = vmatprep.subr.mxu0 0.0
    %7787 = vmatpush1.msra.mxu0 0.0
    %7788 = vmatprep.subr.mxu0 0.0
    %7789 = vmatpush1.msra.mxu0 0.0
    %7790 = vmatprep.subr.mxu0 0.0
    %7791 = vmatpush1.msra.mxu0 0.0
    %7792 = vmatprep.subr.mxu0 0.0
    %7793 = vmatpush1.msra.mxu0 0.0
    %7794 = vmatprep.subr.mxu0 0.0
    %7795 = vmatpush1.msra.mxu0 0.0
    %7796 = vmatprep.subr.mxu0 0.0
    %7797 = vmatpush1.msra.mxu0 0.0
    %7798 = vmatprep.subr.mxu0 0.0
    %7799 = vmatpush1.msra.mxu0 0.0
    %7800 = vmatprep.subr.mxu0 0.0
    %7801 = vmatpush1.msra.mxu0 0.0
    %7802 = vmatprep.subr.mxu0 0.0
    %7803 = vmatpush1.msra.mxu0 0.0
    %7804 = vmatprep.subr.mxu0 0.0
    %7805 = vmatpush1.msra.mxu0 0.0
    %7806 = vmatprep.subr.mxu0 0.0
    %7807 = vmatpush1.msra.mxu0 0.0
    %7808 = vmatprep.subr.mxu0 0.0
    %7809 = vmatpush1.msra.mxu0 0.0
    %7810 = vmatprep.subr.mxu0 0.0
    %7811 = vmatpush1.msra.mxu0 0.0
    %7812 = vmatprep.subr.mxu0 0.0
    %7813 = vmatpush1.msra.mxu0 0.0
    %7814 = vmatprep.subr.mxu0 0.0
    %7815 = vmatpush1.msra.mxu0 0.0
    %7816 = vmatprep.subr.mxu0 0.0
    %7817 = vmatpush1.msra.mxu0 0.0
    %7818 = vmatprep.subr.mxu0 0.0
    %7819 = vmatpush1.msra.mxu0 0.0
    %7820 = vmatprep.subr.mxu0 0.0
    %7821 = vmatpush1.msra.mxu0 0.0
    %7822 = vmatprep.subr.mxu0 0.0
    %7823 = vmatpush1.msra.mxu0 0.0
    %7824 = vmatprep.subr.mxu0 0.0
    %7825 = vmatpush1.msra.mxu0 0.0
    %7826 = vmatprep.subr.mxu0 0.0
    %7827 = vmatpush1.msra.mxu0 0.0
    %7828 = vmatprep.subr.mxu0 0.0
    %7829 = vmatpush1.msra.mxu0 0.0
    %7830 = vmatprep.subr.mxu0 0.0
    %7831 = vmatpush1.msra.mxu0 0.0
    %7832 = vmatprep.subr.mxu0 0.0
    %7833 = vmatpush1.msra.mxu0 0.0
    %7834 = vmatprep.subr.mxu0 0.0
    %7835 = vmatpush1.msra.mxu0 0.0
    %7836 = vmatprep.subr.mxu0 0.0
    %7837 = vmatpush1.msra.mxu0 0.0
    %7838 = vmatprep.mubr.f32.mxu0 0.0
    %7839 = vmatmul.mubr.f32.gmra.mrb[0].mxu0 %v7772
    %v7840 = vpop.f32.mrb[0].mxu0
    %v7841 = vadd.f32 0.0, %v7840
    %v7842 = vpop.f32.mrb[0].mxu0
    %7843 = vdwg.mxu0
    %v7845 = vsel %vm2183, %v7321, 0
    %7847 = vmatprep.subr.mxu0 0.0
    %7848 = vmatpush1.msra.mxu0 %v7692
    %7849 = vmatprep.subr.mxu0 0.0
    %7850 = vmatpush1.msra.mxu0 0.0
    %7851 = vmatprep.subr.mxu0 0.0
    %7852 = vmatpush1.msra.mxu0 0.0
    %7853 = vmatprep.subr.mxu0 0.0
    %7854 = vmatpush1.msra.mxu0 0.0
    %7855 = vmatprep.subr.mxu0 0.0
    %7856 = vmatpush1.msra.mxu0 0.0
    %7857 = vmatprep.subr.mxu0 0.0
    %7858 = vmatpush1.msra.mxu0 0.0
    %7859 = vmatprep.subr.mxu0 0.0
    %7860 = vmatpush1.msra.mxu0 0.0
    %7861 = vmatprep.subr.mxu0 0.0
    %7862 = vmatpush1.msra.mxu0 0.0
    %7863 = vmatprep.subr.mxu0 0.0
    %7864 = vmatpush1.msra.mxu0 0.0
    %7865 = vmatprep.subr.mxu0 0.0
    %7866 = vmatpush1.msra.mxu0 0.0
    %7867 = vmatprep.subr.mxu0 0.0
    %7868 = vmatpush1.msra.mxu0 0.0
    %7869 = vmatprep.subr.mxu0 0.0
    %7870 = vmatpush1.msra.mxu0 0.0
    %7871 = vmatprep.subr.mxu0 0.0
    %7872 = vmatpush1.msra.mxu0 0.0
    %7873 = vmatprep.subr.mxu0 0.0
    %7874 = vmatpush1.msra.mxu0 0.0
    %7875 = vmatprep.subr.mxu0 0.0
    %7876 = vmatpush1.msra.mxu0 0.0
    %7877 = vmatprep.subr.mxu0 0.0
    %7878 = vmatpush1.msra.mxu0 0.0
    %7879 = vmatprep.subr.mxu0 0.0
    %7880 = vmatpush1.msra.mxu0 0.0
    %7881 = vmatprep.subr.mxu0 0.0
    %7882 = vmatpush1.msra.mxu0 0.0
    %7883 = vmatprep.subr.mxu0 0.0
    %7884 = vmatpush1.msra.mxu0 0.0
    %7885 = vmatprep.subr.mxu0 0.0
    %7886 = vmatpush1.msra.mxu0 0.0
    %7887 = vmatprep.subr.mxu0 0.0
    %7888 = vmatpush1.msra.mxu0 0.0
    %7889 = vmatprep.subr.mxu0 0.0
    %7890 = vmatpush1.msra.mxu0 0.0
    %7891 = vmatprep.subr.mxu0 0.0
    %7892 = vmatpush1.msra.mxu0 0.0
    %7893 = vmatprep.subr.mxu0 0.0
    %7894 = vmatpush1.msra.mxu0 0.0
    %7895 = vmatprep.subr.mxu0 0.0
    %7896 = vmatpush1.msra.mxu0 0.0
    %7897 = vmatprep.subr.mxu0 0.0
    %7898 = vmatpush1.msra.mxu0 0.0
    %7899 = vmatprep.subr.mxu0 0.0
    %7900 = vmatpush1.msra.mxu0 0.0
    %7901 = vmatprep.subr.mxu0 0.0
    %7902 = vmatpush1.msra.mxu0 0.0
    %7903 = vmatprep.subr.mxu0 0.0
    %7904 = vmatpush1.msra.mxu0 0.0
    %7905 = vmatprep.subr.mxu0 0.0
    %7906 = vmatpush1.msra.mxu0 0.0
    %7907 = vmatprep.subr.mxu0 0.0
    %7908 = vmatpush1.msra.mxu0 0.0
    %7909 = vmatprep.subr.mxu0 0.0
    %7910 = vmatpush1.msra.mxu0 0.0
    %7911 = vmatprep.mubr.f32.mxu0 0.0
    %7912 = vmatmul.mubr.f32.gmra.mrb[0].mxu0 %v7845
    %v7913 = vpop.f32.mrb[0].mxu0
    %v7914 = vadd.f32 0.0, %v7913
    %v7915 = vpop.f32.mrb[0].mxu0
    %7916 = vdwg.mxu0
    %v7918 = vsel %vm2183, %v7394, 0
    %7920 = vmatprep.subr.mxu0 0.0
    %7921 = vmatpush1.msra.mxu0 %v7693
    %7922 = vmatprep.subr.mxu0 0.0
    %7923 = vmatpush1.msra.mxu0 0.0
    %7924 = vmatprep.subr.mxu0 0.0
    %7925 = vmatpush1.msra.mxu0 0.0
    %7926 = vmatprep.subr.mxu0 0.0
    %7927 = vmatpush1.msra.mxu0 0.0
    %7928 = vmatprep.subr.mxu0 0.0
    %7929 = vmatpush1.msra.mxu0 0.0
    %7930 = vmatprep.subr.mxu0 0.0
    %7931 = vmatpush1.msra.mxu0 0.0
    %7932 = vmatprep.subr.mxu0 0.0
    %7933 = vmatpush1.msra.mxu0 0.0
    %7934 = vmatprep.subr.mxu0 0.0
    %7935 = vmatpush1.msra.mxu0 0.0
    %7936 = vmatprep.subr.mxu0 0.0
    %7937 = vmatpush1.msra.mxu0 0.0
    %7938 = vmatprep.subr.mxu0 0.0
    %7939 = vmatpush1.msra.mxu0 0.0
    %7940 = vmatprep.subr.mxu0 0.0
    %7941 = vmatpush1.msra.mxu0 0.0
    %7942 = vmatprep.subr.mxu0 0.0
    %7943 = vmatpush1.msra.mxu0 0.0
    %7944 = vmatprep.subr.mxu0 0.0
    %7945 = vmatpush1.msra.mxu0 0.0
    %7946 = vmatprep.subr.mxu0 0.0
    %7947 = vmatpush1.msra.mxu0 0.0
    %7948 = vmatprep.subr.mxu0 0.0
    %7949 = vmatpush1.msra.mxu0 0.0
    %7950 = vmatprep.subr.mxu0 0.0
    %7951 = vmatpush1.msra.mxu0 0.0
    %7952 = vmatprep.subr.mxu0 0.0
    %7953 = vmatpush1.msra.mxu0 0.0
    %7954 = vmatprep.subr.mxu0 0.0
    %7955 = vmatpush1.msra.mxu0 0.0
    %7956 = vmatprep.subr.mxu0 0.0
    %7957 = vmatpush1.msra.mxu0 0.0
    %7958 = vmatprep.subr.mxu0 0.0
    %7959 = vmatpush1.msra.mxu0 0.0
    %7960 = vmatprep.subr.mxu0 0.0
    %7961 = vmatpush1.msra.mxu0 0.0
    %7962 = vmatprep.subr.mxu0 0.0
    %7963 = vmatpush1.msra.mxu0 0.0
    %7964 = vmatprep.subr.mxu0 0.0
    %7965 = vmatpush1.msra.mxu0 0.0
    %7966 = vmatprep.subr.mxu0 0.0
    %7967 = vmatpush1.msra.mxu0 0.0
    %7968 = vmatprep.subr.mxu0 0.0
    %7969 = vmatpush1.msra.mxu0 0.0
    %7970 = vmatprep.subr.mxu0 0.0
    %7971 = vmatpush1.msra.mxu0 0.0
    %7972 = vmatprep.subr.mxu0 0.0
    %7973 = vmatpush1.msra.mxu0 0.0
    %7974 = vmatprep.subr.mxu0 0.0
    %7975 = vmatpush1.msra.mxu0 0.0
    %7976 = vmatprep.subr.mxu0 0.0
    %7977 = vmatpush1.msra.mxu0 0.0
    %7978 = vmatprep.subr.mxu0 0.0
    %7979 = vmatpush1.msra.mxu0 0.0
    %7980 = vmatprep.subr.mxu0 0.0
    %7981 = vmatpush1.msra.mxu0 0.0
    %7982 = vmatprep.subr.mxu0 0.0
    %7983 = vmatpush1.msra.mxu0 0.0
    %7984 = vmatprep.mubr.f32.mxu0 0.0
    %7985 = vmatmul.mubr.f32.gmra.mrb[0].mxu0 %v7918
    %v7986 = vpop.f32.mrb[0].mxu0
    %v7987 = vadd.f32 0.0, %v7986
    %v7988 = vpop.f32.mrb[0].mxu0
    %7989 = vdwg.mxu0
    %v7991 = vsel %vm2183, %v7467, 0
    %7993 = vmatprep.subr.mxu0 0.0
    %7994 = vmatpush1.msra.mxu0 %v7694
    %7995 = vmatprep.subr.mxu0 0.0
    %7996 = vmatpush1.msra.mxu0 0.0
    %7997 = vmatprep.subr.mxu0 0.0
    %7998 = vmatpush1.msra.mxu0 0.0
    %7999 = vmatprep.subr.mxu0 0.0
    %8000 = vmatpush1.msra.mxu0 0.0
    %8001 = vmatprep.subr.mxu0 0.0
    %8002 = vmatpush1.msra.mxu0 0.0
    %8003 = vmatprep.subr.mxu0 0.0
    %8004 = vmatpush1.msra.mxu0 0.0
    %8005 = vmatprep.subr.mxu0 0.0
    %8006 = vmatpush1.msra.mxu0 0.0
    %8007 = vmatprep.subr.mxu0 0.0
    %8008 = vmatpush1.msra.mxu0 0.0
    %8009 = vmatprep.subr.mxu0 0.0
    %8010 = vmatpush1.msra.mxu0 0.0
    %8011 = vmatprep.subr.mxu0 0.0
    %8012 = vmatpush1.msra.mxu0 0.0
    %8013 = vmatprep.subr.mxu0 0.0
    %8014 = vmatpush1.msra.mxu0 0.0
    %8015 = vmatprep.subr.mxu0 0.0
    %8016 = vmatpush1.msra.mxu0 0.0
    %8017 = vmatprep.subr.mxu0 0.0
    %8018 = vmatpush1.msra.mxu0 0.0
    %8019 = vmatprep.subr.mxu0 0.0
    %8020 = vmatpush1.msra.mxu0 0.0
    %8021 = vmatprep.subr.mxu0 0.0
    %8022 = vmatpush1.msra.mxu0 0.0
    %8023 = vmatprep.subr.mxu0 0.0
    %8024 = vmatpush1.msra.mxu0 0.0
    %8025 = vmatprep.subr.mxu0 0.0
    %8026 = vmatpush1.msra.mxu0 0.0
    %8027 = vmatprep.subr.mxu0 0.0
    %8028 = vmatpush1.msra.mxu0 0.0
    %8029 = vmatprep.subr.mxu0 0.0
    %8030 = vmatpush1.msra.mxu0 0.0
    %8031 = vmatprep.subr.mxu0 0.0
    %8032 = vmatpush1.msra.mxu0 0.0
    %8033 = vmatprep.subr.mxu0 0.0
    %8034 = vmatpush1.msra.mxu0 0.0
    %8035 = vmatprep.subr.mxu0 0.0
    %8036 = vmatpush1.msra.mxu0 0.0
    %8037 = vmatprep.subr.mxu0 0.0
    %8038 = vmatpush1.msra.mxu0 0.0
    %8039 = vmatprep.subr.mxu0 0.0
    %8040 = vmatpush1.msra.mxu0 0.0
    %8041 = vmatprep.subr.mxu0 0.0
    %8042 = vmatpush1.msra.mxu0 0.0
    %8043 = vmatprep.subr.mxu0 0.0
    %8044 = vmatpush1.msra.mxu0 0.0
    %8045 = vmatprep.subr.mxu0 0.0
    %8046 = vmatpush1.msra.mxu0 0.0
    %8047 = vmatprep.subr.mxu0 0.0
    %8048 = vmatpush1.msra.mxu0 0.0
    %8049 = vmatprep.subr.mxu0 0.0
    %8050 = vmatpush1.msra.mxu0 0.0
    %8051 = vmatprep.subr.mxu0 0.0
    %8052 = vmatpush1.msra.mxu0 0.0
    %8053 = vmatprep.subr.mxu0 0.0
    %8054 = vmatpush1.msra.mxu0 0.0
    %8055 = vmatprep.subr.mxu0 0.0
    %8056 = vmatpush1.msra.mxu0 0.0
    %8057 = vmatprep.mubr.f32.mxu0 0.0
    %8058 = vmatmul.mubr.f32.gmra.mrb[0].mxu0 %v7991
    %v8059 = vpop.f32.mrb[0].mxu0
    %v8060 = vadd.f32 0.0, %v8059
    %v8061 = vpop.f32.mrb[0].mxu0
    %8062 = vdwg.mxu0
    %v8064 = vsel %vm2183, %v7540, 0
    %8066 = vmatprep.subr.mxu0 0.0
    %8067 = vmatpush1.msra.mxu0 %v7695
    %8068 = vmatprep.subr.mxu0 0.0
    %8069 = vmatpush1.msra.mxu0 0.0
    %8070 = vmatprep.subr.mxu0 0.0
    %8071 = vmatpush1.msra.mxu0 0.0
    %8072 = vmatprep.subr.mxu0 0.0
    %8073 = vmatpush1.msra.mxu0 0.0
    %8074 = vmatprep.subr.mxu0 0.0
    %8075 = vmatpush1.msra.mxu0 0.0
    %8076 = vmatprep.subr.mxu0 0.0
    %8077 = vmatpush1.msra.mxu0 0.0
    %8078 = vmatprep.subr.mxu0 0.0
    %8079 = vmatpush1.msra.mxu0 0.0
    %8080 = vmatprep.subr.mxu0 0.0
    %8081 = vmatpush1.msra.mxu0 0.0
    %8082 = vmatprep.subr.mxu0 0.0
    %8083 = vmatpush1.msra.mxu0 0.0
    %8084 = vmatprep.subr.mxu0 0.0
    %8085 = vmatpush1.msra.mxu0 0.0
    %8086 = vmatprep.subr.mxu0 0.0
    %8087 = vmatpush1.msra.mxu0 0.0
    %8088 = vmatprep.subr.mxu0 0.0
    %8089 = vmatpush1.msra.mxu0 0.0
    %8090 = vmatprep.subr.mxu0 0.0
    %8091 = vmatpush1.msra.mxu0 0.0
    %8092 = vmatprep.subr.mxu0 0.0
    %8093 = vmatpush1.msra.mxu0 0.0
    %8094 = vmatprep.subr.mxu0 0.0
    %8095 = vmatpush1.msra.mxu0 0.0
    %8096 = vmatprep.subr.mxu0 0.0
    %8097 = vmatpush1.msra.mxu0 0.0
    %8098 = vmatprep.subr.mxu0 0.0
    %8099 = vmatpush1.msra.mxu0 0.0
    %8100 = vmatprep.subr.mxu0 0.0
    %8101 = vmatpush1.msra.mxu0 0.0
    %8102 = vmatprep.subr.mxu0 0.0
    %8103 = vmatpush1.msra.mxu0 0.0
    %8104 = vmatprep.subr.mxu0 0.0
    %8105 = vmatpush1.msra.mxu0 0.0
    %8106 = vmatprep.subr.mxu0 0.0
    %8107 = vmatpush1.msra.mxu0 0.0
    %8108 = vmatprep.subr.mxu0 0.0
    %8109 = vmatpush1.msra.mxu0 0.0
    %8110 = vmatprep.subr.mxu0 0.0
    %8111 = vmatpush1.msra.mxu0 0.0
    %8112 = vmatprep.subr.mxu0 0.0
    %8113 = vmatpush1.msra.mxu0 0.0
    %8114 = vmatprep.subr.mxu0 0.0
    %8115 = vmatpush1.msra.mxu0 0.0
    %8116 = vmatprep.subr.mxu0 0.0
    %8117 = vmatpush1.msra.mxu0 0.0
    %8118 = vmatprep.subr.mxu0 0.0
    %8119 = vmatpush1.msra.mxu0 0.0
    %8120 = vmatprep.subr.mxu0 0.0
    %8121 = vmatpush1.msra.mxu0 0.0
    %8122 = vmatprep.subr.mxu0 0.0
    %8123 = vmatpush1.msra.mxu0 0.0
    %8124 = vmatprep.subr.mxu0 0.0
    %8125 = vmatpush1.msra.mxu0 0.0
    %8126 = vmatprep.subr.mxu0 0.0
    %8127 = vmatpush1.msra.mxu0 0.0
    %8128 = vmatprep.subr.mxu0 0.0
    %8129 = vmatpush1.msra.mxu0 0.0
    %8130 = vmatprep.mubr.f32.mxu0 0.0
    %8131 = vmatmul.mubr.f32.gmra.mrb[0].mxu0 %v8064
    %v8132 = vpop.f32.mrb[0].mxu0
    %v8133 = vadd.f32 0.0, %v8132
    %v8134 = vpop.f32.mrb[0].mxu0
    %8135 = vdwg.mxu0
    %v8137 = vsel %vm2183, %v7613, 0
    %8139 = vmatprep.subr.mxu0 0.0
    %8140 = vmatpush1.msra.mxu0 %v7696
    %8141 = vmatprep.subr.mxu0 0.0
    %8142 = vmatpush1.msra.mxu0 0.0
    %8143 = vmatprep.subr.mxu0 0.0
    %8144 = vmatpush1.msra.mxu0 0.0
    %8145 = vmatprep.subr.mxu0 0.0
    %8146 = vmatpush1.msra.mxu0 0.0
    %8147 = vmatprep.subr.mxu0 0.0
    %8148 = vmatpush1.msra.mxu0 0.0
    %8149 = vmatprep.subr.mxu0 0.0
    %8150 = vmatpush1.msra.mxu0 0.0
    %8151 = vmatprep.subr.mxu0 0.0
    %8152 = vmatpush1.msra.mxu0 0.0
    %8153 = vmatprep.subr.mxu0 0.0
    %8154 = vmatpush1.msra.mxu0 0.0
    %8155 = vmatprep.subr.mxu0 0.0
    %8156 = vmatpush1.msra.mxu0 0.0
    %8157 = vmatprep.subr.mxu0 0.0
    %8158 = vmatpush1.msra.mxu0 0.0
    %8159 = vmatprep.subr.mxu0 0.0
    %8160 = vmatpush1.msra.mxu0 0.0
    %8161 = vmatprep.subr.mxu0 0.0
    %8162 = vmatpush1.msra.mxu0 0.0
    %8163 = vmatprep.subr.mxu0 0.0
    %8164 = vmatpush1.msra.mxu0 0.0
    %8165 = vmatprep.subr.mxu0 0.0
    %8166 = vmatpush1.msra.mxu0 0.0
    %8167 = vmatprep.subr.mxu0 0.0
    %8168 = vmatpush1.msra.mxu0 0.0
    %8169 = vmatprep.subr.mxu0 0.0
    %8170 = vmatpush1.msra.mxu0 0.0
    %8171 = vmatprep.subr.mxu0 0.0
    %8172 = vmatpush1.msra.mxu0 0.0
    %8173 = vmatprep.subr.mxu0 0.0
    %8174 = vmatpush1.msra.mxu0 0.0
    %8175 = vmatprep.subr.mxu0 0.0
    %8176 = vmatpush1.msra.mxu0 0.0
    %8177 = vmatprep.subr.mxu0 0.0
    %8178 = vmatpush1.msra.mxu0 0.0
    %8179 = vmatprep.subr.mxu0 0.0
    %8180 = vmatpush1.msra.mxu0 0.0
    %8181 = vmatprep.subr.mxu0 0.0
    %8182 = vmatpush1.msra.mxu0 0.0
    %8183 = vmatprep.subr.mxu0 0.0
    %8184 = vmatpush1.msra.mxu0 0.0
    %8185 = vmatprep.subr.mxu0 0.0
    %8186 = vmatpush1.msra.mxu0 0.0
    %8187 = vmatprep.subr.mxu0 0.0
    %8188 = vmatpush1.msra.mxu0 0.0
    %8189 = vmatprep.subr.mxu0 0.0
    %8190 = vmatpush1.msra.mxu0 0.0
    %8191 = vmatprep.subr.mxu0 0.0
    %8192 = vmatpush1.msra.mxu0 0.0
    %8193 = vmatprep.subr.mxu0 0.0
    %8194 = vmatpush1.msra.mxu0 0.0
    %8195 = vmatprep.subr.mxu0 0.0
    %8196 = vmatpush1.msra.mxu0 0.0
    %8197 = vmatprep.subr.mxu0 0.0
    %8198 = vmatpush1.msra.mxu0 0.0
    %8199 = vmatprep.subr.mxu0 0.0
    %8200 = vmatpush1.msra.mxu0 0.0
    %8201 = vmatprep.subr.mxu0 0.0
    %8202 = vmatpush1.msra.mxu0 0.0
    %8203 = vmatprep.mubr.f32.mxu0 0.0
    %8204 = vmatmul.mubr.f32.gmra.mrb[0].mxu0 %v8137
    %v8205 = vpop.f32.mrb[0].mxu0
    %v8206 = vadd.f32 0.0, %v8205
    %v8207 = vpop.f32.mrb[0].mxu0
    %8208 = vdwg.mxu0
    %v8210 = vsel %vm2183, %v7686, 0
    %8212 = vmatprep.subr.mxu0 0.0
    %8213 = vmatpush1.msra.mxu0 %v7697
    %8214 = vmatprep.subr.mxu0 0.0
    %8215 = vmatpush1.msra.mxu0 0.0
    %8216 = vmatprep.subr.mxu0 0.0
    %8217 = vmatpush1.msra.mxu0 0.0
    %8218 = vmatprep.subr.mxu0 0.0
    %8219 = vmatpush1.msra.mxu0 0.0
    %8220 = vmatprep.subr.mxu0 0.0
    %8221 = vmatpush1.msra.mxu0 0.0
    %8222 = vmatprep.subr.mxu0 0.0
    %8223 = vmatpush1.msra.mxu0 0.0
    %8224 = vmatprep.subr.mxu0 0.0
    %8225 = vmatpush1.msra.mxu0 0.0
    %8226 = vmatprep.subr.mxu0 0.0
    %8227 = vmatpush1.msra.mxu0 0.0
    %8228 = vmatprep.subr.mxu0 0.0
    %8229 = vmatpush1.msra.mxu0 0.0
    %8230 = vmatprep.subr.mxu0 0.0
    %8231 = vmatpush1.msra.mxu0 0.0
    %8232 = vmatprep.subr.mxu0 0.0
    %8233 = vmatpush1.msra.mxu0 0.0
    %8234 = vmatprep.subr.mxu0 0.0
    %8235 = vmatpush1.msra.mxu0 0.0
    %8236 = vmatprep.subr.mxu0 0.0
    %8237 = vmatpush1.msra.mxu0 0.0
    %8238 = vmatprep.subr.mxu0 0.0
    %8239 = vmatpush1.msra.mxu0 0.0
    %8240 = vmatprep.subr.mxu0 0.0
    %8241 = vmatpush1.msra.mxu0 0.0
    %8242 = vmatprep.subr.mxu0 0.0
    %8243 = vmatpush1.msra.mxu0 0.0
    %8244 = vmatprep.subr.mxu0 0.0
    %8245 = vmatpush1.msra.mxu0 0.0
    %8246 = vmatprep.subr.mxu0 0.0
    %8247 = vmatpush1.msra.mxu0 0.0
    %8248 = vmatprep.subr.mxu0 0.0
    %8249 = vmatpush1.msra.mxu0 0.0
    %8250 = vmatprep.subr.mxu0 0.0
    %8251 = vmatpush1.msra.mxu0 0.0
    %8252 = vmatprep.subr.mxu0 0.0
    %8253 = vmatpush1.msra.mxu0 0.0
    %8254 = vmatprep.subr.mxu0 0.0
    %8255 = vmatpush1.msra.mxu0 0.0
    %8256 = vmatprep.subr.mxu0 0.0
    %8257 = vmatpush1.msra.mxu0 0.0
    %8258 = vmatprep.subr.mxu0 0.0
    %8259 = vmatpush1.msra.mxu0 0.0
    %8260 = vmatprep.subr.mxu0 0.0
    %8261 = vmatpush1.msra.mxu0 0.0
    %8262 = vmatprep.subr.mxu0 0.0
    %8263 = vmatpush1.msra.mxu0 0.0
    %8264 = vmatprep.subr.mxu0 0.0
    %8265 = vmatpush1.msra.mxu0 0.0
    %8266 = vmatprep.subr.mxu0 0.0
    %8267 = vmatpush1.msra.mxu0 0.0
    %8268 = vmatprep.subr.mxu0 0.0
    %8269 = vmatpush1.msra.mxu0 0.0
    %8270 = vmatprep.subr.mxu0 0.0
    %8271 = vmatpush1.msra.mxu0 0.0
    %8272 = vmatprep.subr.mxu0 0.0
    %8273 = vmatpush1.msra.mxu0 0.0
    %8274 = vmatprep.subr.mxu0 0.0
    %8275 = vmatpush1.msra.mxu0 0.0
    %8276 = vmatprep.mubr.f32.mxu0 0.0
    %8277 = vmatmul.mubr.f32.gmra.mrb[0].mxu0 %v8210
    %v8278 = vpop.f32.mrb[0].mxu0
    %v8279 = vadd.f32 0.0, %v8278
    %v8280 = vpop.f32.mrb[0].mxu0
    %8281 = vdwg.mxu0
    %v8282 = vsel %vm320, %v7768, 0.0
    %v8283 = vsel %vm320, %v7841, 0.0
    %v8284 = vadd.f32 %v8282, %v8283
    %v8285 = vsel %vm320, %v7914, 0.0
    %v8286 = vadd.f32 %v8284, %v8285
    %v8287 = vsel %vm320, %v7987, 0.0
    %v8288 = vadd.f32 %v8286, %v8287
    %v8289 = vsel %vm320, %v8060, 0.0
    %v8290 = vsel %vm320, %v8133, 0.0
    %v8291 = vadd.f32 %v8289, %v8290
    %v8292 = vsel %vm320, %v8206, 0.0
    %v8293 = vadd.f32 %v8291, %v8292
    %v8294 = vsel %vm320, %v8279, 0.0
    %v8295 = vadd.f32 %v8293, %v8294
    %s8296 = scalar_lea.vmem %s15, 1
    %v8297 = vld [vmem:[%s8296] sm:$0x1]
    %v8299 = vlaneseq
    %v8300 = vshrl.u32 %v8299, 7
    %v8301 = vsub.s32 0, %v8300
    %v8302 = vrot.slane %v8297, %v8301
    %v8304 = vadd.f32 %v8288, %v8302
    %v8305 = vadd.f32 %v8295, %v8302
    %v8306 = vadd.f32 %v8304, %v4435
    %v8307 = vadd.f32 %v8305, %v4436
    %s8308 = scalar_lea.vmem %s16, 1
    %v8309 = vld [vmem:[%s8308] sm:$0x1]
    %s8310 = scalar_lea.vmem %s17, 1
    %v8311 = vld [vmem:[%s8310] sm:$0x1]
    %v8312 = vsel %vm320, %v8306, 0.0
    %8313 = vadd.xlane.f32.xlu0 %v8312
    %v8314 = vpop.xlane.xlu0 %8313
    %v8315 = vsel %vm320, %v8307, 0.0
    %8316 = vadd.xlane.f32.xlu0 %v8315
    %v8317 = vpop.xlane.xlu0 %8316
    %v8318 = vmul.f32 %v8314, %v4153
    %v8319 = vmul.f32 %v8317, %v4153
    %v8320 = vsub.f32 %v8306, %v8318
    %v8321 = vsub.f32 %v8307, %v8319
    %v8322 = vmul.f32 %v8320, %v8320
    %v8323 = vmul.f32 %v8321, %v8321
    %v8324 = vsel %vm320, %v8322, 0.0
    %8325 = vadd.xlane.f32.xlu0 %v8324
    %v8326 = vpop.xlane.xlu0 %8325
    %v8327 = vsel %vm320, %v8323, 0.0
    %8328 = vadd.xlane.f32.xlu0 %v8327
    %v8329 = vpop.xlane.xlu0 %8328
    %v8330 = vmul.f32 %v8326, %v4153
    %v8331 = vmul.f32 %v8329, %v4153
    %v8332 = vadd.f32 %v8330, 1e-12
    %v8333 = vadd.f32 %v8331, 1e-12
    %v8334 = vrsqrt.pop %v8332
    %v8335 = vrsqrt.pop %v8333
    %v8336 = vmul.f32 %v8320, %v8334
    %v8337 = vmul.f32 %v8321, %v8335
    %v8339 = vlaneseq
    %v8340 = vshrl.u32 %v8339, 7
    %v8341 = vsub.s32 0, %v8340
    %v8342 = vrot.slane %v8309, %v8341
    %v8344 = vmul.f32 %v8342, %v8336
    %v8345 = vmul.f32 %v8342, %v8337
    %v8347 = vlaneseq
    %v8348 = vshrl.u32 %v8347, 7
    %v8349 = vsub.s32 0, %v8348
    %v8350 = vrot.slane %v8311, %v8349
    %v8352 = vadd.f32 %v8344, %v8350
    %v8353 = vadd.f32 %v8345, %v8350
    %s8354 = scalar_lea.vmem %s18, 32
    %v8355 = vld [vmem:[%s8354] sm:$0xff]
    %v8356 = vld [vmem:[%s8354 + $0x8] sm:$0xff]
    %v8357 = vld [vmem:[%s8354 + $0x10] sm:$0xff]
    %v8358 = vld [vmem:[%s8354 + $0x18] sm:$0xff]
    %s8359 = scalar_lea.vmem %s19, 1
    %v8360 = vld [vmem:[%s8359] sm:$0x1]
    %v8362 = vlaneseq
    %v8363 = vshrl.u32 %v8362, 7
    %v8364 = vsub.s32 0, %v8363
    %v8365 = vrot.slane %v8360, %v8364
    %v8368 = vsel %vm320, %v8352, 0
    %v8371 = vsel %vm320, %v8353, 0
    %8373 = vmatprep.subr.mxu0 0.0
    %8374 = vmatpush1.msra.mxu0 %v8355
    %8375 = vmatprep.subr.mxu0 0.0
    %8376 = vmatpush1.msra.mxu0 %v8356
    %8377 = vmatprep.subr.mxu0 0.0
    %8378 = vmatpush1.msra.mxu0 %v8357
    %8379 = vmatprep.subr.mxu0 0.0
    %8380 = vmatpush1.msra.mxu0 %v8358
    %8381 = vmatprep.subr.mxu0 0.0
    %8382 = vmatpush1.msra.mxu0 0.0
    %8383 = vmatprep.subr.mxu0 0.0
    %8384 = vmatpush1.msra.mxu0 0.0
    %8385 = vmatprep.subr.mxu0 0.0
    %8386 = vmatpush1.msra.mxu0 0.0
    %8387 = vmatprep.subr.mxu0 0.0
    %8388 = vmatpush1.msra.mxu0 0.0
    %8389 = vmatprep.subr.mxu0 0.0
    %8390 = vmatpush1.msra.mxu0 0.0
    %8391 = vmatprep.subr.mxu0 0.0
    %8392 = vmatpush1.msra.mxu0 0.0
    %8393 = vmatprep.subr.mxu0 0.0
    %8394 = vmatpush1.msra.mxu0 0.0
    %8395 = vmatprep.subr.mxu0 0.0
    %8396 = vmatpush1.msra.mxu0 0.0
    %8397 = vmatprep.subr.mxu0 0.0
    %8398 = vmatpush1.msra.mxu0 0.0
    %8399 = vmatprep.subr.mxu0 0.0
    %8400 = vmatpush1.msra.mxu0 0.0
    %8401 = vmatprep.subr.mxu0 0.0
    %8402 = vmatpush1.msra.mxu0 0.0
    %8403 = vmatprep.subr.mxu0 0.0
    %8404 = vmatpush1.msra.mxu0 0.0
    %8405 = vmatprep.subr.mxu0 0.0
    %8406 = vmatpush1.msra.mxu0 0.0
    %8407 = vmatprep.subr.mxu0 0.0
    %8408 = vmatpush1.msra.mxu0 0.0
    %8409 = vmatprep.subr.mxu0 0.0
    %8410 = vmatpush1.msra.mxu0 0.0
    %8411 = vmatprep.subr.mxu0 0.0
    %8412 = vmatpush1.msra.mxu0 0.0
    %8413 = vmatprep.subr.mxu0 0.0
    %8414 = vmatpush1.msra.mxu0 0.0
    %8415 = vmatprep.subr.mxu0 0.0
    %8416 = vmatpush1.msra.mxu0 0.0
    %8417 = vmatprep.subr.mxu0 0.0
    %8418 = vmatpush1.msra.mxu0 0.0
    %8419 = vmatprep.subr.mxu0 0.0
    %8420 = vmatpush1.msra.mxu0 0.0
    %8421 = vmatprep.subr.mxu0 0.0
    %8422 = vmatpush1.msra.mxu0 0.0
    %8423 = vmatprep.subr.mxu0 0.0
    %8424 = vmatpush1.msra.mxu0 0.0
    %8425 = vmatprep.subr.mxu0 0.0
    %8426 = vmatpush1.msra.mxu0 0.0
    %8427 = vmatprep.subr.mxu0 0.0
    %8428 = vmatpush1.msra.mxu0 0.0
    %8429 = vmatprep.subr.mxu0 0.0
    %8430 = vmatpush1.msra.mxu0 0.0
    %8431 = vmatprep.subr.mxu0 0.0
    %8432 = vmatpush1.msra.mxu0 0.0
    %8433 = vmatprep.subr.mxu0 0.0
    %8434 = vmatpush1.msra.mxu0 0.0
    %8435 = vmatprep.subr.mxu0 0.0
    %8436 = vmatpush1.msra.mxu0 0.0
    %8437 = vmatprep.mubr.f32.mxu0 0.0
    %8438 = vmatmul.mubr.f32.gmra.mrb[0].mxu0 %v8368
    %v8439 = vpop.f32.mrb[0].mxu0
    %v8440 = vadd.f32 %v8365, %v8439
    %v8441 = vpop.f32.mrb[0].mxu0
    %8442 = vmatprep.mubr.f32.mxu0 0.0
    %8443 = vmatmul.mubr.f32.gmra.mrb[0].mxu0 %v8371
    %v8444 = vpop.f32.mrb[0].mxu0
    %v8445 = vadd.f32 %v8365, %v8444
    %v8446 = vpop.f32.mrb[0].mxu0
    %8447 = vdwg.mxu0
    %v8448 = vmul.f32 %v8440, 0.5
    %v8449 = vmul.f32 %v8445, 0.5
    %v8450 = vmul.f32 %v8440, %v4284
    %v8451 = vmul.f32 %v8445, %v4284
    %v8452 = verf.f32.pop %v8450
    %v8453 = verf.f32.pop %v8451
    %v8454 = vadd.f32 %v8452, 1.0
    %v8455 = vadd.f32 %v8453, 1.0
    %v8456 = vmul.f32 %v8448, %v8454
    %v8457 = vmul.f32 %v8449, %v8455
    %s8458 = scalar_lea.vmem %s20, 128
    %v8459 = vld [vmem:[%s8458] sm:$0xff]
    %v8460 = vld [vmem:[%s8458 + $0x8] sm:$0xff]
    %v8461 = vld [vmem:[%s8458 + $0x10] sm:$0xff]
    %v8462 = vld [vmem:[%s8458 + $0x18] sm:$0xff]
    %v8463 = vld [vmem:[%s8458 + $0x20] sm:$0xff]
    %v8464 = vld [vmem:[%s8458 + $0x28] sm:$0xff]
    %v8465 = vld [vmem:[%s8458 + $0x30] sm:$0xff]
    %v8466 = vld [vmem:[%s8458 + $0x38] sm:$0xff]
    %v8467 = vld [vmem:[%s8458 + $0x40] sm:$0xff]
    %v8468 = vld [vmem:[%s8458 + $0x48] sm:$0xff]
    %v8469 = vld [vmem:[%s8458 + $0x50] sm:$0xff]
    %v8470 = vld [vmem:[%s8458 + $0x58] sm:$0xff]
    %v8471 = vld [vmem:[%s8458 + $0x60] sm:$0xff]
    %v8472 = vld [vmem:[%s8458 + $0x68] sm:$0xff]
    %v8473 = vld [vmem:[%s8458 + $0x70] sm:$0xff]
    %v8474 = vld [vmem:[%s8458 + $0x78] sm:$0xff]
    %s8475 = scalar_lea.vmem %s21, 1
    %v8476 = vld [vmem:[%s8475] sm:$0x1]
    %v8478 = vlaneseq
    %v8479 = vshrl.u32 %v8478, 7
    %v8480 = vsub.s32 0, %v8479
    %v8481 = vrot.slane %v8476, %v8480
    %8483 = vmatprep.subr.mxu0 0.0
    %8484 = vmatpush1.msra.mxu0 %v8459
    %8485 = vmatprep.subr.mxu0 0.0
    %8486 = vmatpush1.msra.mxu0 %v8460
    %8487 = vmatprep.subr.mxu0 0.0
    %8488 = vmatpush1.msra.mxu0 %v8461
    %8489 = vmatprep.subr.mxu0 0.0
    %8490 = vmatpush1.msra.mxu0 %v8462
    %8491 = vmatprep.subr.mxu0 0.0
    %8492 = vmatpush1.msra.mxu0 %v8463
    %8493 = vmatprep.subr.mxu0 0.0
    %8494 = vmatpush1.msra.mxu0 %v8464
    %8495 = vmatprep.subr.mxu0 0.0
    %8496 = vmatpush1.msra.mxu0 %v8465
    %8497 = vmatprep.subr.mxu0 0.0
    %8498 = vmatpush1.msra.mxu0 %v8466
    %8499 = vmatprep.subr.mxu0 0.0
    %8500 = vmatpush1.msra.mxu0 %v8467
    %8501 = vmatprep.subr.mxu0 0.0
    %8502 = vmatpush1.msra.mxu0 %v8468
    %8503 = vmatprep.subr.mxu0 0.0
    %8504 = vmatpush1.msra.mxu0 %v8469
    %8505 = vmatprep.subr.mxu0 0.0
    %8506 = vmatpush1.msra.mxu0 %v8470
    %8507 = vmatprep.subr.mxu0 0.0
    %8508 = vmatpush1.msra.mxu0 %v8471
    %8509 = vmatprep.subr.mxu0 0.0
    %8510 = vmatpush1.msra.mxu0 %v8472
    %8511 = vmatprep.subr.mxu0 0.0
    %8512 = vmatpush1.msra.mxu0 %v8473
    %8513 = vmatprep.subr.mxu0 0.0
    %8514 = vmatpush1.msra.mxu0 %v8474
    %8515 = vmatprep.subr.mxu0 0.0
    %8516 = vmatpush1.msra.mxu0 0.0
    %8517 = vmatprep.subr.mxu0 0.0
    %8518 = vmatpush1.msra.mxu0 0.0
    %8519 = vmatprep.subr.mxu0 0.0
    %8520 = vmatpush1.msra.mxu0 0.0
    %8521 = vmatprep.subr.mxu0 0.0
    %8522 = vmatpush1.msra.mxu0 0.0
    %8523 = vmatprep.subr.mxu0 0.0
    %8524 = vmatpush1.msra.mxu0 0.0
    %8525 = vmatprep.subr.mxu0 0.0
    %8526 = vmatpush1.msra.mxu0 0.0
    %8527 = vmatprep.subr.mxu0 0.0
    %8528 = vmatpush1.msra.mxu0 0.0
    %8529 = vmatprep.subr.mxu0 0.0
    %8530 = vmatpush1.msra.mxu0 0.0
    %8531 = vmatprep.subr.mxu0 0.0
    %8532 = vmatpush1.msra.mxu0 0.0
    %8533 = vmatprep.subr.mxu0 0.0
    %8534 = vmatpush1.msra.mxu0 0.0
    %8535 = vmatprep.subr.mxu0 0.0
    %8536 = vmatpush1.msra.mxu0 0.0
    %8537 = vmatprep.subr.mxu0 0.0
    %8538 = vmatpush1.msra.mxu0 0.0
    %8539 = vmatprep.subr.mxu0 0.0
    %8540 = vmatpush1.msra.mxu0 0.0
    %8541 = vmatprep.subr.mxu0 0.0
    %8542 = vmatpush1.msra.mxu0 0.0
    %8543 = vmatprep.subr.mxu0 0.0
    %8544 = vmatpush1.msra.mxu0 0.0
    %8545 = vmatprep.subr.mxu0 0.0
    %8546 = vmatpush1.msra.mxu0 0.0
    %8547 = vmatprep.mubr.f32.mxu0 0.0
    %8548 = vmatmul.mubr.f32.gmra.mrb[0].mxu0 %v8456
    %v8549 = vpop.f32.mrb[0].mxu0
    %v8550 = vadd.f32 %v8481, %v8549
    %v8551 = vpop.f32.mrb[0].mxu0
    %8552 = vmatprep.mubr.f32.mxu0 0.0
    %8553 = vmatmul.mubr.f32.gmra.mrb[0].mxu0 %v8457
    %v8554 = vpop.f32.mrb[0].mxu0
    %v8555 = vadd.f32 %v8481, %v8554
    %v8556 = vpop.f32.mrb[0].mxu0
    %8557 = vdwg.mxu0
    %v8558 = vadd.f32 %v8550, %v8352
    %v8559 = vadd.f32 %v8555, %v8353
    %s8560 = scalar_lea.vmem %s22, 1
    %v8561 = vld [vmem:[%s8560] sm:$0x1]
    %s8562 = scalar_lea.vmem %s23, 1
    %v8563 = vld [vmem:[%s8562] sm:$0x1]
    %v8564 = vsel %vm320, %v8558, 0.0
    %8565 = vadd.xlane.f32.xlu0 %v8564
    %v8566 = vpop.xlane.xlu0 %8565
    %v8567 = vsel %vm320, %v8559, 0.0
    %8568 = vadd.xlane.f32.xlu0 %v8567
    %v8569 = vpop.xlane.xlu0 %8568
    %v8570 = vmul.f32 %v8566, %v4153
    %v8571 = vmul.f32 %v8569, %v4153
    %v8572 = vsub.f32 %v8558, %v8570
    %v8573 = vsub.f32 %v8559, %v8571
    %v8574 = vmul.f32 %v8572, %v8572
    %v8575 = vmul.f32 %v8573, %v8573
    %v8576 = vsel %vm320, %v8574, 0.0
    %8577 = vadd.xlane.f32.xlu0 %v8576
    %v8578 = vpop.xlane.xlu0 %8577
    %v8579 = vsel %vm320, %v8575, 0.0
    %8580 = vadd.xlane.f32.xlu0 %v8579
    %v8581 = vpop.xlane.xlu0 %8580
    %v8582 = vmul.f32 %v8578, %v4153
    %v8583 = vmul.f32 %v8581, %v4153
    %v8584 = vadd.f32 %v8582, 1e-12
    %v8585 = vadd.f32 %v8583, 1e-12
    %v8586 = vrsqrt.pop %v8584
    %v8587 = vrsqrt.pop %v8585
    %v8588 = vmul.f32 %v8572, %v8586
    %v8589 = vmul.f32 %v8573, %v8587
    %v8591 = vlaneseq
    %v8592 = vshrl.u32 %v8591, 7
    %v8593 = vsub.s32 0, %v8592
    %v8594 = vrot.slane %v8561, %v8593
    %v8596 = vmul.f32 %v8594, %v8588
    %v8597 = vmul.f32 %v8594, %v8589
    %v8599 = vlaneseq
    %v8600 = vshrl.u32 %v8599, 7
    %v8601 = vsub.s32 0, %v8600
    %v8602 = vrot.slane %v8563, %v8601
    %v8604 = vadd.f32 %v8596, %v8602
    %v8605 = vadd.f32 %v8597, %v8602
    %8606 = vst.msk [vmem:[#allocation2] sm:$0xff] %vm320, %v8604
    %8607 = vst.msk [vmem:[#allocation2 + $0x8] sm:$0xff] %vm320, %v8605
    // Predicated region
    $region98: #{tpu_custom_call.1} parent=1 // pred_check
      _
    $region99: #{tpu_custom_call.1} parent=1 // pred_check_branch
      %8609 = sbr.rel (0) target = $region101
    $region100: #{tpu_custom_call.1} parent=1 // pred_region
      %s8611 = ssub.s32 256, 256
      %8612 = vsyncadd [#allocation3], %s8611
      %s8613 = sshll.u32 [#allocation2], 4
      %s8614 = int_to_ptr.vmem [resolvable:$true] %s8613
      %8619 = dma.vmem_to_hbm [thread:$0]  %s8614, 256, %s24, [#allocation3], 128, 128, 8
    $region101: #{tpu_custom_call.1} parent=1 // pred_fallthru
      _
    // Predicated region
    $region102: #{tpu_custom_call.1} parent=1 // pred_check
      _
    $region103: #{tpu_custom_call.1} parent=1 // pred_check_branch
      %8621 = sbr.rel (0) target = $region105
    $region104: #{tpu_custom_call.1} parent=1 // pred_region
      %8622 = dma.done [#allocation3], 256
    $region105: #{tpu_custom_call.1} parent=1 // pred_fallthru
      _
    %8623 = vsyncpa [#allocation3], 1

</llo_original>
